<compile_context>
chip_gen: v6e
topology: v6e:2x2x1
jax: 0.10.0
libtpu: 0.0.40
codegen_flags: <defaults>
</compile_context>

<pallas_src>
import jax
import jax.numpy as jnp
from jax import lax
from jax.experimental import pallas as pl
from jax.experimental.pallas import tpu as pltpu


# ----------------------------------------------------------------------------
# Fused Inception kernel (one batch element per grid step)
# ----------------------------------------------------------------------------
def _make_inception_kernel(H, W, Cin, ch1x1, ch3r, ch3x3, ch5r, ch5x5, chpool):
    P = H * W
    Cr = ch3r + ch5r          # concatenated reduce channels (3x3 + 5x5 paths)
    C35 = ch3x3 + ch5x5       # fused 3x3 + 5x5 output channels

    def kernel(x_ref, w1_ref, b1_ref, w35_ref, b35_ref, wp_ref, bp_ref,
               o_ref, pad_ref, pool_ref):
        x = x_ref[...]                                   # (H, W, Cin) f32
        xf = x.reshape(P, Cin).astype(jnp.bfloat16)      # (P, Cin) bf16

        # ---- fused 1x1 convs (branch1 | 3x3-reduce | 5x5-reduce): one matmul
        t = jnp.dot(xf, w1_ref[...], preferred_element_type=jnp.float32)
        t = jnp.maximum(t + b1_ref[...], 0.0)            # (P, ch1x1 + Cr) f32

        # ---- branch1: its channel slice goes straight to the output
        o_ref[:, pl.ds(0, ch1x1)] = t[:, 0:ch1x1]

        # ---- branches 2 + 3 fused: zero-pad(2) the concatenated reduce
        #      output, then ONE 5x5 tap-sum with the block-structured weight.
        pad_ref[...] = jnp.zeros_like(pad_ref)
        pad_ref[pl.ds(2, H), pl.ds(2, W), :] = t[:, ch1x1:].reshape(H, W, Cr)
        acc = None
        for dy in range(5):                              # static -> unrolled
            for dx in range(5):
                patch = pad_ref[pl.ds(dy, H), pl.ds(dx, W), :]       # (H,W,Cr)
                patch = patch.reshape(P, Cr).astype(jnp.bfloat16)
                part = jnp.dot(patch, w35_ref[dy, dx],
                               preferred_element_type=jnp.float32)
                acc = part if acc is None else acc + part
        o_ref[:, pl.ds(ch1x1, C35)] = jnp.maximum(acc + b35_ref[...], 0.0)

        # ---- branch4: 3x3 max-pool (stride 1, pad 1, -inf pad), separable,
        #      followed by the pool-projection 1x1 conv.
        pool_ref[...] = jnp.full((H + 2, W + 2, Cin), -jnp.inf, jnp.float32)
        pool_ref[pl.ds(1, H), pl.ds(1, W), :] = x
        rm = jnp.maximum(
            jnp.maximum(pool_ref[pl.ds(0, H + 2), pl.ds(0, W), :],
                        pool_ref[pl.ds(0, H + 2), pl.ds(1, W), :]),
            pool_ref[pl.ds(0, H + 2), pl.ds(2, W), :])   # (H+2, W, Cin)
        m = jnp.maximum(jnp.maximum(rm[0:H], rm[1:1 + H]), rm[2:2 + H])
        x4 = jnp.dot(m.reshape(P, Cin).astype(jnp.bfloat16), wp_ref[...],
                     preferred_element_type=jnp.float32)
        o_ref[:, pl.ds(ch1x1 + C35, chpool)] = jnp.maximum(
            x4 + bp_ref[...], 0.0)

    return kernel


# ----------------------------------------------------------------------------
# Parameters (synthetic, HWIO weights + (1, Cout) bias, like nn.Conv2d)
# ----------------------------------------------------------------------------
def init_inception_params(key, in_channels, ch1x1, ch3x3reduce, ch3x3,
                          ch5x5reduce, ch5x5, chpool):
    def conv_p(k, ksize, cin, cout):
        kw, kb = jax.random.split(k)
        w = 0.1 * jax.random.normal(kw, (ksize, ksize, cin, cout), jnp.float32)
        b = 0.1 * jax.random.normal(kb, (1, cout), jnp.float32)
        return w, b

    keys = jax.random.split(key, 6)
    return {
        "b1": conv_p(keys[0], 1, in_channels, ch1x1),
        "b2a": conv_p(keys[1], 1, in_channels, ch3x3reduce),
        "b2b": conv_p(keys[2], 3, ch3x3reduce, ch3x3),
        "b3a": conv_p(keys[3], 1, in_channels, ch5x5reduce),
        "b3b": conv_p(keys[4], 5, ch5x5reduce, ch5x5),
        "b4": conv_p(keys[5], 1, in_channels, chpool),
    }


# ----------------------------------------------------------------------------
# InceptionBlock forward (NCHW in / NCHW out, like the PyTorch module)
# ----------------------------------------------------------------------------
@jax.jit
def inception_block(x_nchw, params):
    B, Cin, H, W = x_nchw.shape
    x = jnp.transpose(x_nchw, (0, 2, 3, 1)).astype(jnp.float32)   # NHWC

    w1, b1 = params["b1"]
    w2a, b2a = params["b2a"]
    w2b, b2b = params["b2b"]
    w3a, b3a = params["b3a"]
    w3b, b3b = params["b3b"]
    w4, b4 = params["b4"]
    ch1x1, ch3r, ch3x3 = w1.shape[-1], w2a.shape[-1], w2b.shape[-1]
    ch5r, ch5x5, chpool = w3a.shape[-1], w3b.shape[-1], w4.shape[-1]
    Cr, C35 = ch3r + ch5r, ch3x3 + ch5x5
    C123 = ch1x1 + Cr
    Cout = ch1x1 + C35 + chpool
    P = H * W

    # Fuse the three 1x1 convs that share input x into one bf16 weight/bias.
    w1f = jnp.concatenate(
        [w1.reshape(Cin, ch1x1), w2a.reshape(Cin, ch3r),
         w3a.reshape(Cin, ch5r)], axis=1).astype(jnp.bfloat16)
    b1f = jnp.concatenate([b1, b2a, b3a], axis=1)                 # f32

    # Fuse the 3x3 and 5x5 convolutions into one 5x5 tap-sum over the
    # concatenated reduce channels: block-structured (zero-padded) weight.
    # (3x3 kernel lives in the centre 3x3 taps / first ch3r input channels.)
    w35 = jnp.zeros((5, 5, Cr, C35), jnp.float32)
    w35 = w35.at[1:4, 1:4, :ch3r, :ch3x3].set(w2b)
    w35 = w35.at[:, :, ch3r:, ch3x3:].set(w3b)
    w35 = w35.astype(jnp.bfloat16)
    b35 = jnp.concatenate([b2b, b3b], axis=1)                     # f32

    kernel = _make_inception_kernel(H, W, Cin, ch1x1, ch3r, ch3x3,
                                    ch5r, ch5x5, chpool)

    out_flat = pl.pallas_call(
        kernel,
        out_shape=jax.ShapeDtypeStruct((B, P, Cout), jnp.float32),
        grid=(B,),
        in_specs=[
            pl.BlockSpec((None, H, W, Cin), lambda b: (b, 0, 0, 0)),
            pl.BlockSpec((Cin, C123), lambda b: (0, 0)),
            pl.BlockSpec((1, C123), lambda b: (0, 0)),
            pl.BlockSpec((5, 5, Cr, C35), lambda b: (0, 0, 0, 0)),
            pl.BlockSpec((1, C35), lambda b: (0, 0)),
            pl.BlockSpec((Cin, chpool), lambda b: (0, 0)),
            pl.BlockSpec((1, chpool), lambda b: (0, 0)),
        ],
        out_specs=pl.BlockSpec((None, P, Cout), lambda b: (b, 0, 0)),
        scratch_shapes=[
            pltpu.VMEM((H + 4, W + 4, Cr), jnp.float32),   # zero-pad(2) reduce
            pltpu.VMEM((H + 2, W + 2, Cin), jnp.float32),  # -inf padded x
        ],
        compiler_params=pltpu.CompilerParams(
            dimension_semantics=("parallel",)),
    )(x, w1f, b1f, w35, b35,
      w4.reshape(Cin, chpool).astype(jnp.bfloat16), b4)

    # (B, H*W, Cout) -> (B, H, W, Cout) is a free contiguous reshape, then NCHW.
    return jnp.transpose(out_flat.reshape(B, H, W, Cout), (0, 3, 1, 2))


# ----------------------------------------------------------------------------
# Pure-JAX reference (for correctness check)
# ----------------------------------------------------------------------------
def _ref_conv_relu(x, w, b, pad):
    y = lax.conv_general_dilated(
        x, w, window_strides=(1, 1),
        padding=((pad, pad), (pad, pad)),
        dimension_numbers=("NHWC", "HWIO", "NHWC"),
        precision=lax.Precision.HIGHEST)
    return jnp.maximum(y + b.reshape(1, 1, 1, -1), 0.0)


def inception_block_ref(x_nchw, params):
    x = jnp.transpose(x_nchw, (0, 2, 3, 1)).astype(jnp.float32)
    x1 = _ref_conv_relu(x, *params["b1"], pad=0)
    x2 = _ref_conv_relu(_ref_conv_relu(x, *params["b2a"], pad=0),
                        *params["b2b"], pad=1)
    x3 = _ref_conv_relu(_ref_conv_relu(x, *params["b3a"], pad=0),
                        *params["b3b"], pad=2)
    pooled = lax.reduce_window(
        x, -jnp.inf, lax.max, (1, 3, 3, 1), (1, 1, 1, 1),
        padding=((0, 0), (1, 1), (1, 1), (0, 0)))
    x4 = _ref_conv_relu(pooled, *params["b4"], pad=0)
    out = jnp.concatenate([x1, x2, x3, x4], axis=-1)
    return jnp.transpose(out, (0, 3, 1, 2))


# ----------------------------------------------------------------------------
if __name__ == "__main__":
    key = jax.random.PRNGKey(0)
    kx, kp = jax.random.split(key)

    # Small shapes consistent with the module: batch=2, in_channels=4, 16x16.
    B, Cin, H, W = 2, 4, 16, 16
    ch1x1, ch3x3reduce, ch3x3, ch5x5reduce, ch5x5, chpool = 8, 4, 8, 4, 8, 8

    x = jax.random.normal(kx, (B, Cin, H, W), jnp.float32)
    params = init_inception_params(kp, Cin, ch1x1, ch3x3reduce, ch3x3,
                                   ch5x5reduce, ch5x5, chpool)

    out = jax.block_until_ready(inception_block(x, params))

    expected_channels = ch1x1 + ch3x3 + ch5x5 + chpool
    assert out.shape == (B, expected_channels, H, W), out.shape

    ref = jax.block_until_ready(inception_block_ref(x, params))
    max_err = float(jnp.max(jnp.abs(out - ref)))
    assert jnp.allclose(out, ref, atol=2e-2, rtol=2e-2), max_err

    print("KERNEL_OK")
</pallas_src>

<mosaic_0001>
module attributes {stable_mosaic.version = 11 : i64} {
  func.func @kernel(%arg0: i32, %arg1: memref<1x16x16x4xf32, #tpu.memory_space<vmem>>, %arg2: memref<4x16xbf16, #tpu.memory_space<vmem>>, %arg3: memref<1x16xf32, #tpu.memory_space<vmem>>, %arg4: memref<5x5x8x16xbf16, #tpu.memory_space<vmem>>, %arg5: memref<1x16xf32, #tpu.memory_space<vmem>>, %arg6: memref<4x8xbf16, #tpu.memory_space<vmem>>, %arg7: memref<1x8xf32, #tpu.memory_space<vmem>>, %arg8: memref<1x256x32xf32, #tpu.memory_space<vmem>>, %arg9: memref<20x20x8xf32, #tpu.memory_space<vmem>>, %arg10: memref<18x18x4xf32, #tpu.memory_space<vmem>>) attributes {dimension_semantics = [#tpu.dimension_semantics<parallel>], iteration_bounds = array<i64: 2>, scalar_prefetch = 0 : i64, scratch_operands = 2 : i64, tpu.core_type = #tpu.core_type<tc>, window_params = [{transform_indices = @transform_0, window_bounds = array<i64: 1, 16, 16, 4>}, {pipeline_mode = #tpu.pipeline_mode<synchronous>, transform_indices = @transform_1, window_bounds = array<i64: 4, 16>}, {pipeline_mode = #tpu.pipeline_mode<synchronous>, transform_indices = @transform_2, window_bounds = array<i64: 1, 16>}, {pipeline_mode = #tpu.pipeline_mode<synchronous>, transform_indices = @transform_3, window_bounds = array<i64: 5, 5, 8, 16>}, {pipeline_mode = #tpu.pipeline_mode<synchronous>, transform_indices = @transform_4, window_bounds = array<i64: 1, 16>}, {pipeline_mode = #tpu.pipeline_mode<synchronous>, transform_indices = @transform_5, window_bounds = array<i64: 4, 8>}, {pipeline_mode = #tpu.pipeline_mode<synchronous>, transform_indices = @transform_6, window_bounds = array<i64: 1, 8>}, {transform_indices = @transform_7, window_bounds = array<i64: 1, 256, 32>}]} {
    %c0 = arith.constant 0 : index
    %c0_0 = arith.constant 0 : index
    %c0_1 = arith.constant 0 : index
    %c0_2 = arith.constant 0 : index
    %0 = vector.load %arg1[%c0, %c0_0, %c0_1, %c0_2] : memref<1x16x16x4xf32, #tpu.memory_space<vmem>>, vector<1x16x16x4xf32>
    %1 = vector.shape_cast %0 : vector<1x16x16x4xf32> to vector<16x16x4xf32>
    %2 = vector.shape_cast %1 : vector<16x16x4xf32> to vector<256x4xf32>
    %3 = arith.truncf %2 : vector<256x4xf32> to vector<256x4xbf16>
    %c0_3 = arith.constant 0 : index
    %c0_4 = arith.constant 0 : index
    %4 = vector.load %arg2[%c0_3, %c0_4] : memref<4x16xbf16, #tpu.memory_space<vmem>>, vector<4x16xbf16>
    %cst = arith.constant dense<0.000000e+00> : vector<256x16xf32>
    %5 = tpu.matmul %3, %4, %cst {dimension_numbers = #tpu.dot_dimension_numbers<[1], [0], [0], [1], [0, 0, 1, 1], [], []>} : vector<256x4xbf16>, vector<4x16xbf16>, vector<256x16xf32> -> vector<256x16xf32>
    %c0_5 = arith.constant 0 : index
    %c0_6 = arith.constant 0 : index
    %6 = vector.load %arg3[%c0_5, %c0_6] : memref<1x16xf32, #tpu.memory_space<vmem>>, vector<1x16xf32>
    %7 = vector.broadcast %6 : vector<1x16xf32> to vector<256x16xf32>
    %8 = arith.addf %5, %7 : vector<256x16xf32>
    %cst_7 = arith.constant 0.000000e+00 : f32
    %9 = vector.broadcast %cst_7 : f32 to vector<256x16xf32>
    %10 = arith.maximumf %8, %9 : vector<256x16xf32>
    %11 = vector.extract_strided_slice %10 {offsets = [0, 0], sizes = [256, 8], strides = [1, 1]} : vector<256x16xf32> to vector<256x8xf32>
    %c0_8 = arith.constant 0 : index
    %c0_9 = arith.constant 0 : index
    %c0_10 = arith.constant 0 : index
    %12 = vector.load %arg8[%c0_8, %c0_9, %c0_10] : memref<1x256x32xf32, #tpu.memory_space<vmem>>, vector<1x256x8xf32>
    %13 = vector.shape_cast %12 : vector<1x256x8xf32> to vector<256x8xf32>
    %14 = vector.shape_cast %11 : vector<256x8xf32> to vector<1x256x8xf32>
    tpu.vector_store %arg8[%c0_8, %c0_9, %c0_10], %14 {strides = array<i32>} : memref<1x256x32xf32, #tpu.memory_space<vmem>>, vector<1x256x8xf32>,
    %cst_11 = arith.constant 0.000000e+00 : f32
    %15 = vector.broadcast %cst_11 : f32 to vector<20x20x8xf32>
    %c0_12 = arith.constant 0 : index
    %c0_13 = arith.constant 0 : index
    %c0_14 = arith.constant 0 : index
    %16 = vector.load %arg9[%c0_12, %c0_13, %c0_14] : memref<20x20x8xf32, #tpu.memory_space<vmem>>, vector<20x20x8xf32>
    tpu.vector_store %arg9[%c0_12, %c0_13, %c0_14], %15 {strides = array<i32>} : memref<20x20x8xf32, #tpu.memory_space<vmem>>, vector<20x20x8xf32>,
    %17 = vector.extract_strided_slice %10 {offsets = [0, 8], sizes = [256, 8], strides = [1, 1]} : vector<256x16xf32> to vector<256x8xf32>
    %18 = vector.shape_cast %17 : vector<256x8xf32> to vector<16x16x8xf32>
    %c2 = arith.constant 2 : index
    %c2_15 = arith.constant 2 : index
    %c0_16 = arith.constant 0 : index
    %19 = vector.load %arg9[%c2, %c2_15, %c0_16] : memref<20x20x8xf32, #tpu.memory_space<vmem>>, vector<16x16x8xf32>
    tpu.vector_store %arg9[%c2, %c2_15, %c0_16], %18 {strides = array<i32>} : memref<20x20x8xf32, #tpu.memory_space<vmem>>, vector<16x16x8xf32>,
    %c0_17 = arith.constant 0 : index
    %c0_18 = arith.constant 0 : index
    %c0_19 = arith.constant 0 : index
    %20 = vector.load %arg9[%c0_17, %c0_18, %c0_19] : memref<20x20x8xf32, #tpu.memory_space<vmem>>, vector<16x16x8xf32>
    %21 = vector.shape_cast %20 : vector<16x16x8xf32> to vector<256x8xf32>
    %22 = arith.truncf %21 : vector<256x8xf32> to vector<256x8xbf16>
    %c0_20 = arith.constant 0 : index
    %c0_21 = arith.constant 0 : index
    %c0_22 = arith.constant 0 : index
    %c0_23 = arith.constant 0 : index
    %23 = vector.load %arg4[%c0_20, %c0_21, %c0_22, %c0_23] : memref<5x5x8x16xbf16, #tpu.memory_space<vmem>>, vector<1x1x8x16xbf16>
    %24 = vector.shape_cast %23 : vector<1x1x8x16xbf16> to vector<8x16xbf16>
    %cst_24 = arith.constant dense<0.000000e+00> : vector<256x16xf32>
    %25 = tpu.matmul %22, %24, %cst_24 {dimension_numbers = #tpu.dot_dimension_numbers<[1], [0], [0], [1], [0, 0, 1, 1], [], []>} : vector<256x8xbf16>, vector<8x16xbf16>, vector<256x16xf32> -> vector<256x16xf32>
    %c0_25 = arith.constant 0 : index
    %c1 = arith.constant 1 : index
    %c0_26 = arith.constant 0 : index
    %26 = vector.load %arg9[%c0_25, %c1, %c0_26] : memref<20x20x8xf32, #tpu.memory_space<vmem>>, vector<16x16x8xf32>
    %27 = vector.shape_cast %26 : vector<16x16x8xf32> to vector<256x8xf32>
    %28 = arith.truncf %27 : vector<256x8xf32> to vector<256x8xbf16>
    %c0_27 = arith.constant 0 : index
    %c1_28 = arith.constant 1 : index
    %c0_29 = arith.constant 0 : index
    %c0_30 = arith.constant 0 : index
    %29 = vector.load %arg4[%c0_27, %c1_28, %c0_29, %c0_30] : memref<5x5x8x16xbf16, #tpu.memory_space<vmem>>, vector<1x1x8x16xbf16>
    %30 = vector.shape_cast %29 : vector<1x1x8x16xbf16> to vector<8x16xbf16>
    %cst_31 = arith.constant dense<0.000000e+00> : vector<256x16xf32>
    %31 = tpu.matmul %28, %30, %cst_31 {dimension_numbers = #tpu.dot_dimension_numbers<[1], [0], [0], [1], [0, 0, 1, 1], [], []>} : vector<256x8xbf16>, vector<8x16xbf16>, vector<256x16xf32> -> vector<256x16xf32>
    %32 = arith.addf %25, %31 : vector<256x16xf32>
    %c0_32 = arith.constant 0 : index
    %c2_33 = arith.constant 2 : index
    %c0_34 = arith.constant 0 : index
    %33 = vector.load %arg9[%c0_32, %c2_33, %c0_34] : memref<20x20x8xf32, #tpu.memory_space<vmem>>, vector<16x16x8xf32>
    %34 = vector.shape_cast %33 : vector<16x16x8xf32> to vector<256x8xf32>
    %35 = arith.truncf %34 : vector<256x8xf32> to vector<256x8xbf16>
    %c0_35 = arith.constant 0 : index
    %c2_36 = arith.constant 2 : index
    %c0_37 = arith.constant 0 : index
    %c0_38 = arith.constant 0 : index
    %36 = vector.load %arg4[%c0_35, %c2_36, %c0_37, %c0_38] : memref<5x5x8x16xbf16, #tpu.memory_space<vmem>>, vector<1x1x8x16xbf16>
    %37 = vector.shape_cast %36 : vector<1x1x8x16xbf16> to vector<8x16xbf16>
    %cst_39 = arith.constant dense<0.000000e+00> : vector<256x16xf32>
    %38 = tpu.matmul %35, %37, %cst_39 {dimension_numbers = #tpu.dot_dimension_numbers<[1], [0], [0], [1], [0, 0, 1, 1], [], []>} : vector<256x8xbf16>, vector<8x16xbf16>, vector<256x16xf32> -> vector<256x16xf32>
    %39 = arith.addf %32, %38 : vector<256x16xf32>
    %c0_40 = arith.constant 0 : index
    %c3 = arith.constant 3 : index
    %c0_41 = arith.constant 0 : index
    %40 = vector.load %arg9[%c0_40, %c3, %c0_41] : memref<20x20x8xf32, #tpu.memory_space<vmem>>, vector<16x16x8xf32>
    %41 = vector.shape_cast %40 : vector<16x16x8xf32> to vector<256x8xf32>
    %42 = arith.truncf %41 : vector<256x8xf32> to vector<256x8xbf16>
    %c0_42 = arith.constant 0 : index
    %c3_43 = arith.constant 3 : index
    %c0_44 = arith.constant 0 : index
    %c0_45 = arith.constant 0 : index
    %43 = vector.load %arg4[%c0_42, %c3_43, %c0_44, %c0_45] : memref<5x5x8x16xbf16, #tpu.memory_space<vmem>>, vector<1x1x8x16xbf16>
    %44 = vector.shape_cast %43 : vector<1x1x8x16xbf16> to vector<8x16xbf16>
    %cst_46 = arith.constant dense<0.000000e+00> : vector<256x16xf32>
    %45 = tpu.matmul %42, %44, %cst_46 {dimension_numbers = #tpu.dot_dimension_numbers<[1], [0], [0], [1], [0, 0, 1, 1], [], []>} : vector<256x8xbf16>, vector<8x16xbf16>, vector<256x16xf32> -> vector<256x16xf32>
    %46 = arith.addf %39, %45 : vector<256x16xf32>
    %c0_47 = arith.constant 0 : index
    %c4 = arith.constant 4 : index
    %c0_48 = arith.constant 0 : index
    %47 = vector.load %arg9[%c0_47, %c4, %c0_48] : memref<20x20x8xf32, #tpu.memory_space<vmem>>, vector<16x16x8xf32>
    %48 = vector.shape_cast %47 : vector<16x16x8xf32> to vector<256x8xf32>
    %49 = arith.truncf %48 : vector<256x8xf32> to vector<256x8xbf16>
    %c0_49 = arith.constant 0 : index
    %c4_50 = arith.constant 4 : index
    %c0_51 = arith.constant 0 : index
    %c0_52 = arith.constant 0 : index
    %50 = vector.load %arg4[%c0_49, %c4_50, %c0_51, %c0_52] : memref<5x5x8x16xbf16, #tpu.memory_space<vmem>>, vector<1x1x8x16xbf16>
    %51 = vector.shape_cast %50 : vector<1x1x8x16xbf16> to vector<8x16xbf16>
    %cst_53 = arith.constant dense<0.000000e+00> : vector<256x16xf32>
    %52 = tpu.matmul %49, %51, %cst_53 {dimension_numbers = #tpu.dot_dimension_numbers<[1], [0], [0], [1], [0, 0, 1, 1], [], []>} : vector<256x8xbf16>, vector<8x16xbf16>, vector<256x16xf32> -> vector<256x16xf32>
    %53 = arith.addf %46, %52 : vector<256x16xf32>
    %c1_54 = arith.constant 1 : index
    %c0_55 = arith.constant 0 : index
    %c0_56 = arith.constant 0 : index
    %54 = vector.load %arg9[%c1_54, %c0_55, %c0_56] : memref<20x20x8xf32, #tpu.memory_space<vmem>>, vector<16x16x8xf32>
    %55 = vector.shape_cast %54 : vector<16x16x8xf32> to vector<256x8xf32>
    %56 = arith.truncf %55 : vector<256x8xf32> to vector<256x8xbf16>
    %c1_57 = arith.constant 1 : index
    %c0_58 = arith.constant 0 : index
    %c0_59 = arith.constant 0 : index
    %c0_60 = arith.constant 0 : index
    %57 = vector.load %arg4[%c1_57, %c0_58, %c0_59, %c0_60] : memref<5x5x8x16xbf16, #tpu.memory_space<vmem>>, vector<1x1x8x16xbf16>
    %58 = vector.shape_cast %57 : vector<1x1x8x16xbf16> to vector<8x16xbf16>
    %cst_61 = arith.constant dense<0.000000e+00> : vector<256x16xf32>
    %59 = tpu.matmul %56, %58, %cst_61 {dimension_numbers = #tpu.dot_dimension_numbers<[1], [0], [0], [1], [0, 0, 1, 1], [], []>} : vector<256x8xbf16>, vector<8x16xbf16>, vector<256x16xf32> -> vector<256x16xf32>
    %60 = arith.addf %53, %59 : vector<256x16xf32>
    %c1_62 = arith.constant 1 : index
    %c1_63 = arith.constant 1 : index
    %c0_64 = arith.constant 0 : index
    %61 = vector.load %arg9[%c1_62, %c1_63, %c0_64] : memref<20x20x8xf32, #tpu.memory_space<vmem>>, vector<16x16x8xf32>
    %62 = vector.shape_cast %61 : vector<16x16x8xf32> to vector<256x8xf32>
    %63 = arith.truncf %62 : vector<256x8xf32> to vector<256x8xbf16>
    %c1_65 = arith.constant 1 : index
    %c1_66 = arith.constant 1 : index
    %c0_67 = arith.constant 0 : index
    %c0_68 = arith.constant 0 : index
    %64 = vector.load %arg4[%c1_65, %c1_66, %c0_67, %c0_68] : memref<5x5x8x16xbf16, #tpu.memory_space<vmem>>, vector<1x1x8x16xbf16>
    %65 = vector.shape_cast %64 : vector<1x1x8x16xbf16> to vector<8x16xbf16>
    %cst_69 = arith.constant dense<0.000000e+00> : vector<256x16xf32>
    %66 = tpu.matmul %63, %65, %cst_69 {dimension_numbers = #tpu.dot_dimension_numbers<[1], [0], [0], [1], [0, 0, 1, 1], [], []>} : vector<256x8xbf16>, vector<8x16xbf16>, vector<256x16xf32> -> vector<256x16xf32>
    %67 = arith.addf %60, %66 : vector<256x16xf32>
    %c1_70 = arith.constant 1 : index
    %c2_71 = arith.constant 2 : index
    %c0_72 = arith.constant 0 : index
    %68 = vector.load %arg9[%c1_70, %c2_71, %c0_72] : memref<20x20x8xf32, #tpu.memory_space<vmem>>, vector<16x16x8xf32>
    %69 = vector.shape_cast %68 : vector<16x16x8xf32> to vector<256x8xf32>
    %70 = arith.truncf %69 : vector<256x8xf32> to vector<256x8xbf16>
    %c1_73 = arith.constant 1 : index
    %c2_74 = arith.constant 2 : index
    %c0_75 = arith.constant 0 : index
    %c0_76 = arith.constant 0 : index
    %71 = vector.load %arg4[%c1_73, %c2_74, %c0_75, %c0_76] : memref<5x5x8x16xbf16, #tpu.memory_space<vmem>>, vector<1x1x8x16xbf16>
    %72 = vector.shape_cast %71 : vector<1x1x8x16xbf16> to vector<8x16xbf16>
    %cst_77 = arith.constant dense<0.000000e+00> : vector<256x16xf32>
    %73 = tpu.matmul %70, %72, %cst_77 {dimension_numbers = #tpu.dot_dimension_numbers<[1], [0], [0], [1], [0, 0, 1, 1], [], []>} : vector<256x8xbf16>, vector<8x16xbf16>, vector<256x16xf32> -> vector<256x16xf32>
    %74 = arith.addf %67, %73 : vector<256x16xf32>
    %c1_78 = arith.constant 1 : index
    %c3_79 = arith.constant 3 : index
    %c0_80 = arith.constant 0 : index
    %75 = vector.load %arg9[%c1_78, %c3_79, %c0_80] : memref<20x20x8xf32, #tpu.memory_space<vmem>>, vector<16x16x8xf32>
    %76 = vector.shape_cast %75 : vector<16x16x8xf32> to vector<256x8xf32>
    %77 = arith.truncf %76 : vector<256x8xf32> to vector<256x8xbf16>
    %c1_81 = arith.constant 1 : index
    %c3_82 = arith.constant 3 : index
    %c0_83 = arith.constant 0 : index
    %c0_84 = arith.constant 0 : index
    %78 = vector.load %arg4[%c1_81, %c3_82, %c0_83, %c0_84] : memref<5x5x8x16xbf16, #tpu.memory_space<vmem>>, vector<1x1x8x16xbf16>
    %79 = vector.shape_cast %78 : vector<1x1x8x16xbf16> to vector<8x16xbf16>
    %cst_85 = arith.constant dense<0.000000e+00> : vector<256x16xf32>
    %80 = tpu.matmul %77, %79, %cst_85 {dimension_numbers = #tpu.dot_dimension_numbers<[1], [0], [0], [1], [0, 0, 1, 1], [], []>} : vector<256x8xbf16>, vector<8x16xbf16>, vector<256x16xf32> -> vector<256x16xf32>
    %81 = arith.addf %74, %80 : vector<256x16xf32>
    %c1_86 = arith.constant 1 : index
    %c4_87 = arith.constant 4 : index
    %c0_88 = arith.constant 0 : index
    %82 = vector.load %arg9[%c1_86, %c4_87, %c0_88] : memref<20x20x8xf32, #tpu.memory_space<vmem>>, vector<16x16x8xf32>
    %83 = vector.shape_cast %82 : vector<16x16x8xf32> to vector<256x8xf32>
    %84 = arith.truncf %83 : vector<256x8xf32> to vector<256x8xbf16>
    %c1_89 = arith.constant 1 : index
    %c4_90 = arith.constant 4 : index
    %c0_91 = arith.constant 0 : index
    %c0_92 = arith.constant 0 : index
    %85 = vector.load %arg4[%c1_89, %c4_90, %c0_91, %c0_92] : memref<5x5x8x16xbf16, #tpu.memory_space<vmem>>, vector<1x1x8x16xbf16>
    %86 = vector.shape_cast %85 : vector<1x1x8x16xbf16> to vector<8x16xbf16>
    %cst_93 = arith.constant dense<0.000000e+00> : vector<256x16xf32>
    %87 = tpu.matmul %84, %86, %cst_93 {dimension_numbers = #tpu.dot_dimension_numbers<[1], [0], [0], [1], [0, 0, 1, 1], [], []>} : vector<256x8xbf16>, vector<8x16xbf16>, vector<256x16xf32> -> vector<256x16xf32>
    %88 = arith.addf %81, %87 : vector<256x16xf32>
    %c2_94 = arith.constant 2 : index
    %c0_95 = arith.constant 0 : index
    %c0_96 = arith.constant 0 : index
    %89 = vector.load %arg9[%c2_94, %c0_95, %c0_96] : memref<20x20x8xf32, #tpu.memory_space<vmem>>, vector<16x16x8xf32>
    %90 = vector.shape_cast %89 : vector<16x16x8xf32> to vector<256x8xf32>
    %91 = arith.truncf %90 : vector<256x8xf32> to vector<256x8xbf16>
    %c2_97 = arith.constant 2 : index
    %c0_98 = arith.constant 0 : index
    %c0_99 = arith.constant 0 : index
    %c0_100 = arith.constant 0 : index
    %92 = vector.load %arg4[%c2_97, %c0_98, %c0_99, %c0_100] : memref<5x5x8x16xbf16, #tpu.memory_space<vmem>>, vector<1x1x8x16xbf16>
    %93 = vector.shape_cast %92 : vector<1x1x8x16xbf16> to vector<8x16xbf16>
    %cst_101 = arith.constant dense<0.000000e+00> : vector<256x16xf32>
    %94 = tpu.matmul %91, %93, %cst_101 {dimension_numbers = #tpu.dot_dimension_numbers<[1], [0], [0], [1], [0, 0, 1, 1], [], []>} : vector<256x8xbf16>, vector<8x16xbf16>, vector<256x16xf32> -> vector<256x16xf32>
    %95 = arith.addf %88, %94 : vector<256x16xf32>
    %c2_102 = arith.constant 2 : index
    %c1_103 = arith.constant 1 : index
    %c0_104 = arith.constant 0 : index
    %96 = vector.load %arg9[%c2_102, %c1_103, %c0_104] : memref<20x20x8xf32, #tpu.memory_space<vmem>>, vector<16x16x8xf32>
    %97 = vector.shape_cast %96 : vector<16x16x8xf32> to vector<256x8xf32>
    %98 = arith.truncf %97 : vector<256x8xf32> to vector<256x8xbf16>
    %c2_105 = arith.constant 2 : index
    %c1_106 = arith.constant 1 : index
    %c0_107 = arith.constant 0 : index
    %c0_108 = arith.constant 0 : index
    %99 = vector.load %arg4[%c2_105, %c1_106, %c0_107, %c0_108] : memref<5x5x8x16xbf16, #tpu.memory_space<vmem>>, vector<1x1x8x16xbf16>
    %100 = vector.shape_cast %99 : vector<1x1x8x16xbf16> to vector<8x16xbf16>
    %cst_109 = arith.constant dense<0.000000e+00> : vector<256x16xf32>
    %101 = tpu.matmul %98, %100, %cst_109 {dimension_numbers = #tpu.dot_dimension_numbers<[1], [0], [0], [1], [0, 0, 1, 1], [], []>} : vector<256x8xbf16>, vector<8x16xbf16>, vector<256x16xf32> -> vector<256x16xf32>
    %102 = arith.addf %95, %101 : vector<256x16xf32>
    %c2_110 = arith.constant 2 : index
    %c2_111 = arith.constant 2 : index
    %c0_112 = arith.constant 0 : index
    %103 = vector.load %arg9[%c2_110, %c2_111, %c0_112] : memref<20x20x8xf32, #tpu.memory_space<vmem>>, vector<16x16x8xf32>
    %104 = vector.shape_cast %103 : vector<16x16x8xf32> to vector<256x8xf32>
    %105 = arith.truncf %104 : vector<256x8xf32> to vector<256x8xbf16>
    %c2_113 = arith.constant 2 : index
    %c2_114 = arith.constant 2 : index
    %c0_115 = arith.constant 0 : index
    %c0_116 = arith.constant 0 : index
    %106 = vector.load %arg4[%c2_113, %c2_114, %c0_115, %c0_116] : memref<5x5x8x16xbf16, #tpu.memory_space<vmem>>, vector<1x1x8x16xbf16>
    %107 = vector.shape_cast %106 : vector<1x1x8x16xbf16> to vector<8x16xbf16>
    %cst_117 = arith.constant dense<0.000000e+00> : vector<256x16xf32>
    %108 = tpu.matmul %105, %107, %cst_117 {dimension_numbers = #tpu.dot_dimension_numbers<[1], [0], [0], [1], [0, 0, 1, 1], [], []>} : vector<256x8xbf16>, vector<8x16xbf16>, vector<256x16xf32> -> vector<256x16xf32>
    %109 = arith.addf %102, %108 : vector<256x16xf32>
    %c2_118 = arith.constant 2 : index
    %c3_119 = arith.constant 3 : index
    %c0_120 = arith.constant 0 : index
    %110 = vector.load %arg9[%c2_118, %c3_119, %c0_120] : memref<20x20x8xf32, #tpu.memory_space<vmem>>, vector<16x16x8xf32>
    %111 = vector.shape_cast %110 : vector<16x16x8xf32> to vector<256x8xf32>
    %112 = arith.truncf %111 : vector<256x8xf32> to vector<256x8xbf16>
    %c2_121 = arith.constant 2 : index
    %c3_122 = arith.constant 3 : index
    %c0_123 = arith.constant 0 : index
    %c0_124 = arith.constant 0 : index
    %113 = vector.load %arg4[%c2_121, %c3_122, %c0_123, %c0_124] : memref<5x5x8x16xbf16, #tpu.memory_space<vmem>>, vector<1x1x8x16xbf16>
    %114 = vector.shape_cast %113 : vector<1x1x8x16xbf16> to vector<8x16xbf16>
    %cst_125 = arith.constant dense<0.000000e+00> : vector<256x16xf32>
    %115 = tpu.matmul %112, %114, %cst_125 {dimension_numbers = #tpu.dot_dimension_numbers<[1], [0], [0], [1], [0, 0, 1, 1], [], []>} : vector<256x8xbf16>, vector<8x16xbf16>, vector<256x16xf32> -> vector<256x16xf32>
    %116 = arith.addf %109, %115 : vector<256x16xf32>
    %c2_126 = arith.constant 2 : index
    %c4_127 = arith.constant 4 : index
    %c0_128 = arith.constant 0 : index
    %117 = vector.load %arg9[%c2_126, %c4_127, %c0_128] : memref<20x20x8xf32, #tpu.memory_space<vmem>>, vector<16x16x8xf32>
    %118 = vector.shape_cast %117 : vector<16x16x8xf32> to vector<256x8xf32>
    %119 = arith.truncf %118 : vector<256x8xf32> to vector<256x8xbf16>
    %c2_129 = arith.constant 2 : index
    %c4_130 = arith.constant 4 : index
    %c0_131 = arith.constant 0 : index
    %c0_132 = arith.constant 0 : index
    %120 = vector.load %arg4[%c2_129, %c4_130, %c0_131, %c0_132] : memref<5x5x8x16xbf16, #tpu.memory_space<vmem>>, vector<1x1x8x16xbf16>
    %121 = vector.shape_cast %120 : vector<1x1x8x16xbf16> to vector<8x16xbf16>
    %cst_133 = arith.constant dense<0.000000e+00> : vector<256x16xf32>
    %122 = tpu.matmul %119, %121, %cst_133 {dimension_numbers = #tpu.dot_dimension_numbers<[1], [0], [0], [1], [0, 0, 1, 1], [], []>} : vector<256x8xbf16>, vector<8x16xbf16>, vector<256x16xf32> -> vector<256x16xf32>
    %123 = arith.addf %116, %122 : vector<256x16xf32>
    %c3_134 = arith.constant 3 : index
    %c0_135 = arith.constant 0 : index
    %c0_136 = arith.constant 0 : index
    %124 = vector.load %arg9[%c3_134, %c0_135, %c0_136] : memref<20x20x8xf32, #tpu.memory_space<vmem>>, vector<16x16x8xf32>
    %125 = vector.shape_cast %124 : vector<16x16x8xf32> to vector<256x8xf32>
    %126 = arith.truncf %125 : vector<256x8xf32> to vector<256x8xbf16>
    %c3_137 = arith.constant 3 : index
    %c0_138 = arith.constant 0 : index
    %c0_139 = arith.constant 0 : index
    %c0_140 = arith.constant 0 : index
    %127 = vector.load %arg4[%c3_137, %c0_138, %c0_139, %c0_140] : memref<5x5x8x16xbf16, #tpu.memory_space<vmem>>, vector<1x1x8x16xbf16>
    %128 = vector.shape_cast %127 : vector<1x1x8x16xbf16> to vector<8x16xbf16>
    %cst_141 = arith.constant dense<0.000000e+00> : vector<256x16xf32>
    %129 = tpu.matmul %126, %128, %cst_141 {dimension_numbers = #tpu.dot_dimension_numbers<[1], [0], [0], [1], [0, 0, 1, 1], [], []>} : vector<256x8xbf16>, vector<8x16xbf16>, vector<256x16xf32> -> vector<256x16xf32>
    %130 = arith.addf %123, %129 : vector<256x16xf32>
    %c3_142 = arith.constant 3 : index
    %c1_143 = arith.constant 1 : index
    %c0_144 = arith.constant 0 : index
    %131 = vector.load %arg9[%c3_142, %c1_143, %c0_144] : memref<20x20x8xf32, #tpu.memory_space<vmem>>, vector<16x16x8xf32>
    %132 = vector.shape_cast %131 : vector<16x16x8xf32> to vector<256x8xf32>
    %133 = arith.truncf %132 : vector<256x8xf32> to vector<256x8xbf16>
    %c3_145 = arith.constant 3 : index
    %c1_146 = arith.constant 1 : index
    %c0_147 = arith.constant 0 : index
    %c0_148 = arith.constant 0 : index
    %134 = vector.load %arg4[%c3_145, %c1_146, %c0_147, %c0_148] : memref<5x5x8x16xbf16, #tpu.memory_space<vmem>>, vector<1x1x8x16xbf16>
    %135 = vector.shape_cast %134 : vector<1x1x8x16xbf16> to vector<8x16xbf16>
    %cst_149 = arith.constant dense<0.000000e+00> : vector<256x16xf32>
    %136 = tpu.matmul %133, %135, %cst_149 {dimension_numbers = #tpu.dot_dimension_numbers<[1], [0], [0], [1], [0, 0, 1, 1], [], []>} : vector<256x8xbf16>, vector<8x16xbf16>, vector<256x16xf32> -> vector<256x16xf32>
    %137 = arith.addf %130, %136 : vector<256x16xf32>
    %c3_150 = arith.constant 3 : index
    %c2_151 = arith.constant 2 : index
    %c0_152 = arith.constant 0 : index
    %138 = vector.load %arg9[%c3_150, %c2_151, %c0_152] : memref<20x20x8xf32, #tpu.memory_space<vmem>>, vector<16x16x8xf32>
    %139 = vector.shape_cast %138 : vector<16x16x8xf32> to vector<256x8xf32>
    %140 = arith.truncf %139 : vector<256x8xf32> to vector<256x8xbf16>
    %c3_153 = arith.constant 3 : index
    %c2_154 = arith.constant 2 : index
    %c0_155 = arith.constant 0 : index
    %c0_156 = arith.constant 0 : index
    %141 = vector.load %arg4[%c3_153, %c2_154, %c0_155, %c0_156] : memref<5x5x8x16xbf16, #tpu.memory_space<vmem>>, vector<1x1x8x16xbf16>
    %142 = vector.shape_cast %141 : vector<1x1x8x16xbf16> to vector<8x16xbf16>
    %cst_157 = arith.constant dense<0.000000e+00> : vector<256x16xf32>
    %143 = tpu.matmul %140, %142, %cst_157 {dimension_numbers = #tpu.dot_dimension_numbers<[1], [0], [0], [1], [0, 0, 1, 1], [], []>} : vector<256x8xbf16>, vector<8x16xbf16>, vector<256x16xf32> -> vector<256x16xf32>
    %144 = arith.addf %137, %143 : vector<256x16xf32>
    %c3_158 = arith.constant 3 : index
    %c3_159 = arith.constant 3 : index
    %c0_160 = arith.constant 0 : index
    %145 = vector.load %arg9[%c3_158, %c3_159, %c0_160] : memref<20x20x8xf32, #tpu.memory_space<vmem>>, vector<16x16x8xf32>
    %146 = vector.shape_cast %145 : vector<16x16x8xf32> to vector<256x8xf32>
    %147 = arith.truncf %146 : vector<256x8xf32> to vector<256x8xbf16>
    %c3_161 = arith.constant 3 : index
    %c3_162 = arith.constant 3 : index
    %c0_163 = arith.constant 0 : index
    %c0_164 = arith.constant 0 : index
    %148 = vector.load %arg4[%c3_161, %c3_162, %c0_163, %c0_164] : memref<5x5x8x16xbf16, #tpu.memory_space<vmem>>, vector<1x1x8x16xbf16>
    %149 = vector.shape_cast %148 : vector<1x1x8x16xbf16> to vector<8x16xbf16>
    %cst_165 = arith.constant dense<0.000000e+00> : vector<256x16xf32>
    %150 = tpu.matmul %147, %149, %cst_165 {dimension_numbers = #tpu.dot_dimension_numbers<[1], [0], [0], [1], [0, 0, 1, 1], [], []>} : vector<256x8xbf16>, vector<8x16xbf16>, vector<256x16xf32> -> vector<256x16xf32>
    %151 = arith.addf %144, %150 : vector<256x16xf32>
    %c3_166 = arith.constant 3 : index
    %c4_167 = arith.constant 4 : index
    %c0_168 = arith.constant 0 : index
    %152 = vector.load %arg9[%c3_166, %c4_167, %c0_168] : memref<20x20x8xf32, #tpu.memory_space<vmem>>, vector<16x16x8xf32>
    %153 = vector.shape_cast %152 : vector<16x16x8xf32> to vector<256x8xf32>
    %154 = arith.truncf %153 : vector<256x8xf32> to vector<256x8xbf16>
    %c3_169 = arith.constant 3 : index
    %c4_170 = arith.constant 4 : index
    %c0_171 = arith.constant 0 : index
    %c0_172 = arith.constant 0 : index
    %155 = vector.load %arg4[%c3_169, %c4_170, %c0_171, %c0_172] : memref<5x5x8x16xbf16, #tpu.memory_space<vmem>>, vector<1x1x8x16xbf16>
    %156 = vector.shape_cast %155 : vector<1x1x8x16xbf16> to vector<8x16xbf16>
    %cst_173 = arith.constant dense<0.000000e+00> : vector<256x16xf32>
    %157 = tpu.matmul %154, %156, %cst_173 {dimension_numbers = #tpu.dot_dimension_numbers<[1], [0], [0], [1], [0, 0, 1, 1], [], []>} : vector<256x8xbf16>, vector<8x16xbf16>, vector<256x16xf32> -> vector<256x16xf32>
    %158 = arith.addf %151, %157 : vector<256x16xf32>
    %c4_174 = arith.constant 4 : index
    %c0_175 = arith.constant 0 : index
    %c0_176 = arith.constant 0 : index
    %159 = vector.load %arg9[%c4_174, %c0_175, %c0_176] : memref<20x20x8xf32, #tpu.memory_space<vmem>>, vector<16x16x8xf32>
    %160 = vector.shape_cast %159 : vector<16x16x8xf32> to vector<256x8xf32>
    %161 = arith.truncf %160 : vector<256x8xf32> to vector<256x8xbf16>
    %c4_177 = arith.constant 4 : index
    %c0_178 = arith.constant 0 : index
    %c0_179 = arith.constant 0 : index
    %c0_180 = arith.constant 0 : index
    %162 = vector.load %arg4[%c4_177, %c0_178, %c0_179, %c0_180] : memref<5x5x8x16xbf16, #tpu.memory_space<vmem>>, vector<1x1x8x16xbf16>
    %163 = vector.shape_cast %162 : vector<1x1x8x16xbf16> to vector<8x16xbf16>
    %cst_181 = arith.constant dense<0.000000e+00> : vector<256x16xf32>
    %164 = tpu.matmul %161, %163, %cst_181 {dimension_numbers = #tpu.dot_dimension_numbers<[1], [0], [0], [1], [0, 0, 1, 1], [], []>} : vector<256x8xbf16>, vector<8x16xbf16>, vector<256x16xf32> -> vector<256x16xf32>
    %165 = arith.addf %158, %164 : vector<256x16xf32>
    %c4_182 = arith.constant 4 : index
    %c1_183 = arith.constant 1 : index
    %c0_184 = arith.constant 0 : index
    %166 = vector.load %arg9[%c4_182, %c1_183, %c0_184] : memref<20x20x8xf32, #tpu.memory_space<vmem>>, vector<16x16x8xf32>
    %167 = vector.shape_cast %166 : vector<16x16x8xf32> to vector<256x8xf32>
    %168 = arith.truncf %167 : vector<256x8xf32> to vector<256x8xbf16>
    %c4_185 = arith.constant 4 : index
    %c1_186 = arith.constant 1 : index
    %c0_187 = arith.constant 0 : index
    %c0_188 = arith.constant 0 : index
    %169 = vector.load %arg4[%c4_185, %c1_186, %c0_187, %c0_188] : memref<5x5x8x16xbf16, #tpu.memory_space<vmem>>, vector<1x1x8x16xbf16>
    %170 = vector.shape_cast %169 : vector<1x1x8x16xbf16> to vector<8x16xbf16>
    %cst_189 = arith.constant dense<0.000000e+00> : vector<256x16xf32>
    %171 = tpu.matmul %168, %170, %cst_189 {dimension_numbers = #tpu.dot_dimension_numbers<[1], [0], [0], [1], [0, 0, 1, 1], [], []>} : vector<256x8xbf16>, vector<8x16xbf16>, vector<256x16xf32> -> vector<256x16xf32>
    %172 = arith.addf %165, %171 : vector<256x16xf32>
    %c4_190 = arith.constant 4 : index
    %c2_191 = arith.constant 2 : index
    %c0_192 = arith.constant 0 : index
    %173 = vector.load %arg9[%c4_190, %c2_191, %c0_192] : memref<20x20x8xf32, #tpu.memory_space<vmem>>, vector<16x16x8xf32>
    %174 = vector.shape_cast %173 : vector<16x16x8xf32> to vector<256x8xf32>
    %175 = arith.truncf %174 : vector<256x8xf32> to vector<256x8xbf16>
    %c4_193 = arith.constant 4 : index
    %c2_194 = arith.constant 2 : index
    %c0_195 = arith.constant 0 : index
    %c0_196 = arith.constant 0 : index
    %176 = vector.load %arg4[%c4_193, %c2_194, %c0_195, %c0_196] : memref<5x5x8x16xbf16, #tpu.memory_space<vmem>>, vector<1x1x8x16xbf16>
    %177 = vector.shape_cast %176 : vector<1x1x8x16xbf16> to vector<8x16xbf16>
    %cst_197 = arith.constant dense<0.000000e+00> : vector<256x16xf32>
    %178 = tpu.matmul %175, %177, %cst_197 {dimension_numbers = #tpu.dot_dimension_numbers<[1], [0], [0], [1], [0, 0, 1, 1], [], []>} : vector<256x8xbf16>, vector<8x16xbf16>, vector<256x16xf32> -> vector<256x16xf32>
    %179 = arith.addf %172, %178 : vector<256x16xf32>
    %c4_198 = arith.constant 4 : index
    %c3_199 = arith.constant 3 : index
    %c0_200 = arith.constant 0 : index
    %180 = vector.load %arg9[%c4_198, %c3_199, %c0_200] : memref<20x20x8xf32, #tpu.memory_space<vmem>>, vector<16x16x8xf32>
    %181 = vector.shape_cast %180 : vector<16x16x8xf32> to vector<256x8xf32>
    %182 = arith.truncf %181 : vector<256x8xf32> to vector<256x8xbf16>
    %c4_201 = arith.constant 4 : index
    %c3_202 = arith.constant 3 : index
    %c0_203 = arith.constant 0 : index
    %c0_204 = arith.constant 0 : index
    %183 = vector.load %arg4[%c4_201, %c3_202, %c0_203, %c0_204] : memref<5x5x8x16xbf16, #tpu.memory_space<vmem>>, vector<1x1x8x16xbf16>
    %184 = vector.shape_cast %183 : vector<1x1x8x16xbf16> to vector<8x16xbf16>
    %cst_205 = arith.constant dense<0.000000e+00> : vector<256x16xf32>
    %185 = tpu.matmul %182, %184, %cst_205 {dimension_numbers = #tpu.dot_dimension_numbers<[1], [0], [0], [1], [0, 0, 1, 1], [], []>} : vector<256x8xbf16>, vector<8x16xbf16>, vector<256x16xf32> -> vector<256x16xf32>
    %186 = arith.addf %179, %185 : vector<256x16xf32>
    %c4_206 = arith.constant 4 : index
    %c4_207 = arith.constant 4 : index
    %c0_208 = arith.constant 0 : index
    %187 = vector.load %arg9[%c4_206, %c4_207, %c0_208] : memref<20x20x8xf32, #tpu.memory_space<vmem>>, vector<16x16x8xf32>
    %188 = vector.shape_cast %187 : vector<16x16x8xf32> to vector<256x8xf32>
    %189 = arith.truncf %188 : vector<256x8xf32> to vector<256x8xbf16>
    %c4_209 = arith.constant 4 : index
    %c4_210 = arith.constant 4 : index
    %c0_211 = arith.constant 0 : index
    %c0_212 = arith.constant 0 : index
    %190 = vector.load %arg4[%c4_209, %c4_210, %c0_211, %c0_212] : memref<5x5x8x16xbf16, #tpu.memory_space<vmem>>, vector<1x1x8x16xbf16>
    %191 = vector.shape_cast %190 : vector<1x1x8x16xbf16> to vector<8x16xbf16>
    %cst_213 = arith.constant dense<0.000000e+00> : vector<256x16xf32>
    %192 = tpu.matmul %189, %191, %cst_213 {dimension_numbers = #tpu.dot_dimension_numbers<[1], [0], [0], [1], [0, 0, 1, 1], [], []>} : vector<256x8xbf16>, vector<8x16xbf16>, vector<256x16xf32> -> vector<256x16xf32>
    %193 = arith.addf %186, %192 : vector<256x16xf32>
    %c0_214 = arith.constant 0 : index
    %c0_215 = arith.constant 0 : index
    %194 = vector.load %arg5[%c0_214, %c0_215] : memref<1x16xf32, #tpu.memory_space<vmem>>, vector<1x16xf32>
    %195 = vector.broadcast %194 : vector<1x16xf32> to vector<256x16xf32>
    %196 = arith.addf %193, %195 : vector<256x16xf32>
    %cst_216 = arith.constant 0.000000e+00 : f32
    %197 = vector.broadcast %cst_216 : f32 to vector<256x16xf32>
    %198 = arith.maximumf %196, %197 : vector<256x16xf32>
    %c0_217 = arith.constant 0 : index
    %c0_218 = arith.constant 0 : index
    %c8 = arith.constant 8 : index
    %199 = vector.load %arg8[%c0_217, %c0_218, %c8] : memref<1x256x32xf32, #tpu.memory_space<vmem>>, vector<1x256x16xf32>
    %200 = vector.shape_cast %199 : vector<1x256x16xf32> to vector<256x16xf32>
    %201 = vector.shape_cast %198 : vector<256x16xf32> to vector<1x256x16xf32>
    tpu.vector_store %arg8[%c0_217, %c0_218, %c8], %201 {strides = array<i32>} : memref<1x256x32xf32, #tpu.memory_space<vmem>>, vector<1x256x16xf32>,
    %cst_219 = arith.constant 0xFF800000 : f32
    %202 = vector.broadcast %cst_219 : f32 to vector<18x18x4xf32>
    %c0_220 = arith.constant 0 : index
    %c0_221 = arith.constant 0 : index
    %c0_222 = arith.constant 0 : index
    %203 = vector.load %arg10[%c0_220, %c0_221, %c0_222] : memref<18x18x4xf32, #tpu.memory_space<vmem>>, vector<18x18x4xf32>
    tpu.vector_store %arg10[%c0_220, %c0_221, %c0_222], %202 {strides = array<i32>} : memref<18x18x4xf32, #tpu.memory_space<vmem>>, vector<18x18x4xf32>,
    %c1_223 = arith.constant 1 : index
    %c1_224 = arith.constant 1 : index
    %c0_225 = arith.constant 0 : index
    %204 = vector.load %arg10[%c1_223, %c1_224, %c0_225] : memref<18x18x4xf32, #tpu.memory_space<vmem>>, vector<16x16x4xf32>
    tpu.vector_store %arg10[%c1_223, %c1_224, %c0_225], %1 {strides = array<i32>} : memref<18x18x4xf32, #tpu.memory_space<vmem>>, vector<16x16x4xf32>,
    %c0_226 = arith.constant 0 : index
    %c0_227 = arith.constant 0 : index
    %c0_228 = arith.constant 0 : index
    %205 = vector.load %arg10[%c0_226, %c0_227, %c0_228] : memref<18x18x4xf32, #tpu.memory_space<vmem>>, vector<18x16x4xf32>
    %c0_229 = arith.constant 0 : index
    %c1_230 = arith.constant 1 : index
    %c0_231 = arith.constant 0 : index
    %206 = vector.load %arg10[%c0_229, %c1_230, %c0_231] : memref<18x18x4xf32, #tpu.memory_space<vmem>>, vector<18x16x4xf32>
    %207 = arith.maximumf %205, %206 : vector<18x16x4xf32>
    %c0_232 = arith.constant 0 : index
    %c2_233 = arith.constant 2 : index
    %c0_234 = arith.constant 0 : index
    %208 = vector.load %arg10[%c0_232, %c2_233, %c0_234] : memref<18x18x4xf32, #tpu.memory_space<vmem>>, vector<18x16x4xf32>
    %209 = arith.maximumf %207, %208 : vector<18x16x4xf32>
    %210 = vector.extract_strided_slice %209 {offsets = [0, 0, 0], sizes = [16, 16, 4], strides = [1, 1, 1]} : vector<18x16x4xf32> to vector<16x16x4xf32>
    %211 = vector.extract_strided_slice %209 {offsets = [1, 0, 0], sizes = [16, 16, 4], strides = [1, 1, 1]} : vector<18x16x4xf32> to vector<16x16x4xf32>
    %212 = arith.maximumf %210, %211 : vector<16x16x4xf32>
    %213 = vector.extract_strided_slice %209 {offsets = [2, 0, 0], sizes = [16, 16, 4], strides = [1, 1, 1]} : vector<18x16x4xf32> to vector<16x16x4xf32>
    %214 = arith.maximumf %212, %213 : vector<16x16x4xf32>
    %215 = vector.shape_cast %214 : vector<16x16x4xf32> to vector<256x4xf32>
    %216 = arith.truncf %215 : vector<256x4xf32> to vector<256x4xbf16>
    %c0_235 = arith.constant 0 : index
    %c0_236 = arith.constant 0 : index
    %217 = vector.load %arg6[%c0_235, %c0_236] : memref<4x8xbf16, #tpu.memory_space<vmem>>, vector<4x8xbf16>
    %cst_237 = arith.constant dense<0.000000e+00> : vector<256x8xf32>
    %218 = tpu.matmul %216, %217, %cst_237 {dimension_numbers = #tpu.dot_dimension_numbers<[1], [0], [0], [1], [0, 0, 1, 1], [], []>} : vector<256x4xbf16>, vector<4x8xbf16>, vector<256x8xf32> -> vector<256x8xf32>
    %c0_238 = arith.constant 0 : index
    %c0_239 = arith.constant 0 : index
    %219 = vector.load %arg7[%c0_238, %c0_239] : memref<1x8xf32, #tpu.memory_space<vmem>>, vector<1x8xf32>
    %220 = vector.broadcast %219 : vector<1x8xf32> to vector<256x8xf32>
    %221 = arith.addf %218, %220 : vector<256x8xf32>
    %cst_240 = arith.constant 0.000000e+00 : f32
    %222 = vector.broadcast %cst_240 : f32 to vector<256x8xf32>
    %223 = arith.maximumf %221, %222 : vector<256x8xf32>
    %c0_241 = arith.constant 0 : index
    %c0_242 = arith.constant 0 : index
    %c24 = arith.constant 24 : index
    %224 = vector.load %arg8[%c0_241, %c0_242, %c24] : memref<1x256x32xf32, #tpu.memory_space<vmem>>, vector<1x256x8xf32>
    %225 = vector.shape_cast %224 : vector<1x256x8xf32> to vector<256x8xf32>
    %226 = vector.shape_cast %223 : vector<256x8xf32> to vector<1x256x8xf32>
    tpu.vector_store %arg8[%c0_241, %c0_242, %c24], %226 {strides = array<i32>} : memref<1x256x32xf32, #tpu.memory_space<vmem>>, vector<1x256x8xf32>,
    return
  }
  func.func @transform_0(%arg0: i32) -> (i32, i32, i32, i32) {
    %c0_i32 = arith.constant 0 : i32
    %c0_i32_0 = arith.constant 0 : i32
    %c0_i32_1 = arith.constant 0 : i32
    %c0_i32_2 = arith.constant 0 : i32
    return %arg0, %c0_i32, %c0_i32_0, %c0_i32_1 : i32, i32, i32, i32
  }
  func.func @transform_1(%arg0: i32) -> (i32, i32) {
    %c0_i32 = arith.constant 0 : i32
    %c0_i32_0 = arith.constant 0 : i32
    %c0_i32_1 = arith.constant 0 : i32
    return %c0_i32, %c0_i32_0 : i32, i32
  }
  func.func @transform_2(%arg0: i32) -> (i32, i32) {
    %c0_i32 = arith.constant 0 : i32
    %c0_i32_0 = arith.constant 0 : i32
    %c0_i32_1 = arith.constant 0 : i32
    return %c0_i32, %c0_i32_0 : i32, i32
  }
  func.func @transform_3(%arg0: i32) -> (i32, i32, i32, i32) {
    %c0_i32 = arith.constant 0 : i32
    %c0_i32_0 = arith.constant 0 : i32
    %c0_i32_1 = arith.constant 0 : i32
    %c0_i32_2 = arith.constant 0 : i32
    %c0_i32_3 = arith.constant 0 : i32
    return %c0_i32, %c0_i32_0, %c0_i32_1, %c0_i32_2 : i32, i32, i32, i32
  }
  func.func @transform_4(%arg0: i32) -> (i32, i32) {
    %c0_i32 = arith.constant 0 : i32
    %c0_i32_0 = arith.constant 0 : i32
    %c0_i32_1 = arith.constant 0 : i32
    return %c0_i32, %c0_i32_0 : i32, i32
  }
  func.func @transform_5(%arg0: i32) -> (i32, i32) {
    %c0_i32 = arith.constant 0 : i32
    %c0_i32_0 = arith.constant 0 : i32
    %c0_i32_1 = arith.constant 0 : i32
    return %c0_i32, %c0_i32_0 : i32, i32
  }
  func.func @transform_6(%arg0: i32) -> (i32, i32) {
    %c0_i32 = arith.constant 0 : i32
    %c0_i32_0 = arith.constant 0 : i32
    %c0_i32_1 = arith.constant 0 : i32
    return %c0_i32, %c0_i32_0 : i32, i32
  }
  func.func @transform_7(%arg0: i32) -> (i32, i32, i32) {
    %c0_i32 = arith.constant 0 : i32
    %c0_i32_0 = arith.constant 0 : i32
    %c0_i32_1 = arith.constant 0 : i32
    return %arg0, %c0_i32, %c0_i32_0 : i32, i32, i32
  }
}

</mosaic_0001>

<llo_original>
// kernel: inception_block.1
$region0: #{inception_block.1}
  #allocation0 [shape = 'u32[]', space=smem, size = 0x4, offset = 0x4, fixed_abs, tag = 'smem constant byte address 0x4 - core index']
  #allocation1 [shape = 'u32[144,128]{1,0:T(1,128)}', space=vmem, size = 0x12000, scoped, tag = 'internal scratch']
  #allocation2 [shape = 'f32[20,20,8]{2,1,0:T(8,128)}', space=vmem, size = 0x3c000, scoped, tag = 'scratch operand']
  #allocation3 [shape = 'f32[18,18,4]{2,1,0:T(8,128)}', space=vmem, size = 0x36000, scoped, tag = 'scratch operand']
  %s0 = inlined_call_operand.vmem [shape: f32[2,16,16,4], index: 0, kind: input, shape index: {}]
  %s1 = inlined_call_operand.vmem [shape: bf16[4,16], index: 1, kind: input, shape index: {}]
  %s2 = inlined_call_operand.vmem [shape: f32[1,16], index: 2, kind: input, shape index: {}]
  %s3 = inlined_call_operand.vmem [shape: bf16[5,5,8,16], index: 3, kind: input, shape index: {}]
  %s4 = inlined_call_operand.vmem [shape: f32[1,16], index: 4, kind: input, shape index: {}]
  %s5 = inlined_call_operand.vmem [shape: bf16[4,8], index: 5, kind: input, shape index: {}]
  %s6 = inlined_call_operand.vmem [shape: f32[1,8], index: 6, kind: input, shape index: {}]
  %s7 = inlined_call_operand.hbm [shape: f32[2,256,32], index: 7, kind: output, shape index: {}]
  %s8 = sld [smem:[#allocation0]]
  $region61: #{inception_block.1} parent=0
    _
  %s10 = ssub.s32 1, %s8
  %s11 = scalar_select 0, %s10, %s8
  $region1: #{inception_block.1} parent=0
    #allocation4 [shape = 'u8[262144]{0}', space=vmem, size = 0x40000, scoped, tag = 'output window, operand 0']
    #allocation5 [shape = 's32[2]{0}', space=sflag, size = 0x8, scoped, tag = 'scoped memory for inception_block.1']
    %12 = vsyncpa [#allocation5], 0
    %s13 = scalar_lea.sflag [#allocation5], 1
    %14 = vsyncpa %s13, 0
    loop: start=0, step=1, limit=4
    $region2: #{inception_block.1} parent=1 // loop_pre_header
      _
    $region3: #{inception_block.1} parent=1 // loop_header
      %s16 = sphi 0, %s20
      %p17 = scmp.ge.s32.totalorder %s16, 4
      %s26 = sphi 0, %s28
      %s29 = sphi 0, %s26
      %s30 = sphi 0, %s29
      %s46 = sphi 0, %s30
      %s50 = sphi 0, %s50
      %s52 = sphi 0, %s50
      %s53 = sphi 0, %s52
      %s67 = sphi 0, %s53
      %s71 = sphi 0, %s71
      %s73 = sphi 0, %s71
      %s74 = sphi 0, %s73
      %s88 = sphi 0, %s74
      %s92 = sphi 0, %s92
      %s94 = sphi 0, %s92
      %s95 = sphi 0, %s94
      %s109 = sphi 0, %s95
      %s113 = sphi 0, %s113
      %s115 = sphi 0, %s113
      %s116 = sphi 0, %s115
      %s130 = sphi 0, %s116
      %s134 = sphi 0, %s134
      %s136 = sphi 0, %s134
      %s137 = sphi 0, %s136
      %s151 = sphi 0, %s137
      %s155 = sphi 0, %s155
      %s157 = sphi 0, %s155
      %s158 = sphi 0, %s157
      %s172 = sphi 0, %s158
      %s178 = sphi 0, %s180
      %s181 = sphi 0, %s178
      %s182 = sphi 0, %s181
      %s198 = sphi 0, %s182
    $region4: #{inception_block.1} parent=1 // loop_header_branch
      %19 = sbr.rel (%p17) target = $region8
    $region5: #{inception_block.1} parent=1 // loop_body
      %s21 = ssub.s32 %s16, 1
      %s22 = ssub.s32 %s16, 2
      %s23 = sadd.s32 %s16, 1
      %s24 = ssub.s32 %s16, %s23
      %p25 = scmp.eq.s32.totalorder %s24, 0
      %s27 = sadd.s32 %s26, 1
      %s28 = scalar_select %p25, %s26, %s27
      %p31 = pneg %p25
      %p32 = scmp.eq.s32.totalorder %s16, 1
      %p33 = por %p31, %p32
      %p34 = scmp.ne.s32.totalorder %s26, %s29
      %p35 = scmp.eq.s32.totalorder %s16, 0
      %p36 = por %p34, %p35
      %p37 = scmp.ne.s32.totalorder %s26, %s29
      %p38 = scmp.eq.s32.totalorder %s21, 1
      %p39 = por %p37, %p38
      %p40 = scmp.ne.s32.totalorder %s29, %s30
      %p41 = scmp.eq.s32.totalorder %s21, 0
      %p42 = por %p40, %p41
      %p43 = scmp.ne.s32.totalorder %s29, %s30
      %p44 = scmp.eq.s32.totalorder %s22, 1
      %p45 = por %p43, %p44
      %p47 = scmp.ne.s32.totalorder %s30, %s46
      %p48 = scmp.eq.s32.totalorder %s22, 0
      %p49 = por %p47, %p48
      %s51 = sadd.s32 %s50, 1
      %p54 = scmp.eq.s32.totalorder %s16, 1
      %p55 = scmp.ne.s32.totalorder %s50, %s52
      %p56 = scmp.eq.s32.totalorder %s16, 0
      %p57 = por %p55, %p56
      %p58 = scmp.ne.s32.totalorder %s50, %s52
      %p59 = scmp.eq.s32.totalorder %s21, 1
      %p60 = por %p58, %p59
      %p61 = scmp.ne.s32.totalorder %s52, %s53
      %p62 = scmp.eq.s32.totalorder %s21, 0
      %p63 = por %p61, %p62
      %p64 = scmp.ne.s32.totalorder %s52, %s53
      %p65 = scmp.eq.s32.totalorder %s22, 1
      %p66 = por %p64, %p65
      %p68 = scmp.ne.s32.totalorder %s53, %s67
      %p69 = scmp.eq.s32.totalorder %s22, 0
      %p70 = por %p68, %p69
      %s72 = sadd.s32 %s71, 1
      %p75 = scmp.eq.s32.totalorder %s16, 1
      %p76 = scmp.ne.s32.totalorder %s71, %s73
      %p77 = scmp.eq.s32.totalorder %s16, 0
      %p78 = por %p76, %p77
      %p79 = scmp.ne.s32.totalorder %s71, %s73
      %p80 = scmp.eq.s32.totalorder %s21, 1
      %p81 = por %p79, %p80
      %p82 = scmp.ne.s32.totalorder %s73, %s74
      %p83 = scmp.eq.s32.totalorder %s21, 0
      %p84 = por %p82, %p83
      %p85 = scmp.ne.s32.totalorder %s73, %s74
      %p86 = scmp.eq.s32.totalorder %s22, 1
      %p87 = por %p85, %p86
      %p89 = scmp.ne.s32.totalorder %s74, %s88
      %p90 = scmp.eq.s32.totalorder %s22, 0
      %p91 = por %p89, %p90
      %s93 = sadd.s32 %s92, 1
      %p96 = scmp.eq.s32.totalorder %s16, 1
      %p97 = scmp.ne.s32.totalorder %s92, %s94
      %p98 = scmp.eq.s32.totalorder %s16, 0
      %p99 = por %p97, %p98
      %p100 = scmp.ne.s32.totalorder %s92, %s94
      %p101 = scmp.eq.s32.totalorder %s21, 1
      %p102 = por %p100, %p101
      %p103 = scmp.ne.s32.totalorder %s94, %s95
      %p104 = scmp.eq.s32.totalorder %s21, 0
      %p105 = por %p103, %p104
      %p106 = scmp.ne.s32.totalorder %s94, %s95
      %p107 = scmp.eq.s32.totalorder %s22, 1
      %p108 = por %p106, %p107
      %p110 = scmp.ne.s32.totalorder %s95, %s109
      %p111 = scmp.eq.s32.totalorder %s22, 0
      %p112 = por %p110, %p111
      %s114 = sadd.s32 %s113, 1
      %p117 = scmp.eq.s32.totalorder %s16, 1
      %p118 = scmp.ne.s32.totalorder %s113, %s115
      %p119 = scmp.eq.s32.totalorder %s16, 0
      %p120 = por %p118, %p119
      %p121 = scmp.ne.s32.totalorder %s113, %s115
      %p122 = scmp.eq.s32.totalorder %s21, 1
      %p123 = por %p121, %p122
      %p124 = scmp.ne.s32.totalorder %s115, %s116
      %p125 = scmp.eq.s32.totalorder %s21, 0
      %p126 = por %p124, %p125
      %p127 = scmp.ne.s32.totalorder %s115, %s116
      %p128 = scmp.eq.s32.totalorder %s22, 1
      %p129 = por %p127, %p128
      %p131 = scmp.ne.s32.totalorder %s116, %s130
      %p132 = scmp.eq.s32.totalorder %s22, 0
      %p133 = por %p131, %p132
      %s135 = sadd.s32 %s134, 1
      %p138 = scmp.eq.s32.totalorder %s16, 1
      %p139 = scmp.ne.s32.totalorder %s134, %s136
      %p140 = scmp.eq.s32.totalorder %s16, 0
      %p141 = por %p139, %p140
      %p142 = scmp.ne.s32.totalorder %s134, %s136
      %p143 = scmp.eq.s32.totalorder %s21, 1
      %p144 = por %p142, %p143
      %p145 = scmp.ne.s32.totalorder %s136, %s137
      %p146 = scmp.eq.s32.totalorder %s21, 0
      %p147 = por %p145, %p146
      %p148 = scmp.ne.s32.totalorder %s136, %s137
      %p149 = scmp.eq.s32.totalorder %s22, 1
      %p150 = por %p148, %p149
      %p152 = scmp.ne.s32.totalorder %s137, %s151
      %p153 = scmp.eq.s32.totalorder %s22, 0
      %p154 = por %p152, %p153
      %s156 = sadd.s32 %s155, 1
      %p159 = scmp.eq.s32.totalorder %s16, 1
      %p160 = scmp.ne.s32.totalorder %s155, %s157
      %p161 = scmp.eq.s32.totalorder %s16, 0
      %p162 = por %p160, %p161
      %p163 = scmp.ne.s32.totalorder %s155, %s157
      %p164 = scmp.eq.s32.totalorder %s21, 1
      %p165 = por %p163, %p164
      %p166 = scmp.ne.s32.totalorder %s157, %s158
      %p167 = scmp.eq.s32.totalorder %s21, 0
      %p168 = por %p166, %p167
      %p169 = scmp.ne.s32.totalorder %s157, %s158
      %p170 = scmp.eq.s32.totalorder %s22, 1
      %p171 = por %p169, %p170
      %p173 = scmp.ne.s32.totalorder %s158, %s172
      %p174 = scmp.eq.s32.totalorder %s22, 0
      %p175 = por %p173, %p174
      %s176 = ssub.s32 %s16, %s23
      %p177 = scmp.eq.s32.totalorder %s176, 0
      %s179 = sadd.s32 %s178, 1
      %s180 = scalar_select %p177, %s178, %s179
      %p183 = pneg %p177
      %p184 = scmp.eq.s32.totalorder %s16, 1
      %p185 = por %p183, %p184
      %p186 = scmp.ne.s32.totalorder %s178, %s181
      %p187 = scmp.eq.s32.totalorder %s16, 0
      %p188 = por %p186, %p187
      %p189 = scmp.ne.s32.totalorder %s178, %s181
      %p190 = scmp.eq.s32.totalorder %s21, 1
      %p191 = por %p189, %p190
      %p192 = scmp.ne.s32.totalorder %s181, %s182
      %p193 = scmp.eq.s32.totalorder %s21, 0
      %p194 = por %p192, %p193
      %p195 = scmp.ne.s32.totalorder %s181, %s182
      %p196 = scmp.eq.s32.totalorder %s22, 1
      %p197 = por %p195, %p196
      %p199 = scmp.ne.s32.totalorder %s182, %s198
      %p200 = scmp.eq.s32.totalorder %s22, 0
      %p201 = por %p199, %p200
      %p202 = scmp.le.s32.totalorder 1, %s16
      %p203 = scmp.lt.s32.totalorder %s16, 3
      %p204 = pnand %p202, %p203
      %p205 = pneg %p204
      // Predicated region
      $region9: #{inception_block.1} parent=5 // pred_check
        _
      $region10: #{inception_block.1} parent=5 // pred_check_branch
        %207 = sbr.rel (%p204) target = $region12
      $region11: #{inception_block.1} parent=5 // pred_region
        %s208 = ssub.s32 %s16, 1
        // Predicated region
        $region13: #{inception_block.1} parent=11 // pred_check
          %p209 = pneg %p63
        $region14: #{inception_block.1} parent=11 // pred_check_branch
          %211 = sbr.rel (%p209) target = $region16
        $region15: #{inception_block.1} parent=11 // pred_region
          _
        $region16: #{inception_block.1} parent=11 // pred_fallthru
          _
        // Predicated region
        $region17: #{inception_block.1} parent=11 // pred_check
          %p212 = pneg %p84
        $region18: #{inception_block.1} parent=11 // pred_check_branch
          %214 = sbr.rel (%p212) target = $region20
        $region19: #{inception_block.1} parent=11 // pred_region
          _
        $region20: #{inception_block.1} parent=11 // pred_fallthru
          _
        // Predicated region
        $region21: #{inception_block.1} parent=11 // pred_check
          %p215 = pneg %p105
        $region22: #{inception_block.1} parent=11 // pred_check_branch
          %217 = sbr.rel (%p215) target = $region24
        $region23: #{inception_block.1} parent=11 // pred_region
          _
        $region24: #{inception_block.1} parent=11 // pred_fallthru
          _
        // Predicated region
        $region25: #{inception_block.1} parent=11 // pred_check
          %p218 = pneg %p126
        $region26: #{inception_block.1} parent=11 // pred_check_branch
          %220 = sbr.rel (%p218) target = $region28
        $region27: #{inception_block.1} parent=11 // pred_region
          _
        $region28: #{inception_block.1} parent=11 // pred_fallthru
          _
        // Predicated region
        $region29: #{inception_block.1} parent=11 // pred_check
          %p221 = pneg %p147
        $region30: #{inception_block.1} parent=11 // pred_check_branch
          %223 = sbr.rel (%p221) target = $region32
        $region31: #{inception_block.1} parent=11 // pred_region
          _
        $region32: #{inception_block.1} parent=11 // pred_fallthru
          _
        // Predicated region
        $region33: #{inception_block.1} parent=11 // pred_check
          %p224 = pneg %p168
        $region34: #{inception_block.1} parent=11 // pred_check_branch
          %226 = sbr.rel (%p224) target = $region36
        $region35: #{inception_block.1} parent=11 // pred_region
          _
        $region36: #{inception_block.1} parent=11 // pred_fallthru
          _
      $region12: #{inception_block.1} parent=5 // pred_fallthru
        _
      %p227 = scmp.lt.s32.totalorder %s16, 2
      // Predicated region
      $region37: #{inception_block.1} parent=5 // pred_check
        %p228 = pneg %p227
      $region38: #{inception_block.1} parent=5 // pred_check_branch
        %230 = sbr.rel (%p228) target = $region40
      $region39: #{inception_block.1} parent=5 // pred_region
        // Predicated region
        $region41: #{inception_block.1} parent=39 // pred_check
          %p231 = pneg %p36
        $region42: #{inception_block.1} parent=39 // pred_check_branch
          %233 = sbr.rel (%p231) target = $region44
        $region43: #{inception_block.1} parent=39 // pred_region
          %p234 = scmp.lt.s32.totalorder %s16, 1
          %s235 = scalar_select %p234, %s16, 1
          %s236 = smul.addr %s235, 32
          %s237 = smul.addr %s236, 8
          %s238 = scalar_lea.vmem %s0, %s237
        $region44: #{inception_block.1} parent=39 // pred_fallthru
          _
      $region40: #{inception_block.1} parent=5 // pred_fallthru
        _
      %p239 = scmp.le.s32.totalorder 1, %s16
      %p240 = scmp.lt.s32.totalorder %s16, 3
      %p241 = pnand %p239, %p240
      %p242 = pneg %p241
      // Predicated region
      $region45: #{inception_block.1} parent=5 // pred_check
        _
      $region46: #{inception_block.1} parent=5 // pred_check_branch
        %244 = sbr.rel (%p241) target = $region48
      $region47: #{inception_block.1} parent=5 // pred_region
        %s245 = ssub.s32 %s16, 1
        %p246 = scmp.lt.s32.totalorder %s21, 1
        %s247 = scalar_select %p246, %s21, 1
        %s248 = smul.addr %s247, 32
        %s249 = smul.addr %s248, 8
        %s250 = scalar_lea.vmem %s0, %s249
        %p251 = pneg %p42
        %p252 = pneg %p39
        %p253 = pneg %p63
        %p254 = pneg %p60
        %p255 = pneg %p84
        %p256 = pneg %p81
        %p257 = pneg %p105
        %p258 = pneg %p102
        %p259 = pneg %p126
        %p260 = pneg %p123
        %p261 = pneg %p147
        %p262 = pneg %p144
        %p263 = pneg %p168
        %p264 = pneg %p165
        %p265 = pneg %p194
        %p266 = pneg %p191
        %s267 = sand.u32 %s181, 1
        %s268 = scalar_lea.sflag [#allocation5], %s267
        %s269 = sand.u32 %s181, 1
        %s270 = smul.addr %s269, 256
        %s271 = scalar_lea.vmem [#allocation4], %s270
        %p272 = scmp.lt.s32.totalorder %s21, 1
        %s273 = scalar_select %p272, %s21, 1
        %s274 = smul.addr %s273, 32
        %s275 = smul.addr %s274, 8
        %s276 = scalar_lea.vmem %s0, %s275
        %v278 = vld [vmem:[%s276] sm:$0xff]
        %v279 = vld [vmem:[%s276 + $0x8] sm:$0xff]
        %v280 = vld [vmem:[%s276 + $0x10] sm:$0xff]
        %v281 = vld [vmem:[%s276 + $0x18] sm:$0xff]
        %v282 = vld [vmem:[%s276 + $0x20] sm:$0xff]
        %v283 = vld [vmem:[%s276 + $0x28] sm:$0xff]
        %v284 = vld [vmem:[%s276 + $0x30] sm:$0xff]
        %v285 = vld [vmem:[%s276 + $0x38] sm:$0xff]
        %v286 = vld [vmem:[%s276 + $0x40] sm:$0xff]
        %v287 = vld [vmem:[%s276 + $0x48] sm:$0xff]
        %v288 = vld [vmem:[%s276 + $0x50] sm:$0xff]
        %v289 = vld [vmem:[%s276 + $0x58] sm:$0xff]
        %v290 = vld [vmem:[%s276 + $0x60] sm:$0xff]
        %v291 = vld [vmem:[%s276 + $0x68] sm:$0xff]
        %v292 = vld [vmem:[%s276 + $0x70] sm:$0xff]
        %v293 = vld [vmem:[%s276 + $0x78] sm:$0xff]
        %v294 = vld [vmem:[%s276 + $0x80] sm:$0xff]
        %v295 = vld [vmem:[%s276 + $0x88] sm:$0xff]
        %v296 = vld [vmem:[%s276 + $0x90] sm:$0xff]
        %v297 = vld [vmem:[%s276 + $0x98] sm:$0xff]
        %v298 = vld [vmem:[%s276 + $0xa0] sm:$0xff]
        %v299 = vld [vmem:[%s276 + $0xa8] sm:$0xff]
        %v300 = vld [vmem:[%s276 + $0xb0] sm:$0xff]
        %v301 = vld [vmem:[%s276 + $0xb8] sm:$0xff]
        %v302 = vld [vmem:[%s276 + $0xc0] sm:$0xff]
        %v303 = vld [vmem:[%s276 + $0xc8] sm:$0xff]
        %v304 = vld [vmem:[%s276 + $0xd0] sm:$0xff]
        %v305 = vld [vmem:[%s276 + $0xd8] sm:$0xff]
        %v306 = vld [vmem:[%s276 + $0xe0] sm:$0xff]
        %v307 = vld [vmem:[%s276 + $0xe8] sm:$0xff]
        %v308 = vld [vmem:[%s276 + $0xf0] sm:$0xff]
        %v309 = vld [vmem:[%s276 + $0xf8] sm:$0xff]
        %v310 = vpack.c.bf16 %v279, %v278
        %v311 = vpack.c.bf16 %v281, %v280
        %v312 = vpack.c.bf16 %v283, %v282
        %v313 = vpack.c.bf16 %v285, %v284
        %v314 = vpack.c.bf16 %v287, %v286
        %v315 = vpack.c.bf16 %v289, %v288
        %v316 = vpack.c.bf16 %v291, %v290
        %v317 = vpack.c.bf16 %v293, %v292
        %v318 = vpack.c.bf16 %v295, %v294
        %v319 = vpack.c.bf16 %v297, %v296
        %v320 = vpack.c.bf16 %v299, %v298
        %v321 = vpack.c.bf16 %v301, %v300
        %v322 = vpack.c.bf16 %v303, %v302
        %v323 = vpack.c.bf16 %v305, %v304
        %v324 = vpack.c.bf16 %v307, %v306
        %v325 = vpack.c.bf16 %v309, %v308
        %v326 = vld [vmem:[%s1] sm:$0x3]
        %v327 = vld [vmem:[%s2] sm:$0x1]
        %v329 = vlaneseq
        %v330 = vshrl.u32 %v329, 7
        %v331 = vsub.s32 0, %v330
        %v332 = vrot.slane %v327, %v331
        %vm334 = vcmask 31744
        %v336 = vsel %vm334, %v310, 0
        %v339 = vsel %vm334, %v311, 0
        %v342 = vsel %vm334, %v312, 0
        %v345 = vsel %vm334, %v313, 0
        %v348 = vsel %vm334, %v314, 0
        %v351 = vsel %vm334, %v315, 0
        %v354 = vsel %vm334, %v316, 0
        %v357 = vsel %vm334, %v317, 0
        %v360 = vsel %vm334, %v318, 0
        %v363 = vsel %vm334, %v319, 0
        %v366 = vsel %vm334, %v320, 0
        %v369 = vsel %vm334, %v321, 0
        %v372 = vsel %vm334, %v322, 0
        %v375 = vsel %vm334, %v323, 0
        %v378 = vsel %vm334, %v324, 0
        %v381 = vsel %vm334, %v325, 0
        %vm383 = vcmask 1041408
        %v385 = vsel %vm383, %v326, 0
        %387 = vmatprep.subr.bf16.mxu0 0
        %388 = vmatpush1.bf16.msra.mxu0 0
        %389 = vmatprep.subr.bf16.mxu0 0
        %390 = vmatpush1.bf16.msra.mxu0 0
        %391 = vmatprep.subr.bf16.mxu0 0
        %392 = vmatpush1.bf16.msra.mxu0 0
        %393 = vmatprep.subr.bf16.mxu0 0
        %394 = vmatpush1.bf16.msra.mxu0 0
        %395 = vmatprep.subr.bf16.mxu0 0
        %396 = vmatpush1.bf16.msra.mxu0 0
        %397 = vmatprep.subr.bf16.mxu0 0
        %398 = vmatpush1.bf16.msra.mxu0 0
        %399 = vmatprep.subr.bf16.mxu0 0
        %400 = vmatpush1.bf16.msra.mxu0 0
        %401 = vmatprep.subr.bf16.mxu0 0
        %402 = vmatpush1.bf16.msra.mxu0 %v385
        %403 = vmatprep.subr.bf16.mxu0 0
        %404 = vmatpush2.bf16.msra.mxu0 0
        %405 = vmatprep.subr.bf16.mxu0 0
        %406 = vmatpush2.bf16.msra.mxu0 0
        %407 = vmatprep.subr.bf16.mxu0 0
        %408 = vmatpush2.bf16.msra.mxu0 0
        %409 = vmatprep.subr.bf16.mxu0 0
        %410 = vmatpush2.bf16.msra.mxu0 0
        %411 = vmatprep.subr.bf16.mxu0 0
        %412 = vmatpush2.bf16.msra.mxu0 0
        %413 = vmatprep.subr.bf16.mxu0 0
        %414 = vmatpush2.bf16.msra.mxu0 0
        %415 = vmatprep.subr.bf16.mxu0 0
        %416 = vmatpush2.bf16.msra.mxu0 0
        %417 = vmatprep.subr.bf16.mxu0 0
        %418 = vmatpush2.bf16.msra.mxu0 0
        %419 = vmatprep.mubr.bf16.mxu0 0
        %420 = vmatmul.mubr.bf16.gmra.mxu0 %v336
        %v421 = vpop.f32.mrf.mxu0
        %v422 = vadd.f32 %v332, %v421
        %v423 = vpop.f32.mrf.mxu0
        %v424 = vpop.f32.mrf.mxu0
        %v425 = vadd.f32 %v332, %v424
        %v426 = vpop.f32.mrf.mxu0
        %427 = vmatprep.mubr.bf16.mxu0 0
        %428 = vmatmul.mubr.bf16.gmra.mxu0 %v339
        %v429 = vpop.f32.mrf.mxu0
        %v430 = vadd.f32 %v332, %v429
        %v431 = vpop.f32.mrf.mxu0
        %v432 = vpop.f32.mrf.mxu0
        %v433 = vadd.f32 %v332, %v432
        %v434 = vpop.f32.mrf.mxu0
        %435 = vmatprep.mubr.bf16.mxu0 0
        %436 = vmatmul.mubr.bf16.gmra.mxu0 %v342
        %v437 = vpop.f32.mrf.mxu0
        %v438 = vadd.f32 %v332, %v437
        %v439 = vpop.f32.mrf.mxu0
        %v440 = vpop.f32.mrf.mxu0
        %v441 = vadd.f32 %v332, %v440
        %v442 = vpop.f32.mrf.mxu0
        %443 = vmatprep.mubr.bf16.mxu0 0
        %444 = vmatmul.mubr.bf16.gmra.mxu0 %v345
        %v445 = vpop.f32.mrf.mxu0
        %v446 = vadd.f32 %v332, %v445
        %v447 = vpop.f32.mrf.mxu0
        %v448 = vpop.f32.mrf.mxu0
        %v449 = vadd.f32 %v332, %v448
        %v450 = vpop.f32.mrf.mxu0
        %451 = vmatprep.mubr.bf16.mxu0 0
        %452 = vmatmul.mubr.bf16.gmra.mxu0 %v348
        %v453 = vpop.f32.mrf.mxu0
        %v454 = vadd.f32 %v332, %v453
        %v455 = vpop.f32.mrf.mxu0
        %v456 = vpop.f32.mrf.mxu0
        %v457 = vadd.f32 %v332, %v456
        %v458 = vpop.f32.mrf.mxu0
        %459 = vmatprep.mubr.bf16.mxu0 0
        %460 = vmatmul.mubr.bf16.gmra.mxu0 %v351
        %v461 = vpop.f32.mrf.mxu0
        %v462 = vadd.f32 %v332, %v461
        %v463 = vpop.f32.mrf.mxu0
        %v464 = vpop.f32.mrf.mxu0
        %v465 = vadd.f32 %v332, %v464
        %v466 = vpop.f32.mrf.mxu0
        %467 = vmatprep.mubr.bf16.mxu0 0
        %468 = vmatmul.mubr.bf16.gmra.mxu0 %v354
        %v469 = vpop.f32.mrf.mxu0
        %v470 = vadd.f32 %v332, %v469
        %v471 = vpop.f32.mrf.mxu0
        %v472 = vpop.f32.mrf.mxu0
        %v473 = vadd.f32 %v332, %v472
        %v474 = vpop.f32.mrf.mxu0
        %475 = vmatprep.mubr.bf16.mxu0 0
        %476 = vmatmul.mubr.bf16.gmra.mxu0 %v357
        %v477 = vpop.f32.mrf.mxu0
        %v478 = vadd.f32 %v332, %v477
        %v479 = vpop.f32.mrf.mxu0
        %v480 = vpop.f32.mrf.mxu0
        %v481 = vadd.f32 %v332, %v480
        %v482 = vpop.f32.mrf.mxu0
        %483 = vmatprep.mubr.bf16.mxu0 0
        %484 = vmatmul.mubr.bf16.gmra.mxu0 %v360
        %v485 = vpop.f32.mrf.mxu0
        %v486 = vadd.f32 %v332, %v485
        %v487 = vpop.f32.mrf.mxu0
        %v488 = vpop.f32.mrf.mxu0
        %v489 = vadd.f32 %v332, %v488
        %v490 = vpop.f32.mrf.mxu0
        %491 = vmatprep.mubr.bf16.mxu0 0
        %492 = vmatmul.mubr.bf16.gmra.mxu0 %v363
        %v493 = vpop.f32.mrf.mxu0
        %v494 = vadd.f32 %v332, %v493
        %v495 = vpop.f32.mrf.mxu0
        %v496 = vpop.f32.mrf.mxu0
        %v497 = vadd.f32 %v332, %v496
        %v498 = vpop.f32.mrf.mxu0
        %499 = vmatprep.mubr.bf16.mxu0 0
        %500 = vmatmul.mubr.bf16.gmra.mxu0 %v366
        %v501 = vpop.f32.mrf.mxu0
        %v502 = vadd.f32 %v332, %v501
        %v503 = vpop.f32.mrf.mxu0
        %v504 = vpop.f32.mrf.mxu0
        %v505 = vadd.f32 %v332, %v504
        %v506 = vpop.f32.mrf.mxu0
        %507 = vmatprep.mubr.bf16.mxu0 0
        %508 = vmatmul.mubr.bf16.gmra.mxu0 %v369
        %v509 = vpop.f32.mrf.mxu0
        %v510 = vadd.f32 %v332, %v509
        %v511 = vpop.f32.mrf.mxu0
        %v512 = vpop.f32.mrf.mxu0
        %v513 = vadd.f32 %v332, %v512
        %v514 = vpop.f32.mrf.mxu0
        %515 = vmatprep.mubr.bf16.mxu0 0
        %516 = vmatmul.mubr.bf16.gmra.mxu0 %v372
        %v517 = vpop.f32.mrf.mxu0
        %v518 = vadd.f32 %v332, %v517
        %v519 = vpop.f32.mrf.mxu0
        %v520 = vpop.f32.mrf.mxu0
        %v521 = vadd.f32 %v332, %v520
        %v522 = vpop.f32.mrf.mxu0
        %523 = vmatprep.mubr.bf16.mxu0 0
        %524 = vmatmul.mubr.bf16.gmra.mxu0 %v375
        %v525 = vpop.f32.mrf.mxu0
        %v526 = vadd.f32 %v332, %v525
        %v527 = vpop.f32.mrf.mxu0
        %v528 = vpop.f32.mrf.mxu0
        %v529 = vadd.f32 %v332, %v528
        %v530 = vpop.f32.mrf.mxu0
        %531 = vmatprep.mubr.bf16.mxu0 0
        %532 = vmatmul.mubr.bf16.gmra.mxu0 %v378
        %v533 = vpop.f32.mrf.mxu0
        %v534 = vadd.f32 %v332, %v533
        %v535 = vpop.f32.mrf.mxu0
        %v536 = vpop.f32.mrf.mxu0
        %v537 = vadd.f32 %v332, %v536
        %v538 = vpop.f32.mrf.mxu0
        %539 = vmatprep.mubr.bf16.mxu0 0
        %540 = vmatmul.mubr.bf16.gmra.mxu0 %v381
        %v541 = vpop.f32.mrf.mxu0
        %v542 = vadd.f32 %v332, %v541
        %v543 = vpop.f32.mrf.mxu0
        %v544 = vpop.f32.mrf.mxu0
        %v545 = vadd.f32 %v332, %v544
        %v546 = vpop.f32.mrf.mxu0
        %547 = vdwg.mxu0
        %v548 = vmax.f32 %v422, 0.0
        %v549 = vmax.f32 %v425, 0.0
        %v550 = vmax.f32 %v430, 0.0
        %v551 = vmax.f32 %v433, 0.0
        %v552 = vmax.f32 %v438, 0.0
        %v553 = vmax.f32 %v441, 0.0
        %v554 = vmax.f32 %v446, 0.0
        %v555 = vmax.f32 %v449, 0.0
        %v556 = vmax.f32 %v454, 0.0
        %v557 = vmax.f32 %v457, 0.0
        %v558 = vmax.f32 %v462, 0.0
        %v559 = vmax.f32 %v465, 0.0
        %v560 = vmax.f32 %v470, 0.0
        %v561 = vmax.f32 %v473, 0.0
        %v562 = vmax.f32 %v478, 0.0
        %v563 = vmax.f32 %v481, 0.0
        %v564 = vmax.f32 %v486, 0.0
        %v565 = vmax.f32 %v489, 0.0
        %v566 = vmax.f32 %v494, 0.0
        %v567 = vmax.f32 %v497, 0.0
        %v568 = vmax.f32 %v502, 0.0
        %v569 = vmax.f32 %v505, 0.0
        %v570 = vmax.f32 %v510, 0.0
        %v571 = vmax.f32 %v513, 0.0
        %v572 = vmax.f32 %v518, 0.0
        %v573 = vmax.f32 %v521, 0.0
        %v574 = vmax.f32 %v526, 0.0
        %v575 = vmax.f32 %v529, 0.0
        %v576 = vmax.f32 %v534, 0.0
        %v577 = vmax.f32 %v537, 0.0
        %v578 = vmax.f32 %v542, 0.0
        %v579 = vmax.f32 %v545, 0.0
        %vm580 = vcmask 64512
        %581 = vst.msk [vmem:[%s271] sm:$0xff] %vm580, %v548
        %582 = vst.msk [vmem:[%s271 + $0x8] sm:$0xff] %vm580, %v549
        %583 = vst.msk [vmem:[%s271 + $0x10] sm:$0xff] %vm580, %v550
        %584 = vst.msk [vmem:[%s271 + $0x18] sm:$0xff] %vm580, %v551
        %585 = vst.msk [vmem:[%s271 + $0x20] sm:$0xff] %vm580, %v552
        %586 = vst.msk [vmem:[%s271 + $0x28] sm:$0xff] %vm580, %v553
        %587 = vst.msk [vmem:[%s271 + $0x30] sm:$0xff] %vm580, %v554
        %588 = vst.msk [vmem:[%s271 + $0x38] sm:$0xff] %vm580, %v555
        %589 = vst.msk [vmem:[%s271 + $0x40] sm:$0xff] %vm580, %v556
        %590 = vst.msk [vmem:[%s271 + $0x48] sm:$0xff] %vm580, %v557
        %591 = vst.msk [vmem:[%s271 + $0x50] sm:$0xff] %vm580, %v558
        %592 = vst.msk [vmem:[%s271 + $0x58] sm:$0xff] %vm580, %v559
        %593 = vst.msk [vmem:[%s271 + $0x60] sm:$0xff] %vm580, %v560
        %594 = vst.msk [vmem:[%s271 + $0x68] sm:$0xff] %vm580, %v561
        %595 = vst.msk [vmem:[%s271 + $0x70] sm:$0xff] %vm580, %v562
        %596 = vst.msk [vmem:[%s271 + $0x78] sm:$0xff] %vm580, %v563
        %597 = vst.msk [vmem:[%s271 + $0x80] sm:$0xff] %vm580, %v564
        %598 = vst.msk [vmem:[%s271 + $0x88] sm:$0xff] %vm580, %v565
        %599 = vst.msk [vmem:[%s271 + $0x90] sm:$0xff] %vm580, %v566
        %600 = vst.msk [vmem:[%s271 + $0x98] sm:$0xff] %vm580, %v567
        %601 = vst.msk [vmem:[%s271 + $0xa0] sm:$0xff] %vm580, %v568
        %602 = vst.msk [vmem:[%s271 + $0xa8] sm:$0xff] %vm580, %v569
        %603 = vst.msk [vmem:[%s271 + $0xb0] sm:$0xff] %vm580, %v570
        %604 = vst.msk [vmem:[%s271 + $0xb8] sm:$0xff] %vm580, %v571
        %605 = vst.msk [vmem:[%s271 + $0xc0] sm:$0xff] %vm580, %v572
        %606 = vst.msk [vmem:[%s271 + $0xc8] sm:$0xff] %vm580, %v573
        %607 = vst.msk [vmem:[%s271 + $0xd0] sm:$0xff] %vm580, %v574
        %608 = vst.msk [vmem:[%s271 + $0xd8] sm:$0xff] %vm580, %v575
        %609 = vst.msk [vmem:[%s271 + $0xe0] sm:$0xff] %vm580, %v576
        %610 = vst.msk [vmem:[%s271 + $0xe8] sm:$0xff] %vm580, %v577
        %611 = vst.msk [vmem:[%s271 + $0xf0] sm:$0xff] %vm580, %v578
        %612 = vst.msk [vmem:[%s271 + $0xf8] sm:$0xff] %vm580, %v579
        %613 = vst.msk [vmem:[#allocation2] sm:$0xff] %vm580, 0.0
        %614 = vst.msk [vmem:[#allocation2 + $0x8] sm:$0xff] %vm580, 0.0
        %vm615 = vcmask 60416
        %616 = vst.msk [vmem:[#allocation2 + $0x10] sm:$0xf] %vm615, 0.0
        %617 = vst.msk [vmem:[#allocation2 + $0x18] sm:$0xff] %vm580, 0.0
        %618 = vst.msk [vmem:[#allocation2 + $0x20] sm:$0xff] %vm580, 0.0
        %619 = vst.msk [vmem:[#allocation2 + $0x28] sm:$0xf] %vm615, 0.0
        %620 = vst.msk [vmem:[#allocation2 + $0x30] sm:$0xff] %vm580, 0.0
        %621 = vst.msk [vmem:[#allocation2 + $0x38] sm:$0xff] %vm580, 0.0
        %622 = vst.msk [vmem:[#allocation2 + $0x40] sm:$0xf] %vm615, 0.0
        %623 = vst.msk [vmem:[#allocation2 + $0x48] sm:$0xff] %vm580, 0.0
        %624 = vst.msk [vmem:[#allocation2 + $0x50] sm:$0xff] %vm580, 0.0
        %625 = vst.msk [vmem:[#allocation2 + $0x58] sm:$0xf] %vm615, 0.0
        %626 = vst.msk [vmem:[#allocation2 + $0x60] sm:$0xff] %vm580, 0.0
        %627 = vst.msk [vmem:[#allocation2 + $0x68] sm:$0xff] %vm580, 0.0
        %628 = vst.msk [vmem:[#allocation2 + $0x70] sm:$0xf] %vm615, 0.0
        %629 = vst.msk [vmem:[#allocation2 + $0x78] sm:$0xff] %vm580, 0.0
        %630 = vst.msk [vmem:[#allocation2 + $0x80] sm:$0xff] %vm580, 0.0
        %631 = vst.msk [vmem:[#allocation2 + $0x88] sm:$0xf] %vm615, 0.0
        %632 = vst.msk [vmem:[#allocation2 + $0x90] sm:$0xff] %vm580, 0.0
        %633 = vst.msk [vmem:[#allocation2 + $0x98] sm:$0xff] %vm580, 0.0
        %634 = vst.msk [vmem:[#allocation2 + $0xa0] sm:$0xf] %vm615, 0.0
        %635 = vst.msk [vmem:[#allocation2 + $0xa8] sm:$0xff] %vm580, 0.0
        %636 = vst.msk [vmem:[#allocation2 + $0xb0] sm:$0xff] %vm580, 0.0
        %637 = vst.msk [vmem:[#allocation2 + $0xb8] sm:$0xf] %vm615, 0.0
        %638 = vst.msk [vmem:[#allocation2 + $0xc0] sm:$0xff] %vm580, 0.0
        %639 = vst.msk [vmem:[#allocation2 + $0xc8] sm:$0xff] %vm580, 0.0
        %640 = vst.msk [vmem:[#allocation2 + $0xd0] sm:$0xf] %vm615, 0.0
        %641 = vst.msk [vmem:[#allocation2 + $0xd8] sm:$0xff] %vm580, 0.0
        %642 = vst.msk [vmem:[#allocation2 + $0xe0] sm:$0xff] %vm580, 0.0
        %643 = vst.msk [vmem:[#allocation2 + $0xe8] sm:$0xf] %vm615, 0.0
        %644 = vst.msk [vmem:[#allocation2 + $0xf0] sm:$0xff] %vm580, 0.0
        %645 = vst.msk [vmem:[#allocation2 + $0xf8] sm:$0xff] %vm580, 0.0
        %646 = vst.msk [vmem:[#allocation2 + $0x100] sm:$0xf] %vm615, 0.0
        %647 = vst.msk [vmem:[#allocation2 + $0x108] sm:$0xff] %vm580, 0.0
        %648 = vst.msk [vmem:[#allocation2 + $0x110] sm:$0xff] %vm580, 0.0
        %649 = vst.msk [vmem:[#allocation2 + $0x118] sm:$0xf] %vm615, 0.0
        %650 = vst.msk [vmem:[#allocation2 + $0x120] sm:$0xff] %vm580, 0.0
        %651 = vst.msk [vmem:[#allocation2 + $0x128] sm:$0xff] %vm580, 0.0
        %652 = vst.msk [vmem:[#allocation2 + $0x130] sm:$0xf] %vm615, 0.0
        %653 = vst.msk [vmem:[#allocation2 + $0x138] sm:$0xff] %vm580, 0.0
        %654 = vst.msk [vmem:[#allocation2 + $0x140] sm:$0xff] %vm580, 0.0
        %655 = vst.msk [vmem:[#allocation2 + $0x148] sm:$0xf] %vm615, 0.0
        %656 = vst.msk [vmem:[#allocation2 + $0x150] sm:$0xff] %vm580, 0.0
        %657 = vst.msk [vmem:[#allocation2 + $0x158] sm:$0xff] %vm580, 0.0
        %658 = vst.msk [vmem:[#allocation2 + $0x160] sm:$0xf] %vm615, 0.0
        %659 = vst.msk [vmem:[#allocation2 + $0x168] sm:$0xff] %vm580, 0.0
        %660 = vst.msk [vmem:[#allocation2 + $0x170] sm:$0xff] %vm580, 0.0
        %661 = vst.msk [vmem:[#allocation2 + $0x178] sm:$0xf] %vm615, 0.0
        %662 = vst.msk [vmem:[#allocation2 + $0x180] sm:$0xff] %vm580, 0.0
        %663 = vst.msk [vmem:[#allocation2 + $0x188] sm:$0xff] %vm580, 0.0
        %664 = vst.msk [vmem:[#allocation2 + $0x190] sm:$0xf] %vm615, 0.0
        %665 = vst.msk [vmem:[#allocation2 + $0x198] sm:$0xff] %vm580, 0.0
        %666 = vst.msk [vmem:[#allocation2 + $0x1a0] sm:$0xff] %vm580, 0.0
        %667 = vst.msk [vmem:[#allocation2 + $0x1a8] sm:$0xf] %vm615, 0.0
        %668 = vst.msk [vmem:[#allocation2 + $0x1b0] sm:$0xff] %vm580, 0.0
        %669 = vst.msk [vmem:[#allocation2 + $0x1b8] sm:$0xff] %vm580, 0.0
        %670 = vst.msk [vmem:[#allocation2 + $0x1c0] sm:$0xf] %vm615, 0.0
        %671 = vst.msk [vmem:[#allocation2 + $0x1c8] sm:$0xff] %vm580, 0.0
        %672 = vst.msk [vmem:[#allocation2 + $0x1d0] sm:$0xff] %vm580, 0.0
        %673 = vst.msk [vmem:[#allocation2 + $0x1d8] sm:$0xf] %vm615, 0.0
        %706 = vrot.lane.b32.xlu0 %v548, 120
        %v707 = vpop.permute.xlu0 %706
        %708 = vrot.lane.b32.xlu0 %v549, 120
        %v709 = vpop.permute.xlu0 %708
        %710 = vrot.lane.b32.xlu0 %v550, 120
        %v711 = vpop.permute.xlu0 %710
        %712 = vrot.lane.b32.xlu0 %v551, 120
        %v713 = vpop.permute.xlu0 %712
        %714 = vrot.lane.b32.xlu0 %v552, 120
        %v715 = vpop.permute.xlu0 %714
        %716 = vrot.lane.b32.xlu0 %v553, 120
        %v717 = vpop.permute.xlu0 %716
        %718 = vrot.lane.b32.xlu0 %v554, 120
        %v719 = vpop.permute.xlu0 %718
        %720 = vrot.lane.b32.xlu0 %v555, 120
        %v721 = vpop.permute.xlu0 %720
        %722 = vrot.lane.b32.xlu0 %v556, 120
        %v723 = vpop.permute.xlu0 %722
        %724 = vrot.lane.b32.xlu0 %v557, 120
        %v725 = vpop.permute.xlu0 %724
        %726 = vrot.lane.b32.xlu0 %v558, 120
        %v727 = vpop.permute.xlu0 %726
        %728 = vrot.lane.b32.xlu0 %v559, 120
        %v729 = vpop.permute.xlu0 %728
        %730 = vrot.lane.b32.xlu0 %v560, 120
        %v731 = vpop.permute.xlu0 %730
        %732 = vrot.lane.b32.xlu0 %v561, 120
        %v733 = vpop.permute.xlu0 %732
        %734 = vrot.lane.b32.xlu0 %v562, 120
        %v735 = vpop.permute.xlu0 %734
        %736 = vrot.lane.b32.xlu0 %v563, 120
        %v737 = vpop.permute.xlu0 %736
        %738 = vrot.lane.b32.xlu0 %v564, 120
        %v739 = vpop.permute.xlu0 %738
        %740 = vrot.lane.b32.xlu0 %v565, 120
        %v741 = vpop.permute.xlu0 %740
        %742 = vrot.lane.b32.xlu0 %v566, 120
        %v743 = vpop.permute.xlu0 %742
        %744 = vrot.lane.b32.xlu0 %v567, 120
        %v745 = vpop.permute.xlu0 %744
        %746 = vrot.lane.b32.xlu0 %v568, 120
        %v747 = vpop.permute.xlu0 %746
        %748 = vrot.lane.b32.xlu0 %v569, 120
        %v749 = vpop.permute.xlu0 %748
        %750 = vrot.lane.b32.xlu0 %v570, 120
        %v751 = vpop.permute.xlu0 %750
        %752 = vrot.lane.b32.xlu0 %v571, 120
        %v753 = vpop.permute.xlu0 %752
        %754 = vrot.lane.b32.xlu0 %v572, 120
        %v755 = vpop.permute.xlu0 %754
        %756 = vrot.lane.b32.xlu0 %v573, 120
        %v757 = vpop.permute.xlu0 %756
        %758 = vrot.lane.b32.xlu0 %v574, 120
        %v759 = vpop.permute.xlu0 %758
        %760 = vrot.lane.b32.xlu0 %v575, 120
        %v761 = vpop.permute.xlu0 %760
        %762 = vrot.lane.b32.xlu0 %v576, 120
        %v763 = vpop.permute.xlu0 %762
        %764 = vrot.lane.b32.xlu0 %v577, 120
        %v765 = vpop.permute.xlu0 %764
        %766 = vrot.lane.b32.xlu0 %v578, 120
        %v767 = vpop.permute.xlu0 %766
        %768 = vrot.lane.b32.xlu0 %v579, 120
        %v769 = vpop.permute.xlu0 %768
        %s802 = scalar_lea.vmem [#allocation2], 48
        %803 = vst.msk [vmem:[%s802 + $0x2] sm:$0xff] %vm580, %v707
        %804 = vst.msk [vmem:[%s802 + $0xa] sm:$0xff] %vm580, %v709
        %805 = vst.msk [vmem:[%s802 + $0x1a] sm:$0xff] %vm580, %v711
        %806 = vst.msk [vmem:[%s802 + $0x22] sm:$0xff] %vm580, %v713
        %807 = vst.msk [vmem:[%s802 + $0x32] sm:$0xff] %vm580, %v715
        %808 = vst.msk [vmem:[%s802 + $0x3a] sm:$0xff] %vm580, %v717
        %809 = vst.msk [vmem:[%s802 + $0x4a] sm:$0xff] %vm580, %v719
        %810 = vst.msk [vmem:[%s802 + $0x52] sm:$0xff] %vm580, %v721
        %811 = vst.msk [vmem:[%s802 + $0x62] sm:$0xff] %vm580, %v723
        %812 = vst.msk [vmem:[%s802 + $0x6a] sm:$0xff] %vm580, %v725
        %813 = vst.msk [vmem:[%s802 + $0x7a] sm:$0xff] %vm580, %v727
        %814 = vst.msk [vmem:[%s802 + $0x82] sm:$0xff] %vm580, %v729
        %815 = vst.msk [vmem:[%s802 + $0x92] sm:$0xff] %vm580, %v731
        %816 = vst.msk [vmem:[%s802 + $0x9a] sm:$0xff] %vm580, %v733
        %817 = vst.msk [vmem:[%s802 + $0xaa] sm:$0xff] %vm580, %v735
        %818 = vst.msk [vmem:[%s802 + $0xb2] sm:$0xff] %vm580, %v737
        %819 = vst.msk [vmem:[%s802 + $0xc2] sm:$0xff] %vm580, %v739
        %820 = vst.msk [vmem:[%s802 + $0xca] sm:$0xff] %vm580, %v741
        %821 = vst.msk [vmem:[%s802 + $0xda] sm:$0xff] %vm580, %v743
        %822 = vst.msk [vmem:[%s802 + $0xe2] sm:$0xff] %vm580, %v745
        %823 = vst.msk [vmem:[%s802 + $0xf2] sm:$0xff] %vm580, %v747
        %824 = vst.msk [vmem:[%s802 + $0xfa] sm:$0xff] %vm580, %v749
        %825 = vst.msk [vmem:[%s802 + $0x10a] sm:$0xff] %vm580, %v751
        %826 = vst.msk [vmem:[%s802 + $0x112] sm:$0xff] %vm580, %v753
        %827 = vst.msk [vmem:[%s802 + $0x122] sm:$0xff] %vm580, %v755
        %828 = vst.msk [vmem:[%s802 + $0x12a] sm:$0xff] %vm580, %v757
        %829 = vst.msk [vmem:[%s802 + $0x13a] sm:$0xff] %vm580, %v759
        %830 = vst.msk [vmem:[%s802 + $0x142] sm:$0xff] %vm580, %v761
        %831 = vst.msk [vmem:[%s802 + $0x152] sm:$0xff] %vm580, %v763
        %832 = vst.msk [vmem:[%s802 + $0x15a] sm:$0xff] %vm580, %v765
        %833 = vst.msk [vmem:[%s802 + $0x16a] sm:$0xff] %vm580, %v767
        %834 = vst.msk [vmem:[%s802 + $0x172] sm:$0xff] %vm580, %v769
        %v835 = vld [vmem:[#allocation2] sm:$0xff]
        %v836 = vld [vmem:[#allocation2 + $0x8] sm:$0xff]
        %v837 = vld [vmem:[#allocation2 + $0x18] sm:$0xff]
        %v838 = vld [vmem:[#allocation2 + $0x20] sm:$0xff]
        %v839 = vld [vmem:[#allocation2 + $0x30] sm:$0xff]
        %v840 = vld [vmem:[#allocation2 + $0x38] sm:$0xff]
        %v841 = vld [vmem:[#allocation2 + $0x48] sm:$0xff]
        %v842 = vld [vmem:[#allocation2 + $0x50] sm:$0xff]
        %v843 = vld [vmem:[#allocation2 + $0x60] sm:$0xff]
        %v844 = vld [vmem:[#allocation2 + $0x68] sm:$0xff]
        %v845 = vld [vmem:[#allocation2 + $0x78] sm:$0xff]
        %v846 = vld [vmem:[#allocation2 + $0x80] sm:$0xff]
        %v847 = vld [vmem:[#allocation2 + $0x90] sm:$0xff]
        %v848 = vld [vmem:[#allocation2 + $0x98] sm:$0xff]
        %v849 = vld [vmem:[#allocation2 + $0xa8] sm:$0xff]
        %v850 = vld [vmem:[#allocation2 + $0xb0] sm:$0xff]
        %v851 = vld [vmem:[#allocation2 + $0xc0] sm:$0xff]
        %v852 = vld [vmem:[#allocation2 + $0xc8] sm:$0xff]
        %v853 = vld [vmem:[#allocation2 + $0xd8] sm:$0xff]
        %v854 = vld [vmem:[#allocation2 + $0xe0] sm:$0xff]
        %v855 = vld [vmem:[#allocation2 + $0xf0] sm:$0xff]
        %v856 = vld [vmem:[#allocation2 + $0xf8] sm:$0xff]
        %v857 = vld [vmem:[#allocation2 + $0x108] sm:$0xff]
        %v858 = vld [vmem:[#allocation2 + $0x110] sm:$0xff]
        %v859 = vld [vmem:[#allocation2 + $0x120] sm:$0xff]
        %v860 = vld [vmem:[#allocation2 + $0x128] sm:$0xff]
        %v861 = vld [vmem:[#allocation2 + $0x138] sm:$0xff]
        %v862 = vld [vmem:[#allocation2 + $0x140] sm:$0xff]
        %v863 = vld [vmem:[#allocation2 + $0x150] sm:$0xff]
        %v864 = vld [vmem:[#allocation2 + $0x158] sm:$0xff]
        %v865 = vld [vmem:[#allocation2 + $0x168] sm:$0xff]
        %v866 = vld [vmem:[#allocation2 + $0x170] sm:$0xff]
        %v867 = vpack.c.bf16 %v836, %v835
        %v868 = vpack.c.bf16 %v838, %v837
        %v869 = vpack.c.bf16 %v840, %v839
        %v870 = vpack.c.bf16 %v842, %v841
        %v871 = vpack.c.bf16 %v844, %v843
        %v872 = vpack.c.bf16 %v846, %v845
        %v873 = vpack.c.bf16 %v848, %v847
        %v874 = vpack.c.bf16 %v850, %v849
        %v875 = vpack.c.bf16 %v852, %v851
        %v876 = vpack.c.bf16 %v854, %v853
        %v877 = vpack.c.bf16 %v856, %v855
        %v878 = vpack.c.bf16 %v858, %v857
        %v879 = vpack.c.bf16 %v860, %v859
        %v880 = vpack.c.bf16 %v862, %v861
        %v881 = vpack.c.bf16 %v864, %v863
        %v882 = vpack.c.bf16 %v866, %v865
        %v883 = vld [vmem:[%s3] sm:$0xf]
        %v884 = vld [vmem:[#allocation2 + $0x1] sm:$0xff]
        %v885 = vld [vmem:[#allocation2 + $0x9] sm:$0xff]
        %v886 = vld [vmem:[#allocation2 + $0x19] sm:$0xff]
        %v887 = vld [vmem:[#allocation2 + $0x21] sm:$0xff]
        %v888 = vld [vmem:[#allocation2 + $0x31] sm:$0xff]
        %v889 = vld [vmem:[#allocation2 + $0x39] sm:$0xff]
        %v890 = vld [vmem:[#allocation2 + $0x49] sm:$0xff]
        %v891 = vld [vmem:[#allocation2 + $0x51] sm:$0xff]
        %v892 = vld [vmem:[#allocation2 + $0x61] sm:$0xff]
        %v893 = vld [vmem:[#allocation2 + $0x69] sm:$0xff]
        %v894 = vld [vmem:[#allocation2 + $0x79] sm:$0xff]
        %v895 = vld [vmem:[#allocation2 + $0x81] sm:$0xff]
        %v896 = vld [vmem:[#allocation2 + $0x91] sm:$0xff]
        %v897 = vld [vmem:[#allocation2 + $0x99] sm:$0xff]
        %v898 = vld [vmem:[#allocation2 + $0xa9] sm:$0xff]
        %v899 = vld [vmem:[#allocation2 + $0xb1] sm:$0xff]
        %v900 = vld [vmem:[#allocation2 + $0xc1] sm:$0xff]
        %v901 = vld [vmem:[#allocation2 + $0xc9] sm:$0xff]
        %v902 = vld [vmem:[#allocation2 + $0xd9] sm:$0xff]
        %v903 = vld [vmem:[#allocation2 + $0xe1] sm:$0xff]
        %v904 = vld [vmem:[#allocation2 + $0xf1] sm:$0xff]
        %v905 = vld [vmem:[#allocation2 + $0xf9] sm:$0xff]
        %v906 = vld [vmem:[#allocation2 + $0x109] sm:$0xff]
        %v907 = vld [vmem:[#allocation2 + $0x111] sm:$0xff]
        %v908 = vld [vmem:[#allocation2 + $0x121] sm:$0xff]
        %v909 = vld [vmem:[#allocation2 + $0x129] sm:$0xff]
        %v910 = vld [vmem:[#allocation2 + $0x139] sm:$0xff]
        %v911 = vld [vmem:[#allocation2 + $0x141] sm:$0xff]
        %v912 = vld [vmem:[#allocation2 + $0x151] sm:$0xff]
        %v913 = vld [vmem:[#allocation2 + $0x159] sm:$0xff]
        %v914 = vld [vmem:[#allocation2 + $0x169] sm:$0xff]
        %v915 = vld [vmem:[#allocation2 + $0x171] sm:$0xff]
        %v916 = vpack.c.bf16 %v885, %v884
        %v917 = vpack.c.bf16 %v887, %v886
        %v918 = vpack.c.bf16 %v889, %v888
        %v919 = vpack.c.bf16 %v891, %v890
        %v920 = vpack.c.bf16 %v893, %v892
        %v921 = vpack.c.bf16 %v895, %v894
        %v922 = vpack.c.bf16 %v897, %v896
        %v923 = vpack.c.bf16 %v899, %v898
        %v924 = vpack.c.bf16 %v901, %v900
        %v925 = vpack.c.bf16 %v903, %v902
        %v926 = vpack.c.bf16 %v905, %v904
        %v927 = vpack.c.bf16 %v907, %v906
        %v928 = vpack.c.bf16 %v909, %v908
        %v929 = vpack.c.bf16 %v911, %v910
        %v930 = vpack.c.bf16 %v913, %v912
        %v931 = vpack.c.bf16 %v915, %v914
        %s932 = scalar_lea.vmem %s3, 4
        %v933 = vld [vmem:[%s932] sm:$0xf]
        %v935 = vsel %vm580, %v916, 0
        %v938 = vsel %vm580, %v917, 0
        %v941 = vsel %vm580, %v918, 0
        %v944 = vsel %vm580, %v919, 0
        %v947 = vsel %vm580, %v920, 0
        %v950 = vsel %vm580, %v921, 0
        %v953 = vsel %vm580, %v922, 0
        %v956 = vsel %vm580, %v923, 0
        %v959 = vsel %vm580, %v924, 0
        %v962 = vsel %vm580, %v925, 0
        %v965 = vsel %vm580, %v926, 0
        %v968 = vsel %vm580, %v927, 0
        %v971 = vsel %vm580, %v928, 0
        %v974 = vsel %vm580, %v929, 0
        %v977 = vsel %vm580, %v930, 0
        %v980 = vsel %vm580, %v931, 0
        %vm982 = vcmask 1043456
        %v984 = vsel %vm982, %v933, 0
        %986 = vmatprep.subr.bf16.mxu0 0
        %987 = vmatpush1.bf16.msra.mxu0 0
        %988 = vmatprep.subr.bf16.mxu0 0
        %989 = vmatpush1.bf16.msra.mxu0 0
        %990 = vmatprep.subr.bf16.mxu0 0
        %991 = vmatpush1.bf16.msra.mxu0 0
        %992 = vmatprep.subr.bf16.mxu0 0
        %993 = vmatpush1.bf16.msra.mxu0 0
        %994 = vmatprep.subr.bf16.mxu0 0
        %995 = vmatpush1.bf16.msra.mxu0 0
        %996 = vmatprep.subr.bf16.mxu0 0
        %997 = vmatpush1.bf16.msra.mxu0 0
        %998 = vmatprep.subr.bf16.mxu0 0
        %999 = vmatpush1.bf16.msra.mxu0 0
        %1000 = vmatprep.subr.bf16.mxu0 0
        %1001 = vmatpush1.bf16.msra.mxu0 %v984
        %1002 = vmatprep.subr.bf16.mxu0 0
        %1003 = vmatpush2.bf16.msra.mxu0 0
        %1004 = vmatprep.subr.bf16.mxu0 0
        %1005 = vmatpush2.bf16.msra.mxu0 0
        %1006 = vmatprep.subr.bf16.mxu0 0
        %1007 = vmatpush2.bf16.msra.mxu0 0
        %1008 = vmatprep.subr.bf16.mxu0 0
        %1009 = vmatpush2.bf16.msra.mxu0 0
        %1010 = vmatprep.subr.bf16.mxu0 0
        %1011 = vmatpush2.bf16.msra.mxu0 0
        %1012 = vmatprep.subr.bf16.mxu0 0
        %1013 = vmatpush2.bf16.msra.mxu0 0
        %1014 = vmatprep.subr.bf16.mxu0 0
        %1015 = vmatpush2.bf16.msra.mxu0 0
        %1016 = vmatprep.subr.bf16.mxu0 0
        %1017 = vmatpush2.bf16.msra.mxu0 0
        %1018 = vmatprep.mubr.bf16.mxu0 0
        %1019 = vmatmul.mubr.bf16.gmra.mxu0 %v935
        %v1020 = vpop.f32.mrf.mxu0
        %v1021 = vadd.f32 0.0, %v1020
        %v1022 = vpop.f32.mrf.mxu0
        %v1023 = vpop.f32.mrf.mxu0
        %v1024 = vadd.f32 0.0, %v1023
        %v1025 = vpop.f32.mrf.mxu0
        %1026 = vmatprep.mubr.bf16.mxu0 0
        %1027 = vmatmul.mubr.bf16.gmra.mxu0 %v938
        %v1028 = vpop.f32.mrf.mxu0
        %v1029 = vadd.f32 0.0, %v1028
        %v1030 = vpop.f32.mrf.mxu0
        %v1031 = vpop.f32.mrf.mxu0
        %v1032 = vadd.f32 0.0, %v1031
        %v1033 = vpop.f32.mrf.mxu0
        %1034 = vmatprep.mubr.bf16.mxu0 0
        %1035 = vmatmul.mubr.bf16.gmra.mxu0 %v941
        %v1036 = vpop.f32.mrf.mxu0
        %v1037 = vadd.f32 0.0, %v1036
        %v1038 = vpop.f32.mrf.mxu0
        %v1039 = vpop.f32.mrf.mxu0
        %v1040 = vadd.f32 0.0, %v1039
        %v1041 = vpop.f32.mrf.mxu0
        %1042 = vmatprep.mubr.bf16.mxu0 0
        %1043 = vmatmul.mubr.bf16.gmra.mxu0 %v944
        %v1044 = vpop.f32.mrf.mxu0
        %v1045 = vadd.f32 0.0, %v1044
        %v1046 = vpop.f32.mrf.mxu0
        %v1047 = vpop.f32.mrf.mxu0
        %v1048 = vadd.f32 0.0, %v1047
        %v1049 = vpop.f32.mrf.mxu0
        %1050 = vmatprep.mubr.bf16.mxu0 0
        %1051 = vmatmul.mubr.bf16.gmra.mxu0 %v947
        %v1052 = vpop.f32.mrf.mxu0
        %v1053 = vadd.f32 0.0, %v1052
        %v1054 = vpop.f32.mrf.mxu0
        %v1055 = vpop.f32.mrf.mxu0
        %v1056 = vadd.f32 0.0, %v1055
        %v1057 = vpop.f32.mrf.mxu0
        %1058 = vmatprep.mubr.bf16.mxu0 0
        %1059 = vmatmul.mubr.bf16.gmra.mxu0 %v950
        %v1060 = vpop.f32.mrf.mxu0
        %v1061 = vadd.f32 0.0, %v1060
        %v1062 = vpop.f32.mrf.mxu0
        %v1063 = vpop.f32.mrf.mxu0
        %v1064 = vadd.f32 0.0, %v1063
        %v1065 = vpop.f32.mrf.mxu0
        %1066 = vmatprep.mubr.bf16.mxu0 0
        %1067 = vmatmul.mubr.bf16.gmra.mxu0 %v953
        %v1068 = vpop.f32.mrf.mxu0
        %v1069 = vadd.f32 0.0, %v1068
        %v1070 = vpop.f32.mrf.mxu0
        %v1071 = vpop.f32.mrf.mxu0
        %v1072 = vadd.f32 0.0, %v1071
        %v1073 = vpop.f32.mrf.mxu0
        %1074 = vmatprep.mubr.bf16.mxu0 0
        %1075 = vmatmul.mubr.bf16.gmra.mxu0 %v956
        %v1076 = vpop.f32.mrf.mxu0
        %v1077 = vadd.f32 0.0, %v1076
        %v1078 = vpop.f32.mrf.mxu0
        %v1079 = vpop.f32.mrf.mxu0
        %v1080 = vadd.f32 0.0, %v1079
        %v1081 = vpop.f32.mrf.mxu0
        %1082 = vmatprep.mubr.bf16.mxu0 0
        %1083 = vmatmul.mubr.bf16.gmra.mxu0 %v959
        %v1084 = vpop.f32.mrf.mxu0
        %v1085 = vadd.f32 0.0, %v1084
        %v1086 = vpop.f32.mrf.mxu0
        %v1087 = vpop.f32.mrf.mxu0
        %v1088 = vadd.f32 0.0, %v1087
        %v1089 = vpop.f32.mrf.mxu0
        %1090 = vmatprep.mubr.bf16.mxu0 0
        %1091 = vmatmul.mubr.bf16.gmra.mxu0 %v962
        %v1092 = vpop.f32.mrf.mxu0
        %v1093 = vadd.f32 0.0, %v1092
        %v1094 = vpop.f32.mrf.mxu0
        %v1095 = vpop.f32.mrf.mxu0
        %v1096 = vadd.f32 0.0, %v1095
        %v1097 = vpop.f32.mrf.mxu0
        %1098 = vmatprep.mubr.bf16.mxu0 0
        %1099 = vmatmul.mubr.bf16.gmra.mxu0 %v965
        %v1100 = vpop.f32.mrf.mxu0
        %v1101 = vadd.f32 0.0, %v1100
        %v1102 = vpop.f32.mrf.mxu0
        %v1103 = vpop.f32.mrf.mxu0
        %v1104 = vadd.f32 0.0, %v1103
        %v1105 = vpop.f32.mrf.mxu0
        %1106 = vmatprep.mubr.bf16.mxu0 0
        %1107 = vmatmul.mubr.bf16.gmra.mxu0 %v968
        %v1108 = vpop.f32.mrf.mxu0
        %v1109 = vadd.f32 0.0, %v1108
        %v1110 = vpop.f32.mrf.mxu0
        %v1111 = vpop.f32.mrf.mxu0
        %v1112 = vadd.f32 0.0, %v1111
        %v1113 = vpop.f32.mrf.mxu0
        %1114 = vmatprep.mubr.bf16.mxu0 0
        %1115 = vmatmul.mubr.bf16.gmra.mxu0 %v971
        %v1116 = vpop.f32.mrf.mxu0
        %v1117 = vadd.f32 0.0, %v1116
        %v1118 = vpop.f32.mrf.mxu0
        %v1119 = vpop.f32.mrf.mxu0
        %v1120 = vadd.f32 0.0, %v1119
        %v1121 = vpop.f32.mrf.mxu0
        %1122 = vmatprep.mubr.bf16.mxu0 0
        %1123 = vmatmul.mubr.bf16.gmra.mxu0 %v974
        %v1124 = vpop.f32.mrf.mxu0
        %v1125 = vadd.f32 0.0, %v1124
        %v1126 = vpop.f32.mrf.mxu0
        %v1127 = vpop.f32.mrf.mxu0
        %v1128 = vadd.f32 0.0, %v1127
        %v1129 = vpop.f32.mrf.mxu0
        %1130 = vmatprep.mubr.bf16.mxu0 0
        %1131 = vmatmul.mubr.bf16.gmra.mxu0 %v977
        %v1132 = vpop.f32.mrf.mxu0
        %v1133 = vadd.f32 0.0, %v1132
        %v1134 = vpop.f32.mrf.mxu0
        %v1135 = vpop.f32.mrf.mxu0
        %v1136 = vadd.f32 0.0, %v1135
        %v1137 = vpop.f32.mrf.mxu0
        %1138 = vmatprep.mubr.bf16.mxu0 0
        %1139 = vmatmul.mubr.bf16.gmra.mxu0 %v980
        %v1140 = vpop.f32.mrf.mxu0
        %v1141 = vadd.f32 0.0, %v1140
        %v1142 = vpop.f32.mrf.mxu0
        %v1143 = vpop.f32.mrf.mxu0
        %v1144 = vadd.f32 0.0, %v1143
        %v1145 = vpop.f32.mrf.mxu0
        %1146 = vdwg.mxu0
        %v1148 = vsel %vm580, %v867, 0
        %v1151 = vsel %vm580, %v868, 0
        %v1154 = vsel %vm580, %v869, 0
        %v1157 = vsel %vm580, %v870, 0
        %v1160 = vsel %vm580, %v871, 0
        %v1163 = vsel %vm580, %v872, 0
        %v1166 = vsel %vm580, %v873, 0
        %v1169 = vsel %vm580, %v874, 0
        %v1172 = vsel %vm580, %v875, 0
        %v1175 = vsel %vm580, %v876, 0
        %v1178 = vsel %vm580, %v877, 0
        %v1181 = vsel %vm580, %v878, 0
        %v1184 = vsel %vm580, %v879, 0
        %v1187 = vsel %vm580, %v880, 0
        %v1190 = vsel %vm580, %v881, 0
        %v1193 = vsel %vm580, %v882, 0
        %v1196 = vsel %vm982, %v883, 0
        %1198 = vmatprep.subr.bf16.mxu0 0
        %1199 = vmatpush1.bf16.msra.mxu0 0
        %1200 = vmatprep.subr.bf16.mxu0 0
        %1201 = vmatpush1.bf16.msra.mxu0 0
        %1202 = vmatprep.subr.bf16.mxu0 0
        %1203 = vmatpush1.bf16.msra.mxu0 0
        %1204 = vmatprep.subr.bf16.mxu0 0
        %1205 = vmatpush1.bf16.msra.mxu0 0
        %1206 = vmatprep.subr.bf16.mxu0 0
        %1207 = vmatpush1.bf16.msra.mxu0 0
        %1208 = vmatprep.subr.bf16.mxu0 0
        %1209 = vmatpush1.bf16.msra.mxu0 0
        %1210 = vmatprep.subr.bf16.mxu0 0
        %1211 = vmatpush1.bf16.msra.mxu0 0
        %1212 = vmatprep.subr.bf16.mxu0 0
        %1213 = vmatpush1.bf16.msra.mxu0 %v1196
        %1214 = vmatprep.subr.bf16.mxu0 0
        %1215 = vmatpush2.bf16.msra.mxu0 0
        %1216 = vmatprep.subr.bf16.mxu0 0
        %1217 = vmatpush2.bf16.msra.mxu0 0
        %1218 = vmatprep.subr.bf16.mxu0 0
        %1219 = vmatpush2.bf16.msra.mxu0 0
        %1220 = vmatprep.subr.bf16.mxu0 0
        %1221 = vmatpush2.bf16.msra.mxu0 0
        %1222 = vmatprep.subr.bf16.mxu0 0
        %1223 = vmatpush2.bf16.msra.mxu0 0
        %1224 = vmatprep.subr.bf16.mxu0 0
        %1225 = vmatpush2.bf16.msra.mxu0 0
        %1226 = vmatprep.subr.bf16.mxu0 0
        %1227 = vmatpush2.bf16.msra.mxu0 0
        %1228 = vmatprep.subr.bf16.mxu0 0
        %1229 = vmatpush2.bf16.msra.mxu0 0
        %1230 = vmatprep.mubr.bf16.mxu0 0
        %1231 = vmatmul.mubr.bf16.gmra.mxu0 %v1148
        %v1232 = vpop.f32.mrf.mxu0
        %v1233 = vadd.f32 %v1021, %v1232
        %v1234 = vpop.f32.mrf.mxu0
        %v1235 = vpop.f32.mrf.mxu0
        %v1236 = vadd.f32 %v1024, %v1235
        %v1237 = vpop.f32.mrf.mxu0
        %1238 = vmatprep.mubr.bf16.mxu0 0
        %1239 = vmatmul.mubr.bf16.gmra.mxu0 %v1151
        %v1240 = vpop.f32.mrf.mxu0
        %v1241 = vadd.f32 %v1029, %v1240
        %v1242 = vpop.f32.mrf.mxu0
        %v1243 = vpop.f32.mrf.mxu0
        %v1244 = vadd.f32 %v1032, %v1243
        %v1245 = vpop.f32.mrf.mxu0
        %1246 = vmatprep.mubr.bf16.mxu0 0
        %1247 = vmatmul.mubr.bf16.gmra.mxu0 %v1154
        %v1248 = vpop.f32.mrf.mxu0
        %v1249 = vadd.f32 %v1037, %v1248
        %v1250 = vpop.f32.mrf.mxu0
        %v1251 = vpop.f32.mrf.mxu0
        %v1252 = vadd.f32 %v1040, %v1251
        %v1253 = vpop.f32.mrf.mxu0
        %1254 = vmatprep.mubr.bf16.mxu0 0
        %1255 = vmatmul.mubr.bf16.gmra.mxu0 %v1157
        %v1256 = vpop.f32.mrf.mxu0
        %v1257 = vadd.f32 %v1045, %v1256
        %v1258 = vpop.f32.mrf.mxu0
        %v1259 = vpop.f32.mrf.mxu0
        %v1260 = vadd.f32 %v1048, %v1259
        %v1261 = vpop.f32.mrf.mxu0
        %1262 = vmatprep.mubr.bf16.mxu0 0
        %1263 = vmatmul.mubr.bf16.gmra.mxu0 %v1160
        %v1264 = vpop.f32.mrf.mxu0
        %v1265 = vadd.f32 %v1053, %v1264
        %v1266 = vpop.f32.mrf.mxu0
        %v1267 = vpop.f32.mrf.mxu0
        %v1268 = vadd.f32 %v1056, %v1267
        %v1269 = vpop.f32.mrf.mxu0
        %1270 = vmatprep.mubr.bf16.mxu0 0
        %1271 = vmatmul.mubr.bf16.gmra.mxu0 %v1163
        %v1272 = vpop.f32.mrf.mxu0
        %v1273 = vadd.f32 %v1061, %v1272
        %v1274 = vpop.f32.mrf.mxu0
        %v1275 = vpop.f32.mrf.mxu0
        %v1276 = vadd.f32 %v1064, %v1275
        %v1277 = vpop.f32.mrf.mxu0
        %1278 = vmatprep.mubr.bf16.mxu0 0
        %1279 = vmatmul.mubr.bf16.gmra.mxu0 %v1166
        %v1280 = vpop.f32.mrf.mxu0
        %v1281 = vadd.f32 %v1069, %v1280
        %v1282 = vpop.f32.mrf.mxu0
        %v1283 = vpop.f32.mrf.mxu0
        %v1284 = vadd.f32 %v1072, %v1283
        %v1285 = vpop.f32.mrf.mxu0
        %1286 = vmatprep.mubr.bf16.mxu0 0
        %1287 = vmatmul.mubr.bf16.gmra.mxu0 %v1169
        %v1288 = vpop.f32.mrf.mxu0
        %v1289 = vadd.f32 %v1077, %v1288
        %v1290 = vpop.f32.mrf.mxu0
        %v1291 = vpop.f32.mrf.mxu0
        %v1292 = vadd.f32 %v1080, %v1291
        %v1293 = vpop.f32.mrf.mxu0
        %1294 = vmatprep.mubr.bf16.mxu0 0
        %1295 = vmatmul.mubr.bf16.gmra.mxu0 %v1172
        %v1296 = vpop.f32.mrf.mxu0
        %v1297 = vadd.f32 %v1085, %v1296
        %v1298 = vpop.f32.mrf.mxu0
        %v1299 = vpop.f32.mrf.mxu0
        %v1300 = vadd.f32 %v1088, %v1299
        %v1301 = vpop.f32.mrf.mxu0
        %1302 = vmatprep.mubr.bf16.mxu0 0
        %1303 = vmatmul.mubr.bf16.gmra.mxu0 %v1175
        %v1304 = vpop.f32.mrf.mxu0
        %v1305 = vadd.f32 %v1093, %v1304
        %v1306 = vpop.f32.mrf.mxu0
        %v1307 = vpop.f32.mrf.mxu0
        %v1308 = vadd.f32 %v1096, %v1307
        %v1309 = vpop.f32.mrf.mxu0
        %1310 = vmatprep.mubr.bf16.mxu0 0
        %1311 = vmatmul.mubr.bf16.gmra.mxu0 %v1178
        %v1312 = vpop.f32.mrf.mxu0
        %v1313 = vadd.f32 %v1101, %v1312
        %v1314 = vpop.f32.mrf.mxu0
        %v1315 = vpop.f32.mrf.mxu0
        %v1316 = vadd.f32 %v1104, %v1315
        %v1317 = vpop.f32.mrf.mxu0
        %1318 = vmatprep.mubr.bf16.mxu0 0
        %1319 = vmatmul.mubr.bf16.gmra.mxu0 %v1181
        %v1320 = vpop.f32.mrf.mxu0
        %v1321 = vadd.f32 %v1109, %v1320
        %v1322 = vpop.f32.mrf.mxu0
        %v1323 = vpop.f32.mrf.mxu0
        %v1324 = vadd.f32 %v1112, %v1323
        %v1325 = vpop.f32.mrf.mxu0
        %1326 = vmatprep.mubr.bf16.mxu0 0
        %1327 = vmatmul.mubr.bf16.gmra.mxu0 %v1184
        %v1328 = vpop.f32.mrf.mxu0
        %v1329 = vadd.f32 %v1117, %v1328
        %v1330 = vpop.f32.mrf.mxu0
        %v1331 = vpop.f32.mrf.mxu0
        %v1332 = vadd.f32 %v1120, %v1331
        %v1333 = vpop.f32.mrf.mxu0
        %1334 = vmatprep.mubr.bf16.mxu0 0
        %1335 = vmatmul.mubr.bf16.gmra.mxu0 %v1187
        %v1336 = vpop.f32.mrf.mxu0
        %v1337 = vadd.f32 %v1125, %v1336
        %v1338 = vpop.f32.mrf.mxu0
        %v1339 = vpop.f32.mrf.mxu0
        %v1340 = vadd.f32 %v1128, %v1339
        %v1341 = vpop.f32.mrf.mxu0
        %1342 = vmatprep.mubr.bf16.mxu0 0
        %1343 = vmatmul.mubr.bf16.gmra.mxu0 %v1190
        %v1344 = vpop.f32.mrf.mxu0
        %v1345 = vadd.f32 %v1133, %v1344
        %v1346 = vpop.f32.mrf.mxu0
        %v1347 = vpop.f32.mrf.mxu0
        %v1348 = vadd.f32 %v1136, %v1347
        %v1349 = vpop.f32.mrf.mxu0
        %1350 = vmatprep.mubr.bf16.mxu0 0
        %1351 = vmatmul.mubr.bf16.gmra.mxu0 %v1193
        %v1352 = vpop.f32.mrf.mxu0
        %v1353 = vadd.f32 %v1141, %v1352
        %v1354 = vpop.f32.mrf.mxu0
        %v1355 = vpop.f32.mrf.mxu0
        %v1356 = vadd.f32 %v1144, %v1355
        %v1357 = vpop.f32.mrf.mxu0
        %1358 = vdwg.mxu0
        %v1359 = vld [vmem:[#allocation2 + $0x2] sm:$0xff]
        %v1360 = vld [vmem:[#allocation2 + $0xa] sm:$0xff]
        %v1361 = vld [vmem:[#allocation2 + $0x1a] sm:$0xff]
        %v1362 = vld [vmem:[#allocation2 + $0x22] sm:$0xff]
        %v1363 = vld [vmem:[#allocation2 + $0x32] sm:$0xff]
        %v1364 = vld [vmem:[#allocation2 + $0x3a] sm:$0xff]
        %v1365 = vld [vmem:[#allocation2 + $0x4a] sm:$0xff]
        %v1366 = vld [vmem:[#allocation2 + $0x52] sm:$0xff]
        %v1367 = vld [vmem:[#allocation2 + $0x62] sm:$0xff]
        %v1368 = vld [vmem:[#allocation2 + $0x6a] sm:$0xff]
        %v1369 = vld [vmem:[#allocation2 + $0x7a] sm:$0xff]
        %v1370 = vld [vmem:[#allocation2 + $0x82] sm:$0xff]
        %v1371 = vld [vmem:[#allocation2 + $0x92] sm:$0xff]
        %v1372 = vld [vmem:[#allocation2 + $0x9a] sm:$0xff]
        %v1373 = vld [vmem:[#allocation2 + $0xaa] sm:$0xff]
        %v1374 = vld [vmem:[#allocation2 + $0xb2] sm:$0xff]
        %v1375 = vld [vmem:[#allocation2 + $0xc2] sm:$0xff]
        %v1376 = vld [vmem:[#allocation2 + $0xca] sm:$0xff]
        %v1377 = vld [vmem:[#allocation2 + $0xda] sm:$0xff]
        %v1378 = vld [vmem:[#allocation2 + $0xe2] sm:$0xff]
        %v1379 = vld [vmem:[#allocation2 + $0xf2] sm:$0xff]
        %v1380 = vld [vmem:[#allocation2 + $0xfa] sm:$0xff]
        %v1381 = vld [vmem:[#allocation2 + $0x10a] sm:$0xff]
        %v1382 = vld [vmem:[#allocation2 + $0x112] sm:$0xff]
        %v1383 = vld [vmem:[#allocation2 + $0x122] sm:$0xff]
        %v1384 = vld [vmem:[#allocation2 + $0x12a] sm:$0xff]
        %v1385 = vld [vmem:[#allocation2 + $0x13a] sm:$0xff]
        %v1386 = vld [vmem:[#allocation2 + $0x142] sm:$0xff]
        %v1387 = vld [vmem:[#allocation2 + $0x152] sm:$0xff]
        %v1388 = vld [vmem:[#allocation2 + $0x15a] sm:$0xff]
        %v1389 = vld [vmem:[#allocation2 + $0x16a] sm:$0xff]
        %v1390 = vld [vmem:[#allocation2 + $0x172] sm:$0xff]
        %v1391 = vpack.c.bf16 %v1360, %v1359
        %v1392 = vpack.c.bf16 %v1362, %v1361
        %v1393 = vpack.c.bf16 %v1364, %v1363
        %v1394 = vpack.c.bf16 %v1366, %v1365
        %v1395 = vpack.c.bf16 %v1368, %v1367
        %v1396 = vpack.c.bf16 %v1370, %v1369
        %v1397 = vpack.c.bf16 %v1372, %v1371
        %v1398 = vpack.c.bf16 %v1374, %v1373
        %v1399 = vpack.c.bf16 %v1376, %v1375
        %v1400 = vpack.c.bf16 %v1378, %v1377
        %v1401 = vpack.c.bf16 %v1380, %v1379
        %v1402 = vpack.c.bf16 %v1382, %v1381
        %v1403 = vpack.c.bf16 %v1384, %v1383
        %v1404 = vpack.c.bf16 %v1386, %v1385
        %v1405 = vpack.c.bf16 %v1388, %v1387
        %v1406 = vpack.c.bf16 %v1390, %v1389
        %s1407 = scalar_lea.vmem %s3, 8
        %v1408 = vld [vmem:[%s1407] sm:$0xf]
        %v1410 = vsel %vm580, %v1391, 0
        %v1413 = vsel %vm580, %v1392, 0
        %v1416 = vsel %vm580, %v1393, 0
        %v1419 = vsel %vm580, %v1394, 0
        %v1422 = vsel %vm580, %v1395, 0
        %v1425 = vsel %vm580, %v1396, 0
        %v1428 = vsel %vm580, %v1397, 0
        %v1431 = vsel %vm580, %v1398, 0
        %v1434 = vsel %vm580, %v1399, 0
        %v1437 = vsel %vm580, %v1400, 0
        %v1440 = vsel %vm580, %v1401, 0
        %v1443 = vsel %vm580, %v1402, 0
        %v1446 = vsel %vm580, %v1403, 0
        %v1449 = vsel %vm580, %v1404, 0
        %v1452 = vsel %vm580, %v1405, 0
        %v1455 = vsel %vm580, %v1406, 0
        %v1458 = vsel %vm982, %v1408, 0
        %1460 = vmatprep.subr.bf16.mxu0 0
        %1461 = vmatpush1.bf16.msra.mxu0 0
        %1462 = vmatprep.subr.bf16.mxu0 0
        %1463 = vmatpush1.bf16.msra.mxu0 0
        %1464 = vmatprep.subr.bf16.mxu0 0
        %1465 = vmatpush1.bf16.msra.mxu0 0
        %1466 = vmatprep.subr.bf16.mxu0 0
        %1467 = vmatpush1.bf16.msra.mxu0 0
        %1468 = vmatprep.subr.bf16.mxu0 0
        %1469 = vmatpush1.bf16.msra.mxu0 0
        %1470 = vmatprep.subr.bf16.mxu0 0
        %1471 = vmatpush1.bf16.msra.mxu0 0
        %1472 = vmatprep.subr.bf16.mxu0 0
        %1473 = vmatpush1.bf16.msra.mxu0 0
        %1474 = vmatprep.subr.bf16.mxu0 0
        %1475 = vmatpush1.bf16.msra.mxu0 %v1458
        %1476 = vmatprep.subr.bf16.mxu0 0
        %1477 = vmatpush2.bf16.msra.mxu0 0
        %1478 = vmatprep.subr.bf16.mxu0 0
        %1479 = vmatpush2.bf16.msra.mxu0 0
        %1480 = vmatprep.subr.bf16.mxu0 0
        %1481 = vmatpush2.bf16.msra.mxu0 0
        %1482 = vmatprep.subr.bf16.mxu0 0
        %1483 = vmatpush2.bf16.msra.mxu0 0
        %1484 = vmatprep.subr.bf16.mxu0 0
        %1485 = vmatpush2.bf16.msra.mxu0 0
        %1486 = vmatprep.subr.bf16.mxu0 0
        %1487 = vmatpush2.bf16.msra.mxu0 0
        %1488 = vmatprep.subr.bf16.mxu0 0
        %1489 = vmatpush2.bf16.msra.mxu0 0
        %1490 = vmatprep.subr.bf16.mxu0 0
        %1491 = vmatpush2.bf16.msra.mxu0 0
        %1492 = vmatprep.mubr.bf16.mxu0 0
        %1493 = vmatmul.mubr.bf16.gmra.mxu0 %v1410
        %v1494 = vpop.f32.mrf.mxu0
        %v1495 = vadd.f32 0.0, %v1494
        %v1496 = vpop.f32.mrf.mxu0
        %v1497 = vpop.f32.mrf.mxu0
        %v1498 = vadd.f32 0.0, %v1497
        %v1499 = vpop.f32.mrf.mxu0
        %1500 = vmatprep.mubr.bf16.mxu0 0
        %1501 = vmatmul.mubr.bf16.gmra.mxu0 %v1413
        %v1502 = vpop.f32.mrf.mxu0
        %v1503 = vadd.f32 0.0, %v1502
        %v1504 = vpop.f32.mrf.mxu0
        %v1505 = vpop.f32.mrf.mxu0
        %v1506 = vadd.f32 0.0, %v1505
        %v1507 = vpop.f32.mrf.mxu0
        %1508 = vmatprep.mubr.bf16.mxu0 0
        %1509 = vmatmul.mubr.bf16.gmra.mxu0 %v1416
        %v1510 = vpop.f32.mrf.mxu0
        %v1511 = vadd.f32 0.0, %v1510
        %v1512 = vpop.f32.mrf.mxu0
        %v1513 = vpop.f32.mrf.mxu0
        %v1514 = vadd.f32 0.0, %v1513
        %v1515 = vpop.f32.mrf.mxu0
        %1516 = vmatprep.mubr.bf16.mxu0 0
        %1517 = vmatmul.mubr.bf16.gmra.mxu0 %v1419
        %v1518 = vpop.f32.mrf.mxu0
        %v1519 = vadd.f32 0.0, %v1518
        %v1520 = vpop.f32.mrf.mxu0
        %v1521 = vpop.f32.mrf.mxu0
        %v1522 = vadd.f32 0.0, %v1521
        %v1523 = vpop.f32.mrf.mxu0
        %1524 = vmatprep.mubr.bf16.mxu0 0
        %1525 = vmatmul.mubr.bf16.gmra.mxu0 %v1422
        %v1526 = vpop.f32.mrf.mxu0
        %v1527 = vadd.f32 0.0, %v1526
        %v1528 = vpop.f32.mrf.mxu0
        %v1529 = vpop.f32.mrf.mxu0
        %v1530 = vadd.f32 0.0, %v1529
        %v1531 = vpop.f32.mrf.mxu0
        %1532 = vmatprep.mubr.bf16.mxu0 0
        %1533 = vmatmul.mubr.bf16.gmra.mxu0 %v1425
        %v1534 = vpop.f32.mrf.mxu0
        %v1535 = vadd.f32 0.0, %v1534
        %v1536 = vpop.f32.mrf.mxu0
        %v1537 = vpop.f32.mrf.mxu0
        %v1538 = vadd.f32 0.0, %v1537
        %v1539 = vpop.f32.mrf.mxu0
        %1540 = vmatprep.mubr.bf16.mxu0 0
        %1541 = vmatmul.mubr.bf16.gmra.mxu0 %v1428
        %v1542 = vpop.f32.mrf.mxu0
        %v1543 = vadd.f32 0.0, %v1542
        %v1544 = vpop.f32.mrf.mxu0
        %v1545 = vpop.f32.mrf.mxu0
        %v1546 = vadd.f32 0.0, %v1545
        %v1547 = vpop.f32.mrf.mxu0
        %1548 = vmatprep.mubr.bf16.mxu0 0
        %1549 = vmatmul.mubr.bf16.gmra.mxu0 %v1431
        %v1550 = vpop.f32.mrf.mxu0
        %v1551 = vadd.f32 0.0, %v1550
        %v1552 = vpop.f32.mrf.mxu0
        %v1553 = vpop.f32.mrf.mxu0
        %v1554 = vadd.f32 0.0, %v1553
        %v1555 = vpop.f32.mrf.mxu0
        %1556 = vmatprep.mubr.bf16.mxu0 0
        %1557 = vmatmul.mubr.bf16.gmra.mxu0 %v1434
        %v1558 = vpop.f32.mrf.mxu0
        %v1559 = vadd.f32 0.0, %v1558
        %v1560 = vpop.f32.mrf.mxu0
        %v1561 = vpop.f32.mrf.mxu0
        %v1562 = vadd.f32 0.0, %v1561
        %v1563 = vpop.f32.mrf.mxu0
        %1564 = vmatprep.mubr.bf16.mxu0 0
        %1565 = vmatmul.mubr.bf16.gmra.mxu0 %v1437
        %v1566 = vpop.f32.mrf.mxu0
        %v1567 = vadd.f32 0.0, %v1566
        %v1568 = vpop.f32.mrf.mxu0
        %v1569 = vpop.f32.mrf.mxu0
        %v1570 = vadd.f32 0.0, %v1569
        %v1571 = vpop.f32.mrf.mxu0
        %1572 = vmatprep.mubr.bf16.mxu0 0
        %1573 = vmatmul.mubr.bf16.gmra.mxu0 %v1440
        %v1574 = vpop.f32.mrf.mxu0
        %v1575 = vadd.f32 0.0, %v1574
        %v1576 = vpop.f32.mrf.mxu0
        %v1577 = vpop.f32.mrf.mxu0
        %v1578 = vadd.f32 0.0, %v1577
        %v1579 = vpop.f32.mrf.mxu0
        %1580 = vmatprep.mubr.bf16.mxu0 0
        %1581 = vmatmul.mubr.bf16.gmra.mxu0 %v1443
        %v1582 = vpop.f32.mrf.mxu0
        %v1583 = vadd.f32 0.0, %v1582
        %v1584 = vpop.f32.mrf.mxu0
        %v1585 = vpop.f32.mrf.mxu0
        %v1586 = vadd.f32 0.0, %v1585
        %v1587 = vpop.f32.mrf.mxu0
        %1588 = vmatprep.mubr.bf16.mxu0 0
        %1589 = vmatmul.mubr.bf16.gmra.mxu0 %v1446
        %v1590 = vpop.f32.mrf.mxu0
        %v1591 = vadd.f32 0.0, %v1590
        %v1592 = vpop.f32.mrf.mxu0
        %v1593 = vpop.f32.mrf.mxu0
        %v1594 = vadd.f32 0.0, %v1593
        %v1595 = vpop.f32.mrf.mxu0
        %1596 = vmatprep.mubr.bf16.mxu0 0
        %1597 = vmatmul.mubr.bf16.gmra.mxu0 %v1449
        %v1598 = vpop.f32.mrf.mxu0
        %v1599 = vadd.f32 0.0, %v1598
        %v1600 = vpop.f32.mrf.mxu0
        %v1601 = vpop.f32.mrf.mxu0
        %v1602 = vadd.f32 0.0, %v1601
        %v1603 = vpop.f32.mrf.mxu0
        %1604 = vmatprep.mubr.bf16.mxu0 0
        %1605 = vmatmul.mubr.bf16.gmra.mxu0 %v1452
        %v1606 = vpop.f32.mrf.mxu0
        %v1607 = vadd.f32 0.0, %v1606
        %v1608 = vpop.f32.mrf.mxu0
        %v1609 = vpop.f32.mrf.mxu0
        %v1610 = vadd.f32 0.0, %v1609
        %v1611 = vpop.f32.mrf.mxu0
        %1612 = vmatprep.mubr.bf16.mxu0 0
        %1613 = vmatmul.mubr.bf16.gmra.mxu0 %v1455
        %v1614 = vpop.f32.mrf.mxu0
        %v1615 = vadd.f32 0.0, %v1614
        %v1616 = vpop.f32.mrf.mxu0
        %v1617 = vpop.f32.mrf.mxu0
        %v1618 = vadd.f32 0.0, %v1617
        %v1619 = vpop.f32.mrf.mxu0
        %1620 = vdwg.mxu0
        %v1621 = vadd.f32 %v1233, %v1495
        %v1622 = vadd.f32 %v1236, %v1498
        %v1623 = vadd.f32 %v1241, %v1503
        %v1624 = vadd.f32 %v1244, %v1506
        %v1625 = vadd.f32 %v1249, %v1511
        %v1626 = vadd.f32 %v1252, %v1514
        %v1627 = vadd.f32 %v1257, %v1519
        %v1628 = vadd.f32 %v1260, %v1522
        %v1629 = vadd.f32 %v1265, %v1527
        %v1630 = vadd.f32 %v1268, %v1530
        %v1631 = vadd.f32 %v1273, %v1535
        %v1632 = vadd.f32 %v1276, %v1538
        %v1633 = vadd.f32 %v1281, %v1543
        %v1634 = vadd.f32 %v1284, %v1546
        %v1635 = vadd.f32 %v1289, %v1551
        %v1636 = vadd.f32 %v1292, %v1554
        %v1637 = vadd.f32 %v1297, %v1559
        %v1638 = vadd.f32 %v1300, %v1562
        %v1639 = vadd.f32 %v1305, %v1567
        %v1640 = vadd.f32 %v1308, %v1570
        %v1641 = vadd.f32 %v1313, %v1575
        %v1642 = vadd.f32 %v1316, %v1578
        %v1643 = vadd.f32 %v1321, %v1583
        %v1644 = vadd.f32 %v1324, %v1586
        %v1645 = vadd.f32 %v1329, %v1591
        %v1646 = vadd.f32 %v1332, %v1594
        %v1647 = vadd.f32 %v1337, %v1599
        %v1648 = vadd.f32 %v1340, %v1602
        %v1649 = vadd.f32 %v1345, %v1607
        %v1650 = vadd.f32 %v1348, %v1610
        %v1651 = vadd.f32 %v1353, %v1615
        %v1652 = vadd.f32 %v1356, %v1618
        %v1653 = vld [vmem:[#allocation2 + $0x3] sm:$0xff]
        %v1654 = vld [vmem:[#allocation2 + $0xb] sm:$0xff]
        %v1655 = vld [vmem:[#allocation2 + $0x1b] sm:$0xff]
        %v1656 = vld [vmem:[#allocation2 + $0x23] sm:$0xff]
        %v1657 = vld [vmem:[#allocation2 + $0x33] sm:$0xff]
        %v1658 = vld [vmem:[#allocation2 + $0x3b] sm:$0xff]
        %v1659 = vld [vmem:[#allocation2 + $0x4b] sm:$0xff]
        %v1660 = vld [vmem:[#allocation2 + $0x53] sm:$0xff]
        %v1661 = vld [vmem:[#allocation2 + $0x63] sm:$0xff]
        %v1662 = vld [vmem:[#allocation2 + $0x6b] sm:$0xff]
        %v1663 = vld [vmem:[#allocation2 + $0x7b] sm:$0xff]
        %v1664 = vld [vmem:[#allocation2 + $0x83] sm:$0xff]
        %v1665 = vld [vmem:[#allocation2 + $0x93] sm:$0xff]
        %v1666 = vld [vmem:[#allocation2 + $0x9b] sm:$0xff]
        %v1667 = vld [vmem:[#allocation2 + $0xab] sm:$0xff]
        %v1668 = vld [vmem:[#allocation2 + $0xb3] sm:$0xff]
        %v1669 = vld [vmem:[#allocation2 + $0xc3] sm:$0xff]
        %v1670 = vld [vmem:[#allocation2 + $0xcb] sm:$0xff]
        %v1671 = vld [vmem:[#allocation2 + $0xdb] sm:$0xff]
        %v1672 = vld [vmem:[#allocation2 + $0xe3] sm:$0xff]
        %v1673 = vld [vmem:[#allocation2 + $0xf3] sm:$0xff]
        %v1674 = vld [vmem:[#allocation2 + $0xfb] sm:$0xff]
        %v1675 = vld [vmem:[#allocation2 + $0x10b] sm:$0xff]
        %v1676 = vld [vmem:[#allocation2 + $0x113] sm:$0xff]
        %v1677 = vld [vmem:[#allocation2 + $0x123] sm:$0xff]
        %v1678 = vld [vmem:[#allocation2 + $0x12b] sm:$0xff]
        %v1679 = vld [vmem:[#allocation2 + $0x13b] sm:$0xff]
        %v1680 = vld [vmem:[#allocation2 + $0x143] sm:$0xff]
        %v1681 = vld [vmem:[#allocation2 + $0x153] sm:$0xff]
        %v1682 = vld [vmem:[#allocation2 + $0x15b] sm:$0xff]
        %v1683 = vld [vmem:[#allocation2 + $0x16b] sm:$0xff]
        %v1684 = vld [vmem:[#allocation2 + $0x173] sm:$0xff]
        %v1685 = vpack.c.bf16 %v1654, %v1653
        %v1686 = vpack.c.bf16 %v1656, %v1655
        %v1687 = vpack.c.bf16 %v1658, %v1657
        %v1688 = vpack.c.bf16 %v1660, %v1659
        %v1689 = vpack.c.bf16 %v1662, %v1661
        %v1690 = vpack.c.bf16 %v1664, %v1663
        %v1691 = vpack.c.bf16 %v1666, %v1665
        %v1692 = vpack.c.bf16 %v1668, %v1667
        %v1693 = vpack.c.bf16 %v1670, %v1669
        %v1694 = vpack.c.bf16 %v1672, %v1671
        %v1695 = vpack.c.bf16 %v1674, %v1673
        %v1696 = vpack.c.bf16 %v1676, %v1675
        %v1697 = vpack.c.bf16 %v1678, %v1677
        %v1698 = vpack.c.bf16 %v1680, %v1679
        %v1699 = vpack.c.bf16 %v1682, %v1681
        %v1700 = vpack.c.bf16 %v1684, %v1683
        %s1701 = scalar_lea.vmem %s3, 12
        %v1702 = vld [vmem:[%s1701] sm:$0xf]
        %v1704 = vsel %vm580, %v1685, 0
        %v1707 = vsel %vm580, %v1686, 0
        %v1710 = vsel %vm580, %v1687, 0
        %v1713 = vsel %vm580, %v1688, 0
        %v1716 = vsel %vm580, %v1689, 0
        %v1719 = vsel %vm580, %v1690, 0
        %v1722 = vsel %vm580, %v1691, 0
        %v1725 = vsel %vm580, %v1692, 0
        %v1728 = vsel %vm580, %v1693, 0
        %v1731 = vsel %vm580, %v1694, 0
        %v1734 = vsel %vm580, %v1695, 0
        %v1737 = vsel %vm580, %v1696, 0
        %v1740 = vsel %vm580, %v1697, 0
        %v1743 = vsel %vm580, %v1698, 0
        %v1746 = vsel %vm580, %v1699, 0
        %v1749 = vsel %vm580, %v1700, 0
        %v1752 = vsel %vm982, %v1702, 0
        %1754 = vmatprep.subr.bf16.mxu0 0
        %1755 = vmatpush1.bf16.msra.mxu0 0
        %1756 = vmatprep.subr.bf16.mxu0 0
        %1757 = vmatpush1.bf16.msra.mxu0 0
        %1758 = vmatprep.subr.bf16.mxu0 0
        %1759 = vmatpush1.bf16.msra.mxu0 0
        %1760 = vmatprep.subr.bf16.mxu0 0
        %1761 = vmatpush1.bf16.msra.mxu0 0
        %1762 = vmatprep.subr.bf16.mxu0 0
        %1763 = vmatpush1.bf16.msra.mxu0 0
        %1764 = vmatprep.subr.bf16.mxu0 0
        %1765 = vmatpush1.bf16.msra.mxu0 0
        %1766 = vmatprep.subr.bf16.mxu0 0
        %1767 = vmatpush1.bf16.msra.mxu0 0
        %1768 = vmatprep.subr.bf16.mxu0 0
        %1769 = vmatpush1.bf16.msra.mxu0 %v1752
        %1770 = vmatprep.subr.bf16.mxu0 0
        %1771 = vmatpush2.bf16.msra.mxu0 0
        %1772 = vmatprep.subr.bf16.mxu0 0
        %1773 = vmatpush2.bf16.msra.mxu0 0
        %1774 = vmatprep.subr.bf16.mxu0 0
        %1775 = vmatpush2.bf16.msra.mxu0 0
        %1776 = vmatprep.subr.bf16.mxu0 0
        %1777 = vmatpush2.bf16.msra.mxu0 0
        %1778 = vmatprep.subr.bf16.mxu0 0
        %1779 = vmatpush2.bf16.msra.mxu0 0
        %1780 = vmatprep.subr.bf16.mxu0 0
        %1781 = vmatpush2.bf16.msra.mxu0 0
        %1782 = vmatprep.subr.bf16.mxu0 0
        %1783 = vmatpush2.bf16.msra.mxu0 0
        %1784 = vmatprep.subr.bf16.mxu0 0
        %1785 = vmatpush2.bf16.msra.mxu0 0
        %1786 = vmatprep.mubr.bf16.mxu0 0
        %1787 = vmatmul.mubr.bf16.gmra.mxu0 %v1704
        %v1788 = vpop.f32.mrf.mxu0
        %v1789 = vadd.f32 0.0, %v1788
        %v1790 = vpop.f32.mrf.mxu0
        %v1791 = vpop.f32.mrf.mxu0
        %v1792 = vadd.f32 0.0, %v1791
        %v1793 = vpop.f32.mrf.mxu0
        %1794 = vmatprep.mubr.bf16.mxu0 0
        %1795 = vmatmul.mubr.bf16.gmra.mxu0 %v1707
        %v1796 = vpop.f32.mrf.mxu0
        %v1797 = vadd.f32 0.0, %v1796
        %v1798 = vpop.f32.mrf.mxu0
        %v1799 = vpop.f32.mrf.mxu0
        %v1800 = vadd.f32 0.0, %v1799
        %v1801 = vpop.f32.mrf.mxu0
        %1802 = vmatprep.mubr.bf16.mxu0 0
        %1803 = vmatmul.mubr.bf16.gmra.mxu0 %v1710
        %v1804 = vpop.f32.mrf.mxu0
        %v1805 = vadd.f32 0.0, %v1804
        %v1806 = vpop.f32.mrf.mxu0
        %v1807 = vpop.f32.mrf.mxu0
        %v1808 = vadd.f32 0.0, %v1807
        %v1809 = vpop.f32.mrf.mxu0
        %1810 = vmatprep.mubr.bf16.mxu0 0
        %1811 = vmatmul.mubr.bf16.gmra.mxu0 %v1713
        %v1812 = vpop.f32.mrf.mxu0
        %v1813 = vadd.f32 0.0, %v1812
        %v1814 = vpop.f32.mrf.mxu0
        %v1815 = vpop.f32.mrf.mxu0
        %v1816 = vadd.f32 0.0, %v1815
        %v1817 = vpop.f32.mrf.mxu0
        %1818 = vmatprep.mubr.bf16.mxu0 0
        %1819 = vmatmul.mubr.bf16.gmra.mxu0 %v1716
        %v1820 = vpop.f32.mrf.mxu0
        %v1821 = vadd.f32 0.0, %v1820
        %v1822 = vpop.f32.mrf.mxu0
        %v1823 = vpop.f32.mrf.mxu0
        %v1824 = vadd.f32 0.0, %v1823
        %v1825 = vpop.f32.mrf.mxu0
        %1826 = vmatprep.mubr.bf16.mxu0 0
        %1827 = vmatmul.mubr.bf16.gmra.mxu0 %v1719
        %v1828 = vpop.f32.mrf.mxu0
        %v1829 = vadd.f32 0.0, %v1828
        %v1830 = vpop.f32.mrf.mxu0
        %v1831 = vpop.f32.mrf.mxu0
        %v1832 = vadd.f32 0.0, %v1831
        %v1833 = vpop.f32.mrf.mxu0
        %1834 = vmatprep.mubr.bf16.mxu0 0
        %1835 = vmatmul.mubr.bf16.gmra.mxu0 %v1722
        %v1836 = vpop.f32.mrf.mxu0
        %v1837 = vadd.f32 0.0, %v1836
        %v1838 = vpop.f32.mrf.mxu0
        %v1839 = vpop.f32.mrf.mxu0
        %v1840 = vadd.f32 0.0, %v1839
        %v1841 = vpop.f32.mrf.mxu0
        %1842 = vmatprep.mubr.bf16.mxu0 0
        %1843 = vmatmul.mubr.bf16.gmra.mxu0 %v1725
        %v1844 = vpop.f32.mrf.mxu0
        %v1845 = vadd.f32 0.0, %v1844
        %v1846 = vpop.f32.mrf.mxu0
        %v1847 = vpop.f32.mrf.mxu0
        %v1848 = vadd.f32 0.0, %v1847
        %v1849 = vpop.f32.mrf.mxu0
        %1850 = vmatprep.mubr.bf16.mxu0 0
        %1851 = vmatmul.mubr.bf16.gmra.mxu0 %v1728
        %v1852 = vpop.f32.mrf.mxu0
        %v1853 = vadd.f32 0.0, %v1852
        %v1854 = vpop.f32.mrf.mxu0
        %v1855 = vpop.f32.mrf.mxu0
        %v1856 = vadd.f32 0.0, %v1855
        %v1857 = vpop.f32.mrf.mxu0
        %1858 = vmatprep.mubr.bf16.mxu0 0
        %1859 = vmatmul.mubr.bf16.gmra.mxu0 %v1731
        %v1860 = vpop.f32.mrf.mxu0
        %v1861 = vadd.f32 0.0, %v1860
        %v1862 = vpop.f32.mrf.mxu0
        %v1863 = vpop.f32.mrf.mxu0
        %v1864 = vadd.f32 0.0, %v1863
        %v1865 = vpop.f32.mrf.mxu0
        %1866 = vmatprep.mubr.bf16.mxu0 0
        %1867 = vmatmul.mubr.bf16.gmra.mxu0 %v1734
        %v1868 = vpop.f32.mrf.mxu0
        %v1869 = vadd.f32 0.0, %v1868
        %v1870 = vpop.f32.mrf.mxu0
        %v1871 = vpop.f32.mrf.mxu0
        %v1872 = vadd.f32 0.0, %v1871
        %v1873 = vpop.f32.mrf.mxu0
        %1874 = vmatprep.mubr.bf16.mxu0 0
        %1875 = vmatmul.mubr.bf16.gmra.mxu0 %v1737
        %v1876 = vpop.f32.mrf.mxu0
        %v1877 = vadd.f32 0.0, %v1876
        %v1878 = vpop.f32.mrf.mxu0
        %v1879 = vpop.f32.mrf.mxu0
        %v1880 = vadd.f32 0.0, %v1879
        %v1881 = vpop.f32.mrf.mxu0
        %1882 = vmatprep.mubr.bf16.mxu0 0
        %1883 = vmatmul.mubr.bf16.gmra.mxu0 %v1740
        %v1884 = vpop.f32.mrf.mxu0
        %v1885 = vadd.f32 0.0, %v1884
        %v1886 = vpop.f32.mrf.mxu0
        %v1887 = vpop.f32.mrf.mxu0
        %v1888 = vadd.f32 0.0, %v1887
        %v1889 = vpop.f32.mrf.mxu0
        %1890 = vmatprep.mubr.bf16.mxu0 0
        %1891 = vmatmul.mubr.bf16.gmra.mxu0 %v1743
        %v1892 = vpop.f32.mrf.mxu0
        %v1893 = vadd.f32 0.0, %v1892
        %v1894 = vpop.f32.mrf.mxu0
        %v1895 = vpop.f32.mrf.mxu0
        %v1896 = vadd.f32 0.0, %v1895
        %v1897 = vpop.f32.mrf.mxu0
        %1898 = vmatprep.mubr.bf16.mxu0 0
        %1899 = vmatmul.mubr.bf16.gmra.mxu0 %v1746
        %v1900 = vpop.f32.mrf.mxu0
        %v1901 = vadd.f32 0.0, %v1900
        %v1902 = vpop.f32.mrf.mxu0
        %v1903 = vpop.f32.mrf.mxu0
        %v1904 = vadd.f32 0.0, %v1903
        %v1905 = vpop.f32.mrf.mxu0
        %1906 = vmatprep.mubr.bf16.mxu0 0
        %1907 = vmatmul.mubr.bf16.gmra.mxu0 %v1749
        %v1908 = vpop.f32.mrf.mxu0
        %v1909 = vadd.f32 0.0, %v1908
        %v1910 = vpop.f32.mrf.mxu0
        %v1911 = vpop.f32.mrf.mxu0
        %v1912 = vadd.f32 0.0, %v1911
        %v1913 = vpop.f32.mrf.mxu0
        %1914 = vdwg.mxu0
        %v1915 = vadd.f32 %v1621, %v1789
        %v1916 = vadd.f32 %v1622, %v1792
        %v1917 = vadd.f32 %v1623, %v1797
        %v1918 = vadd.f32 %v1624, %v1800
        %v1919 = vadd.f32 %v1625, %v1805
        %v1920 = vadd.f32 %v1626, %v1808
        %v1921 = vadd.f32 %v1627, %v1813
        %v1922 = vadd.f32 %v1628, %v1816
        %v1923 = vadd.f32 %v1629, %v1821
        %v1924 = vadd.f32 %v1630, %v1824
        %v1925 = vadd.f32 %v1631, %v1829
        %v1926 = vadd.f32 %v1632, %v1832
        %v1927 = vadd.f32 %v1633, %v1837
        %v1928 = vadd.f32 %v1634, %v1840
        %v1929 = vadd.f32 %v1635, %v1845
        %v1930 = vadd.f32 %v1636, %v1848
        %v1931 = vadd.f32 %v1637, %v1853
        %v1932 = vadd.f32 %v1638, %v1856
        %v1933 = vadd.f32 %v1639, %v1861
        %v1934 = vadd.f32 %v1640, %v1864
        %v1935 = vadd.f32 %v1641, %v1869
        %v1936 = vadd.f32 %v1642, %v1872
        %v1937 = vadd.f32 %v1643, %v1877
        %v1938 = vadd.f32 %v1644, %v1880
        %v1939 = vadd.f32 %v1645, %v1885
        %v1940 = vadd.f32 %v1646, %v1888
        %v1941 = vadd.f32 %v1647, %v1893
        %v1942 = vadd.f32 %v1648, %v1896
        %v1943 = vadd.f32 %v1649, %v1901
        %v1944 = vadd.f32 %v1650, %v1904
        %v1945 = vadd.f32 %v1651, %v1909
        %v1946 = vadd.f32 %v1652, %v1912
        %v1947 = vld [vmem:[#allocation2 + $0x4] sm:$0xff]
        %v1948 = vld [vmem:[#allocation2 + $0xc] sm:$0xff]
        %v1949 = vld [vmem:[#allocation2 + $0x1c] sm:$0xff]
        %v1950 = vld [vmem:[#allocation2 + $0x24] sm:$0xff]
        %v1951 = vld [vmem:[#allocation2 + $0x34] sm:$0xff]
        %v1952 = vld [vmem:[#allocation2 + $0x3c] sm:$0xff]
        %v1953 = vld [vmem:[#allocation2 + $0x4c] sm:$0xff]
        %v1954 = vld [vmem:[#allocation2 + $0x54] sm:$0xff]
        %v1955 = vld [vmem:[#allocation2 + $0x64] sm:$0xff]
        %v1956 = vld [vmem:[#allocation2 + $0x6c] sm:$0xff]
        %v1957 = vld [vmem:[#allocation2 + $0x7c] sm:$0xff]
        %v1958 = vld [vmem:[#allocation2 + $0x84] sm:$0xff]
        %v1959 = vld [vmem:[#allocation2 + $0x94] sm:$0xff]
        %v1960 = vld [vmem:[#allocation2 + $0x9c] sm:$0xff]
        %v1961 = vld [vmem:[#allocation2 + $0xac] sm:$0xff]
        %v1962 = vld [vmem:[#allocation2 + $0xb4] sm:$0xff]
        %v1963 = vld [vmem:[#allocation2 + $0xc4] sm:$0xff]
        %v1964 = vld [vmem:[#allocation2 + $0xcc] sm:$0xff]
        %v1965 = vld [vmem:[#allocation2 + $0xdc] sm:$0xff]
        %v1966 = vld [vmem:[#allocation2 + $0xe4] sm:$0xff]
        %v1967 = vld [vmem:[#allocation2 + $0xf4] sm:$0xff]
        %v1968 = vld [vmem:[#allocation2 + $0xfc] sm:$0xff]
        %v1969 = vld [vmem:[#allocation2 + $0x10c] sm:$0xff]
        %v1970 = vld [vmem:[#allocation2 + $0x114] sm:$0xff]
        %v1971 = vld [vmem:[#allocation2 + $0x124] sm:$0xff]
        %v1972 = vld [vmem:[#allocation2 + $0x12c] sm:$0xff]
        %v1973 = vld [vmem:[#allocation2 + $0x13c] sm:$0xff]
        %v1974 = vld [vmem:[#allocation2 + $0x144] sm:$0xff]
        %v1975 = vld [vmem:[#allocation2 + $0x154] sm:$0xff]
        %v1976 = vld [vmem:[#allocation2 + $0x15c] sm:$0xff]
        %v1977 = vld [vmem:[#allocation2 + $0x16c] sm:$0xff]
        %v1978 = vld [vmem:[#allocation2 + $0x174] sm:$0xff]
        %v1979 = vpack.c.bf16 %v1948, %v1947
        %v1980 = vpack.c.bf16 %v1950, %v1949
        %v1981 = vpack.c.bf16 %v1952, %v1951
        %v1982 = vpack.c.bf16 %v1954, %v1953
        %v1983 = vpack.c.bf16 %v1956, %v1955
        %v1984 = vpack.c.bf16 %v1958, %v1957
        %v1985 = vpack.c.bf16 %v1960, %v1959
        %v1986 = vpack.c.bf16 %v1962, %v1961
        %v1987 = vpack.c.bf16 %v1964, %v1963
        %v1988 = vpack.c.bf16 %v1966, %v1965
        %v1989 = vpack.c.bf16 %v1968, %v1967
        %v1990 = vpack.c.bf16 %v1970, %v1969
        %v1991 = vpack.c.bf16 %v1972, %v1971
        %v1992 = vpack.c.bf16 %v1974, %v1973
        %v1993 = vpack.c.bf16 %v1976, %v1975
        %v1994 = vpack.c.bf16 %v1978, %v1977
        %s1995 = scalar_lea.vmem %s3, 16
        %v1996 = vld [vmem:[%s1995] sm:$0xf]
        %v1998 = vsel %vm580, %v1979, 0
        %v2001 = vsel %vm580, %v1980, 0
        %v2004 = vsel %vm580, %v1981, 0
        %v2007 = vsel %vm580, %v1982, 0
        %v2010 = vsel %vm580, %v1983, 0
        %v2013 = vsel %vm580, %v1984, 0
        %v2016 = vsel %vm580, %v1985, 0
        %v2019 = vsel %vm580, %v1986, 0
        %v2022 = vsel %vm580, %v1987, 0
        %v2025 = vsel %vm580, %v1988, 0
        %v2028 = vsel %vm580, %v1989, 0
        %v2031 = vsel %vm580, %v1990, 0
        %v2034 = vsel %vm580, %v1991, 0
        %v2037 = vsel %vm580, %v1992, 0
        %v2040 = vsel %vm580, %v1993, 0
        %v2043 = vsel %vm580, %v1994, 0
        %v2046 = vsel %vm982, %v1996, 0
        %2048 = vmatprep.subr.bf16.mxu0 0
        %2049 = vmatpush1.bf16.msra.mxu0 0
        %2050 = vmatprep.subr.bf16.mxu0 0
        %2051 = vmatpush1.bf16.msra.mxu0 0
        %2052 = vmatprep.subr.bf16.mxu0 0
        %2053 = vmatpush1.bf16.msra.mxu0 0
        %2054 = vmatprep.subr.bf16.mxu0 0
        %2055 = vmatpush1.bf16.msra.mxu0 0
        %2056 = vmatprep.subr.bf16.mxu0 0
        %2057 = vmatpush1.bf16.msra.mxu0 0
        %2058 = vmatprep.subr.bf16.mxu0 0
        %2059 = vmatpush1.bf16.msra.mxu0 0
        %2060 = vmatprep.subr.bf16.mxu0 0
        %2061 = vmatpush1.bf16.msra.mxu0 0
        %2062 = vmatprep.subr.bf16.mxu0 0
        %2063 = vmatpush1.bf16.msra.mxu0 %v2046
        %2064 = vmatprep.subr.bf16.mxu0 0
        %2065 = vmatpush2.bf16.msra.mxu0 0
        %2066 = vmatprep.subr.bf16.mxu0 0
        %2067 = vmatpush2.bf16.msra.mxu0 0
        %2068 = vmatprep.subr.bf16.mxu0 0
        %2069 = vmatpush2.bf16.msra.mxu0 0
        %2070 = vmatprep.subr.bf16.mxu0 0
        %2071 = vmatpush2.bf16.msra.mxu0 0
        %2072 = vmatprep.subr.bf16.mxu0 0
        %2073 = vmatpush2.bf16.msra.mxu0 0
        %2074 = vmatprep.subr.bf16.mxu0 0
        %2075 = vmatpush2.bf16.msra.mxu0 0
        %2076 = vmatprep.subr.bf16.mxu0 0
        %2077 = vmatpush2.bf16.msra.mxu0 0
        %2078 = vmatprep.subr.bf16.mxu0 0
        %2079 = vmatpush2.bf16.msra.mxu0 0
        %2080 = vmatprep.mubr.bf16.mxu0 0
        %2081 = vmatmul.mubr.bf16.gmra.mxu0 %v1998
        %v2082 = vpop.f32.mrf.mxu0
        %v2083 = vadd.f32 0.0, %v2082
        %v2084 = vpop.f32.mrf.mxu0
        %v2085 = vpop.f32.mrf.mxu0
        %v2086 = vadd.f32 0.0, %v2085
        %v2087 = vpop.f32.mrf.mxu0
        %2088 = vmatprep.mubr.bf16.mxu0 0
        %2089 = vmatmul.mubr.bf16.gmra.mxu0 %v2001
        %v2090 = vpop.f32.mrf.mxu0
        %v2091 = vadd.f32 0.0, %v2090
        %v2092 = vpop.f32.mrf.mxu0
        %v2093 = vpop.f32.mrf.mxu0
        %v2094 = vadd.f32 0.0, %v2093
        %v2095 = vpop.f32.mrf.mxu0
        %2096 = vmatprep.mubr.bf16.mxu0 0
        %2097 = vmatmul.mubr.bf16.gmra.mxu0 %v2004
        %v2098 = vpop.f32.mrf.mxu0
        %v2099 = vadd.f32 0.0, %v2098
        %v2100 = vpop.f32.mrf.mxu0
        %v2101 = vpop.f32.mrf.mxu0
        %v2102 = vadd.f32 0.0, %v2101
        %v2103 = vpop.f32.mrf.mxu0
        %2104 = vmatprep.mubr.bf16.mxu0 0
        %2105 = vmatmul.mubr.bf16.gmra.mxu0 %v2007
        %v2106 = vpop.f32.mrf.mxu0
        %v2107 = vadd.f32 0.0, %v2106
        %v2108 = vpop.f32.mrf.mxu0
        %v2109 = vpop.f32.mrf.mxu0
        %v2110 = vadd.f32 0.0, %v2109
        %v2111 = vpop.f32.mrf.mxu0
        %2112 = vmatprep.mubr.bf16.mxu0 0
        %2113 = vmatmul.mubr.bf16.gmra.mxu0 %v2010
        %v2114 = vpop.f32.mrf.mxu0
        %v2115 = vadd.f32 0.0, %v2114
        %v2116 = vpop.f32.mrf.mxu0
        %v2117 = vpop.f32.mrf.mxu0
        %v2118 = vadd.f32 0.0, %v2117
        %v2119 = vpop.f32.mrf.mxu0
        %2120 = vmatprep.mubr.bf16.mxu0 0
        %2121 = vmatmul.mubr.bf16.gmra.mxu0 %v2013
        %v2122 = vpop.f32.mrf.mxu0
        %v2123 = vadd.f32 0.0, %v2122
        %v2124 = vpop.f32.mrf.mxu0
        %v2125 = vpop.f32.mrf.mxu0
        %v2126 = vadd.f32 0.0, %v2125
        %v2127 = vpop.f32.mrf.mxu0
        %2128 = vmatprep.mubr.bf16.mxu0 0
        %2129 = vmatmul.mubr.bf16.gmra.mxu0 %v2016
        %v2130 = vpop.f32.mrf.mxu0
        %v2131 = vadd.f32 0.0, %v2130
        %v2132 = vpop.f32.mrf.mxu0
        %v2133 = vpop.f32.mrf.mxu0
        %v2134 = vadd.f32 0.0, %v2133
        %v2135 = vpop.f32.mrf.mxu0
        %2136 = vmatprep.mubr.bf16.mxu0 0
        %2137 = vmatmul.mubr.bf16.gmra.mxu0 %v2019
        %v2138 = vpop.f32.mrf.mxu0
        %v2139 = vadd.f32 0.0, %v2138
        %v2140 = vpop.f32.mrf.mxu0
        %v2141 = vpop.f32.mrf.mxu0
        %v2142 = vadd.f32 0.0, %v2141
        %v2143 = vpop.f32.mrf.mxu0
        %2144 = vmatprep.mubr.bf16.mxu0 0
        %2145 = vmatmul.mubr.bf16.gmra.mxu0 %v2022
        %v2146 = vpop.f32.mrf.mxu0
        %v2147 = vadd.f32 0.0, %v2146
        %v2148 = vpop.f32.mrf.mxu0
        %v2149 = vpop.f32.mrf.mxu0
        %v2150 = vadd.f32 0.0, %v2149
        %v2151 = vpop.f32.mrf.mxu0
        %2152 = vmatprep.mubr.bf16.mxu0 0
        %2153 = vmatmul.mubr.bf16.gmra.mxu0 %v2025
        %v2154 = vpop.f32.mrf.mxu0
        %v2155 = vadd.f32 0.0, %v2154
        %v2156 = vpop.f32.mrf.mxu0
        %v2157 = vpop.f32.mrf.mxu0
        %v2158 = vadd.f32 0.0, %v2157
        %v2159 = vpop.f32.mrf.mxu0
        %2160 = vmatprep.mubr.bf16.mxu0 0
        %2161 = vmatmul.mubr.bf16.gmra.mxu0 %v2028
        %v2162 = vpop.f32.mrf.mxu0
        %v2163 = vadd.f32 0.0, %v2162
        %v2164 = vpop.f32.mrf.mxu0
        %v2165 = vpop.f32.mrf.mxu0
        %v2166 = vadd.f32 0.0, %v2165
        %v2167 = vpop.f32.mrf.mxu0
        %2168 = vmatprep.mubr.bf16.mxu0 0
        %2169 = vmatmul.mubr.bf16.gmra.mxu0 %v2031
        %v2170 = vpop.f32.mrf.mxu0
        %v2171 = vadd.f32 0.0, %v2170
        %v2172 = vpop.f32.mrf.mxu0
        %v2173 = vpop.f32.mrf.mxu0
        %v2174 = vadd.f32 0.0, %v2173
        %v2175 = vpop.f32.mrf.mxu0
        %2176 = vmatprep.mubr.bf16.mxu0 0
        %2177 = vmatmul.mubr.bf16.gmra.mxu0 %v2034
        %v2178 = vpop.f32.mrf.mxu0
        %v2179 = vadd.f32 0.0, %v2178
        %v2180 = vpop.f32.mrf.mxu0
        %v2181 = vpop.f32.mrf.mxu0
        %v2182 = vadd.f32 0.0, %v2181
        %v2183 = vpop.f32.mrf.mxu0
        %2184 = vmatprep.mubr.bf16.mxu0 0
        %2185 = vmatmul.mubr.bf16.gmra.mxu0 %v2037
        %v2186 = vpop.f32.mrf.mxu0
        %v2187 = vadd.f32 0.0, %v2186
        %v2188 = vpop.f32.mrf.mxu0
        %v2189 = vpop.f32.mrf.mxu0
        %v2190 = vadd.f32 0.0, %v2189
        %v2191 = vpop.f32.mrf.mxu0
        %2192 = vmatprep.mubr.bf16.mxu0 0
        %2193 = vmatmul.mubr.bf16.gmra.mxu0 %v2040
        %v2194 = vpop.f32.mrf.mxu0
        %v2195 = vadd.f32 0.0, %v2194
        %v2196 = vpop.f32.mrf.mxu0
        %v2197 = vpop.f32.mrf.mxu0
        %v2198 = vadd.f32 0.0, %v2197
        %v2199 = vpop.f32.mrf.mxu0
        %2200 = vmatprep.mubr.bf16.mxu0 0
        %2201 = vmatmul.mubr.bf16.gmra.mxu0 %v2043
        %v2202 = vpop.f32.mrf.mxu0
        %v2203 = vadd.f32 0.0, %v2202
        %v2204 = vpop.f32.mrf.mxu0
        %v2205 = vpop.f32.mrf.mxu0
        %v2206 = vadd.f32 0.0, %v2205
        %v2207 = vpop.f32.mrf.mxu0
        %2208 = vdwg.mxu0
        %v2209 = vadd.f32 %v1915, %v2083
        %v2210 = vadd.f32 %v1916, %v2086
        %v2211 = vadd.f32 %v1917, %v2091
        %v2212 = vadd.f32 %v1918, %v2094
        %v2213 = vadd.f32 %v1919, %v2099
        %v2214 = vadd.f32 %v1920, %v2102
        %v2215 = vadd.f32 %v1921, %v2107
        %v2216 = vadd.f32 %v1922, %v2110
        %v2217 = vadd.f32 %v1923, %v2115
        %v2218 = vadd.f32 %v1924, %v2118
        %v2219 = vadd.f32 %v1925, %v2123
        %v2220 = vadd.f32 %v1926, %v2126
        %v2221 = vadd.f32 %v1927, %v2131
        %v2222 = vadd.f32 %v1928, %v2134
        %v2223 = vadd.f32 %v1929, %v2139
        %v2224 = vadd.f32 %v1930, %v2142
        %v2225 = vadd.f32 %v1931, %v2147
        %v2226 = vadd.f32 %v1932, %v2150
        %v2227 = vadd.f32 %v1933, %v2155
        %v2228 = vadd.f32 %v1934, %v2158
        %v2229 = vadd.f32 %v1935, %v2163
        %v2230 = vadd.f32 %v1936, %v2166
        %v2231 = vadd.f32 %v1937, %v2171
        %v2232 = vadd.f32 %v1938, %v2174
        %v2233 = vadd.f32 %v1939, %v2179
        %v2234 = vadd.f32 %v1940, %v2182
        %v2235 = vadd.f32 %v1941, %v2187
        %v2236 = vadd.f32 %v1942, %v2190
        %v2237 = vadd.f32 %v1943, %v2195
        %v2238 = vadd.f32 %v1944, %v2198
        %v2239 = vadd.f32 %v1945, %v2203
        %v2240 = vadd.f32 %v1946, %v2206
        %s2241 = scalar_lea.vmem [#allocation2], 24
        %v2242 = vld [vmem:[%s2241] sm:$0xff]
        %v2243 = vld [vmem:[%s2241 + $0x8] sm:$0xff]
        %v2244 = vld [vmem:[%s2241 + $0x18] sm:$0xff]
        %v2245 = vld [vmem:[%s2241 + $0x20] sm:$0xff]
        %v2246 = vld [vmem:[%s2241 + $0x30] sm:$0xff]
        %v2247 = vld [vmem:[%s2241 + $0x38] sm:$0xff]
        %v2248 = vld [vmem:[%s2241 + $0x48] sm:$0xff]
        %v2249 = vld [vmem:[%s2241 + $0x50] sm:$0xff]
        %v2250 = vld [vmem:[%s2241 + $0x60] sm:$0xff]
        %v2251 = vld [vmem:[%s2241 + $0x68] sm:$0xff]
        %v2252 = vld [vmem:[%s2241 + $0x78] sm:$0xff]
        %v2253 = vld [vmem:[%s2241 + $0x80] sm:$0xff]
        %v2254 = vld [vmem:[%s2241 + $0x90] sm:$0xff]
        %v2255 = vld [vmem:[%s2241 + $0x98] sm:$0xff]
        %v2256 = vld [vmem:[%s2241 + $0xa8] sm:$0xff]
        %v2257 = vld [vmem:[%s2241 + $0xb0] sm:$0xff]
        %v2258 = vld [vmem:[%s2241 + $0xc0] sm:$0xff]
        %v2259 = vld [vmem:[%s2241 + $0xc8] sm:$0xff]
        %v2260 = vld [vmem:[%s2241 + $0xd8] sm:$0xff]
        %v2261 = vld [vmem:[%s2241 + $0xe0] sm:$0xff]
        %v2262 = vld [vmem:[%s2241 + $0xf0] sm:$0xff]
        %v2263 = vld [vmem:[%s2241 + $0xf8] sm:$0xff]
        %v2264 = vld [vmem:[%s2241 + $0x108] sm:$0xff]
        %v2265 = vld [vmem:[%s2241 + $0x110] sm:$0xff]
        %v2266 = vld [vmem:[%s2241 + $0x120] sm:$0xff]
        %v2267 = vld [vmem:[%s2241 + $0x128] sm:$0xff]
        %v2268 = vld [vmem:[%s2241 + $0x138] sm:$0xff]
        %v2269 = vld [vmem:[%s2241 + $0x140] sm:$0xff]
        %v2270 = vld [vmem:[%s2241 + $0x150] sm:$0xff]
        %v2271 = vld [vmem:[%s2241 + $0x158] sm:$0xff]
        %v2272 = vld [vmem:[%s2241 + $0x168] sm:$0xff]
        %v2273 = vld [vmem:[%s2241 + $0x170] sm:$0xff]
        %v2274 = vpack.c.bf16 %v2243, %v2242
        %v2275 = vpack.c.bf16 %v2245, %v2244
        %v2276 = vpack.c.bf16 %v2247, %v2246
        %v2277 = vpack.c.bf16 %v2249, %v2248
        %v2278 = vpack.c.bf16 %v2251, %v2250
        %v2279 = vpack.c.bf16 %v2253, %v2252
        %v2280 = vpack.c.bf16 %v2255, %v2254
        %v2281 = vpack.c.bf16 %v2257, %v2256
        %v2282 = vpack.c.bf16 %v2259, %v2258
        %v2283 = vpack.c.bf16 %v2261, %v2260
        %v2284 = vpack.c.bf16 %v2263, %v2262
        %v2285 = vpack.c.bf16 %v2265, %v2264
        %v2286 = vpack.c.bf16 %v2267, %v2266
        %v2287 = vpack.c.bf16 %v2269, %v2268
        %v2288 = vpack.c.bf16 %v2271, %v2270
        %v2289 = vpack.c.bf16 %v2273, %v2272
        %s2290 = scalar_lea.vmem %s3, 20
        %v2291 = vld [vmem:[%s2290] sm:$0xf]
        %v2293 = vsel %vm580, %v2274, 0
        %v2296 = vsel %vm580, %v2275, 0
        %v2299 = vsel %vm580, %v2276, 0
        %v2302 = vsel %vm580, %v2277, 0
        %v2305 = vsel %vm580, %v2278, 0
        %v2308 = vsel %vm580, %v2279, 0
        %v2311 = vsel %vm580, %v2280, 0
        %v2314 = vsel %vm580, %v2281, 0
        %v2317 = vsel %vm580, %v2282, 0
        %v2320 = vsel %vm580, %v2283, 0
        %v2323 = vsel %vm580, %v2284, 0
        %v2326 = vsel %vm580, %v2285, 0
        %v2329 = vsel %vm580, %v2286, 0
        %v2332 = vsel %vm580, %v2287, 0
        %v2335 = vsel %vm580, %v2288, 0
        %v2338 = vsel %vm580, %v2289, 0
        %v2341 = vsel %vm982, %v2291, 0
        %2343 = vmatprep.subr.bf16.mxu0 0
        %2344 = vmatpush1.bf16.msra.mxu0 0
        %2345 = vmatprep.subr.bf16.mxu0 0
        %2346 = vmatpush1.bf16.msra.mxu0 0
        %2347 = vmatprep.subr.bf16.mxu0 0
        %2348 = vmatpush1.bf16.msra.mxu0 0
        %2349 = vmatprep.subr.bf16.mxu0 0
        %2350 = vmatpush1.bf16.msra.mxu0 0
        %2351 = vmatprep.subr.bf16.mxu0 0
        %2352 = vmatpush1.bf16.msra.mxu0 0
        %2353 = vmatprep.subr.bf16.mxu0 0
        %2354 = vmatpush1.bf16.msra.mxu0 0
        %2355 = vmatprep.subr.bf16.mxu0 0
        %2356 = vmatpush1.bf16.msra.mxu0 0
        %2357 = vmatprep.subr.bf16.mxu0 0
        %2358 = vmatpush1.bf16.msra.mxu0 %v2341
        %2359 = vmatprep.subr.bf16.mxu0 0
        %2360 = vmatpush2.bf16.msra.mxu0 0
        %2361 = vmatprep.subr.bf16.mxu0 0
        %2362 = vmatpush2.bf16.msra.mxu0 0
        %2363 = vmatprep.subr.bf16.mxu0 0
        %2364 = vmatpush2.bf16.msra.mxu0 0
        %2365 = vmatprep.subr.bf16.mxu0 0
        %2366 = vmatpush2.bf16.msra.mxu0 0
        %2367 = vmatprep.subr.bf16.mxu0 0
        %2368 = vmatpush2.bf16.msra.mxu0 0
        %2369 = vmatprep.subr.bf16.mxu0 0
        %2370 = vmatpush2.bf16.msra.mxu0 0
        %2371 = vmatprep.subr.bf16.mxu0 0
        %2372 = vmatpush2.bf16.msra.mxu0 0
        %2373 = vmatprep.subr.bf16.mxu0 0
        %2374 = vmatpush2.bf16.msra.mxu0 0
        %2375 = vmatprep.mubr.bf16.mxu0 0
        %2376 = vmatmul.mubr.bf16.gmra.mxu0 %v2293
        %v2377 = vpop.f32.mrf.mxu0
        %v2378 = vadd.f32 0.0, %v2377
        %v2379 = vpop.f32.mrf.mxu0
        %v2380 = vpop.f32.mrf.mxu0
        %v2381 = vadd.f32 0.0, %v2380
        %v2382 = vpop.f32.mrf.mxu0
        %2383 = vmatprep.mubr.bf16.mxu0 0
        %2384 = vmatmul.mubr.bf16.gmra.mxu0 %v2296
        %v2385 = vpop.f32.mrf.mxu0
        %v2386 = vadd.f32 0.0, %v2385
        %v2387 = vpop.f32.mrf.mxu0
        %v2388 = vpop.f32.mrf.mxu0
        %v2389 = vadd.f32 0.0, %v2388
        %v2390 = vpop.f32.mrf.mxu0
        %2391 = vmatprep.mubr.bf16.mxu0 0
        %2392 = vmatmul.mubr.bf16.gmra.mxu0 %v2299
        %v2393 = vpop.f32.mrf.mxu0
        %v2394 = vadd.f32 0.0, %v2393
        %v2395 = vpop.f32.mrf.mxu0
        %v2396 = vpop.f32.mrf.mxu0
        %v2397 = vadd.f32 0.0, %v2396
        %v2398 = vpop.f32.mrf.mxu0
        %2399 = vmatprep.mubr.bf16.mxu0 0
        %2400 = vmatmul.mubr.bf16.gmra.mxu0 %v2302
        %v2401 = vpop.f32.mrf.mxu0
        %v2402 = vadd.f32 0.0, %v2401
        %v2403 = vpop.f32.mrf.mxu0
        %v2404 = vpop.f32.mrf.mxu0
        %v2405 = vadd.f32 0.0, %v2404
        %v2406 = vpop.f32.mrf.mxu0
        %2407 = vmatprep.mubr.bf16.mxu0 0
        %2408 = vmatmul.mubr.bf16.gmra.mxu0 %v2305
        %v2409 = vpop.f32.mrf.mxu0
        %v2410 = vadd.f32 0.0, %v2409
        %v2411 = vpop.f32.mrf.mxu0
        %v2412 = vpop.f32.mrf.mxu0
        %v2413 = vadd.f32 0.0, %v2412
        %v2414 = vpop.f32.mrf.mxu0
        %2415 = vmatprep.mubr.bf16.mxu0 0
        %2416 = vmatmul.mubr.bf16.gmra.mxu0 %v2308
        %v2417 = vpop.f32.mrf.mxu0
        %v2418 = vadd.f32 0.0, %v2417
        %v2419 = vpop.f32.mrf.mxu0
        %v2420 = vpop.f32.mrf.mxu0
        %v2421 = vadd.f32 0.0, %v2420
        %v2422 = vpop.f32.mrf.mxu0
        %2423 = vmatprep.mubr.bf16.mxu0 0
        %2424 = vmatmul.mubr.bf16.gmra.mxu0 %v2311
        %v2425 = vpop.f32.mrf.mxu0
        %v2426 = vadd.f32 0.0, %v2425
        %v2427 = vpop.f32.mrf.mxu0
        %v2428 = vpop.f32.mrf.mxu0
        %v2429 = vadd.f32 0.0, %v2428
        %v2430 = vpop.f32.mrf.mxu0
        %2431 = vmatprep.mubr.bf16.mxu0 0
        %2432 = vmatmul.mubr.bf16.gmra.mxu0 %v2314
        %v2433 = vpop.f32.mrf.mxu0
        %v2434 = vadd.f32 0.0, %v2433
        %v2435 = vpop.f32.mrf.mxu0
        %v2436 = vpop.f32.mrf.mxu0
        %v2437 = vadd.f32 0.0, %v2436
        %v2438 = vpop.f32.mrf.mxu0
        %2439 = vmatprep.mubr.bf16.mxu0 0
        %2440 = vmatmul.mubr.bf16.gmra.mxu0 %v2317
        %v2441 = vpop.f32.mrf.mxu0
        %v2442 = vadd.f32 0.0, %v2441
        %v2443 = vpop.f32.mrf.mxu0
        %v2444 = vpop.f32.mrf.mxu0
        %v2445 = vadd.f32 0.0, %v2444
        %v2446 = vpop.f32.mrf.mxu0
        %2447 = vmatprep.mubr.bf16.mxu0 0
        %2448 = vmatmul.mubr.bf16.gmra.mxu0 %v2320
        %v2449 = vpop.f32.mrf.mxu0
        %v2450 = vadd.f32 0.0, %v2449
        %v2451 = vpop.f32.mrf.mxu0
        %v2452 = vpop.f32.mrf.mxu0
        %v2453 = vadd.f32 0.0, %v2452
        %v2454 = vpop.f32.mrf.mxu0
        %2455 = vmatprep.mubr.bf16.mxu0 0
        %2456 = vmatmul.mubr.bf16.gmra.mxu0 %v2323
        %v2457 = vpop.f32.mrf.mxu0
        %v2458 = vadd.f32 0.0, %v2457
        %v2459 = vpop.f32.mrf.mxu0
        %v2460 = vpop.f32.mrf.mxu0
        %v2461 = vadd.f32 0.0, %v2460
        %v2462 = vpop.f32.mrf.mxu0
        %2463 = vmatprep.mubr.bf16.mxu0 0
        %2464 = vmatmul.mubr.bf16.gmra.mxu0 %v2326
        %v2465 = vpop.f32.mrf.mxu0
        %v2466 = vadd.f32 0.0, %v2465
        %v2467 = vpop.f32.mrf.mxu0
        %v2468 = vpop.f32.mrf.mxu0
        %v2469 = vadd.f32 0.0, %v2468
        %v2470 = vpop.f32.mrf.mxu0
        %2471 = vmatprep.mubr.bf16.mxu0 0
        %2472 = vmatmul.mubr.bf16.gmra.mxu0 %v2329
        %v2473 = vpop.f32.mrf.mxu0
        %v2474 = vadd.f32 0.0, %v2473
        %v2475 = vpop.f32.mrf.mxu0
        %v2476 = vpop.f32.mrf.mxu0
        %v2477 = vadd.f32 0.0, %v2476
        %v2478 = vpop.f32.mrf.mxu0
        %2479 = vmatprep.mubr.bf16.mxu0 0
        %2480 = vmatmul.mubr.bf16.gmra.mxu0 %v2332
        %v2481 = vpop.f32.mrf.mxu0
        %v2482 = vadd.f32 0.0, %v2481
        %v2483 = vpop.f32.mrf.mxu0
        %v2484 = vpop.f32.mrf.mxu0
        %v2485 = vadd.f32 0.0, %v2484
        %v2486 = vpop.f32.mrf.mxu0
        %2487 = vmatprep.mubr.bf16.mxu0 0
        %2488 = vmatmul.mubr.bf16.gmra.mxu0 %v2335
        %v2489 = vpop.f32.mrf.mxu0
        %v2490 = vadd.f32 0.0, %v2489
        %v2491 = vpop.f32.mrf.mxu0
        %v2492 = vpop.f32.mrf.mxu0
        %v2493 = vadd.f32 0.0, %v2492
        %v2494 = vpop.f32.mrf.mxu0
        %2495 = vmatprep.mubr.bf16.mxu0 0
        %2496 = vmatmul.mubr.bf16.gmra.mxu0 %v2338
        %v2497 = vpop.f32.mrf.mxu0
        %v2498 = vadd.f32 0.0, %v2497
        %v2499 = vpop.f32.mrf.mxu0
        %v2500 = vpop.f32.mrf.mxu0
        %v2501 = vadd.f32 0.0, %v2500
        %v2502 = vpop.f32.mrf.mxu0
        %2503 = vdwg.mxu0
        %v2504 = vadd.f32 %v2209, %v2378
        %v2505 = vadd.f32 %v2210, %v2381
        %v2506 = vadd.f32 %v2211, %v2386
        %v2507 = vadd.f32 %v2212, %v2389
        %v2508 = vadd.f32 %v2213, %v2394
        %v2509 = vadd.f32 %v2214, %v2397
        %v2510 = vadd.f32 %v2215, %v2402
        %v2511 = vadd.f32 %v2216, %v2405
        %v2512 = vadd.f32 %v2217, %v2410
        %v2513 = vadd.f32 %v2218, %v2413
        %v2514 = vadd.f32 %v2219, %v2418
        %v2515 = vadd.f32 %v2220, %v2421
        %v2516 = vadd.f32 %v2221, %v2426
        %v2517 = vadd.f32 %v2222, %v2429
        %v2518 = vadd.f32 %v2223, %v2434
        %v2519 = vadd.f32 %v2224, %v2437
        %v2520 = vadd.f32 %v2225, %v2442
        %v2521 = vadd.f32 %v2226, %v2445
        %v2522 = vadd.f32 %v2227, %v2450
        %v2523 = vadd.f32 %v2228, %v2453
        %v2524 = vadd.f32 %v2229, %v2458
        %v2525 = vadd.f32 %v2230, %v2461
        %v2526 = vadd.f32 %v2231, %v2466
        %v2527 = vadd.f32 %v2232, %v2469
        %v2528 = vadd.f32 %v2233, %v2474
        %v2529 = vadd.f32 %v2234, %v2477
        %v2530 = vadd.f32 %v2235, %v2482
        %v2531 = vadd.f32 %v2236, %v2485
        %v2532 = vadd.f32 %v2237, %v2490
        %v2533 = vadd.f32 %v2238, %v2493
        %v2534 = vadd.f32 %v2239, %v2498
        %v2535 = vadd.f32 %v2240, %v2501
        %v2536 = vld [vmem:[%s2241 + $0x1] sm:$0xff]
        %v2537 = vld [vmem:[%s2241 + $0x9] sm:$0xff]
        %v2538 = vld [vmem:[%s2241 + $0x19] sm:$0xff]
        %v2539 = vld [vmem:[%s2241 + $0x21] sm:$0xff]
        %v2540 = vld [vmem:[%s2241 + $0x31] sm:$0xff]
        %v2541 = vld [vmem:[%s2241 + $0x39] sm:$0xff]
        %v2542 = vld [vmem:[%s2241 + $0x49] sm:$0xff]
        %v2543 = vld [vmem:[%s2241 + $0x51] sm:$0xff]
        %v2544 = vld [vmem:[%s2241 + $0x61] sm:$0xff]
        %v2545 = vld [vmem:[%s2241 + $0x69] sm:$0xff]
        %v2546 = vld [vmem:[%s2241 + $0x79] sm:$0xff]
        %v2547 = vld [vmem:[%s2241 + $0x81] sm:$0xff]
        %v2548 = vld [vmem:[%s2241 + $0x91] sm:$0xff]
        %v2549 = vld [vmem:[%s2241 + $0x99] sm:$0xff]
        %v2550 = vld [vmem:[%s2241 + $0xa9] sm:$0xff]
        %v2551 = vld [vmem:[%s2241 + $0xb1] sm:$0xff]
        %v2552 = vld [vmem:[%s2241 + $0xc1] sm:$0xff]
        %v2553 = vld [vmem:[%s2241 + $0xc9] sm:$0xff]
        %v2554 = vld [vmem:[%s2241 + $0xd9] sm:$0xff]
        %v2555 = vld [vmem:[%s2241 + $0xe1] sm:$0xff]
        %v2556 = vld [vmem:[%s2241 + $0xf1] sm:$0xff]
        %v2557 = vld [vmem:[%s2241 + $0xf9] sm:$0xff]
        %v2558 = vld [vmem:[%s2241 + $0x109] sm:$0xff]
        %v2559 = vld [vmem:[%s2241 + $0x111] sm:$0xff]
        %v2560 = vld [vmem:[%s2241 + $0x121] sm:$0xff]
        %v2561 = vld [vmem:[%s2241 + $0x129] sm:$0xff]
        %v2562 = vld [vmem:[%s2241 + $0x139] sm:$0xff]
        %v2563 = vld [vmem:[%s2241 + $0x141] sm:$0xff]
        %v2564 = vld [vmem:[%s2241 + $0x151] sm:$0xff]
        %v2565 = vld [vmem:[%s2241 + $0x159] sm:$0xff]
        %v2566 = vld [vmem:[%s2241 + $0x169] sm:$0xff]
        %v2567 = vld [vmem:[%s2241 + $0x171] sm:$0xff]
        %v2568 = vpack.c.bf16 %v2537, %v2536
        %v2569 = vpack.c.bf16 %v2539, %v2538
        %v2570 = vpack.c.bf16 %v2541, %v2540
        %v2571 = vpack.c.bf16 %v2543, %v2542
        %v2572 = vpack.c.bf16 %v2545, %v2544
        %v2573 = vpack.c.bf16 %v2547, %v2546
        %v2574 = vpack.c.bf16 %v2549, %v2548
        %v2575 = vpack.c.bf16 %v2551, %v2550
        %v2576 = vpack.c.bf16 %v2553, %v2552
        %v2577 = vpack.c.bf16 %v2555, %v2554
        %v2578 = vpack.c.bf16 %v2557, %v2556
        %v2579 = vpack.c.bf16 %v2559, %v2558
        %v2580 = vpack.c.bf16 %v2561, %v2560
        %v2581 = vpack.c.bf16 %v2563, %v2562
        %v2582 = vpack.c.bf16 %v2565, %v2564
        %v2583 = vpack.c.bf16 %v2567, %v2566
        %s2584 = scalar_lea.vmem %s3, 24
        %v2585 = vld [vmem:[%s2584] sm:$0xf]
        %v2587 = vsel %vm580, %v2568, 0
        %v2590 = vsel %vm580, %v2569, 0
        %v2593 = vsel %vm580, %v2570, 0
        %v2596 = vsel %vm580, %v2571, 0
        %v2599 = vsel %vm580, %v2572, 0
        %v2602 = vsel %vm580, %v2573, 0
        %v2605 = vsel %vm580, %v2574, 0
        %v2608 = vsel %vm580, %v2575, 0
        %v2611 = vsel %vm580, %v2576, 0
        %v2614 = vsel %vm580, %v2577, 0
        %v2617 = vsel %vm580, %v2578, 0
        %v2620 = vsel %vm580, %v2579, 0
        %v2623 = vsel %vm580, %v2580, 0
        %v2626 = vsel %vm580, %v2581, 0
        %v2629 = vsel %vm580, %v2582, 0
        %v2632 = vsel %vm580, %v2583, 0
        %v2635 = vsel %vm982, %v2585, 0
        %2637 = vmatprep.subr.bf16.mxu0 0
        %2638 = vmatpush1.bf16.msra.mxu0 0
        %2639 = vmatprep.subr.bf16.mxu0 0
        %2640 = vmatpush1.bf16.msra.mxu0 0
        %2641 = vmatprep.subr.bf16.mxu0 0
        %2642 = vmatpush1.bf16.msra.mxu0 0
        %2643 = vmatprep.subr.bf16.mxu0 0
        %2644 = vmatpush1.bf16.msra.mxu0 0
        %2645 = vmatprep.subr.bf16.mxu0 0
        %2646 = vmatpush1.bf16.msra.mxu0 0
        %2647 = vmatprep.subr.bf16.mxu0 0
        %2648 = vmatpush1.bf16.msra.mxu0 0
        %2649 = vmatprep.subr.bf16.mxu0 0
        %2650 = vmatpush1.bf16.msra.mxu0 0
        %2651 = vmatprep.subr.bf16.mxu0 0
        %2652 = vmatpush1.bf16.msra.mxu0 %v2635
        %2653 = vmatprep.subr.bf16.mxu0 0
        %2654 = vmatpush2.bf16.msra.mxu0 0
        %2655 = vmatprep.subr.bf16.mxu0 0
        %2656 = vmatpush2.bf16.msra.mxu0 0
        %2657 = vmatprep.subr.bf16.mxu0 0
        %2658 = vmatpush2.bf16.msra.mxu0 0
        %2659 = vmatprep.subr.bf16.mxu0 0
        %2660 = vmatpush2.bf16.msra.mxu0 0
        %2661 = vmatprep.subr.bf16.mxu0 0
        %2662 = vmatpush2.bf16.msra.mxu0 0
        %2663 = vmatprep.subr.bf16.mxu0 0
        %2664 = vmatpush2.bf16.msra.mxu0 0
        %2665 = vmatprep.subr.bf16.mxu0 0
        %2666 = vmatpush2.bf16.msra.mxu0 0
        %2667 = vmatprep.subr.bf16.mxu0 0
        %2668 = vmatpush2.bf16.msra.mxu0 0
        %2669 = vmatprep.mubr.bf16.mxu0 0
        %2670 = vmatmul.mubr.bf16.gmra.mxu0 %v2587
        %v2671 = vpop.f32.mrf.mxu0
        %v2672 = vadd.f32 0.0, %v2671
        %v2673 = vpop.f32.mrf.mxu0
        %v2674 = vpop.f32.mrf.mxu0
        %v2675 = vadd.f32 0.0, %v2674
        %v2676 = vpop.f32.mrf.mxu0
        %2677 = vmatprep.mubr.bf16.mxu0 0
        %2678 = vmatmul.mubr.bf16.gmra.mxu0 %v2590
        %v2679 = vpop.f32.mrf.mxu0
        %v2680 = vadd.f32 0.0, %v2679
        %v2681 = vpop.f32.mrf.mxu0
        %v2682 = vpop.f32.mrf.mxu0
        %v2683 = vadd.f32 0.0, %v2682
        %v2684 = vpop.f32.mrf.mxu0
        %2685 = vmatprep.mubr.bf16.mxu0 0
        %2686 = vmatmul.mubr.bf16.gmra.mxu0 %v2593
        %v2687 = vpop.f32.mrf.mxu0
        %v2688 = vadd.f32 0.0, %v2687
        %v2689 = vpop.f32.mrf.mxu0
        %v2690 = vpop.f32.mrf.mxu0
        %v2691 = vadd.f32 0.0, %v2690
        %v2692 = vpop.f32.mrf.mxu0
        %2693 = vmatprep.mubr.bf16.mxu0 0
        %2694 = vmatmul.mubr.bf16.gmra.mxu0 %v2596
        %v2695 = vpop.f32.mrf.mxu0
        %v2696 = vadd.f32 0.0, %v2695
        %v2697 = vpop.f32.mrf.mxu0
        %v2698 = vpop.f32.mrf.mxu0
        %v2699 = vadd.f32 0.0, %v2698
        %v2700 = vpop.f32.mrf.mxu0
        %2701 = vmatprep.mubr.bf16.mxu0 0
        %2702 = vmatmul.mubr.bf16.gmra.mxu0 %v2599
        %v2703 = vpop.f32.mrf.mxu0
        %v2704 = vadd.f32 0.0, %v2703
        %v2705 = vpop.f32.mrf.mxu0
        %v2706 = vpop.f32.mrf.mxu0
        %v2707 = vadd.f32 0.0, %v2706
        %v2708 = vpop.f32.mrf.mxu0
        %2709 = vmatprep.mubr.bf16.mxu0 0
        %2710 = vmatmul.mubr.bf16.gmra.mxu0 %v2602
        %v2711 = vpop.f32.mrf.mxu0
        %v2712 = vadd.f32 0.0, %v2711
        %v2713 = vpop.f32.mrf.mxu0
        %v2714 = vpop.f32.mrf.mxu0
        %v2715 = vadd.f32 0.0, %v2714
        %v2716 = vpop.f32.mrf.mxu0
        %2717 = vmatprep.mubr.bf16.mxu0 0
        %2718 = vmatmul.mubr.bf16.gmra.mxu0 %v2605
        %v2719 = vpop.f32.mrf.mxu0
        %v2720 = vadd.f32 0.0, %v2719
        %v2721 = vpop.f32.mrf.mxu0
        %v2722 = vpop.f32.mrf.mxu0
        %v2723 = vadd.f32 0.0, %v2722
        %v2724 = vpop.f32.mrf.mxu0
        %2725 = vmatprep.mubr.bf16.mxu0 0
        %2726 = vmatmul.mubr.bf16.gmra.mxu0 %v2608
        %v2727 = vpop.f32.mrf.mxu0
        %v2728 = vadd.f32 0.0, %v2727
        %v2729 = vpop.f32.mrf.mxu0
        %v2730 = vpop.f32.mrf.mxu0
        %v2731 = vadd.f32 0.0, %v2730
        %v2732 = vpop.f32.mrf.mxu0
        %2733 = vmatprep.mubr.bf16.mxu0 0
        %2734 = vmatmul.mubr.bf16.gmra.mxu0 %v2611
        %v2735 = vpop.f32.mrf.mxu0
        %v2736 = vadd.f32 0.0, %v2735
        %v2737 = vpop.f32.mrf.mxu0
        %v2738 = vpop.f32.mrf.mxu0
        %v2739 = vadd.f32 0.0, %v2738
        %v2740 = vpop.f32.mrf.mxu0
        %2741 = vmatprep.mubr.bf16.mxu0 0
        %2742 = vmatmul.mubr.bf16.gmra.mxu0 %v2614
        %v2743 = vpop.f32.mrf.mxu0
        %v2744 = vadd.f32 0.0, %v2743
        %v2745 = vpop.f32.mrf.mxu0
        %v2746 = vpop.f32.mrf.mxu0
        %v2747 = vadd.f32 0.0, %v2746
        %v2748 = vpop.f32.mrf.mxu0
        %2749 = vmatprep.mubr.bf16.mxu0 0
        %2750 = vmatmul.mubr.bf16.gmra.mxu0 %v2617
        %v2751 = vpop.f32.mrf.mxu0
        %v2752 = vadd.f32 0.0, %v2751
        %v2753 = vpop.f32.mrf.mxu0
        %v2754 = vpop.f32.mrf.mxu0
        %v2755 = vadd.f32 0.0, %v2754
        %v2756 = vpop.f32.mrf.mxu0
        %2757 = vmatprep.mubr.bf16.mxu0 0
        %2758 = vmatmul.mubr.bf16.gmra.mxu0 %v2620
        %v2759 = vpop.f32.mrf.mxu0
        %v2760 = vadd.f32 0.0, %v2759
        %v2761 = vpop.f32.mrf.mxu0
        %v2762 = vpop.f32.mrf.mxu0
        %v2763 = vadd.f32 0.0, %v2762
        %v2764 = vpop.f32.mrf.mxu0
        %2765 = vmatprep.mubr.bf16.mxu0 0
        %2766 = vmatmul.mubr.bf16.gmra.mxu0 %v2623
        %v2767 = vpop.f32.mrf.mxu0
        %v2768 = vadd.f32 0.0, %v2767
        %v2769 = vpop.f32.mrf.mxu0
        %v2770 = vpop.f32.mrf.mxu0
        %v2771 = vadd.f32 0.0, %v2770
        %v2772 = vpop.f32.mrf.mxu0
        %2773 = vmatprep.mubr.bf16.mxu0 0
        %2774 = vmatmul.mubr.bf16.gmra.mxu0 %v2626
        %v2775 = vpop.f32.mrf.mxu0
        %v2776 = vadd.f32 0.0, %v2775
        %v2777 = vpop.f32.mrf.mxu0
        %v2778 = vpop.f32.mrf.mxu0
        %v2779 = vadd.f32 0.0, %v2778
        %v2780 = vpop.f32.mrf.mxu0
        %2781 = vmatprep.mubr.bf16.mxu0 0
        %2782 = vmatmul.mubr.bf16.gmra.mxu0 %v2629
        %v2783 = vpop.f32.mrf.mxu0
        %v2784 = vadd.f32 0.0, %v2783
        %v2785 = vpop.f32.mrf.mxu0
        %v2786 = vpop.f32.mrf.mxu0
        %v2787 = vadd.f32 0.0, %v2786
        %v2788 = vpop.f32.mrf.mxu0
        %2789 = vmatprep.mubr.bf16.mxu0 0
        %2790 = vmatmul.mubr.bf16.gmra.mxu0 %v2632
        %v2791 = vpop.f32.mrf.mxu0
        %v2792 = vadd.f32 0.0, %v2791
        %v2793 = vpop.f32.mrf.mxu0
        %v2794 = vpop.f32.mrf.mxu0
        %v2795 = vadd.f32 0.0, %v2794
        %v2796 = vpop.f32.mrf.mxu0
        %2797 = vdwg.mxu0
        %v2798 = vadd.f32 %v2504, %v2672
        %v2799 = vadd.f32 %v2505, %v2675
        %v2800 = vadd.f32 %v2506, %v2680
        %v2801 = vadd.f32 %v2507, %v2683
        %v2802 = vadd.f32 %v2508, %v2688
        %v2803 = vadd.f32 %v2509, %v2691
        %v2804 = vadd.f32 %v2510, %v2696
        %v2805 = vadd.f32 %v2511, %v2699
        %v2806 = vadd.f32 %v2512, %v2704
        %v2807 = vadd.f32 %v2513, %v2707
        %v2808 = vadd.f32 %v2514, %v2712
        %v2809 = vadd.f32 %v2515, %v2715
        %v2810 = vadd.f32 %v2516, %v2720
        %v2811 = vadd.f32 %v2517, %v2723
        %v2812 = vadd.f32 %v2518, %v2728
        %v2813 = vadd.f32 %v2519, %v2731
        %v2814 = vadd.f32 %v2520, %v2736
        %v2815 = vadd.f32 %v2521, %v2739
        %v2816 = vadd.f32 %v2522, %v2744
        %v2817 = vadd.f32 %v2523, %v2747
        %v2818 = vadd.f32 %v2524, %v2752
        %v2819 = vadd.f32 %v2525, %v2755
        %v2820 = vadd.f32 %v2526, %v2760
        %v2821 = vadd.f32 %v2527, %v2763
        %v2822 = vadd.f32 %v2528, %v2768
        %v2823 = vadd.f32 %v2529, %v2771
        %v2824 = vadd.f32 %v2530, %v2776
        %v2825 = vadd.f32 %v2531, %v2779
        %v2826 = vadd.f32 %v2532, %v2784
        %v2827 = vadd.f32 %v2533, %v2787
        %v2828 = vadd.f32 %v2534, %v2792
        %v2829 = vadd.f32 %v2535, %v2795
        %v2830 = vld [vmem:[%s2241 + $0x2] sm:$0xff]
        %v2831 = vld [vmem:[%s2241 + $0xa] sm:$0xff]
        %v2832 = vld [vmem:[%s2241 + $0x1a] sm:$0xff]
        %v2833 = vld [vmem:[%s2241 + $0x22] sm:$0xff]
        %v2834 = vld [vmem:[%s2241 + $0x32] sm:$0xff]
        %v2835 = vld [vmem:[%s2241 + $0x3a] sm:$0xff]
        %v2836 = vld [vmem:[%s2241 + $0x4a] sm:$0xff]
        %v2837 = vld [vmem:[%s2241 + $0x52] sm:$0xff]
        %v2838 = vld [vmem:[%s2241 + $0x62] sm:$0xff]
        %v2839 = vld [vmem:[%s2241 + $0x6a] sm:$0xff]
        %v2840 = vld [vmem:[%s2241 + $0x7a] sm:$0xff]
        %v2841 = vld [vmem:[%s2241 + $0x82] sm:$0xff]
        %v2842 = vld [vmem:[%s2241 + $0x92] sm:$0xff]
        %v2843 = vld [vmem:[%s2241 + $0x9a] sm:$0xff]
        %v2844 = vld [vmem:[%s2241 + $0xaa] sm:$0xff]
        %v2845 = vld [vmem:[%s2241 + $0xb2] sm:$0xff]
        %v2846 = vld [vmem:[%s2241 + $0xc2] sm:$0xff]
        %v2847 = vld [vmem:[%s2241 + $0xca] sm:$0xff]
        %v2848 = vld [vmem:[%s2241 + $0xda] sm:$0xff]
        %v2849 = vld [vmem:[%s2241 + $0xe2] sm:$0xff]
        %v2850 = vld [vmem:[%s2241 + $0xf2] sm:$0xff]
        %v2851 = vld [vmem:[%s2241 + $0xfa] sm:$0xff]
        %v2852 = vld [vmem:[%s2241 + $0x10a] sm:$0xff]
        %v2853 = vld [vmem:[%s2241 + $0x112] sm:$0xff]
        %v2854 = vld [vmem:[%s2241 + $0x122] sm:$0xff]
        %v2855 = vld [vmem:[%s2241 + $0x12a] sm:$0xff]
        %v2856 = vld [vmem:[%s2241 + $0x13a] sm:$0xff]
        %v2857 = vld [vmem:[%s2241 + $0x142] sm:$0xff]
        %v2858 = vld [vmem:[%s2241 + $0x152] sm:$0xff]
        %v2859 = vld [vmem:[%s2241 + $0x15a] sm:$0xff]
        %v2860 = vld [vmem:[%s2241 + $0x16a] sm:$0xff]
        %v2861 = vld [vmem:[%s2241 + $0x172] sm:$0xff]
        %v2862 = vpack.c.bf16 %v2831, %v2830
        %v2863 = vpack.c.bf16 %v2833, %v2832
        %v2864 = vpack.c.bf16 %v2835, %v2834
        %v2865 = vpack.c.bf16 %v2837, %v2836
        %v2866 = vpack.c.bf16 %v2839, %v2838
        %v2867 = vpack.c.bf16 %v2841, %v2840
        %v2868 = vpack.c.bf16 %v2843, %v2842
        %v2869 = vpack.c.bf16 %v2845, %v2844
        %v2870 = vpack.c.bf16 %v2847, %v2846
        %v2871 = vpack.c.bf16 %v2849, %v2848
        %v2872 = vpack.c.bf16 %v2851, %v2850
        %v2873 = vpack.c.bf16 %v2853, %v2852
        %v2874 = vpack.c.bf16 %v2855, %v2854
        %v2875 = vpack.c.bf16 %v2857, %v2856
        %v2876 = vpack.c.bf16 %v2859, %v2858
        %v2877 = vpack.c.bf16 %v2861, %v2860
        %s2878 = scalar_lea.vmem %s3, 28
        %v2879 = vld [vmem:[%s2878] sm:$0xf]
        %v2881 = vsel %vm580, %v2862, 0
        %v2884 = vsel %vm580, %v2863, 0
        %v2887 = vsel %vm580, %v2864, 0
        %v2890 = vsel %vm580, %v2865, 0
        %v2893 = vsel %vm580, %v2866, 0
        %v2896 = vsel %vm580, %v2867, 0
        %v2899 = vsel %vm580, %v2868, 0
        %v2902 = vsel %vm580, %v2869, 0
        %v2905 = vsel %vm580, %v2870, 0
        %v2908 = vsel %vm580, %v2871, 0
        %v2911 = vsel %vm580, %v2872, 0
        %v2914 = vsel %vm580, %v2873, 0
        %v2917 = vsel %vm580, %v2874, 0
        %v2920 = vsel %vm580, %v2875, 0
        %v2923 = vsel %vm580, %v2876, 0
        %v2926 = vsel %vm580, %v2877, 0
        %v2929 = vsel %vm982, %v2879, 0
        %2931 = vmatprep.subr.bf16.mxu0 0
        %2932 = vmatpush1.bf16.msra.mxu0 0
        %2933 = vmatprep.subr.bf16.mxu0 0
        %2934 = vmatpush1.bf16.msra.mxu0 0
        %2935 = vmatprep.subr.bf16.mxu0 0
        %2936 = vmatpush1.bf16.msra.mxu0 0
        %2937 = vmatprep.subr.bf16.mxu0 0
        %2938 = vmatpush1.bf16.msra.mxu0 0
        %2939 = vmatprep.subr.bf16.mxu0 0
        %2940 = vmatpush1.bf16.msra.mxu0 0
        %2941 = vmatprep.subr.bf16.mxu0 0
        %2942 = vmatpush1.bf16.msra.mxu0 0
        %2943 = vmatprep.subr.bf16.mxu0 0
        %2944 = vmatpush1.bf16.msra.mxu0 0
        %2945 = vmatprep.subr.bf16.mxu0 0
        %2946 = vmatpush1.bf16.msra.mxu0 %v2929
        %2947 = vmatprep.subr.bf16.mxu0 0
        %2948 = vmatpush2.bf16.msra.mxu0 0
        %2949 = vmatprep.subr.bf16.mxu0 0
        %2950 = vmatpush2.bf16.msra.mxu0 0
        %2951 = vmatprep.subr.bf16.mxu0 0
        %2952 = vmatpush2.bf16.msra.mxu0 0
        %2953 = vmatprep.subr.bf16.mxu0 0
        %2954 = vmatpush2.bf16.msra.mxu0 0
        %2955 = vmatprep.subr.bf16.mxu0 0
        %2956 = vmatpush2.bf16.msra.mxu0 0
        %2957 = vmatprep.subr.bf16.mxu0 0
        %2958 = vmatpush2.bf16.msra.mxu0 0
        %2959 = vmatprep.subr.bf16.mxu0 0
        %2960 = vmatpush2.bf16.msra.mxu0 0
        %2961 = vmatprep.subr.bf16.mxu0 0
        %2962 = vmatpush2.bf16.msra.mxu0 0
        %2963 = vmatprep.mubr.bf16.mxu0 0
        %2964 = vmatmul.mubr.bf16.gmra.mxu0 %v2881
        %v2965 = vpop.f32.mrf.mxu0
        %v2966 = vadd.f32 0.0, %v2965
        %v2967 = vpop.f32.mrf.mxu0
        %v2968 = vpop.f32.mrf.mxu0
        %v2969 = vadd.f32 0.0, %v2968
        %v2970 = vpop.f32.mrf.mxu0
        %2971 = vmatprep.mubr.bf16.mxu0 0
        %2972 = vmatmul.mubr.bf16.gmra.mxu0 %v2884
        %v2973 = vpop.f32.mrf.mxu0
        %v2974 = vadd.f32 0.0, %v2973
        %v2975 = vpop.f32.mrf.mxu0
        %v2976 = vpop.f32.mrf.mxu0
        %v2977 = vadd.f32 0.0, %v2976
        %v2978 = vpop.f32.mrf.mxu0
        %2979 = vmatprep.mubr.bf16.mxu0 0
        %2980 = vmatmul.mubr.bf16.gmra.mxu0 %v2887
        %v2981 = vpop.f32.mrf.mxu0
        %v2982 = vadd.f32 0.0, %v2981
        %v2983 = vpop.f32.mrf.mxu0
        %v2984 = vpop.f32.mrf.mxu0
        %v2985 = vadd.f32 0.0, %v2984
        %v2986 = vpop.f32.mrf.mxu0
        %2987 = vmatprep.mubr.bf16.mxu0 0
        %2988 = vmatmul.mubr.bf16.gmra.mxu0 %v2890
        %v2989 = vpop.f32.mrf.mxu0
        %v2990 = vadd.f32 0.0, %v2989
        %v2991 = vpop.f32.mrf.mxu0
        %v2992 = vpop.f32.mrf.mxu0
        %v2993 = vadd.f32 0.0, %v2992
        %v2994 = vpop.f32.mrf.mxu0
        %2995 = vmatprep.mubr.bf16.mxu0 0
        %2996 = vmatmul.mubr.bf16.gmra.mxu0 %v2893
        %v2997 = vpop.f32.mrf.mxu0
        %v2998 = vadd.f32 0.0, %v2997
        %v2999 = vpop.f32.mrf.mxu0
        %v3000 = vpop.f32.mrf.mxu0
        %v3001 = vadd.f32 0.0, %v3000
        %v3002 = vpop.f32.mrf.mxu0
        %3003 = vmatprep.mubr.bf16.mxu0 0
        %3004 = vmatmul.mubr.bf16.gmra.mxu0 %v2896
        %v3005 = vpop.f32.mrf.mxu0
        %v3006 = vadd.f32 0.0, %v3005
        %v3007 = vpop.f32.mrf.mxu0
        %v3008 = vpop.f32.mrf.mxu0
        %v3009 = vadd.f32 0.0, %v3008
        %v3010 = vpop.f32.mrf.mxu0
        %3011 = vmatprep.mubr.bf16.mxu0 0
        %3012 = vmatmul.mubr.bf16.gmra.mxu0 %v2899
        %v3013 = vpop.f32.mrf.mxu0
        %v3014 = vadd.f32 0.0, %v3013
        %v3015 = vpop.f32.mrf.mxu0
        %v3016 = vpop.f32.mrf.mxu0
        %v3017 = vadd.f32 0.0, %v3016
        %v3018 = vpop.f32.mrf.mxu0
        %3019 = vmatprep.mubr.bf16.mxu0 0
        %3020 = vmatmul.mubr.bf16.gmra.mxu0 %v2902
        %v3021 = vpop.f32.mrf.mxu0
        %v3022 = vadd.f32 0.0, %v3021
        %v3023 = vpop.f32.mrf.mxu0
        %v3024 = vpop.f32.mrf.mxu0
        %v3025 = vadd.f32 0.0, %v3024
        %v3026 = vpop.f32.mrf.mxu0
        %3027 = vmatprep.mubr.bf16.mxu0 0
        %3028 = vmatmul.mubr.bf16.gmra.mxu0 %v2905
        %v3029 = vpop.f32.mrf.mxu0
        %v3030 = vadd.f32 0.0, %v3029
        %v3031 = vpop.f32.mrf.mxu0
        %v3032 = vpop.f32.mrf.mxu0
        %v3033 = vadd.f32 0.0, %v3032
        %v3034 = vpop.f32.mrf.mxu0
        %3035 = vmatprep.mubr.bf16.mxu0 0
        %3036 = vmatmul.mubr.bf16.gmra.mxu0 %v2908
        %v3037 = vpop.f32.mrf.mxu0
        %v3038 = vadd.f32 0.0, %v3037
        %v3039 = vpop.f32.mrf.mxu0
        %v3040 = vpop.f32.mrf.mxu0
        %v3041 = vadd.f32 0.0, %v3040
        %v3042 = vpop.f32.mrf.mxu0
        %3043 = vmatprep.mubr.bf16.mxu0 0
        %3044 = vmatmul.mubr.bf16.gmra.mxu0 %v2911
        %v3045 = vpop.f32.mrf.mxu0
        %v3046 = vadd.f32 0.0, %v3045
        %v3047 = vpop.f32.mrf.mxu0
        %v3048 = vpop.f32.mrf.mxu0
        %v3049 = vadd.f32 0.0, %v3048
        %v3050 = vpop.f32.mrf.mxu0
        %3051 = vmatprep.mubr.bf16.mxu0 0
        %3052 = vmatmul.mubr.bf16.gmra.mxu0 %v2914
        %v3053 = vpop.f32.mrf.mxu0
        %v3054 = vadd.f32 0.0, %v3053
        %v3055 = vpop.f32.mrf.mxu0
        %v3056 = vpop.f32.mrf.mxu0
        %v3057 = vadd.f32 0.0, %v3056
        %v3058 = vpop.f32.mrf.mxu0
        %3059 = vmatprep.mubr.bf16.mxu0 0
        %3060 = vmatmul.mubr.bf16.gmra.mxu0 %v2917
        %v3061 = vpop.f32.mrf.mxu0
        %v3062 = vadd.f32 0.0, %v3061
        %v3063 = vpop.f32.mrf.mxu0
        %v3064 = vpop.f32.mrf.mxu0
        %v3065 = vadd.f32 0.0, %v3064
        %v3066 = vpop.f32.mrf.mxu0
        %3067 = vmatprep.mubr.bf16.mxu0 0
        %3068 = vmatmul.mubr.bf16.gmra.mxu0 %v2920
        %v3069 = vpop.f32.mrf.mxu0
        %v3070 = vadd.f32 0.0, %v3069
        %v3071 = vpop.f32.mrf.mxu0
        %v3072 = vpop.f32.mrf.mxu0
        %v3073 = vadd.f32 0.0, %v3072
        %v3074 = vpop.f32.mrf.mxu0
        %3075 = vmatprep.mubr.bf16.mxu0 0
        %3076 = vmatmul.mubr.bf16.gmra.mxu0 %v2923
        %v3077 = vpop.f32.mrf.mxu0
        %v3078 = vadd.f32 0.0, %v3077
        %v3079 = vpop.f32.mrf.mxu0
        %v3080 = vpop.f32.mrf.mxu0
        %v3081 = vadd.f32 0.0, %v3080
        %v3082 = vpop.f32.mrf.mxu0
        %3083 = vmatprep.mubr.bf16.mxu0 0
        %3084 = vmatmul.mubr.bf16.gmra.mxu0 %v2926
        %v3085 = vpop.f32.mrf.mxu0
        %v3086 = vadd.f32 0.0, %v3085
        %v3087 = vpop.f32.mrf.mxu0
        %v3088 = vpop.f32.mrf.mxu0
        %v3089 = vadd.f32 0.0, %v3088
        %v3090 = vpop.f32.mrf.mxu0
        %3091 = vdwg.mxu0
        %v3092 = vadd.f32 %v2798, %v2966
        %v3093 = vadd.f32 %v2799, %v2969
        %v3094 = vadd.f32 %v2800, %v2974
        %v3095 = vadd.f32 %v2801, %v2977
        %v3096 = vadd.f32 %v2802, %v2982
        %v3097 = vadd.f32 %v2803, %v2985
        %v3098 = vadd.f32 %v2804, %v2990
        %v3099 = vadd.f32 %v2805, %v2993
        %v3100 = vadd.f32 %v2806, %v2998
        %v3101 = vadd.f32 %v2807, %v3001
        %v3102 = vadd.f32 %v2808, %v3006
        %v3103 = vadd.f32 %v2809, %v3009
        %v3104 = vadd.f32 %v2810, %v3014
        %v3105 = vadd.f32 %v2811, %v3017
        %v3106 = vadd.f32 %v2812, %v3022
        %v3107 = vadd.f32 %v2813, %v3025
        %v3108 = vadd.f32 %v2814, %v3030
        %v3109 = vadd.f32 %v2815, %v3033
        %v3110 = vadd.f32 %v2816, %v3038
        %v3111 = vadd.f32 %v2817, %v3041
        %v3112 = vadd.f32 %v2818, %v3046
        %v3113 = vadd.f32 %v2819, %v3049
        %v3114 = vadd.f32 %v2820, %v3054
        %v3115 = vadd.f32 %v2821, %v3057
        %v3116 = vadd.f32 %v2822, %v3062
        %v3117 = vadd.f32 %v2823, %v3065
        %v3118 = vadd.f32 %v2824, %v3070
        %v3119 = vadd.f32 %v2825, %v3073
        %v3120 = vadd.f32 %v2826, %v3078
        %v3121 = vadd.f32 %v2827, %v3081
        %v3122 = vadd.f32 %v2828, %v3086
        %v3123 = vadd.f32 %v2829, %v3089
        %v3124 = vld [vmem:[%s2241 + $0x3] sm:$0xff]
        %v3125 = vld [vmem:[%s2241 + $0xb] sm:$0xff]
        %v3126 = vld [vmem:[%s2241 + $0x1b] sm:$0xff]
        %v3127 = vld [vmem:[%s2241 + $0x23] sm:$0xff]
        %v3128 = vld [vmem:[%s2241 + $0x33] sm:$0xff]
        %v3129 = vld [vmem:[%s2241 + $0x3b] sm:$0xff]
        %v3130 = vld [vmem:[%s2241 + $0x4b] sm:$0xff]
        %v3131 = vld [vmem:[%s2241 + $0x53] sm:$0xff]
        %v3132 = vld [vmem:[%s2241 + $0x63] sm:$0xff]
        %v3133 = vld [vmem:[%s2241 + $0x6b] sm:$0xff]
        %v3134 = vld [vmem:[%s2241 + $0x7b] sm:$0xff]
        %v3135 = vld [vmem:[%s2241 + $0x83] sm:$0xff]
        %v3136 = vld [vmem:[%s2241 + $0x93] sm:$0xff]
        %v3137 = vld [vmem:[%s2241 + $0x9b] sm:$0xff]
        %v3138 = vld [vmem:[%s2241 + $0xab] sm:$0xff]
        %v3139 = vld [vmem:[%s2241 + $0xb3] sm:$0xff]
        %v3140 = vld [vmem:[%s2241 + $0xc3] sm:$0xff]
        %v3141 = vld [vmem:[%s2241 + $0xcb] sm:$0xff]
        %v3142 = vld [vmem:[%s2241 + $0xdb] sm:$0xff]
        %v3143 = vld [vmem:[%s2241 + $0xe3] sm:$0xff]
        %v3144 = vld [vmem:[%s2241 + $0xf3] sm:$0xff]
        %v3145 = vld [vmem:[%s2241 + $0xfb] sm:$0xff]
        %v3146 = vld [vmem:[%s2241 + $0x10b] sm:$0xff]
        %v3147 = vld [vmem:[%s2241 + $0x113] sm:$0xff]
        %v3148 = vld [vmem:[%s2241 + $0x123] sm:$0xff]
        %v3149 = vld [vmem:[%s2241 + $0x12b] sm:$0xff]
        %v3150 = vld [vmem:[%s2241 + $0x13b] sm:$0xff]
        %v3151 = vld [vmem:[%s2241 + $0x143] sm:$0xff]
        %v3152 = vld [vmem:[%s2241 + $0x153] sm:$0xff]
        %v3153 = vld [vmem:[%s2241 + $0x15b] sm:$0xff]
        %v3154 = vld [vmem:[%s2241 + $0x16b] sm:$0xff]
        %v3155 = vld [vmem:[%s2241 + $0x173] sm:$0xff]
        %v3156 = vpack.c.bf16 %v3125, %v3124
        %v3157 = vpack.c.bf16 %v3127, %v3126
        %v3158 = vpack.c.bf16 %v3129, %v3128
        %v3159 = vpack.c.bf16 %v3131, %v3130
        %v3160 = vpack.c.bf16 %v3133, %v3132
        %v3161 = vpack.c.bf16 %v3135, %v3134
        %v3162 = vpack.c.bf16 %v3137, %v3136
        %v3163 = vpack.c.bf16 %v3139, %v3138
        %v3164 = vpack.c.bf16 %v3141, %v3140
        %v3165 = vpack.c.bf16 %v3143, %v3142
        %v3166 = vpack.c.bf16 %v3145, %v3144
        %v3167 = vpack.c.bf16 %v3147, %v3146
        %v3168 = vpack.c.bf16 %v3149, %v3148
        %v3169 = vpack.c.bf16 %v3151, %v3150
        %v3170 = vpack.c.bf16 %v3153, %v3152
        %v3171 = vpack.c.bf16 %v3155, %v3154
        %s3172 = scalar_lea.vmem %s3, 32
        %v3173 = vld [vmem:[%s3172] sm:$0xf]
        %v3175 = vsel %vm580, %v3156, 0
        %v3178 = vsel %vm580, %v3157, 0
        %v3181 = vsel %vm580, %v3158, 0
        %v3184 = vsel %vm580, %v3159, 0
        %v3187 = vsel %vm580, %v3160, 0
        %v3190 = vsel %vm580, %v3161, 0
        %v3193 = vsel %vm580, %v3162, 0
        %v3196 = vsel %vm580, %v3163, 0
        %v3199 = vsel %vm580, %v3164, 0
        %v3202 = vsel %vm580, %v3165, 0
        %v3205 = vsel %vm580, %v3166, 0
        %v3208 = vsel %vm580, %v3167, 0
        %v3211 = vsel %vm580, %v3168, 0
        %v3214 = vsel %vm580, %v3169, 0
        %v3217 = vsel %vm580, %v3170, 0
        %v3220 = vsel %vm580, %v3171, 0
        %v3223 = vsel %vm982, %v3173, 0
        %3225 = vmatprep.subr.bf16.mxu0 0
        %3226 = vmatpush1.bf16.msra.mxu0 0
        %3227 = vmatprep.subr.bf16.mxu0 0
        %3228 = vmatpush1.bf16.msra.mxu0 0
        %3229 = vmatprep.subr.bf16.mxu0 0
        %3230 = vmatpush1.bf16.msra.mxu0 0
        %3231 = vmatprep.subr.bf16.mxu0 0
        %3232 = vmatpush1.bf16.msra.mxu0 0
        %3233 = vmatprep.subr.bf16.mxu0 0
        %3234 = vmatpush1.bf16.msra.mxu0 0
        %3235 = vmatprep.subr.bf16.mxu0 0
        %3236 = vmatpush1.bf16.msra.mxu0 0
        %3237 = vmatprep.subr.bf16.mxu0 0
        %3238 = vmatpush1.bf16.msra.mxu0 0
        %3239 = vmatprep.subr.bf16.mxu0 0
        %3240 = vmatpush1.bf16.msra.mxu0 %v3223
        %3241 = vmatprep.subr.bf16.mxu0 0
        %3242 = vmatpush2.bf16.msra.mxu0 0
        %3243 = vmatprep.subr.bf16.mxu0 0
        %3244 = vmatpush2.bf16.msra.mxu0 0
        %3245 = vmatprep.subr.bf16.mxu0 0
        %3246 = vmatpush2.bf16.msra.mxu0 0
        %3247 = vmatprep.subr.bf16.mxu0 0
        %3248 = vmatpush2.bf16.msra.mxu0 0
        %3249 = vmatprep.subr.bf16.mxu0 0
        %3250 = vmatpush2.bf16.msra.mxu0 0
        %3251 = vmatprep.subr.bf16.mxu0 0
        %3252 = vmatpush2.bf16.msra.mxu0 0
        %3253 = vmatprep.subr.bf16.mxu0 0
        %3254 = vmatpush2.bf16.msra.mxu0 0
        %3255 = vmatprep.subr.bf16.mxu0 0
        %3256 = vmatpush2.bf16.msra.mxu0 0
        %3257 = vmatprep.mubr.bf16.mxu0 0
        %3258 = vmatmul.mubr.bf16.gmra.mxu0 %v3175
        %v3259 = vpop.f32.mrf.mxu0
        %v3260 = vadd.f32 0.0, %v3259
        %v3261 = vpop.f32.mrf.mxu0
        %v3262 = vpop.f32.mrf.mxu0
        %v3263 = vadd.f32 0.0, %v3262
        %v3264 = vpop.f32.mrf.mxu0
        %3265 = vmatprep.mubr.bf16.mxu0 0
        %3266 = vmatmul.mubr.bf16.gmra.mxu0 %v3178
        %v3267 = vpop.f32.mrf.mxu0
        %v3268 = vadd.f32 0.0, %v3267
        %v3269 = vpop.f32.mrf.mxu0
        %v3270 = vpop.f32.mrf.mxu0
        %v3271 = vadd.f32 0.0, %v3270
        %v3272 = vpop.f32.mrf.mxu0
        %3273 = vmatprep.mubr.bf16.mxu0 0
        %3274 = vmatmul.mubr.bf16.gmra.mxu0 %v3181
        %v3275 = vpop.f32.mrf.mxu0
        %v3276 = vadd.f32 0.0, %v3275
        %v3277 = vpop.f32.mrf.mxu0
        %v3278 = vpop.f32.mrf.mxu0
        %v3279 = vadd.f32 0.0, %v3278
        %v3280 = vpop.f32.mrf.mxu0
        %3281 = vmatprep.mubr.bf16.mxu0 0
        %3282 = vmatmul.mubr.bf16.gmra.mxu0 %v3184
        %v3283 = vpop.f32.mrf.mxu0
        %v3284 = vadd.f32 0.0, %v3283
        %v3285 = vpop.f32.mrf.mxu0
        %v3286 = vpop.f32.mrf.mxu0
        %v3287 = vadd.f32 0.0, %v3286
        %v3288 = vpop.f32.mrf.mxu0
        %3289 = vmatprep.mubr.bf16.mxu0 0
        %3290 = vmatmul.mubr.bf16.gmra.mxu0 %v3187
        %v3291 = vpop.f32.mrf.mxu0
        %v3292 = vadd.f32 0.0, %v3291
        %v3293 = vpop.f32.mrf.mxu0
        %v3294 = vpop.f32.mrf.mxu0
        %v3295 = vadd.f32 0.0, %v3294
        %v3296 = vpop.f32.mrf.mxu0
        %3297 = vmatprep.mubr.bf16.mxu0 0
        %3298 = vmatmul.mubr.bf16.gmra.mxu0 %v3190
        %v3299 = vpop.f32.mrf.mxu0
        %v3300 = vadd.f32 0.0, %v3299
        %v3301 = vpop.f32.mrf.mxu0
        %v3302 = vpop.f32.mrf.mxu0
        %v3303 = vadd.f32 0.0, %v3302
        %v3304 = vpop.f32.mrf.mxu0
        %3305 = vmatprep.mubr.bf16.mxu0 0
        %3306 = vmatmul.mubr.bf16.gmra.mxu0 %v3193
        %v3307 = vpop.f32.mrf.mxu0
        %v3308 = vadd.f32 0.0, %v3307
        %v3309 = vpop.f32.mrf.mxu0
        %v3310 = vpop.f32.mrf.mxu0
        %v3311 = vadd.f32 0.0, %v3310
        %v3312 = vpop.f32.mrf.mxu0
        %3313 = vmatprep.mubr.bf16.mxu0 0
        %3314 = vmatmul.mubr.bf16.gmra.mxu0 %v3196
        %v3315 = vpop.f32.mrf.mxu0
        %v3316 = vadd.f32 0.0, %v3315
        %v3317 = vpop.f32.mrf.mxu0
        %v3318 = vpop.f32.mrf.mxu0
        %v3319 = vadd.f32 0.0, %v3318
        %v3320 = vpop.f32.mrf.mxu0
        %3321 = vmatprep.mubr.bf16.mxu0 0
        %3322 = vmatmul.mubr.bf16.gmra.mxu0 %v3199
        %v3323 = vpop.f32.mrf.mxu0
        %v3324 = vadd.f32 0.0, %v3323
        %v3325 = vpop.f32.mrf.mxu0
        %v3326 = vpop.f32.mrf.mxu0
        %v3327 = vadd.f32 0.0, %v3326
        %v3328 = vpop.f32.mrf.mxu0
        %3329 = vmatprep.mubr.bf16.mxu0 0
        %3330 = vmatmul.mubr.bf16.gmra.mxu0 %v3202
        %v3331 = vpop.f32.mrf.mxu0
        %v3332 = vadd.f32 0.0, %v3331
        %v3333 = vpop.f32.mrf.mxu0
        %v3334 = vpop.f32.mrf.mxu0
        %v3335 = vadd.f32 0.0, %v3334
        %v3336 = vpop.f32.mrf.mxu0
        %3337 = vmatprep.mubr.bf16.mxu0 0
        %3338 = vmatmul.mubr.bf16.gmra.mxu0 %v3205
        %v3339 = vpop.f32.mrf.mxu0
        %v3340 = vadd.f32 0.0, %v3339
        %v3341 = vpop.f32.mrf.mxu0
        %v3342 = vpop.f32.mrf.mxu0
        %v3343 = vadd.f32 0.0, %v3342
        %v3344 = vpop.f32.mrf.mxu0
        %3345 = vmatprep.mubr.bf16.mxu0 0
        %3346 = vmatmul.mubr.bf16.gmra.mxu0 %v3208
        %v3347 = vpop.f32.mrf.mxu0
        %v3348 = vadd.f32 0.0, %v3347
        %v3349 = vpop.f32.mrf.mxu0
        %v3350 = vpop.f32.mrf.mxu0
        %v3351 = vadd.f32 0.0, %v3350
        %v3352 = vpop.f32.mrf.mxu0
        %3353 = vmatprep.mubr.bf16.mxu0 0
        %3354 = vmatmul.mubr.bf16.gmra.mxu0 %v3211
        %v3355 = vpop.f32.mrf.mxu0
        %v3356 = vadd.f32 0.0, %v3355
        %v3357 = vpop.f32.mrf.mxu0
        %v3358 = vpop.f32.mrf.mxu0
        %v3359 = vadd.f32 0.0, %v3358
        %v3360 = vpop.f32.mrf.mxu0
        %3361 = vmatprep.mubr.bf16.mxu0 0
        %3362 = vmatmul.mubr.bf16.gmra.mxu0 %v3214
        %v3363 = vpop.f32.mrf.mxu0
        %v3364 = vadd.f32 0.0, %v3363
        %v3365 = vpop.f32.mrf.mxu0
        %v3366 = vpop.f32.mrf.mxu0
        %v3367 = vadd.f32 0.0, %v3366
        %v3368 = vpop.f32.mrf.mxu0
        %3369 = vmatprep.mubr.bf16.mxu0 0
        %3370 = vmatmul.mubr.bf16.gmra.mxu0 %v3217
        %v3371 = vpop.f32.mrf.mxu0
        %v3372 = vadd.f32 0.0, %v3371
        %v3373 = vpop.f32.mrf.mxu0
        %v3374 = vpop.f32.mrf.mxu0
        %v3375 = vadd.f32 0.0, %v3374
        %v3376 = vpop.f32.mrf.mxu0
        %3377 = vmatprep.mubr.bf16.mxu0 0
        %3378 = vmatmul.mubr.bf16.gmra.mxu0 %v3220
        %v3379 = vpop.f32.mrf.mxu0
        %v3380 = vadd.f32 0.0, %v3379
        %v3381 = vpop.f32.mrf.mxu0
        %v3382 = vpop.f32.mrf.mxu0
        %v3383 = vadd.f32 0.0, %v3382
        %v3384 = vpop.f32.mrf.mxu0
        %3385 = vdwg.mxu0
        %v3386 = vadd.f32 %v3092, %v3260
        %v3387 = vadd.f32 %v3093, %v3263
        %v3388 = vadd.f32 %v3094, %v3268
        %v3389 = vadd.f32 %v3095, %v3271
        %v3390 = vadd.f32 %v3096, %v3276
        %v3391 = vadd.f32 %v3097, %v3279
        %v3392 = vadd.f32 %v3098, %v3284
        %v3393 = vadd.f32 %v3099, %v3287
        %v3394 = vadd.f32 %v3100, %v3292
        %v3395 = vadd.f32 %v3101, %v3295
        %v3396 = vadd.f32 %v3102, %v3300
        %v3397 = vadd.f32 %v3103, %v3303
        %v3398 = vadd.f32 %v3104, %v3308
        %v3399 = vadd.f32 %v3105, %v3311
        %v3400 = vadd.f32 %v3106, %v3316
        %v3401 = vadd.f32 %v3107, %v3319
        %v3402 = vadd.f32 %v3108, %v3324
        %v3403 = vadd.f32 %v3109, %v3327
        %v3404 = vadd.f32 %v3110, %v3332
        %v3405 = vadd.f32 %v3111, %v3335
        %v3406 = vadd.f32 %v3112, %v3340
        %v3407 = vadd.f32 %v3113, %v3343
        %v3408 = vadd.f32 %v3114, %v3348
        %v3409 = vadd.f32 %v3115, %v3351
        %v3410 = vadd.f32 %v3116, %v3356
        %v3411 = vadd.f32 %v3117, %v3359
        %v3412 = vadd.f32 %v3118, %v3364
        %v3413 = vadd.f32 %v3119, %v3367
        %v3414 = vadd.f32 %v3120, %v3372
        %v3415 = vadd.f32 %v3121, %v3375
        %v3416 = vadd.f32 %v3122, %v3380
        %v3417 = vadd.f32 %v3123, %v3383
        %v3418 = vld [vmem:[%s2241 + $0x4] sm:$0xff]
        %v3419 = vld [vmem:[%s2241 + $0xc] sm:$0xff]
        %v3420 = vld [vmem:[%s2241 + $0x1c] sm:$0xff]
        %v3421 = vld [vmem:[%s2241 + $0x24] sm:$0xff]
        %v3422 = vld [vmem:[%s2241 + $0x34] sm:$0xff]
        %v3423 = vld [vmem:[%s2241 + $0x3c] sm:$0xff]
        %v3424 = vld [vmem:[%s2241 + $0x4c] sm:$0xff]
        %v3425 = vld [vmem:[%s2241 + $0x54] sm:$0xff]
        %v3426 = vld [vmem:[%s2241 + $0x64] sm:$0xff]
        %v3427 = vld [vmem:[%s2241 + $0x6c] sm:$0xff]
        %v3428 = vld [vmem:[%s2241 + $0x7c] sm:$0xff]
        %v3429 = vld [vmem:[%s2241 + $0x84] sm:$0xff]
        %v3430 = vld [vmem:[%s2241 + $0x94] sm:$0xff]
        %v3431 = vld [vmem:[%s2241 + $0x9c] sm:$0xff]
        %v3432 = vld [vmem:[%s2241 + $0xac] sm:$0xff]
        %v3433 = vld [vmem:[%s2241 + $0xb4] sm:$0xff]
        %v3434 = vld [vmem:[%s2241 + $0xc4] sm:$0xff]
        %v3435 = vld [vmem:[%s2241 + $0xcc] sm:$0xff]
        %v3436 = vld [vmem:[%s2241 + $0xdc] sm:$0xff]
        %v3437 = vld [vmem:[%s2241 + $0xe4] sm:$0xff]
        %v3438 = vld [vmem:[%s2241 + $0xf4] sm:$0xff]
        %v3439 = vld [vmem:[%s2241 + $0xfc] sm:$0xff]
        %v3440 = vld [vmem:[%s2241 + $0x10c] sm:$0xff]
        %v3441 = vld [vmem:[%s2241 + $0x114] sm:$0xff]
        %v3442 = vld [vmem:[%s2241 + $0x124] sm:$0xff]
        %v3443 = vld [vmem:[%s2241 + $0x12c] sm:$0xff]
        %v3444 = vld [vmem:[%s2241 + $0x13c] sm:$0xff]
        %v3445 = vld [vmem:[%s2241 + $0x144] sm:$0xff]
        %v3446 = vld [vmem:[%s2241 + $0x154] sm:$0xff]
        %v3447 = vld [vmem:[%s2241 + $0x15c] sm:$0xff]
        %v3448 = vld [vmem:[%s2241 + $0x16c] sm:$0xff]
        %v3449 = vld [vmem:[%s2241 + $0x174] sm:$0xff]
        %v3450 = vpack.c.bf16 %v3419, %v3418
        %v3451 = vpack.c.bf16 %v3421, %v3420
        %v3452 = vpack.c.bf16 %v3423, %v3422
        %v3453 = vpack.c.bf16 %v3425, %v3424
        %v3454 = vpack.c.bf16 %v3427, %v3426
        %v3455 = vpack.c.bf16 %v3429, %v3428
        %v3456 = vpack.c.bf16 %v3431, %v3430
        %v3457 = vpack.c.bf16 %v3433, %v3432
        %v3458 = vpack.c.bf16 %v3435, %v3434
        %v3459 = vpack.c.bf16 %v3437, %v3436
        %v3460 = vpack.c.bf16 %v3439, %v3438
        %v3461 = vpack.c.bf16 %v3441, %v3440
        %v3462 = vpack.c.bf16 %v3443, %v3442
        %v3463 = vpack.c.bf16 %v3445, %v3444
        %v3464 = vpack.c.bf16 %v3447, %v3446
        %v3465 = vpack.c.bf16 %v3449, %v3448
        %s3466 = scalar_lea.vmem %s3, 36
        %v3467 = vld [vmem:[%s3466] sm:$0xf]
        %v3469 = vsel %vm580, %v3450, 0
        %v3472 = vsel %vm580, %v3451, 0
        %v3475 = vsel %vm580, %v3452, 0
        %v3478 = vsel %vm580, %v3453, 0
        %v3481 = vsel %vm580, %v3454, 0
        %v3484 = vsel %vm580, %v3455, 0
        %v3487 = vsel %vm580, %v3456, 0
        %v3490 = vsel %vm580, %v3457, 0
        %v3493 = vsel %vm580, %v3458, 0
        %v3496 = vsel %vm580, %v3459, 0
        %v3499 = vsel %vm580, %v3460, 0
        %v3502 = vsel %vm580, %v3461, 0
        %v3505 = vsel %vm580, %v3462, 0
        %v3508 = vsel %vm580, %v3463, 0
        %v3511 = vsel %vm580, %v3464, 0
        %v3514 = vsel %vm580, %v3465, 0
        %v3517 = vsel %vm982, %v3467, 0
        %3519 = vmatprep.subr.bf16.mxu0 0
        %3520 = vmatpush1.bf16.msra.mxu0 0
        %3521 = vmatprep.subr.bf16.mxu0 0
        %3522 = vmatpush1.bf16.msra.mxu0 0
        %3523 = vmatprep.subr.bf16.mxu0 0
        %3524 = vmatpush1.bf16.msra.mxu0 0
        %3525 = vmatprep.subr.bf16.mxu0 0
        %3526 = vmatpush1.bf16.msra.mxu0 0
        %3527 = vmatprep.subr.bf16.mxu0 0
        %3528 = vmatpush1.bf16.msra.mxu0 0
        %3529 = vmatprep.subr.bf16.mxu0 0
        %3530 = vmatpush1.bf16.msra.mxu0 0
        %3531 = vmatprep.subr.bf16.mxu0 0
        %3532 = vmatpush1.bf16.msra.mxu0 0
        %3533 = vmatprep.subr.bf16.mxu0 0
        %3534 = vmatpush1.bf16.msra.mxu0 %v3517
        %3535 = vmatprep.subr.bf16.mxu0 0
        %3536 = vmatpush2.bf16.msra.mxu0 0
        %3537 = vmatprep.subr.bf16.mxu0 0
        %3538 = vmatpush2.bf16.msra.mxu0 0
        %3539 = vmatprep.subr.bf16.mxu0 0
        %3540 = vmatpush2.bf16.msra.mxu0 0
        %3541 = vmatprep.subr.bf16.mxu0 0
        %3542 = vmatpush2.bf16.msra.mxu0 0
        %3543 = vmatprep.subr.bf16.mxu0 0
        %3544 = vmatpush2.bf16.msra.mxu0 0
        %3545 = vmatprep.subr.bf16.mxu0 0
        %3546 = vmatpush2.bf16.msra.mxu0 0
        %3547 = vmatprep.subr.bf16.mxu0 0
        %3548 = vmatpush2.bf16.msra.mxu0 0
        %3549 = vmatprep.subr.bf16.mxu0 0
        %3550 = vmatpush2.bf16.msra.mxu0 0
        %3551 = vmatprep.mubr.bf16.mxu0 0
        %3552 = vmatmul.mubr.bf16.gmra.mxu0 %v3469
        %v3553 = vpop.f32.mrf.mxu0
        %v3554 = vadd.f32 0.0, %v3553
        %v3555 = vpop.f32.mrf.mxu0
        %v3556 = vpop.f32.mrf.mxu0
        %v3557 = vadd.f32 0.0, %v3556
        %v3558 = vpop.f32.mrf.mxu0
        %3559 = vmatprep.mubr.bf16.mxu0 0
        %3560 = vmatmul.mubr.bf16.gmra.mxu0 %v3472
        %v3561 = vpop.f32.mrf.mxu0
        %v3562 = vadd.f32 0.0, %v3561
        %v3563 = vpop.f32.mrf.mxu0
        %v3564 = vpop.f32.mrf.mxu0
        %v3565 = vadd.f32 0.0, %v3564
        %v3566 = vpop.f32.mrf.mxu0
        %3567 = vmatprep.mubr.bf16.mxu0 0
        %3568 = vmatmul.mubr.bf16.gmra.mxu0 %v3475
        %v3569 = vpop.f32.mrf.mxu0
        %v3570 = vadd.f32 0.0, %v3569
        %v3571 = vpop.f32.mrf.mxu0
        %v3572 = vpop.f32.mrf.mxu0
        %v3573 = vadd.f32 0.0, %v3572
        %v3574 = vpop.f32.mrf.mxu0
        %3575 = vmatprep.mubr.bf16.mxu0 0
        %3576 = vmatmul.mubr.bf16.gmra.mxu0 %v3478
        %v3577 = vpop.f32.mrf.mxu0
        %v3578 = vadd.f32 0.0, %v3577
        %v3579 = vpop.f32.mrf.mxu0
        %v3580 = vpop.f32.mrf.mxu0
        %v3581 = vadd.f32 0.0, %v3580
        %v3582 = vpop.f32.mrf.mxu0
        %3583 = vmatprep.mubr.bf16.mxu0 0
        %3584 = vmatmul.mubr.bf16.gmra.mxu0 %v3481
        %v3585 = vpop.f32.mrf.mxu0
        %v3586 = vadd.f32 0.0, %v3585
        %v3587 = vpop.f32.mrf.mxu0
        %v3588 = vpop.f32.mrf.mxu0
        %v3589 = vadd.f32 0.0, %v3588
        %v3590 = vpop.f32.mrf.mxu0
        %3591 = vmatprep.mubr.bf16.mxu0 0
        %3592 = vmatmul.mubr.bf16.gmra.mxu0 %v3484
        %v3593 = vpop.f32.mrf.mxu0
        %v3594 = vadd.f32 0.0, %v3593
        %v3595 = vpop.f32.mrf.mxu0
        %v3596 = vpop.f32.mrf.mxu0
        %v3597 = vadd.f32 0.0, %v3596
        %v3598 = vpop.f32.mrf.mxu0
        %3599 = vmatprep.mubr.bf16.mxu0 0
        %3600 = vmatmul.mubr.bf16.gmra.mxu0 %v3487
        %v3601 = vpop.f32.mrf.mxu0
        %v3602 = vadd.f32 0.0, %v3601
        %v3603 = vpop.f32.mrf.mxu0
        %v3604 = vpop.f32.mrf.mxu0
        %v3605 = vadd.f32 0.0, %v3604
        %v3606 = vpop.f32.mrf.mxu0
        %3607 = vmatprep.mubr.bf16.mxu0 0
        %3608 = vmatmul.mubr.bf16.gmra.mxu0 %v3490
        %v3609 = vpop.f32.mrf.mxu0
        %v3610 = vadd.f32 0.0, %v3609
        %v3611 = vpop.f32.mrf.mxu0
        %v3612 = vpop.f32.mrf.mxu0
        %v3613 = vadd.f32 0.0, %v3612
        %v3614 = vpop.f32.mrf.mxu0
        %3615 = vmatprep.mubr.bf16.mxu0 0
        %3616 = vmatmul.mubr.bf16.gmra.mxu0 %v3493
        %v3617 = vpop.f32.mrf.mxu0
        %v3618 = vadd.f32 0.0, %v3617
        %v3619 = vpop.f32.mrf.mxu0
        %v3620 = vpop.f32.mrf.mxu0
        %v3621 = vadd.f32 0.0, %v3620
        %v3622 = vpop.f32.mrf.mxu0
        %3623 = vmatprep.mubr.bf16.mxu0 0
        %3624 = vmatmul.mubr.bf16.gmra.mxu0 %v3496
        %v3625 = vpop.f32.mrf.mxu0
        %v3626 = vadd.f32 0.0, %v3625
        %v3627 = vpop.f32.mrf.mxu0
        %v3628 = vpop.f32.mrf.mxu0
        %v3629 = vadd.f32 0.0, %v3628
        %v3630 = vpop.f32.mrf.mxu0
        %3631 = vmatprep.mubr.bf16.mxu0 0
        %3632 = vmatmul.mubr.bf16.gmra.mxu0 %v3499
        %v3633 = vpop.f32.mrf.mxu0
        %v3634 = vadd.f32 0.0, %v3633
        %v3635 = vpop.f32.mrf.mxu0
        %v3636 = vpop.f32.mrf.mxu0
        %v3637 = vadd.f32 0.0, %v3636
        %v3638 = vpop.f32.mrf.mxu0
        %3639 = vmatprep.mubr.bf16.mxu0 0
        %3640 = vmatmul.mubr.bf16.gmra.mxu0 %v3502
        %v3641 = vpop.f32.mrf.mxu0
        %v3642 = vadd.f32 0.0, %v3641
        %v3643 = vpop.f32.mrf.mxu0
        %v3644 = vpop.f32.mrf.mxu0
        %v3645 = vadd.f32 0.0, %v3644
        %v3646 = vpop.f32.mrf.mxu0
        %3647 = vmatprep.mubr.bf16.mxu0 0
        %3648 = vmatmul.mubr.bf16.gmra.mxu0 %v3505
        %v3649 = vpop.f32.mrf.mxu0
        %v3650 = vadd.f32 0.0, %v3649
        %v3651 = vpop.f32.mrf.mxu0
        %v3652 = vpop.f32.mrf.mxu0
        %v3653 = vadd.f32 0.0, %v3652
        %v3654 = vpop.f32.mrf.mxu0
        %3655 = vmatprep.mubr.bf16.mxu0 0
        %3656 = vmatmul.mubr.bf16.gmra.mxu0 %v3508
        %v3657 = vpop.f32.mrf.mxu0
        %v3658 = vadd.f32 0.0, %v3657
        %v3659 = vpop.f32.mrf.mxu0
        %v3660 = vpop.f32.mrf.mxu0
        %v3661 = vadd.f32 0.0, %v3660
        %v3662 = vpop.f32.mrf.mxu0
        %3663 = vmatprep.mubr.bf16.mxu0 0
        %3664 = vmatmul.mubr.bf16.gmra.mxu0 %v3511
        %v3665 = vpop.f32.mrf.mxu0
        %v3666 = vadd.f32 0.0, %v3665
        %v3667 = vpop.f32.mrf.mxu0
        %v3668 = vpop.f32.mrf.mxu0
        %v3669 = vadd.f32 0.0, %v3668
        %v3670 = vpop.f32.mrf.mxu0
        %3671 = vmatprep.mubr.bf16.mxu0 0
        %3672 = vmatmul.mubr.bf16.gmra.mxu0 %v3514
        %v3673 = vpop.f32.mrf.mxu0
        %v3674 = vadd.f32 0.0, %v3673
        %v3675 = vpop.f32.mrf.mxu0
        %v3676 = vpop.f32.mrf.mxu0
        %v3677 = vadd.f32 0.0, %v3676
        %v3678 = vpop.f32.mrf.mxu0
        %3679 = vdwg.mxu0
        %v3680 = vadd.f32 %v3386, %v3554
        %v3681 = vadd.f32 %v3387, %v3557
        %v3682 = vadd.f32 %v3388, %v3562
        %v3683 = vadd.f32 %v3389, %v3565
        %v3684 = vadd.f32 %v3390, %v3570
        %v3685 = vadd.f32 %v3391, %v3573
        %v3686 = vadd.f32 %v3392, %v3578
        %v3687 = vadd.f32 %v3393, %v3581
        %v3688 = vadd.f32 %v3394, %v3586
        %v3689 = vadd.f32 %v3395, %v3589
        %v3690 = vadd.f32 %v3396, %v3594
        %v3691 = vadd.f32 %v3397, %v3597
        %v3692 = vadd.f32 %v3398, %v3602
        %v3693 = vadd.f32 %v3399, %v3605
        %v3694 = vadd.f32 %v3400, %v3610
        %v3695 = vadd.f32 %v3401, %v3613
        %v3696 = vadd.f32 %v3402, %v3618
        %v3697 = vadd.f32 %v3403, %v3621
        %v3698 = vadd.f32 %v3404, %v3626
        %v3699 = vadd.f32 %v3405, %v3629
        %v3700 = vadd.f32 %v3406, %v3634
        %v3701 = vadd.f32 %v3407, %v3637
        %v3702 = vadd.f32 %v3408, %v3642
        %v3703 = vadd.f32 %v3409, %v3645
        %v3704 = vadd.f32 %v3410, %v3650
        %v3705 = vadd.f32 %v3411, %v3653
        %v3706 = vadd.f32 %v3412, %v3658
        %v3707 = vadd.f32 %v3413, %v3661
        %v3708 = vadd.f32 %v3414, %v3666
        %v3709 = vadd.f32 %v3415, %v3669
        %v3710 = vadd.f32 %v3416, %v3674
        %v3711 = vadd.f32 %v3417, %v3677
        %v3712 = vld [vmem:[%s802] sm:$0xff]
        %v3713 = vld [vmem:[%s802 + $0x8] sm:$0xff]
        %v3714 = vld [vmem:[%s802 + $0x18] sm:$0xff]
        %v3715 = vld [vmem:[%s802 + $0x20] sm:$0xff]
        %v3716 = vld [vmem:[%s802 + $0x30] sm:$0xff]
        %v3717 = vld [vmem:[%s802 + $0x38] sm:$0xff]
        %v3718 = vld [vmem:[%s802 + $0x48] sm:$0xff]
        %v3719 = vld [vmem:[%s802 + $0x50] sm:$0xff]
        %v3720 = vld [vmem:[%s802 + $0x60] sm:$0xff]
        %v3721 = vld [vmem:[%s802 + $0x68] sm:$0xff]
        %v3722 = vld [vmem:[%s802 + $0x78] sm:$0xff]
        %v3723 = vld [vmem:[%s802 + $0x80] sm:$0xff]
        %v3724 = vld [vmem:[%s802 + $0x90] sm:$0xff]
        %v3725 = vld [vmem:[%s802 + $0x98] sm:$0xff]
        %v3726 = vld [vmem:[%s802 + $0xa8] sm:$0xff]
        %v3727 = vld [vmem:[%s802 + $0xb0] sm:$0xff]
        %v3728 = vld [vmem:[%s802 + $0xc0] sm:$0xff]
        %v3729 = vld [vmem:[%s802 + $0xc8] sm:$0xff]
        %v3730 = vld [vmem:[%s802 + $0xd8] sm:$0xff]
        %v3731 = vld [vmem:[%s802 + $0xe0] sm:$0xff]
        %v3732 = vld [vmem:[%s802 + $0xf0] sm:$0xff]
        %v3733 = vld [vmem:[%s802 + $0xf8] sm:$0xff]
        %v3734 = vld [vmem:[%s802 + $0x108] sm:$0xff]
        %v3735 = vld [vmem:[%s802 + $0x110] sm:$0xff]
        %v3736 = vld [vmem:[%s802 + $0x120] sm:$0xff]
        %v3737 = vld [vmem:[%s802 + $0x128] sm:$0xff]
        %v3738 = vld [vmem:[%s802 + $0x138] sm:$0xff]
        %v3739 = vld [vmem:[%s802 + $0x140] sm:$0xff]
        %v3740 = vld [vmem:[%s802 + $0x150] sm:$0xff]
        %v3741 = vld [vmem:[%s802 + $0x158] sm:$0xff]
        %v3742 = vld [vmem:[%s802 + $0x168] sm:$0xff]
        %v3743 = vld [vmem:[%s802 + $0x170] sm:$0xff]
        %v3744 = vpack.c.bf16 %v3713, %v3712
        %v3745 = vpack.c.bf16 %v3715, %v3714
        %v3746 = vpack.c.bf16 %v3717, %v3716
        %v3747 = vpack.c.bf16 %v3719, %v3718
        %v3748 = vpack.c.bf16 %v3721, %v3720
        %v3749 = vpack.c.bf16 %v3723, %v3722
        %v3750 = vpack.c.bf16 %v3725, %v3724
        %v3751 = vpack.c.bf16 %v3727, %v3726
        %v3752 = vpack.c.bf16 %v3729, %v3728
        %v3753 = vpack.c.bf16 %v3731, %v3730
        %v3754 = vpack.c.bf16 %v3733, %v3732
        %v3755 = vpack.c.bf16 %v3735, %v3734
        %v3756 = vpack.c.bf16 %v3737, %v3736
        %v3757 = vpack.c.bf16 %v3739, %v3738
        %v3758 = vpack.c.bf16 %v3741, %v3740
        %v3759 = vpack.c.bf16 %v3743, %v3742
        %s3760 = scalar_lea.vmem %s3, 40
        %v3761 = vld [vmem:[%s3760] sm:$0xf]
        %v3763 = vsel %vm580, %v3744, 0
        %v3766 = vsel %vm580, %v3745, 0
        %v3769 = vsel %vm580, %v3746, 0
        %v3772 = vsel %vm580, %v3747, 0
        %v3775 = vsel %vm580, %v3748, 0
        %v3778 = vsel %vm580, %v3749, 0
        %v3781 = vsel %vm580, %v3750, 0
        %v3784 = vsel %vm580, %v3751, 0
        %v3787 = vsel %vm580, %v3752, 0
        %v3790 = vsel %vm580, %v3753, 0
        %v3793 = vsel %vm580, %v3754, 0
        %v3796 = vsel %vm580, %v3755, 0
        %v3799 = vsel %vm580, %v3756, 0
        %v3802 = vsel %vm580, %v3757, 0
        %v3805 = vsel %vm580, %v3758, 0
        %v3808 = vsel %vm580, %v3759, 0
        %v3811 = vsel %vm982, %v3761, 0
        %3813 = vmatprep.subr.bf16.mxu0 0
        %3814 = vmatpush1.bf16.msra.mxu0 0
        %3815 = vmatprep.subr.bf16.mxu0 0
        %3816 = vmatpush1.bf16.msra.mxu0 0
        %3817 = vmatprep.subr.bf16.mxu0 0
        %3818 = vmatpush1.bf16.msra.mxu0 0
        %3819 = vmatprep.subr.bf16.mxu0 0
        %3820 = vmatpush1.bf16.msra.mxu0 0
        %3821 = vmatprep.subr.bf16.mxu0 0
        %3822 = vmatpush1.bf16.msra.mxu0 0
        %3823 = vmatprep.subr.bf16.mxu0 0
        %3824 = vmatpush1.bf16.msra.mxu0 0
        %3825 = vmatprep.subr.bf16.mxu0 0
        %3826 = vmatpush1.bf16.msra.mxu0 0
        %3827 = vmatprep.subr.bf16.mxu0 0
        %3828 = vmatpush1.bf16.msra.mxu0 %v3811
        %3829 = vmatprep.subr.bf16.mxu0 0
        %3830 = vmatpush2.bf16.msra.mxu0 0
        %3831 = vmatprep.subr.bf16.mxu0 0
        %3832 = vmatpush2.bf16.msra.mxu0 0
        %3833 = vmatprep.subr.bf16.mxu0 0
        %3834 = vmatpush2.bf16.msra.mxu0 0
        %3835 = vmatprep.subr.bf16.mxu0 0
        %3836 = vmatpush2.bf16.msra.mxu0 0
        %3837 = vmatprep.subr.bf16.mxu0 0
        %3838 = vmatpush2.bf16.msra.mxu0 0
        %3839 = vmatprep.subr.bf16.mxu0 0
        %3840 = vmatpush2.bf16.msra.mxu0 0
        %3841 = vmatprep.subr.bf16.mxu0 0
        %3842 = vmatpush2.bf16.msra.mxu0 0
        %3843 = vmatprep.subr.bf16.mxu0 0
        %3844 = vmatpush2.bf16.msra.mxu0 0
        %3845 = vmatprep.mubr.bf16.mxu0 0
        %3846 = vmatmul.mubr.bf16.gmra.mxu0 %v3763
        %v3847 = vpop.f32.mrf.mxu0
        %v3848 = vadd.f32 0.0, %v3847
        %v3849 = vpop.f32.mrf.mxu0
        %v3850 = vpop.f32.mrf.mxu0
        %v3851 = vadd.f32 0.0, %v3850
        %v3852 = vpop.f32.mrf.mxu0
        %3853 = vmatprep.mubr.bf16.mxu0 0
        %3854 = vmatmul.mubr.bf16.gmra.mxu0 %v3766
        %v3855 = vpop.f32.mrf.mxu0
        %v3856 = vadd.f32 0.0, %v3855
        %v3857 = vpop.f32.mrf.mxu0
        %v3858 = vpop.f32.mrf.mxu0
        %v3859 = vadd.f32 0.0, %v3858
        %v3860 = vpop.f32.mrf.mxu0
        %3861 = vmatprep.mubr.bf16.mxu0 0
        %3862 = vmatmul.mubr.bf16.gmra.mxu0 %v3769
        %v3863 = vpop.f32.mrf.mxu0
        %v3864 = vadd.f32 0.0, %v3863
        %v3865 = vpop.f32.mrf.mxu0
        %v3866 = vpop.f32.mrf.mxu0
        %v3867 = vadd.f32 0.0, %v3866
        %v3868 = vpop.f32.mrf.mxu0
        %3869 = vmatprep.mubr.bf16.mxu0 0
        %3870 = vmatmul.mubr.bf16.gmra.mxu0 %v3772
        %v3871 = vpop.f32.mrf.mxu0
        %v3872 = vadd.f32 0.0, %v3871
        %v3873 = vpop.f32.mrf.mxu0
        %v3874 = vpop.f32.mrf.mxu0
        %v3875 = vadd.f32 0.0, %v3874
        %v3876 = vpop.f32.mrf.mxu0
        %3877 = vmatprep.mubr.bf16.mxu0 0
        %3878 = vmatmul.mubr.bf16.gmra.mxu0 %v3775
        %v3879 = vpop.f32.mrf.mxu0
        %v3880 = vadd.f32 0.0, %v3879
        %v3881 = vpop.f32.mrf.mxu0
        %v3882 = vpop.f32.mrf.mxu0
        %v3883 = vadd.f32 0.0, %v3882
        %v3884 = vpop.f32.mrf.mxu0
        %3885 = vmatprep.mubr.bf16.mxu0 0
        %3886 = vmatmul.mubr.bf16.gmra.mxu0 %v3778
        %v3887 = vpop.f32.mrf.mxu0
        %v3888 = vadd.f32 0.0, %v3887
        %v3889 = vpop.f32.mrf.mxu0
        %v3890 = vpop.f32.mrf.mxu0
        %v3891 = vadd.f32 0.0, %v3890
        %v3892 = vpop.f32.mrf.mxu0
        %3893 = vmatprep.mubr.bf16.mxu0 0
        %3894 = vmatmul.mubr.bf16.gmra.mxu0 %v3781
        %v3895 = vpop.f32.mrf.mxu0
        %v3896 = vadd.f32 0.0, %v3895
        %v3897 = vpop.f32.mrf.mxu0
        %v3898 = vpop.f32.mrf.mxu0
        %v3899 = vadd.f32 0.0, %v3898
        %v3900 = vpop.f32.mrf.mxu0
        %3901 = vmatprep.mubr.bf16.mxu0 0
        %3902 = vmatmul.mubr.bf16.gmra.mxu0 %v3784
        %v3903 = vpop.f32.mrf.mxu0
        %v3904 = vadd.f32 0.0, %v3903
        %v3905 = vpop.f32.mrf.mxu0
        %v3906 = vpop.f32.mrf.mxu0
        %v3907 = vadd.f32 0.0, %v3906
        %v3908 = vpop.f32.mrf.mxu0
        %3909 = vmatprep.mubr.bf16.mxu0 0
        %3910 = vmatmul.mubr.bf16.gmra.mxu0 %v3787
        %v3911 = vpop.f32.mrf.mxu0
        %v3912 = vadd.f32 0.0, %v3911
        %v3913 = vpop.f32.mrf.mxu0
        %v3914 = vpop.f32.mrf.mxu0
        %v3915 = vadd.f32 0.0, %v3914
        %v3916 = vpop.f32.mrf.mxu0
        %3917 = vmatprep.mubr.bf16.mxu0 0
        %3918 = vmatmul.mubr.bf16.gmra.mxu0 %v3790
        %v3919 = vpop.f32.mrf.mxu0
        %v3920 = vadd.f32 0.0, %v3919
        %v3921 = vpop.f32.mrf.mxu0
        %v3922 = vpop.f32.mrf.mxu0
        %v3923 = vadd.f32 0.0, %v3922
        %v3924 = vpop.f32.mrf.mxu0
        %3925 = vmatprep.mubr.bf16.mxu0 0
        %3926 = vmatmul.mubr.bf16.gmra.mxu0 %v3793
        %v3927 = vpop.f32.mrf.mxu0
        %v3928 = vadd.f32 0.0, %v3927
        %v3929 = vpop.f32.mrf.mxu0
        %v3930 = vpop.f32.mrf.mxu0
        %v3931 = vadd.f32 0.0, %v3930
        %v3932 = vpop.f32.mrf.mxu0
        %3933 = vmatprep.mubr.bf16.mxu0 0
        %3934 = vmatmul.mubr.bf16.gmra.mxu0 %v3796
        %v3935 = vpop.f32.mrf.mxu0
        %v3936 = vadd.f32 0.0, %v3935
        %v3937 = vpop.f32.mrf.mxu0
        %v3938 = vpop.f32.mrf.mxu0
        %v3939 = vadd.f32 0.0, %v3938
        %v3940 = vpop.f32.mrf.mxu0
        %3941 = vmatprep.mubr.bf16.mxu0 0
        %3942 = vmatmul.mubr.bf16.gmra.mxu0 %v3799
        %v3943 = vpop.f32.mrf.mxu0
        %v3944 = vadd.f32 0.0, %v3943
        %v3945 = vpop.f32.mrf.mxu0
        %v3946 = vpop.f32.mrf.mxu0
        %v3947 = vadd.f32 0.0, %v3946
        %v3948 = vpop.f32.mrf.mxu0
        %3949 = vmatprep.mubr.bf16.mxu0 0
        %3950 = vmatmul.mubr.bf16.gmra.mxu0 %v3802
        %v3951 = vpop.f32.mrf.mxu0
        %v3952 = vadd.f32 0.0, %v3951
        %v3953 = vpop.f32.mrf.mxu0
        %v3954 = vpop.f32.mrf.mxu0
        %v3955 = vadd.f32 0.0, %v3954
        %v3956 = vpop.f32.mrf.mxu0
        %3957 = vmatprep.mubr.bf16.mxu0 0
        %3958 = vmatmul.mubr.bf16.gmra.mxu0 %v3805
        %v3959 = vpop.f32.mrf.mxu0
        %v3960 = vadd.f32 0.0, %v3959
        %v3961 = vpop.f32.mrf.mxu0
        %v3962 = vpop.f32.mrf.mxu0
        %v3963 = vadd.f32 0.0, %v3962
        %v3964 = vpop.f32.mrf.mxu0
        %3965 = vmatprep.mubr.bf16.mxu0 0
        %3966 = vmatmul.mubr.bf16.gmra.mxu0 %v3808
        %v3967 = vpop.f32.mrf.mxu0
        %v3968 = vadd.f32 0.0, %v3967
        %v3969 = vpop.f32.mrf.mxu0
        %v3970 = vpop.f32.mrf.mxu0
        %v3971 = vadd.f32 0.0, %v3970
        %v3972 = vpop.f32.mrf.mxu0
        %3973 = vdwg.mxu0
        %v3974 = vadd.f32 %v3680, %v3848
        %v3975 = vadd.f32 %v3681, %v3851
        %v3976 = vadd.f32 %v3682, %v3856
        %v3977 = vadd.f32 %v3683, %v3859
        %v3978 = vadd.f32 %v3684, %v3864
        %v3979 = vadd.f32 %v3685, %v3867
        %v3980 = vadd.f32 %v3686, %v3872
        %v3981 = vadd.f32 %v3687, %v3875
        %v3982 = vadd.f32 %v3688, %v3880
        %v3983 = vadd.f32 %v3689, %v3883
        %v3984 = vadd.f32 %v3690, %v3888
        %v3985 = vadd.f32 %v3691, %v3891
        %v3986 = vadd.f32 %v3692, %v3896
        %v3987 = vadd.f32 %v3693, %v3899
        %v3988 = vadd.f32 %v3694, %v3904
        %v3989 = vadd.f32 %v3695, %v3907
        %v3990 = vadd.f32 %v3696, %v3912
        %v3991 = vadd.f32 %v3697, %v3915
        %v3992 = vadd.f32 %v3698, %v3920
        %v3993 = vadd.f32 %v3699, %v3923
        %v3994 = vadd.f32 %v3700, %v3928
        %v3995 = vadd.f32 %v3701, %v3931
        %v3996 = vadd.f32 %v3702, %v3936
        %v3997 = vadd.f32 %v3703, %v3939
        %v3998 = vadd.f32 %v3704, %v3944
        %v3999 = vadd.f32 %v3705, %v3947
        %v4000 = vadd.f32 %v3706, %v3952
        %v4001 = vadd.f32 %v3707, %v3955
        %v4002 = vadd.f32 %v3708, %v3960
        %v4003 = vadd.f32 %v3709, %v3963
        %v4004 = vadd.f32 %v3710, %v3968
        %v4005 = vadd.f32 %v3711, %v3971
        %v4006 = vld [vmem:[%s802 + $0x1] sm:$0xff]
        %v4007 = vld [vmem:[%s802 + $0x9] sm:$0xff]
        %v4008 = vld [vmem:[%s802 + $0x19] sm:$0xff]
        %v4009 = vld [vmem:[%s802 + $0x21] sm:$0xff]
        %v4010 = vld [vmem:[%s802 + $0x31] sm:$0xff]
        %v4011 = vld [vmem:[%s802 + $0x39] sm:$0xff]
        %v4012 = vld [vmem:[%s802 + $0x49] sm:$0xff]
        %v4013 = vld [vmem:[%s802 + $0x51] sm:$0xff]
        %v4014 = vld [vmem:[%s802 + $0x61] sm:$0xff]
        %v4015 = vld [vmem:[%s802 + $0x69] sm:$0xff]
        %v4016 = vld [vmem:[%s802 + $0x79] sm:$0xff]
        %v4017 = vld [vmem:[%s802 + $0x81] sm:$0xff]
        %v4018 = vld [vmem:[%s802 + $0x91] sm:$0xff]
        %v4019 = vld [vmem:[%s802 + $0x99] sm:$0xff]
        %v4020 = vld [vmem:[%s802 + $0xa9] sm:$0xff]
        %v4021 = vld [vmem:[%s802 + $0xb1] sm:$0xff]
        %v4022 = vld [vmem:[%s802 + $0xc1] sm:$0xff]
        %v4023 = vld [vmem:[%s802 + $0xc9] sm:$0xff]
        %v4024 = vld [vmem:[%s802 + $0xd9] sm:$0xff]
        %v4025 = vld [vmem:[%s802 + $0xe1] sm:$0xff]
        %v4026 = vld [vmem:[%s802 + $0xf1] sm:$0xff]
        %v4027 = vld [vmem:[%s802 + $0xf9] sm:$0xff]
        %v4028 = vld [vmem:[%s802 + $0x109] sm:$0xff]
        %v4029 = vld [vmem:[%s802 + $0x111] sm:$0xff]
        %v4030 = vld [vmem:[%s802 + $0x121] sm:$0xff]
        %v4031 = vld [vmem:[%s802 + $0x129] sm:$0xff]
        %v4032 = vld [vmem:[%s802 + $0x139] sm:$0xff]
        %v4033 = vld [vmem:[%s802 + $0x141] sm:$0xff]
        %v4034 = vld [vmem:[%s802 + $0x151] sm:$0xff]
        %v4035 = vld [vmem:[%s802 + $0x159] sm:$0xff]
        %v4036 = vld [vmem:[%s802 + $0x169] sm:$0xff]
        %v4037 = vld [vmem:[%s802 + $0x171] sm:$0xff]
        %v4038 = vpack.c.bf16 %v4007, %v4006
        %v4039 = vpack.c.bf16 %v4009, %v4008
        %v4040 = vpack.c.bf16 %v4011, %v4010
        %v4041 = vpack.c.bf16 %v4013, %v4012
        %v4042 = vpack.c.bf16 %v4015, %v4014
        %v4043 = vpack.c.bf16 %v4017, %v4016
        %v4044 = vpack.c.bf16 %v4019, %v4018
        %v4045 = vpack.c.bf16 %v4021, %v4020
        %v4046 = vpack.c.bf16 %v4023, %v4022
        %v4047 = vpack.c.bf16 %v4025, %v4024
        %v4048 = vpack.c.bf16 %v4027, %v4026
        %v4049 = vpack.c.bf16 %v4029, %v4028
        %v4050 = vpack.c.bf16 %v4031, %v4030
        %v4051 = vpack.c.bf16 %v4033, %v4032
        %v4052 = vpack.c.bf16 %v4035, %v4034
        %v4053 = vpack.c.bf16 %v4037, %v4036
        %s4054 = scalar_lea.vmem %s3, 44
        %v4055 = vld [vmem:[%s4054] sm:$0xf]
        %v4057 = vsel %vm580, %v4038, 0
        %v4060 = vsel %vm580, %v4039, 0
        %v4063 = vsel %vm580, %v4040, 0
        %v4066 = vsel %vm580, %v4041, 0
        %v4069 = vsel %vm580, %v4042, 0
        %v4072 = vsel %vm580, %v4043, 0
        %v4075 = vsel %vm580, %v4044, 0
        %v4078 = vsel %vm580, %v4045, 0
        %v4081 = vsel %vm580, %v4046, 0
        %v4084 = vsel %vm580, %v4047, 0
        %v4087 = vsel %vm580, %v4048, 0
        %v4090 = vsel %vm580, %v4049, 0
        %v4093 = vsel %vm580, %v4050, 0
        %v4096 = vsel %vm580, %v4051, 0
        %v4099 = vsel %vm580, %v4052, 0
        %v4102 = vsel %vm580, %v4053, 0
        %v4105 = vsel %vm982, %v4055, 0
        %4107 = vmatprep.subr.bf16.mxu0 0
        %4108 = vmatpush1.bf16.msra.mxu0 0
        %4109 = vmatprep.subr.bf16.mxu0 0
        %4110 = vmatpush1.bf16.msra.mxu0 0
        %4111 = vmatprep.subr.bf16.mxu0 0
        %4112 = vmatpush1.bf16.msra.mxu0 0
        %4113 = vmatprep.subr.bf16.mxu0 0
        %4114 = vmatpush1.bf16.msra.mxu0 0
        %4115 = vmatprep.subr.bf16.mxu0 0
        %4116 = vmatpush1.bf16.msra.mxu0 0
        %4117 = vmatprep.subr.bf16.mxu0 0
        %4118 = vmatpush1.bf16.msra.mxu0 0
        %4119 = vmatprep.subr.bf16.mxu0 0
        %4120 = vmatpush1.bf16.msra.mxu0 0
        %4121 = vmatprep.subr.bf16.mxu0 0
        %4122 = vmatpush1.bf16.msra.mxu0 %v4105
        %4123 = vmatprep.subr.bf16.mxu0 0
        %4124 = vmatpush2.bf16.msra.mxu0 0
        %4125 = vmatprep.subr.bf16.mxu0 0
        %4126 = vmatpush2.bf16.msra.mxu0 0
        %4127 = vmatprep.subr.bf16.mxu0 0
        %4128 = vmatpush2.bf16.msra.mxu0 0
        %4129 = vmatprep.subr.bf16.mxu0 0
        %4130 = vmatpush2.bf16.msra.mxu0 0
        %4131 = vmatprep.subr.bf16.mxu0 0
        %4132 = vmatpush2.bf16.msra.mxu0 0
        %4133 = vmatprep.subr.bf16.mxu0 0
        %4134 = vmatpush2.bf16.msra.mxu0 0
        %4135 = vmatprep.subr.bf16.mxu0 0
        %4136 = vmatpush2.bf16.msra.mxu0 0
        %4137 = vmatprep.subr.bf16.mxu0 0
        %4138 = vmatpush2.bf16.msra.mxu0 0
        %4139 = vmatprep.mubr.bf16.mxu0 0
        %4140 = vmatmul.mubr.bf16.gmra.mxu0 %v4057
        %v4141 = vpop.f32.mrf.mxu0
        %v4142 = vadd.f32 0.0, %v4141
        %v4143 = vpop.f32.mrf.mxu0
        %v4144 = vpop.f32.mrf.mxu0
        %v4145 = vadd.f32 0.0, %v4144
        %v4146 = vpop.f32.mrf.mxu0
        %4147 = vmatprep.mubr.bf16.mxu0 0
        %4148 = vmatmul.mubr.bf16.gmra.mxu0 %v4060
        %v4149 = vpop.f32.mrf.mxu0
        %v4150 = vadd.f32 0.0, %v4149
        %v4151 = vpop.f32.mrf.mxu0
        %v4152 = vpop.f32.mrf.mxu0
        %v4153 = vadd.f32 0.0, %v4152
        %v4154 = vpop.f32.mrf.mxu0
        %4155 = vmatprep.mubr.bf16.mxu0 0
        %4156 = vmatmul.mubr.bf16.gmra.mxu0 %v4063
        %v4157 = vpop.f32.mrf.mxu0
        %v4158 = vadd.f32 0.0, %v4157
        %v4159 = vpop.f32.mrf.mxu0
        %v4160 = vpop.f32.mrf.mxu0
        %v4161 = vadd.f32 0.0, %v4160
        %v4162 = vpop.f32.mrf.mxu0
        %4163 = vmatprep.mubr.bf16.mxu0 0
        %4164 = vmatmul.mubr.bf16.gmra.mxu0 %v4066
        %v4165 = vpop.f32.mrf.mxu0
        %v4166 = vadd.f32 0.0, %v4165
        %v4167 = vpop.f32.mrf.mxu0
        %v4168 = vpop.f32.mrf.mxu0
        %v4169 = vadd.f32 0.0, %v4168
        %v4170 = vpop.f32.mrf.mxu0
        %4171 = vmatprep.mubr.bf16.mxu0 0
        %4172 = vmatmul.mubr.bf16.gmra.mxu0 %v4069
        %v4173 = vpop.f32.mrf.mxu0
        %v4174 = vadd.f32 0.0, %v4173
        %v4175 = vpop.f32.mrf.mxu0
        %v4176 = vpop.f32.mrf.mxu0
        %v4177 = vadd.f32 0.0, %v4176
        %v4178 = vpop.f32.mrf.mxu0
        %4179 = vmatprep.mubr.bf16.mxu0 0
        %4180 = vmatmul.mubr.bf16.gmra.mxu0 %v4072
        %v4181 = vpop.f32.mrf.mxu0
        %v4182 = vadd.f32 0.0, %v4181
        %v4183 = vpop.f32.mrf.mxu0
        %v4184 = vpop.f32.mrf.mxu0
        %v4185 = vadd.f32 0.0, %v4184
        %v4186 = vpop.f32.mrf.mxu0
        %4187 = vmatprep.mubr.bf16.mxu0 0
        %4188 = vmatmul.mubr.bf16.gmra.mxu0 %v4075
        %v4189 = vpop.f32.mrf.mxu0
        %v4190 = vadd.f32 0.0, %v4189
        %v4191 = vpop.f32.mrf.mxu0
        %v4192 = vpop.f32.mrf.mxu0
        %v4193 = vadd.f32 0.0, %v4192
        %v4194 = vpop.f32.mrf.mxu0
        %4195 = vmatprep.mubr.bf16.mxu0 0
        %4196 = vmatmul.mubr.bf16.gmra.mxu0 %v4078
        %v4197 = vpop.f32.mrf.mxu0
        %v4198 = vadd.f32 0.0, %v4197
        %v4199 = vpop.f32.mrf.mxu0
        %v4200 = vpop.f32.mrf.mxu0
        %v4201 = vadd.f32 0.0, %v4200
        %v4202 = vpop.f32.mrf.mxu0
        %4203 = vmatprep.mubr.bf16.mxu0 0
        %4204 = vmatmul.mubr.bf16.gmra.mxu0 %v4081
        %v4205 = vpop.f32.mrf.mxu0
        %v4206 = vadd.f32 0.0, %v4205
        %v4207 = vpop.f32.mrf.mxu0
        %v4208 = vpop.f32.mrf.mxu0
        %v4209 = vadd.f32 0.0, %v4208
        %v4210 = vpop.f32.mrf.mxu0
        %4211 = vmatprep.mubr.bf16.mxu0 0
        %4212 = vmatmul.mubr.bf16.gmra.mxu0 %v4084
        %v4213 = vpop.f32.mrf.mxu0
        %v4214 = vadd.f32 0.0, %v4213
        %v4215 = vpop.f32.mrf.mxu0
        %v4216 = vpop.f32.mrf.mxu0
        %v4217 = vadd.f32 0.0, %v4216
        %v4218 = vpop.f32.mrf.mxu0
        %4219 = vmatprep.mubr.bf16.mxu0 0
        %4220 = vmatmul.mubr.bf16.gmra.mxu0 %v4087
        %v4221 = vpop.f32.mrf.mxu0
        %v4222 = vadd.f32 0.0, %v4221
        %v4223 = vpop.f32.mrf.mxu0
        %v4224 = vpop.f32.mrf.mxu0
        %v4225 = vadd.f32 0.0, %v4224
        %v4226 = vpop.f32.mrf.mxu0
        %4227 = vmatprep.mubr.bf16.mxu0 0
        %4228 = vmatmul.mubr.bf16.gmra.mxu0 %v4090
        %v4229 = vpop.f32.mrf.mxu0
        %v4230 = vadd.f32 0.0, %v4229
        %v4231 = vpop.f32.mrf.mxu0
        %v4232 = vpop.f32.mrf.mxu0
        %v4233 = vadd.f32 0.0, %v4232
        %v4234 = vpop.f32.mrf.mxu0
        %4235 = vmatprep.mubr.bf16.mxu0 0
        %4236 = vmatmul.mubr.bf16.gmra.mxu0 %v4093
        %v4237 = vpop.f32.mrf.mxu0
        %v4238 = vadd.f32 0.0, %v4237
        %v4239 = vpop.f32.mrf.mxu0
        %v4240 = vpop.f32.mrf.mxu0
        %v4241 = vadd.f32 0.0, %v4240
        %v4242 = vpop.f32.mrf.mxu0
        %4243 = vmatprep.mubr.bf16.mxu0 0
        %4244 = vmatmul.mubr.bf16.gmra.mxu0 %v4096
        %v4245 = vpop.f32.mrf.mxu0
        %v4246 = vadd.f32 0.0, %v4245
        %v4247 = vpop.f32.mrf.mxu0
        %v4248 = vpop.f32.mrf.mxu0
        %v4249 = vadd.f32 0.0, %v4248
        %v4250 = vpop.f32.mrf.mxu0
        %4251 = vmatprep.mubr.bf16.mxu0 0
        %4252 = vmatmul.mubr.bf16.gmra.mxu0 %v4099
        %v4253 = vpop.f32.mrf.mxu0
        %v4254 = vadd.f32 0.0, %v4253
        %v4255 = vpop.f32.mrf.mxu0
        %v4256 = vpop.f32.mrf.mxu0
        %v4257 = vadd.f32 0.0, %v4256
        %v4258 = vpop.f32.mrf.mxu0
        %4259 = vmatprep.mubr.bf16.mxu0 0
        %4260 = vmatmul.mubr.bf16.gmra.mxu0 %v4102
        %v4261 = vpop.f32.mrf.mxu0
        %v4262 = vadd.f32 0.0, %v4261
        %v4263 = vpop.f32.mrf.mxu0
        %v4264 = vpop.f32.mrf.mxu0
        %v4265 = vadd.f32 0.0, %v4264
        %v4266 = vpop.f32.mrf.mxu0
        %4267 = vdwg.mxu0
        %v4268 = vadd.f32 %v3974, %v4142
        %v4269 = vadd.f32 %v3975, %v4145
        %v4270 = vadd.f32 %v3976, %v4150
        %v4271 = vadd.f32 %v3977, %v4153
        %v4272 = vadd.f32 %v3978, %v4158
        %v4273 = vadd.f32 %v3979, %v4161
        %v4274 = vadd.f32 %v3980, %v4166
        %v4275 = vadd.f32 %v3981, %v4169
        %v4276 = vadd.f32 %v3982, %v4174
        %v4277 = vadd.f32 %v3983, %v4177
        %v4278 = vadd.f32 %v3984, %v4182
        %v4279 = vadd.f32 %v3985, %v4185
        %v4280 = vadd.f32 %v3986, %v4190
        %v4281 = vadd.f32 %v3987, %v4193
        %v4282 = vadd.f32 %v3988, %v4198
        %v4283 = vadd.f32 %v3989, %v4201
        %v4284 = vadd.f32 %v3990, %v4206
        %v4285 = vadd.f32 %v3991, %v4209
        %v4286 = vadd.f32 %v3992, %v4214
        %v4287 = vadd.f32 %v3993, %v4217
        %v4288 = vadd.f32 %v3994, %v4222
        %v4289 = vadd.f32 %v3995, %v4225
        %v4290 = vadd.f32 %v3996, %v4230
        %v4291 = vadd.f32 %v3997, %v4233
        %v4292 = vadd.f32 %v3998, %v4238
        %v4293 = vadd.f32 %v3999, %v4241
        %v4294 = vadd.f32 %v4000, %v4246
        %v4295 = vadd.f32 %v4001, %v4249
        %v4296 = vadd.f32 %v4002, %v4254
        %v4297 = vadd.f32 %v4003, %v4257
        %v4298 = vadd.f32 %v4004, %v4262
        %v4299 = vadd.f32 %v4005, %v4265
        %v4300 = vld [vmem:[%s802 + $0x2] sm:$0xff]
        %v4301 = vld [vmem:[%s802 + $0xa] sm:$0xff]
        %v4302 = vld [vmem:[%s802 + $0x1a] sm:$0xff]
        %v4303 = vld [vmem:[%s802 + $0x22] sm:$0xff]
        %v4304 = vld [vmem:[%s802 + $0x32] sm:$0xff]
        %v4305 = vld [vmem:[%s802 + $0x3a] sm:$0xff]
        %v4306 = vld [vmem:[%s802 + $0x4a] sm:$0xff]
        %v4307 = vld [vmem:[%s802 + $0x52] sm:$0xff]
        %v4308 = vld [vmem:[%s802 + $0x62] sm:$0xff]
        %v4309 = vld [vmem:[%s802 + $0x6a] sm:$0xff]
        %v4310 = vld [vmem:[%s802 + $0x7a] sm:$0xff]
        %v4311 = vld [vmem:[%s802 + $0x82] sm:$0xff]
        %v4312 = vld [vmem:[%s802 + $0x92] sm:$0xff]
        %v4313 = vld [vmem:[%s802 + $0x9a] sm:$0xff]
        %v4314 = vld [vmem:[%s802 + $0xaa] sm:$0xff]
        %v4315 = vld [vmem:[%s802 + $0xb2] sm:$0xff]
        %v4316 = vld [vmem:[%s802 + $0xc2] sm:$0xff]
        %v4317 = vld [vmem:[%s802 + $0xca] sm:$0xff]
        %v4318 = vld [vmem:[%s802 + $0xda] sm:$0xff]
        %v4319 = vld [vmem:[%s802 + $0xe2] sm:$0xff]
        %v4320 = vld [vmem:[%s802 + $0xf2] sm:$0xff]
        %v4321 = vld [vmem:[%s802 + $0xfa] sm:$0xff]
        %v4322 = vld [vmem:[%s802 + $0x10a] sm:$0xff]
        %v4323 = vld [vmem:[%s802 + $0x112] sm:$0xff]
        %v4324 = vld [vmem:[%s802 + $0x122] sm:$0xff]
        %v4325 = vld [vmem:[%s802 + $0x12a] sm:$0xff]
        %v4326 = vld [vmem:[%s802 + $0x13a] sm:$0xff]
        %v4327 = vld [vmem:[%s802 + $0x142] sm:$0xff]
        %v4328 = vld [vmem:[%s802 + $0x152] sm:$0xff]
        %v4329 = vld [vmem:[%s802 + $0x15a] sm:$0xff]
        %v4330 = vld [vmem:[%s802 + $0x16a] sm:$0xff]
        %v4331 = vld [vmem:[%s802 + $0x172] sm:$0xff]
        %v4332 = vpack.c.bf16 %v4301, %v4300
        %v4333 = vpack.c.bf16 %v4303, %v4302
        %v4334 = vpack.c.bf16 %v4305, %v4304
        %v4335 = vpack.c.bf16 %v4307, %v4306
        %v4336 = vpack.c.bf16 %v4309, %v4308
        %v4337 = vpack.c.bf16 %v4311, %v4310
        %v4338 = vpack.c.bf16 %v4313, %v4312
        %v4339 = vpack.c.bf16 %v4315, %v4314
        %v4340 = vpack.c.bf16 %v4317, %v4316
        %v4341 = vpack.c.bf16 %v4319, %v4318
        %v4342 = vpack.c.bf16 %v4321, %v4320
        %v4343 = vpack.c.bf16 %v4323, %v4322
        %v4344 = vpack.c.bf16 %v4325, %v4324
        %v4345 = vpack.c.bf16 %v4327, %v4326
        %v4346 = vpack.c.bf16 %v4329, %v4328
        %v4347 = vpack.c.bf16 %v4331, %v4330
        %s4348 = scalar_lea.vmem %s3, 48
        %v4349 = vld [vmem:[%s4348] sm:$0xf]
        %v4351 = vsel %vm580, %v4332, 0
        %v4354 = vsel %vm580, %v4333, 0
        %v4357 = vsel %vm580, %v4334, 0
        %v4360 = vsel %vm580, %v4335, 0
        %v4363 = vsel %vm580, %v4336, 0
        %v4366 = vsel %vm580, %v4337, 0
        %v4369 = vsel %vm580, %v4338, 0
        %v4372 = vsel %vm580, %v4339, 0
        %v4375 = vsel %vm580, %v4340, 0
        %v4378 = vsel %vm580, %v4341, 0
        %v4381 = vsel %vm580, %v4342, 0
        %v4384 = vsel %vm580, %v4343, 0
        %v4387 = vsel %vm580, %v4344, 0
        %v4390 = vsel %vm580, %v4345, 0
        %v4393 = vsel %vm580, %v4346, 0
        %v4396 = vsel %vm580, %v4347, 0
        %v4399 = vsel %vm982, %v4349, 0
        %4401 = vmatprep.subr.bf16.mxu0 0
        %4402 = vmatpush1.bf16.msra.mxu0 0
        %4403 = vmatprep.subr.bf16.mxu0 0
        %4404 = vmatpush1.bf16.msra.mxu0 0
        %4405 = vmatprep.subr.bf16.mxu0 0
        %4406 = vmatpush1.bf16.msra.mxu0 0
        %4407 = vmatprep.subr.bf16.mxu0 0
        %4408 = vmatpush1.bf16.msra.mxu0 0
        %4409 = vmatprep.subr.bf16.mxu0 0
        %4410 = vmatpush1.bf16.msra.mxu0 0
        %4411 = vmatprep.subr.bf16.mxu0 0
        %4412 = vmatpush1.bf16.msra.mxu0 0
        %4413 = vmatprep.subr.bf16.mxu0 0
        %4414 = vmatpush1.bf16.msra.mxu0 0
        %4415 = vmatprep.subr.bf16.mxu0 0
        %4416 = vmatpush1.bf16.msra.mxu0 %v4399
        %4417 = vmatprep.subr.bf16.mxu0 0
        %4418 = vmatpush2.bf16.msra.mxu0 0
        %4419 = vmatprep.subr.bf16.mxu0 0
        %4420 = vmatpush2.bf16.msra.mxu0 0
        %4421 = vmatprep.subr.bf16.mxu0 0
        %4422 = vmatpush2.bf16.msra.mxu0 0
        %4423 = vmatprep.subr.bf16.mxu0 0
        %4424 = vmatpush2.bf16.msra.mxu0 0
        %4425 = vmatprep.subr.bf16.mxu0 0
        %4426 = vmatpush2.bf16.msra.mxu0 0
        %4427 = vmatprep.subr.bf16.mxu0 0
        %4428 = vmatpush2.bf16.msra.mxu0 0
        %4429 = vmatprep.subr.bf16.mxu0 0
        %4430 = vmatpush2.bf16.msra.mxu0 0
        %4431 = vmatprep.subr.bf16.mxu0 0
        %4432 = vmatpush2.bf16.msra.mxu0 0
        %4433 = vmatprep.mubr.bf16.mxu0 0
        %4434 = vmatmul.mubr.bf16.gmra.mxu0 %v4351
        %v4435 = vpop.f32.mrf.mxu0
        %v4436 = vadd.f32 0.0, %v4435
        %v4437 = vpop.f32.mrf.mxu0
        %v4438 = vpop.f32.mrf.mxu0
        %v4439 = vadd.f32 0.0, %v4438
        %v4440 = vpop.f32.mrf.mxu0
        %4441 = vmatprep.mubr.bf16.mxu0 0
        %4442 = vmatmul.mubr.bf16.gmra.mxu0 %v4354
        %v4443 = vpop.f32.mrf.mxu0
        %v4444 = vadd.f32 0.0, %v4443
        %v4445 = vpop.f32.mrf.mxu0
        %v4446 = vpop.f32.mrf.mxu0
        %v4447 = vadd.f32 0.0, %v4446
        %v4448 = vpop.f32.mrf.mxu0
        %4449 = vmatprep.mubr.bf16.mxu0 0
        %4450 = vmatmul.mubr.bf16.gmra.mxu0 %v4357
        %v4451 = vpop.f32.mrf.mxu0
        %v4452 = vadd.f32 0.0, %v4451
        %v4453 = vpop.f32.mrf.mxu0
        %v4454 = vpop.f32.mrf.mxu0
        %v4455 = vadd.f32 0.0, %v4454
        %v4456 = vpop.f32.mrf.mxu0
        %4457 = vmatprep.mubr.bf16.mxu0 0
        %4458 = vmatmul.mubr.bf16.gmra.mxu0 %v4360
        %v4459 = vpop.f32.mrf.mxu0
        %v4460 = vadd.f32 0.0, %v4459
        %v4461 = vpop.f32.mrf.mxu0
        %v4462 = vpop.f32.mrf.mxu0
        %v4463 = vadd.f32 0.0, %v4462
        %v4464 = vpop.f32.mrf.mxu0
        %4465 = vmatprep.mubr.bf16.mxu0 0
        %4466 = vmatmul.mubr.bf16.gmra.mxu0 %v4363
        %v4467 = vpop.f32.mrf.mxu0
        %v4468 = vadd.f32 0.0, %v4467
        %v4469 = vpop.f32.mrf.mxu0
        %v4470 = vpop.f32.mrf.mxu0
        %v4471 = vadd.f32 0.0, %v4470
        %v4472 = vpop.f32.mrf.mxu0
        %4473 = vmatprep.mubr.bf16.mxu0 0
        %4474 = vmatmul.mubr.bf16.gmra.mxu0 %v4366
        %v4475 = vpop.f32.mrf.mxu0
        %v4476 = vadd.f32 0.0, %v4475
        %v4477 = vpop.f32.mrf.mxu0
        %v4478 = vpop.f32.mrf.mxu0
        %v4479 = vadd.f32 0.0, %v4478
        %v4480 = vpop.f32.mrf.mxu0
        %4481 = vmatprep.mubr.bf16.mxu0 0
        %4482 = vmatmul.mubr.bf16.gmra.mxu0 %v4369
        %v4483 = vpop.f32.mrf.mxu0
        %v4484 = vadd.f32 0.0, %v4483
        %v4485 = vpop.f32.mrf.mxu0
        %v4486 = vpop.f32.mrf.mxu0
        %v4487 = vadd.f32 0.0, %v4486
        %v4488 = vpop.f32.mrf.mxu0
        %4489 = vmatprep.mubr.bf16.mxu0 0
        %4490 = vmatmul.mubr.bf16.gmra.mxu0 %v4372
        %v4491 = vpop.f32.mrf.mxu0
        %v4492 = vadd.f32 0.0, %v4491
        %v4493 = vpop.f32.mrf.mxu0
        %v4494 = vpop.f32.mrf.mxu0
        %v4495 = vadd.f32 0.0, %v4494
        %v4496 = vpop.f32.mrf.mxu0
        %4497 = vmatprep.mubr.bf16.mxu0 0
        %4498 = vmatmul.mubr.bf16.gmra.mxu0 %v4375
        %v4499 = vpop.f32.mrf.mxu0
        %v4500 = vadd.f32 0.0, %v4499
        %v4501 = vpop.f32.mrf.mxu0
        %v4502 = vpop.f32.mrf.mxu0
        %v4503 = vadd.f32 0.0, %v4502
        %v4504 = vpop.f32.mrf.mxu0
        %4505 = vmatprep.mubr.bf16.mxu0 0
        %4506 = vmatmul.mubr.bf16.gmra.mxu0 %v4378
        %v4507 = vpop.f32.mrf.mxu0
        %v4508 = vadd.f32 0.0, %v4507
        %v4509 = vpop.f32.mrf.mxu0
        %v4510 = vpop.f32.mrf.mxu0
        %v4511 = vadd.f32 0.0, %v4510
        %v4512 = vpop.f32.mrf.mxu0
        %4513 = vmatprep.mubr.bf16.mxu0 0
        %4514 = vmatmul.mubr.bf16.gmra.mxu0 %v4381
        %v4515 = vpop.f32.mrf.mxu0
        %v4516 = vadd.f32 0.0, %v4515
        %v4517 = vpop.f32.mrf.mxu0
        %v4518 = vpop.f32.mrf.mxu0
        %v4519 = vadd.f32 0.0, %v4518
        %v4520 = vpop.f32.mrf.mxu0
        %4521 = vmatprep.mubr.bf16.mxu0 0
        %4522 = vmatmul.mubr.bf16.gmra.mxu0 %v4384
        %v4523 = vpop.f32.mrf.mxu0
        %v4524 = vadd.f32 0.0, %v4523
        %v4525 = vpop.f32.mrf.mxu0
        %v4526 = vpop.f32.mrf.mxu0
        %v4527 = vadd.f32 0.0, %v4526
        %v4528 = vpop.f32.mrf.mxu0
        %4529 = vmatprep.mubr.bf16.mxu0 0
        %4530 = vmatmul.mubr.bf16.gmra.mxu0 %v4387
        %v4531 = vpop.f32.mrf.mxu0
        %v4532 = vadd.f32 0.0, %v4531
        %v4533 = vpop.f32.mrf.mxu0
        %v4534 = vpop.f32.mrf.mxu0
        %v4535 = vadd.f32 0.0, %v4534
        %v4536 = vpop.f32.mrf.mxu0
        %4537 = vmatprep.mubr.bf16.mxu0 0
        %4538 = vmatmul.mubr.bf16.gmra.mxu0 %v4390
        %v4539 = vpop.f32.mrf.mxu0
        %v4540 = vadd.f32 0.0, %v4539
        %v4541 = vpop.f32.mrf.mxu0
        %v4542 = vpop.f32.mrf.mxu0
        %v4543 = vadd.f32 0.0, %v4542
        %v4544 = vpop.f32.mrf.mxu0
        %4545 = vmatprep.mubr.bf16.mxu0 0
        %4546 = vmatmul.mubr.bf16.gmra.mxu0 %v4393
        %v4547 = vpop.f32.mrf.mxu0
        %v4548 = vadd.f32 0.0, %v4547
        %v4549 = vpop.f32.mrf.mxu0
        %v4550 = vpop.f32.mrf.mxu0
        %v4551 = vadd.f32 0.0, %v4550
        %v4552 = vpop.f32.mrf.mxu0
        %4553 = vmatprep.mubr.bf16.mxu0 0
        %4554 = vmatmul.mubr.bf16.gmra.mxu0 %v4396
        %v4555 = vpop.f32.mrf.mxu0
        %v4556 = vadd.f32 0.0, %v4555
        %v4557 = vpop.f32.mrf.mxu0
        %v4558 = vpop.f32.mrf.mxu0
        %v4559 = vadd.f32 0.0, %v4558
        %v4560 = vpop.f32.mrf.mxu0
        %4561 = vdwg.mxu0
        %v4562 = vadd.f32 %v4268, %v4436
        %v4563 = vadd.f32 %v4269, %v4439
        %v4564 = vadd.f32 %v4270, %v4444
        %v4565 = vadd.f32 %v4271, %v4447
        %v4566 = vadd.f32 %v4272, %v4452
        %v4567 = vadd.f32 %v4273, %v4455
        %v4568 = vadd.f32 %v4274, %v4460
        %v4569 = vadd.f32 %v4275, %v4463
        %v4570 = vadd.f32 %v4276, %v4468
        %v4571 = vadd.f32 %v4277, %v4471
        %v4572 = vadd.f32 %v4278, %v4476
        %v4573 = vadd.f32 %v4279, %v4479
        %v4574 = vadd.f32 %v4280, %v4484
        %v4575 = vadd.f32 %v4281, %v4487
        %v4576 = vadd.f32 %v4282, %v4492
        %v4577 = vadd.f32 %v4283, %v4495
        %v4578 = vadd.f32 %v4284, %v4500
        %v4579 = vadd.f32 %v4285, %v4503
        %v4580 = vadd.f32 %v4286, %v4508
        %v4581 = vadd.f32 %v4287, %v4511
        %v4582 = vadd.f32 %v4288, %v4516
        %v4583 = vadd.f32 %v4289, %v4519
        %v4584 = vadd.f32 %v4290, %v4524
        %v4585 = vadd.f32 %v4291, %v4527
        %v4586 = vadd.f32 %v4292, %v4532
        %v4587 = vadd.f32 %v4293, %v4535
        %v4588 = vadd.f32 %v4294, %v4540
        %v4589 = vadd.f32 %v4295, %v4543
        %v4590 = vadd.f32 %v4296, %v4548
        %v4591 = vadd.f32 %v4297, %v4551
        %v4592 = vadd.f32 %v4298, %v4556
        %v4593 = vadd.f32 %v4299, %v4559
        %v4594 = vld [vmem:[%s802 + $0x3] sm:$0xff]
        %v4595 = vld [vmem:[%s802 + $0xb] sm:$0xff]
        %v4596 = vld [vmem:[%s802 + $0x1b] sm:$0xff]
        %v4597 = vld [vmem:[%s802 + $0x23] sm:$0xff]
        %v4598 = vld [vmem:[%s802 + $0x33] sm:$0xff]
        %v4599 = vld [vmem:[%s802 + $0x3b] sm:$0xff]
        %v4600 = vld [vmem:[%s802 + $0x4b] sm:$0xff]
        %v4601 = vld [vmem:[%s802 + $0x53] sm:$0xff]
        %v4602 = vld [vmem:[%s802 + $0x63] sm:$0xff]
        %v4603 = vld [vmem:[%s802 + $0x6b] sm:$0xff]
        %v4604 = vld [vmem:[%s802 + $0x7b] sm:$0xff]
        %v4605 = vld [vmem:[%s802 + $0x83] sm:$0xff]
        %v4606 = vld [vmem:[%s802 + $0x93] sm:$0xff]
        %v4607 = vld [vmem:[%s802 + $0x9b] sm:$0xff]
        %v4608 = vld [vmem:[%s802 + $0xab] sm:$0xff]
        %v4609 = vld [vmem:[%s802 + $0xb3] sm:$0xff]
        %v4610 = vld [vmem:[%s802 + $0xc3] sm:$0xff]
        %v4611 = vld [vmem:[%s802 + $0xcb] sm:$0xff]
        %v4612 = vld [vmem:[%s802 + $0xdb] sm:$0xff]
        %v4613 = vld [vmem:[%s802 + $0xe3] sm:$0xff]
        %v4614 = vld [vmem:[%s802 + $0xf3] sm:$0xff]
        %v4615 = vld [vmem:[%s802 + $0xfb] sm:$0xff]
        %v4616 = vld [vmem:[%s802 + $0x10b] sm:$0xff]
        %v4617 = vld [vmem:[%s802 + $0x113] sm:$0xff]
        %v4618 = vld [vmem:[%s802 + $0x123] sm:$0xff]
        %v4619 = vld [vmem:[%s802 + $0x12b] sm:$0xff]
        %v4620 = vld [vmem:[%s802 + $0x13b] sm:$0xff]
        %v4621 = vld [vmem:[%s802 + $0x143] sm:$0xff]
        %v4622 = vld [vmem:[%s802 + $0x153] sm:$0xff]
        %v4623 = vld [vmem:[%s802 + $0x15b] sm:$0xff]
        %v4624 = vld [vmem:[%s802 + $0x16b] sm:$0xff]
        %v4625 = vld [vmem:[%s802 + $0x173] sm:$0xff]
        %v4626 = vpack.c.bf16 %v4595, %v4594
        %v4627 = vpack.c.bf16 %v4597, %v4596
        %v4628 = vpack.c.bf16 %v4599, %v4598
        %v4629 = vpack.c.bf16 %v4601, %v4600
        %v4630 = vpack.c.bf16 %v4603, %v4602
        %v4631 = vpack.c.bf16 %v4605, %v4604
        %v4632 = vpack.c.bf16 %v4607, %v4606
        %v4633 = vpack.c.bf16 %v4609, %v4608
        %v4634 = vpack.c.bf16 %v4611, %v4610
        %v4635 = vpack.c.bf16 %v4613, %v4612
        %v4636 = vpack.c.bf16 %v4615, %v4614
        %v4637 = vpack.c.bf16 %v4617, %v4616
        %v4638 = vpack.c.bf16 %v4619, %v4618
        %v4639 = vpack.c.bf16 %v4621, %v4620
        %v4640 = vpack.c.bf16 %v4623, %v4622
        %v4641 = vpack.c.bf16 %v4625, %v4624
        %s4642 = scalar_lea.vmem %s3, 52
        %v4643 = vld [vmem:[%s4642] sm:$0xf]
        %v4645 = vsel %vm580, %v4626, 0
        %v4648 = vsel %vm580, %v4627, 0
        %v4651 = vsel %vm580, %v4628, 0
        %v4654 = vsel %vm580, %v4629, 0
        %v4657 = vsel %vm580, %v4630, 0
        %v4660 = vsel %vm580, %v4631, 0
        %v4663 = vsel %vm580, %v4632, 0
        %v4666 = vsel %vm580, %v4633, 0
        %v4669 = vsel %vm580, %v4634, 0
        %v4672 = vsel %vm580, %v4635, 0
        %v4675 = vsel %vm580, %v4636, 0
        %v4678 = vsel %vm580, %v4637, 0
        %v4681 = vsel %vm580, %v4638, 0
        %v4684 = vsel %vm580, %v4639, 0
        %v4687 = vsel %vm580, %v4640, 0
        %v4690 = vsel %vm580, %v4641, 0
        %v4693 = vsel %vm982, %v4643, 0
        %4695 = vmatprep.subr.bf16.mxu0 0
        %4696 = vmatpush1.bf16.msra.mxu0 0
        %4697 = vmatprep.subr.bf16.mxu0 0
        %4698 = vmatpush1.bf16.msra.mxu0 0
        %4699 = vmatprep.subr.bf16.mxu0 0
        %4700 = vmatpush1.bf16.msra.mxu0 0
        %4701 = vmatprep.subr.bf16.mxu0 0
        %4702 = vmatpush1.bf16.msra.mxu0 0
        %4703 = vmatprep.subr.bf16.mxu0 0
        %4704 = vmatpush1.bf16.msra.mxu0 0
        %4705 = vmatprep.subr.bf16.mxu0 0
        %4706 = vmatpush1.bf16.msra.mxu0 0
        %4707 = vmatprep.subr.bf16.mxu0 0
        %4708 = vmatpush1.bf16.msra.mxu0 0
        %4709 = vmatprep.subr.bf16.mxu0 0
        %4710 = vmatpush1.bf16.msra.mxu0 %v4693
        %4711 = vmatprep.subr.bf16.mxu0 0
        %4712 = vmatpush2.bf16.msra.mxu0 0
        %4713 = vmatprep.subr.bf16.mxu0 0
        %4714 = vmatpush2.bf16.msra.mxu0 0
        %4715 = vmatprep.subr.bf16.mxu0 0
        %4716 = vmatpush2.bf16.msra.mxu0 0
        %4717 = vmatprep.subr.bf16.mxu0 0
        %4718 = vmatpush2.bf16.msra.mxu0 0
        %4719 = vmatprep.subr.bf16.mxu0 0
        %4720 = vmatpush2.bf16.msra.mxu0 0
        %4721 = vmatprep.subr.bf16.mxu0 0
        %4722 = vmatpush2.bf16.msra.mxu0 0
        %4723 = vmatprep.subr.bf16.mxu0 0
        %4724 = vmatpush2.bf16.msra.mxu0 0
        %4725 = vmatprep.subr.bf16.mxu0 0
        %4726 = vmatpush2.bf16.msra.mxu0 0
        %4727 = vmatprep.mubr.bf16.mxu0 0
        %4728 = vmatmul.mubr.bf16.gmra.mxu0 %v4645
        %v4729 = vpop.f32.mrf.mxu0
        %v4730 = vadd.f32 0.0, %v4729
        %v4731 = vpop.f32.mrf.mxu0
        %v4732 = vpop.f32.mrf.mxu0
        %v4733 = vadd.f32 0.0, %v4732
        %v4734 = vpop.f32.mrf.mxu0
        %4735 = vmatprep.mubr.bf16.mxu0 0
        %4736 = vmatmul.mubr.bf16.gmra.mxu0 %v4648
        %v4737 = vpop.f32.mrf.mxu0
        %v4738 = vadd.f32 0.0, %v4737
        %v4739 = vpop.f32.mrf.mxu0
        %v4740 = vpop.f32.mrf.mxu0
        %v4741 = vadd.f32 0.0, %v4740
        %v4742 = vpop.f32.mrf.mxu0
        %4743 = vmatprep.mubr.bf16.mxu0 0
        %4744 = vmatmul.mubr.bf16.gmra.mxu0 %v4651
        %v4745 = vpop.f32.mrf.mxu0
        %v4746 = vadd.f32 0.0, %v4745
        %v4747 = vpop.f32.mrf.mxu0
        %v4748 = vpop.f32.mrf.mxu0
        %v4749 = vadd.f32 0.0, %v4748
        %v4750 = vpop.f32.mrf.mxu0
        %4751 = vmatprep.mubr.bf16.mxu0 0
        %4752 = vmatmul.mubr.bf16.gmra.mxu0 %v4654
        %v4753 = vpop.f32.mrf.mxu0
        %v4754 = vadd.f32 0.0, %v4753
        %v4755 = vpop.f32.mrf.mxu0
        %v4756 = vpop.f32.mrf.mxu0
        %v4757 = vadd.f32 0.0, %v4756
        %v4758 = vpop.f32.mrf.mxu0
        %4759 = vmatprep.mubr.bf16.mxu0 0
        %4760 = vmatmul.mubr.bf16.gmra.mxu0 %v4657
        %v4761 = vpop.f32.mrf.mxu0
        %v4762 = vadd.f32 0.0, %v4761
        %v4763 = vpop.f32.mrf.mxu0
        %v4764 = vpop.f32.mrf.mxu0
        %v4765 = vadd.f32 0.0, %v4764
        %v4766 = vpop.f32.mrf.mxu0
        %4767 = vmatprep.mubr.bf16.mxu0 0
        %4768 = vmatmul.mubr.bf16.gmra.mxu0 %v4660
        %v4769 = vpop.f32.mrf.mxu0
        %v4770 = vadd.f32 0.0, %v4769
        %v4771 = vpop.f32.mrf.mxu0
        %v4772 = vpop.f32.mrf.mxu0
        %v4773 = vadd.f32 0.0, %v4772
        %v4774 = vpop.f32.mrf.mxu0
        %4775 = vmatprep.mubr.bf16.mxu0 0
        %4776 = vmatmul.mubr.bf16.gmra.mxu0 %v4663
        %v4777 = vpop.f32.mrf.mxu0
        %v4778 = vadd.f32 0.0, %v4777
        %v4779 = vpop.f32.mrf.mxu0
        %v4780 = vpop.f32.mrf.mxu0
        %v4781 = vadd.f32 0.0, %v4780
        %v4782 = vpop.f32.mrf.mxu0
        %4783 = vmatprep.mubr.bf16.mxu0 0
        %4784 = vmatmul.mubr.bf16.gmra.mxu0 %v4666
        %v4785 = vpop.f32.mrf.mxu0
        %v4786 = vadd.f32 0.0, %v4785
        %v4787 = vpop.f32.mrf.mxu0
        %v4788 = vpop.f32.mrf.mxu0
        %v4789 = vadd.f32 0.0, %v4788
        %v4790 = vpop.f32.mrf.mxu0
        %4791 = vmatprep.mubr.bf16.mxu0 0
        %4792 = vmatmul.mubr.bf16.gmra.mxu0 %v4669
        %v4793 = vpop.f32.mrf.mxu0
        %v4794 = vadd.f32 0.0, %v4793
        %v4795 = vpop.f32.mrf.mxu0
        %v4796 = vpop.f32.mrf.mxu0
        %v4797 = vadd.f32 0.0, %v4796
        %v4798 = vpop.f32.mrf.mxu0
        %4799 = vmatprep.mubr.bf16.mxu0 0
        %4800 = vmatmul.mubr.bf16.gmra.mxu0 %v4672
        %v4801 = vpop.f32.mrf.mxu0
        %v4802 = vadd.f32 0.0, %v4801
        %v4803 = vpop.f32.mrf.mxu0
        %v4804 = vpop.f32.mrf.mxu0
        %v4805 = vadd.f32 0.0, %v4804
        %v4806 = vpop.f32.mrf.mxu0
        %4807 = vmatprep.mubr.bf16.mxu0 0
        %4808 = vmatmul.mubr.bf16.gmra.mxu0 %v4675
        %v4809 = vpop.f32.mrf.mxu0
        %v4810 = vadd.f32 0.0, %v4809
        %v4811 = vpop.f32.mrf.mxu0
        %v4812 = vpop.f32.mrf.mxu0
        %v4813 = vadd.f32 0.0, %v4812
        %v4814 = vpop.f32.mrf.mxu0
        %4815 = vmatprep.mubr.bf16.mxu0 0
        %4816 = vmatmul.mubr.bf16.gmra.mxu0 %v4678
        %v4817 = vpop.f32.mrf.mxu0
        %v4818 = vadd.f32 0.0, %v4817
        %v4819 = vpop.f32.mrf.mxu0
        %v4820 = vpop.f32.mrf.mxu0
        %v4821 = vadd.f32 0.0, %v4820
        %v4822 = vpop.f32.mrf.mxu0
        %4823 = vmatprep.mubr.bf16.mxu0 0
        %4824 = vmatmul.mubr.bf16.gmra.mxu0 %v4681
        %v4825 = vpop.f32.mrf.mxu0
        %v4826 = vadd.f32 0.0, %v4825
        %v4827 = vpop.f32.mrf.mxu0
        %v4828 = vpop.f32.mrf.mxu0
        %v4829 = vadd.f32 0.0, %v4828
        %v4830 = vpop.f32.mrf.mxu0
        %4831 = vmatprep.mubr.bf16.mxu0 0
        %4832 = vmatmul.mubr.bf16.gmra.mxu0 %v4684
        %v4833 = vpop.f32.mrf.mxu0
        %v4834 = vadd.f32 0.0, %v4833
        %v4835 = vpop.f32.mrf.mxu0
        %v4836 = vpop.f32.mrf.mxu0
        %v4837 = vadd.f32 0.0, %v4836
        %v4838 = vpop.f32.mrf.mxu0
        %4839 = vmatprep.mubr.bf16.mxu0 0
        %4840 = vmatmul.mubr.bf16.gmra.mxu0 %v4687
        %v4841 = vpop.f32.mrf.mxu0
        %v4842 = vadd.f32 0.0, %v4841
        %v4843 = vpop.f32.mrf.mxu0
        %v4844 = vpop.f32.mrf.mxu0
        %v4845 = vadd.f32 0.0, %v4844
        %v4846 = vpop.f32.mrf.mxu0
        %4847 = vmatprep.mubr.bf16.mxu0 0
        %4848 = vmatmul.mubr.bf16.gmra.mxu0 %v4690
        %v4849 = vpop.f32.mrf.mxu0
        %v4850 = vadd.f32 0.0, %v4849
        %v4851 = vpop.f32.mrf.mxu0
        %v4852 = vpop.f32.mrf.mxu0
        %v4853 = vadd.f32 0.0, %v4852
        %v4854 = vpop.f32.mrf.mxu0
        %4855 = vdwg.mxu0
        %v4856 = vadd.f32 %v4562, %v4730
        %v4857 = vadd.f32 %v4563, %v4733
        %v4858 = vadd.f32 %v4564, %v4738
        %v4859 = vadd.f32 %v4565, %v4741
        %v4860 = vadd.f32 %v4566, %v4746
        %v4861 = vadd.f32 %v4567, %v4749
        %v4862 = vadd.f32 %v4568, %v4754
        %v4863 = vadd.f32 %v4569, %v4757
        %v4864 = vadd.f32 %v4570, %v4762
        %v4865 = vadd.f32 %v4571, %v4765
        %v4866 = vadd.f32 %v4572, %v4770
        %v4867 = vadd.f32 %v4573, %v4773
        %v4868 = vadd.f32 %v4574, %v4778
        %v4869 = vadd.f32 %v4575, %v4781
        %v4870 = vadd.f32 %v4576, %v4786
        %v4871 = vadd.f32 %v4577, %v4789
        %v4872 = vadd.f32 %v4578, %v4794
        %v4873 = vadd.f32 %v4579, %v4797
        %v4874 = vadd.f32 %v4580, %v4802
        %v4875 = vadd.f32 %v4581, %v4805
        %v4876 = vadd.f32 %v4582, %v4810
        %v4877 = vadd.f32 %v4583, %v4813
        %v4878 = vadd.f32 %v4584, %v4818
        %v4879 = vadd.f32 %v4585, %v4821
        %v4880 = vadd.f32 %v4586, %v4826
        %v4881 = vadd.f32 %v4587, %v4829
        %v4882 = vadd.f32 %v4588, %v4834
        %v4883 = vadd.f32 %v4589, %v4837
        %v4884 = vadd.f32 %v4590, %v4842
        %v4885 = vadd.f32 %v4591, %v4845
        %v4886 = vadd.f32 %v4592, %v4850
        %v4887 = vadd.f32 %v4593, %v4853
        %v4888 = vld [vmem:[%s802 + $0x4] sm:$0xff]
        %v4889 = vld [vmem:[%s802 + $0xc] sm:$0xff]
        %v4890 = vld [vmem:[%s802 + $0x1c] sm:$0xff]
        %v4891 = vld [vmem:[%s802 + $0x24] sm:$0xff]
        %v4892 = vld [vmem:[%s802 + $0x34] sm:$0xff]
        %v4893 = vld [vmem:[%s802 + $0x3c] sm:$0xff]
        %v4894 = vld [vmem:[%s802 + $0x4c] sm:$0xff]
        %v4895 = vld [vmem:[%s802 + $0x54] sm:$0xff]
        %v4896 = vld [vmem:[%s802 + $0x64] sm:$0xff]
        %v4897 = vld [vmem:[%s802 + $0x6c] sm:$0xff]
        %v4898 = vld [vmem:[%s802 + $0x7c] sm:$0xff]
        %v4899 = vld [vmem:[%s802 + $0x84] sm:$0xff]
        %v4900 = vld [vmem:[%s802 + $0x94] sm:$0xff]
        %v4901 = vld [vmem:[%s802 + $0x9c] sm:$0xff]
        %v4902 = vld [vmem:[%s802 + $0xac] sm:$0xff]
        %v4903 = vld [vmem:[%s802 + $0xb4] sm:$0xff]
        %v4904 = vld [vmem:[%s802 + $0xc4] sm:$0xff]
        %v4905 = vld [vmem:[%s802 + $0xcc] sm:$0xff]
        %v4906 = vld [vmem:[%s802 + $0xdc] sm:$0xff]
        %v4907 = vld [vmem:[%s802 + $0xe4] sm:$0xff]
        %v4908 = vld [vmem:[%s802 + $0xf4] sm:$0xff]
        %v4909 = vld [vmem:[%s802 + $0xfc] sm:$0xff]
        %v4910 = vld [vmem:[%s802 + $0x10c] sm:$0xff]
        %v4911 = vld [vmem:[%s802 + $0x114] sm:$0xff]
        %v4912 = vld [vmem:[%s802 + $0x124] sm:$0xff]
        %v4913 = vld [vmem:[%s802 + $0x12c] sm:$0xff]
        %v4914 = vld [vmem:[%s802 + $0x13c] sm:$0xff]
        %v4915 = vld [vmem:[%s802 + $0x144] sm:$0xff]
        %v4916 = vld [vmem:[%s802 + $0x154] sm:$0xff]
        %v4917 = vld [vmem:[%s802 + $0x15c] sm:$0xff]
        %v4918 = vld [vmem:[%s802 + $0x16c] sm:$0xff]
        %v4919 = vld [vmem:[%s802 + $0x174] sm:$0xff]
        %v4920 = vpack.c.bf16 %v4889, %v4888
        %v4921 = vpack.c.bf16 %v4891, %v4890
        %v4922 = vpack.c.bf16 %v4893, %v4892
        %v4923 = vpack.c.bf16 %v4895, %v4894
        %v4924 = vpack.c.bf16 %v4897, %v4896
        %v4925 = vpack.c.bf16 %v4899, %v4898
        %v4926 = vpack.c.bf16 %v4901, %v4900
        %v4927 = vpack.c.bf16 %v4903, %v4902
        %v4928 = vpack.c.bf16 %v4905, %v4904
        %v4929 = vpack.c.bf16 %v4907, %v4906
        %v4930 = vpack.c.bf16 %v4909, %v4908
        %v4931 = vpack.c.bf16 %v4911, %v4910
        %v4932 = vpack.c.bf16 %v4913, %v4912
        %v4933 = vpack.c.bf16 %v4915, %v4914
        %v4934 = vpack.c.bf16 %v4917, %v4916
        %v4935 = vpack.c.bf16 %v4919, %v4918
        %s4936 = scalar_lea.vmem %s3, 56
        %v4937 = vld [vmem:[%s4936] sm:$0xf]
        %v4939 = vsel %vm580, %v4920, 0
        %v4942 = vsel %vm580, %v4921, 0
        %v4945 = vsel %vm580, %v4922, 0
        %v4948 = vsel %vm580, %v4923, 0
        %v4951 = vsel %vm580, %v4924, 0
        %v4954 = vsel %vm580, %v4925, 0
        %v4957 = vsel %vm580, %v4926, 0
        %v4960 = vsel %vm580, %v4927, 0
        %v4963 = vsel %vm580, %v4928, 0
        %v4966 = vsel %vm580, %v4929, 0
        %v4969 = vsel %vm580, %v4930, 0
        %v4972 = vsel %vm580, %v4931, 0
        %v4975 = vsel %vm580, %v4932, 0
        %v4978 = vsel %vm580, %v4933, 0
        %v4981 = vsel %vm580, %v4934, 0
        %v4984 = vsel %vm580, %v4935, 0
        %v4987 = vsel %vm982, %v4937, 0
        %4989 = vmatprep.subr.bf16.mxu0 0
        %4990 = vmatpush1.bf16.msra.mxu0 0
        %4991 = vmatprep.subr.bf16.mxu0 0
        %4992 = vmatpush1.bf16.msra.mxu0 0
        %4993 = vmatprep.subr.bf16.mxu0 0
        %4994 = vmatpush1.bf16.msra.mxu0 0
        %4995 = vmatprep.subr.bf16.mxu0 0
        %4996 = vmatpush1.bf16.msra.mxu0 0
        %4997 = vmatprep.subr.bf16.mxu0 0
        %4998 = vmatpush1.bf16.msra.mxu0 0
        %4999 = vmatprep.subr.bf16.mxu0 0
        %5000 = vmatpush1.bf16.msra.mxu0 0
        %5001 = vmatprep.subr.bf16.mxu0 0
        %5002 = vmatpush1.bf16.msra.mxu0 0
        %5003 = vmatprep.subr.bf16.mxu0 0
        %5004 = vmatpush1.bf16.msra.mxu0 %v4987
        %5005 = vmatprep.subr.bf16.mxu0 0
        %5006 = vmatpush2.bf16.msra.mxu0 0
        %5007 = vmatprep.subr.bf16.mxu0 0
        %5008 = vmatpush2.bf16.msra.mxu0 0
        %5009 = vmatprep.subr.bf16.mxu0 0
        %5010 = vmatpush2.bf16.msra.mxu0 0
        %5011 = vmatprep.subr.bf16.mxu0 0
        %5012 = vmatpush2.bf16.msra.mxu0 0
        %5013 = vmatprep.subr.bf16.mxu0 0
        %5014 = vmatpush2.bf16.msra.mxu0 0
        %5015 = vmatprep.subr.bf16.mxu0 0
        %5016 = vmatpush2.bf16.msra.mxu0 0
        %5017 = vmatprep.subr.bf16.mxu0 0
        %5018 = vmatpush2.bf16.msra.mxu0 0
        %5019 = vmatprep.subr.bf16.mxu0 0
        %5020 = vmatpush2.bf16.msra.mxu0 0
        %5021 = vmatprep.mubr.bf16.mxu0 0
        %5022 = vmatmul.mubr.bf16.gmra.mxu0 %v4939
        %v5023 = vpop.f32.mrf.mxu0
        %v5024 = vadd.f32 0.0, %v5023
        %v5025 = vpop.f32.mrf.mxu0
        %v5026 = vpop.f32.mrf.mxu0
        %v5027 = vadd.f32 0.0, %v5026
        %v5028 = vpop.f32.mrf.mxu0
        %5029 = vmatprep.mubr.bf16.mxu0 0
        %5030 = vmatmul.mubr.bf16.gmra.mxu0 %v4942
        %v5031 = vpop.f32.mrf.mxu0
        %v5032 = vadd.f32 0.0, %v5031
        %v5033 = vpop.f32.mrf.mxu0
        %v5034 = vpop.f32.mrf.mxu0
        %v5035 = vadd.f32 0.0, %v5034
        %v5036 = vpop.f32.mrf.mxu0
        %5037 = vmatprep.mubr.bf16.mxu0 0
        %5038 = vmatmul.mubr.bf16.gmra.mxu0 %v4945
        %v5039 = vpop.f32.mrf.mxu0
        %v5040 = vadd.f32 0.0, %v5039
        %v5041 = vpop.f32.mrf.mxu0
        %v5042 = vpop.f32.mrf.mxu0
        %v5043 = vadd.f32 0.0, %v5042
        %v5044 = vpop.f32.mrf.mxu0
        %5045 = vmatprep.mubr.bf16.mxu0 0
        %5046 = vmatmul.mubr.bf16.gmra.mxu0 %v4948
        %v5047 = vpop.f32.mrf.mxu0
        %v5048 = vadd.f32 0.0, %v5047
        %v5049 = vpop.f32.mrf.mxu0
        %v5050 = vpop.f32.mrf.mxu0
        %v5051 = vadd.f32 0.0, %v5050
        %v5052 = vpop.f32.mrf.mxu0
        %5053 = vmatprep.mubr.bf16.mxu0 0
        %5054 = vmatmul.mubr.bf16.gmra.mxu0 %v4951
        %v5055 = vpop.f32.mrf.mxu0
        %v5056 = vadd.f32 0.0, %v5055
        %v5057 = vpop.f32.mrf.mxu0
        %v5058 = vpop.f32.mrf.mxu0
        %v5059 = vadd.f32 0.0, %v5058
        %v5060 = vpop.f32.mrf.mxu0
        %5061 = vmatprep.mubr.bf16.mxu0 0
        %5062 = vmatmul.mubr.bf16.gmra.mxu0 %v4954
        %v5063 = vpop.f32.mrf.mxu0
        %v5064 = vadd.f32 0.0, %v5063
        %v5065 = vpop.f32.mrf.mxu0
        %v5066 = vpop.f32.mrf.mxu0
        %v5067 = vadd.f32 0.0, %v5066
        %v5068 = vpop.f32.mrf.mxu0
        %5069 = vmatprep.mubr.bf16.mxu0 0
        %5070 = vmatmul.mubr.bf16.gmra.mxu0 %v4957
        %v5071 = vpop.f32.mrf.mxu0
        %v5072 = vadd.f32 0.0, %v5071
        %v5073 = vpop.f32.mrf.mxu0
        %v5074 = vpop.f32.mrf.mxu0
        %v5075 = vadd.f32 0.0, %v5074
        %v5076 = vpop.f32.mrf.mxu0
        %5077 = vmatprep.mubr.bf16.mxu0 0
        %5078 = vmatmul.mubr.bf16.gmra.mxu0 %v4960
        %v5079 = vpop.f32.mrf.mxu0
        %v5080 = vadd.f32 0.0, %v5079
        %v5081 = vpop.f32.mrf.mxu0
        %v5082 = vpop.f32.mrf.mxu0
        %v5083 = vadd.f32 0.0, %v5082
        %v5084 = vpop.f32.mrf.mxu0
        %5085 = vmatprep.mubr.bf16.mxu0 0
        %5086 = vmatmul.mubr.bf16.gmra.mxu0 %v4963
        %v5087 = vpop.f32.mrf.mxu0
        %v5088 = vadd.f32 0.0, %v5087
        %v5089 = vpop.f32.mrf.mxu0
        %v5090 = vpop.f32.mrf.mxu0
        %v5091 = vadd.f32 0.0, %v5090
        %v5092 = vpop.f32.mrf.mxu0
        %5093 = vmatprep.mubr.bf16.mxu0 0
        %5094 = vmatmul.mubr.bf16.gmra.mxu0 %v4966
        %v5095 = vpop.f32.mrf.mxu0
        %v5096 = vadd.f32 0.0, %v5095
        %v5097 = vpop.f32.mrf.mxu0
        %v5098 = vpop.f32.mrf.mxu0
        %v5099 = vadd.f32 0.0, %v5098
        %v5100 = vpop.f32.mrf.mxu0
        %5101 = vmatprep.mubr.bf16.mxu0 0
        %5102 = vmatmul.mubr.bf16.gmra.mxu0 %v4969
        %v5103 = vpop.f32.mrf.mxu0
        %v5104 = vadd.f32 0.0, %v5103
        %v5105 = vpop.f32.mrf.mxu0
        %v5106 = vpop.f32.mrf.mxu0
        %v5107 = vadd.f32 0.0, %v5106
        %v5108 = vpop.f32.mrf.mxu0
        %5109 = vmatprep.mubr.bf16.mxu0 0
        %5110 = vmatmul.mubr.bf16.gmra.mxu0 %v4972
        %v5111 = vpop.f32.mrf.mxu0
        %v5112 = vadd.f32 0.0, %v5111
        %v5113 = vpop.f32.mrf.mxu0
        %v5114 = vpop.f32.mrf.mxu0
        %v5115 = vadd.f32 0.0, %v5114
        %v5116 = vpop.f32.mrf.mxu0
        %5117 = vmatprep.mubr.bf16.mxu0 0
        %5118 = vmatmul.mubr.bf16.gmra.mxu0 %v4975
        %v5119 = vpop.f32.mrf.mxu0
        %v5120 = vadd.f32 0.0, %v5119
        %v5121 = vpop.f32.mrf.mxu0
        %v5122 = vpop.f32.mrf.mxu0
        %v5123 = vadd.f32 0.0, %v5122
        %v5124 = vpop.f32.mrf.mxu0
        %5125 = vmatprep.mubr.bf16.mxu0 0
        %5126 = vmatmul.mubr.bf16.gmra.mxu0 %v4978
        %v5127 = vpop.f32.mrf.mxu0
        %v5128 = vadd.f32 0.0, %v5127
        %v5129 = vpop.f32.mrf.mxu0
        %v5130 = vpop.f32.mrf.mxu0
        %v5131 = vadd.f32 0.0, %v5130
        %v5132 = vpop.f32.mrf.mxu0
        %5133 = vmatprep.mubr.bf16.mxu0 0
        %5134 = vmatmul.mubr.bf16.gmra.mxu0 %v4981
        %v5135 = vpop.f32.mrf.mxu0
        %v5136 = vadd.f32 0.0, %v5135
        %v5137 = vpop.f32.mrf.mxu0
        %v5138 = vpop.f32.mrf.mxu0
        %v5139 = vadd.f32 0.0, %v5138
        %v5140 = vpop.f32.mrf.mxu0
        %5141 = vmatprep.mubr.bf16.mxu0 0
        %5142 = vmatmul.mubr.bf16.gmra.mxu0 %v4984
        %v5143 = vpop.f32.mrf.mxu0
        %v5144 = vadd.f32 0.0, %v5143
        %v5145 = vpop.f32.mrf.mxu0
        %v5146 = vpop.f32.mrf.mxu0
        %v5147 = vadd.f32 0.0, %v5146
        %v5148 = vpop.f32.mrf.mxu0
        %5149 = vdwg.mxu0
        %v5150 = vadd.f32 %v4856, %v5024
        %v5151 = vadd.f32 %v4857, %v5027
        %v5152 = vadd.f32 %v4858, %v5032
        %v5153 = vadd.f32 %v4859, %v5035
        %v5154 = vadd.f32 %v4860, %v5040
        %v5155 = vadd.f32 %v4861, %v5043
        %v5156 = vadd.f32 %v4862, %v5048
        %v5157 = vadd.f32 %v4863, %v5051
        %v5158 = vadd.f32 %v4864, %v5056
        %v5159 = vadd.f32 %v4865, %v5059
        %v5160 = vadd.f32 %v4866, %v5064
        %v5161 = vadd.f32 %v4867, %v5067
        %v5162 = vadd.f32 %v4868, %v5072
        %v5163 = vadd.f32 %v4869, %v5075
        %v5164 = vadd.f32 %v4870, %v5080
        %v5165 = vadd.f32 %v4871, %v5083
        %v5166 = vadd.f32 %v4872, %v5088
        %v5167 = vadd.f32 %v4873, %v5091
        %v5168 = vadd.f32 %v4874, %v5096
        %v5169 = vadd.f32 %v4875, %v5099
        %v5170 = vadd.f32 %v4876, %v5104
        %v5171 = vadd.f32 %v4877, %v5107
        %v5172 = vadd.f32 %v4878, %v5112
        %v5173 = vadd.f32 %v4879, %v5115
        %v5174 = vadd.f32 %v4880, %v5120
        %v5175 = vadd.f32 %v4881, %v5123
        %v5176 = vadd.f32 %v4882, %v5128
        %v5177 = vadd.f32 %v4883, %v5131
        %v5178 = vadd.f32 %v4884, %v5136
        %v5179 = vadd.f32 %v4885, %v5139
        %v5180 = vadd.f32 %v4886, %v5144
        %v5181 = vadd.f32 %v4887, %v5147
        %s5182 = scalar_lea.vmem [#allocation2], 72
        %v5183 = vld [vmem:[%s5182] sm:$0xff]
        %v5184 = vld [vmem:[%s5182 + $0x8] sm:$0xff]
        %v5185 = vld [vmem:[%s5182 + $0x18] sm:$0xff]
        %v5186 = vld [vmem:[%s5182 + $0x20] sm:$0xff]
        %v5187 = vld [vmem:[%s5182 + $0x30] sm:$0xff]
        %v5188 = vld [vmem:[%s5182 + $0x38] sm:$0xff]
        %v5189 = vld [vmem:[%s5182 + $0x48] sm:$0xff]
        %v5190 = vld [vmem:[%s5182 + $0x50] sm:$0xff]
        %v5191 = vld [vmem:[%s5182 + $0x60] sm:$0xff]
        %v5192 = vld [vmem:[%s5182 + $0x68] sm:$0xff]
        %v5193 = vld [vmem:[%s5182 + $0x78] sm:$0xff]
        %v5194 = vld [vmem:[%s5182 + $0x80] sm:$0xff]
        %v5195 = vld [vmem:[%s5182 + $0x90] sm:$0xff]
        %v5196 = vld [vmem:[%s5182 + $0x98] sm:$0xff]
        %v5197 = vld [vmem:[%s5182 + $0xa8] sm:$0xff]
        %v5198 = vld [vmem:[%s5182 + $0xb0] sm:$0xff]
        %v5199 = vld [vmem:[%s5182 + $0xc0] sm:$0xff]
        %v5200 = vld [vmem:[%s5182 + $0xc8] sm:$0xff]
        %v5201 = vld [vmem:[%s5182 + $0xd8] sm:$0xff]
        %v5202 = vld [vmem:[%s5182 + $0xe0] sm:$0xff]
        %v5203 = vld [vmem:[%s5182 + $0xf0] sm:$0xff]
        %v5204 = vld [vmem:[%s5182 + $0xf8] sm:$0xff]
        %v5205 = vld [vmem:[%s5182 + $0x108] sm:$0xff]
        %v5206 = vld [vmem:[%s5182 + $0x110] sm:$0xff]
        %v5207 = vld [vmem:[%s5182 + $0x120] sm:$0xff]
        %v5208 = vld [vmem:[%s5182 + $0x128] sm:$0xff]
        %v5209 = vld [vmem:[%s5182 + $0x138] sm:$0xff]
        %v5210 = vld [vmem:[%s5182 + $0x140] sm:$0xff]
        %v5211 = vld [vmem:[%s5182 + $0x150] sm:$0xff]
        %v5212 = vld [vmem:[%s5182 + $0x158] sm:$0xff]
        %v5213 = vld [vmem:[%s5182 + $0x168] sm:$0xff]
        %v5214 = vld [vmem:[%s5182 + $0x170] sm:$0xff]
        %v5215 = vpack.c.bf16 %v5184, %v5183
        %v5216 = vpack.c.bf16 %v5186, %v5185
        %v5217 = vpack.c.bf16 %v5188, %v5187
        %v5218 = vpack.c.bf16 %v5190, %v5189
        %v5219 = vpack.c.bf16 %v5192, %v5191
        %v5220 = vpack.c.bf16 %v5194, %v5193
        %v5221 = vpack.c.bf16 %v5196, %v5195
        %v5222 = vpack.c.bf16 %v5198, %v5197
        %v5223 = vpack.c.bf16 %v5200, %v5199
        %v5224 = vpack.c.bf16 %v5202, %v5201
        %v5225 = vpack.c.bf16 %v5204, %v5203
        %v5226 = vpack.c.bf16 %v5206, %v5205
        %v5227 = vpack.c.bf16 %v5208, %v5207
        %v5228 = vpack.c.bf16 %v5210, %v5209
        %v5229 = vpack.c.bf16 %v5212, %v5211
        %v5230 = vpack.c.bf16 %v5214, %v5213
        %s5231 = scalar_lea.vmem %s3, 60
        %v5232 = vld [vmem:[%s5231] sm:$0xf]
        %v5234 = vsel %vm580, %v5215, 0
        %v5237 = vsel %vm580, %v5216, 0
        %v5240 = vsel %vm580, %v5217, 0
        %v5243 = vsel %vm580, %v5218, 0
        %v5246 = vsel %vm580, %v5219, 0
        %v5249 = vsel %vm580, %v5220, 0
        %v5252 = vsel %vm580, %v5221, 0
        %v5255 = vsel %vm580, %v5222, 0
        %v5258 = vsel %vm580, %v5223, 0
        %v5261 = vsel %vm580, %v5224, 0
        %v5264 = vsel %vm580, %v5225, 0
        %v5267 = vsel %vm580, %v5226, 0
        %v5270 = vsel %vm580, %v5227, 0
        %v5273 = vsel %vm580, %v5228, 0
        %v5276 = vsel %vm580, %v5229, 0
        %v5279 = vsel %vm580, %v5230, 0
        %v5282 = vsel %vm982, %v5232, 0
        %5284 = vmatprep.subr.bf16.mxu0 0
        %5285 = vmatpush1.bf16.msra.mxu0 0
        %5286 = vmatprep.subr.bf16.mxu0 0
        %5287 = vmatpush1.bf16.msra.mxu0 0
        %5288 = vmatprep.subr.bf16.mxu0 0
        %5289 = vmatpush1.bf16.msra.mxu0 0
        %5290 = vmatprep.subr.bf16.mxu0 0
        %5291 = vmatpush1.bf16.msra.mxu0 0
        %5292 = vmatprep.subr.bf16.mxu0 0
        %5293 = vmatpush1.bf16.msra.mxu0 0
        %5294 = vmatprep.subr.bf16.mxu0 0
        %5295 = vmatpush1.bf16.msra.mxu0 0
        %5296 = vmatprep.subr.bf16.mxu0 0
        %5297 = vmatpush1.bf16.msra.mxu0 0
        %5298 = vmatprep.subr.bf16.mxu0 0
        %5299 = vmatpush1.bf16.msra.mxu0 %v5282
        %5300 = vmatprep.subr.bf16.mxu0 0
        %5301 = vmatpush2.bf16.msra.mxu0 0
        %5302 = vmatprep.subr.bf16.mxu0 0
        %5303 = vmatpush2.bf16.msra.mxu0 0
        %5304 = vmatprep.subr.bf16.mxu0 0
        %5305 = vmatpush2.bf16.msra.mxu0 0
        %5306 = vmatprep.subr.bf16.mxu0 0
        %5307 = vmatpush2.bf16.msra.mxu0 0
        %5308 = vmatprep.subr.bf16.mxu0 0
        %5309 = vmatpush2.bf16.msra.mxu0 0
        %5310 = vmatprep.subr.bf16.mxu0 0
        %5311 = vmatpush2.bf16.msra.mxu0 0
        %5312 = vmatprep.subr.bf16.mxu0 0
        %5313 = vmatpush2.bf16.msra.mxu0 0
        %5314 = vmatprep.subr.bf16.mxu0 0
        %5315 = vmatpush2.bf16.msra.mxu0 0
        %5316 = vmatprep.mubr.bf16.mxu0 0
        %5317 = vmatmul.mubr.bf16.gmra.mxu0 %v5234
        %v5318 = vpop.f32.mrf.mxu0
        %v5319 = vadd.f32 0.0, %v5318
        %v5320 = vpop.f32.mrf.mxu0
        %v5321 = vpop.f32.mrf.mxu0
        %v5322 = vadd.f32 0.0, %v5321
        %v5323 = vpop.f32.mrf.mxu0
        %5324 = vmatprep.mubr.bf16.mxu0 0
        %5325 = vmatmul.mubr.bf16.gmra.mxu0 %v5237
        %v5326 = vpop.f32.mrf.mxu0
        %v5327 = vadd.f32 0.0, %v5326
        %v5328 = vpop.f32.mrf.mxu0
        %v5329 = vpop.f32.mrf.mxu0
        %v5330 = vadd.f32 0.0, %v5329
        %v5331 = vpop.f32.mrf.mxu0
        %5332 = vmatprep.mubr.bf16.mxu0 0
        %5333 = vmatmul.mubr.bf16.gmra.mxu0 %v5240
        %v5334 = vpop.f32.mrf.mxu0
        %v5335 = vadd.f32 0.0, %v5334
        %v5336 = vpop.f32.mrf.mxu0
        %v5337 = vpop.f32.mrf.mxu0
        %v5338 = vadd.f32 0.0, %v5337
        %v5339 = vpop.f32.mrf.mxu0
        %5340 = vmatprep.mubr.bf16.mxu0 0
        %5341 = vmatmul.mubr.bf16.gmra.mxu0 %v5243
        %v5342 = vpop.f32.mrf.mxu0
        %v5343 = vadd.f32 0.0, %v5342
        %v5344 = vpop.f32.mrf.mxu0
        %v5345 = vpop.f32.mrf.mxu0
        %v5346 = vadd.f32 0.0, %v5345
        %v5347 = vpop.f32.mrf.mxu0
        %5348 = vmatprep.mubr.bf16.mxu0 0
        %5349 = vmatmul.mubr.bf16.gmra.mxu0 %v5246
        %v5350 = vpop.f32.mrf.mxu0
        %v5351 = vadd.f32 0.0, %v5350
        %v5352 = vpop.f32.mrf.mxu0
        %v5353 = vpop.f32.mrf.mxu0
        %v5354 = vadd.f32 0.0, %v5353
        %v5355 = vpop.f32.mrf.mxu0
        %5356 = vmatprep.mubr.bf16.mxu0 0
        %5357 = vmatmul.mubr.bf16.gmra.mxu0 %v5249
        %v5358 = vpop.f32.mrf.mxu0
        %v5359 = vadd.f32 0.0, %v5358
        %v5360 = vpop.f32.mrf.mxu0
        %v5361 = vpop.f32.mrf.mxu0
        %v5362 = vadd.f32 0.0, %v5361
        %v5363 = vpop.f32.mrf.mxu0
        %5364 = vmatprep.mubr.bf16.mxu0 0
        %5365 = vmatmul.mubr.bf16.gmra.mxu0 %v5252
        %v5366 = vpop.f32.mrf.mxu0
        %v5367 = vadd.f32 0.0, %v5366
        %v5368 = vpop.f32.mrf.mxu0
        %v5369 = vpop.f32.mrf.mxu0
        %v5370 = vadd.f32 0.0, %v5369
        %v5371 = vpop.f32.mrf.mxu0
        %5372 = vmatprep.mubr.bf16.mxu0 0
        %5373 = vmatmul.mubr.bf16.gmra.mxu0 %v5255
        %v5374 = vpop.f32.mrf.mxu0
        %v5375 = vadd.f32 0.0, %v5374
        %v5376 = vpop.f32.mrf.mxu0
        %v5377 = vpop.f32.mrf.mxu0
        %v5378 = vadd.f32 0.0, %v5377
        %v5379 = vpop.f32.mrf.mxu0
        %5380 = vmatprep.mubr.bf16.mxu0 0
        %5381 = vmatmul.mubr.bf16.gmra.mxu0 %v5258
        %v5382 = vpop.f32.mrf.mxu0
        %v5383 = vadd.f32 0.0, %v5382
        %v5384 = vpop.f32.mrf.mxu0
        %v5385 = vpop.f32.mrf.mxu0
        %v5386 = vadd.f32 0.0, %v5385
        %v5387 = vpop.f32.mrf.mxu0
        %5388 = vmatprep.mubr.bf16.mxu0 0
        %5389 = vmatmul.mubr.bf16.gmra.mxu0 %v5261
        %v5390 = vpop.f32.mrf.mxu0
        %v5391 = vadd.f32 0.0, %v5390
        %v5392 = vpop.f32.mrf.mxu0
        %v5393 = vpop.f32.mrf.mxu0
        %v5394 = vadd.f32 0.0, %v5393
        %v5395 = vpop.f32.mrf.mxu0
        %5396 = vmatprep.mubr.bf16.mxu0 0
        %5397 = vmatmul.mubr.bf16.gmra.mxu0 %v5264
        %v5398 = vpop.f32.mrf.mxu0
        %v5399 = vadd.f32 0.0, %v5398
        %v5400 = vpop.f32.mrf.mxu0
        %v5401 = vpop.f32.mrf.mxu0
        %v5402 = vadd.f32 0.0, %v5401
        %v5403 = vpop.f32.mrf.mxu0
        %5404 = vmatprep.mubr.bf16.mxu0 0
        %5405 = vmatmul.mubr.bf16.gmra.mxu0 %v5267
        %v5406 = vpop.f32.mrf.mxu0
        %v5407 = vadd.f32 0.0, %v5406
        %v5408 = vpop.f32.mrf.mxu0
        %v5409 = vpop.f32.mrf.mxu0
        %v5410 = vadd.f32 0.0, %v5409
        %v5411 = vpop.f32.mrf.mxu0
        %5412 = vmatprep.mubr.bf16.mxu0 0
        %5413 = vmatmul.mubr.bf16.gmra.mxu0 %v5270
        %v5414 = vpop.f32.mrf.mxu0
        %v5415 = vadd.f32 0.0, %v5414
        %v5416 = vpop.f32.mrf.mxu0
        %v5417 = vpop.f32.mrf.mxu0
        %v5418 = vadd.f32 0.0, %v5417
        %v5419 = vpop.f32.mrf.mxu0
        %5420 = vmatprep.mubr.bf16.mxu0 0
        %5421 = vmatmul.mubr.bf16.gmra.mxu0 %v5273
        %v5422 = vpop.f32.mrf.mxu0
        %v5423 = vadd.f32 0.0, %v5422
        %v5424 = vpop.f32.mrf.mxu0
        %v5425 = vpop.f32.mrf.mxu0
        %v5426 = vadd.f32 0.0, %v5425
        %v5427 = vpop.f32.mrf.mxu0
        %5428 = vmatprep.mubr.bf16.mxu0 0
        %5429 = vmatmul.mubr.bf16.gmra.mxu0 %v5276
        %v5430 = vpop.f32.mrf.mxu0
        %v5431 = vadd.f32 0.0, %v5430
        %v5432 = vpop.f32.mrf.mxu0
        %v5433 = vpop.f32.mrf.mxu0
        %v5434 = vadd.f32 0.0, %v5433
        %v5435 = vpop.f32.mrf.mxu0
        %5436 = vmatprep.mubr.bf16.mxu0 0
        %5437 = vmatmul.mubr.bf16.gmra.mxu0 %v5279
        %v5438 = vpop.f32.mrf.mxu0
        %v5439 = vadd.f32 0.0, %v5438
        %v5440 = vpop.f32.mrf.mxu0
        %v5441 = vpop.f32.mrf.mxu0
        %v5442 = vadd.f32 0.0, %v5441
        %v5443 = vpop.f32.mrf.mxu0
        %5444 = vdwg.mxu0
        %v5445 = vadd.f32 %v5150, %v5319
        %v5446 = vadd.f32 %v5151, %v5322
        %v5447 = vadd.f32 %v5152, %v5327
        %v5448 = vadd.f32 %v5153, %v5330
        %v5449 = vadd.f32 %v5154, %v5335
        %v5450 = vadd.f32 %v5155, %v5338
        %v5451 = vadd.f32 %v5156, %v5343
        %v5452 = vadd.f32 %v5157, %v5346
        %v5453 = vadd.f32 %v5158, %v5351
        %v5454 = vadd.f32 %v5159, %v5354
        %v5455 = vadd.f32 %v5160, %v5359
        %v5456 = vadd.f32 %v5161, %v5362
        %v5457 = vadd.f32 %v5162, %v5367
        %v5458 = vadd.f32 %v5163, %v5370
        %v5459 = vadd.f32 %v5164, %v5375
        %v5460 = vadd.f32 %v5165, %v5378
        %v5461 = vadd.f32 %v5166, %v5383
        %v5462 = vadd.f32 %v5167, %v5386
        %v5463 = vadd.f32 %v5168, %v5391
        %v5464 = vadd.f32 %v5169, %v5394
        %v5465 = vadd.f32 %v5170, %v5399
        %v5466 = vadd.f32 %v5171, %v5402
        %v5467 = vadd.f32 %v5172, %v5407
        %v5468 = vadd.f32 %v5173, %v5410
        %v5469 = vadd.f32 %v5174, %v5415
        %v5470 = vadd.f32 %v5175, %v5418
        %v5471 = vadd.f32 %v5176, %v5423
        %v5472 = vadd.f32 %v5177, %v5426
        %v5473 = vadd.f32 %v5178, %v5431
        %v5474 = vadd.f32 %v5179, %v5434
        %v5475 = vadd.f32 %v5180, %v5439
        %v5476 = vadd.f32 %v5181, %v5442
        %v5477 = vld [vmem:[%s5182 + $0x1] sm:$0xff]
        %v5478 = vld [vmem:[%s5182 + $0x9] sm:$0xff]
        %v5479 = vld [vmem:[%s5182 + $0x19] sm:$0xff]
        %v5480 = vld [vmem:[%s5182 + $0x21] sm:$0xff]
        %v5481 = vld [vmem:[%s5182 + $0x31] sm:$0xff]
        %v5482 = vld [vmem:[%s5182 + $0x39] sm:$0xff]
        %v5483 = vld [vmem:[%s5182 + $0x49] sm:$0xff]
        %v5484 = vld [vmem:[%s5182 + $0x51] sm:$0xff]
        %v5485 = vld [vmem:[%s5182 + $0x61] sm:$0xff]
        %v5486 = vld [vmem:[%s5182 + $0x69] sm:$0xff]
        %v5487 = vld [vmem:[%s5182 + $0x79] sm:$0xff]
        %v5488 = vld [vmem:[%s5182 + $0x81] sm:$0xff]
        %v5489 = vld [vmem:[%s5182 + $0x91] sm:$0xff]
        %v5490 = vld [vmem:[%s5182 + $0x99] sm:$0xff]
        %v5491 = vld [vmem:[%s5182 + $0xa9] sm:$0xff]
        %v5492 = vld [vmem:[%s5182 + $0xb1] sm:$0xff]
        %v5493 = vld [vmem:[%s5182 + $0xc1] sm:$0xff]
        %v5494 = vld [vmem:[%s5182 + $0xc9] sm:$0xff]
        %v5495 = vld [vmem:[%s5182 + $0xd9] sm:$0xff]
        %v5496 = vld [vmem:[%s5182 + $0xe1] sm:$0xff]
        %v5497 = vld [vmem:[%s5182 + $0xf1] sm:$0xff]
        %v5498 = vld [vmem:[%s5182 + $0xf9] sm:$0xff]
        %v5499 = vld [vmem:[%s5182 + $0x109] sm:$0xff]
        %v5500 = vld [vmem:[%s5182 + $0x111] sm:$0xff]
        %v5501 = vld [vmem:[%s5182 + $0x121] sm:$0xff]
        %v5502 = vld [vmem:[%s5182 + $0x129] sm:$0xff]
        %v5503 = vld [vmem:[%s5182 + $0x139] sm:$0xff]
        %v5504 = vld [vmem:[%s5182 + $0x141] sm:$0xff]
        %v5505 = vld [vmem:[%s5182 + $0x151] sm:$0xff]
        %v5506 = vld [vmem:[%s5182 + $0x159] sm:$0xff]
        %v5507 = vld [vmem:[%s5182 + $0x169] sm:$0xff]
        %v5508 = vld [vmem:[%s5182 + $0x171] sm:$0xff]
        %v5509 = vpack.c.bf16 %v5478, %v5477
        %v5510 = vpack.c.bf16 %v5480, %v5479
        %v5511 = vpack.c.bf16 %v5482, %v5481
        %v5512 = vpack.c.bf16 %v5484, %v5483
        %v5513 = vpack.c.bf16 %v5486, %v5485
        %v5514 = vpack.c.bf16 %v5488, %v5487
        %v5515 = vpack.c.bf16 %v5490, %v5489
        %v5516 = vpack.c.bf16 %v5492, %v5491
        %v5517 = vpack.c.bf16 %v5494, %v5493
        %v5518 = vpack.c.bf16 %v5496, %v5495
        %v5519 = vpack.c.bf16 %v5498, %v5497
        %v5520 = vpack.c.bf16 %v5500, %v5499
        %v5521 = vpack.c.bf16 %v5502, %v5501
        %v5522 = vpack.c.bf16 %v5504, %v5503
        %v5523 = vpack.c.bf16 %v5506, %v5505
        %v5524 = vpack.c.bf16 %v5508, %v5507
        %s5525 = scalar_lea.vmem %s3, 64
        %v5526 = vld [vmem:[%s5525] sm:$0xf]
        %v5528 = vsel %vm580, %v5509, 0
        %v5531 = vsel %vm580, %v5510, 0
        %v5534 = vsel %vm580, %v5511, 0
        %v5537 = vsel %vm580, %v5512, 0
        %v5540 = vsel %vm580, %v5513, 0
        %v5543 = vsel %vm580, %v5514, 0
        %v5546 = vsel %vm580, %v5515, 0
        %v5549 = vsel %vm580, %v5516, 0
        %v5552 = vsel %vm580, %v5517, 0
        %v5555 = vsel %vm580, %v5518, 0
        %v5558 = vsel %vm580, %v5519, 0
        %v5561 = vsel %vm580, %v5520, 0
        %v5564 = vsel %vm580, %v5521, 0
        %v5567 = vsel %vm580, %v5522, 0
        %v5570 = vsel %vm580, %v5523, 0
        %v5573 = vsel %vm580, %v5524, 0
        %v5576 = vsel %vm982, %v5526, 0
        %5578 = vmatprep.subr.bf16.mxu0 0
        %5579 = vmatpush1.bf16.msra.mxu0 0
        %5580 = vmatprep.subr.bf16.mxu0 0
        %5581 = vmatpush1.bf16.msra.mxu0 0
        %5582 = vmatprep.subr.bf16.mxu0 0
        %5583 = vmatpush1.bf16.msra.mxu0 0
        %5584 = vmatprep.subr.bf16.mxu0 0
        %5585 = vmatpush1.bf16.msra.mxu0 0
        %5586 = vmatprep.subr.bf16.mxu0 0
        %5587 = vmatpush1.bf16.msra.mxu0 0
        %5588 = vmatprep.subr.bf16.mxu0 0
        %5589 = vmatpush1.bf16.msra.mxu0 0
        %5590 = vmatprep.subr.bf16.mxu0 0
        %5591 = vmatpush1.bf16.msra.mxu0 0
        %5592 = vmatprep.subr.bf16.mxu0 0
        %5593 = vmatpush1.bf16.msra.mxu0 %v5576
        %5594 = vmatprep.subr.bf16.mxu0 0
        %5595 = vmatpush2.bf16.msra.mxu0 0
        %5596 = vmatprep.subr.bf16.mxu0 0
        %5597 = vmatpush2.bf16.msra.mxu0 0
        %5598 = vmatprep.subr.bf16.mxu0 0
        %5599 = vmatpush2.bf16.msra.mxu0 0
        %5600 = vmatprep.subr.bf16.mxu0 0
        %5601 = vmatpush2.bf16.msra.mxu0 0
        %5602 = vmatprep.subr.bf16.mxu0 0
        %5603 = vmatpush2.bf16.msra.mxu0 0
        %5604 = vmatprep.subr.bf16.mxu0 0
        %5605 = vmatpush2.bf16.msra.mxu0 0
        %5606 = vmatprep.subr.bf16.mxu0 0
        %5607 = vmatpush2.bf16.msra.mxu0 0
        %5608 = vmatprep.subr.bf16.mxu0 0
        %5609 = vmatpush2.bf16.msra.mxu0 0
        %5610 = vmatprep.mubr.bf16.mxu0 0
        %5611 = vmatmul.mubr.bf16.gmra.mxu0 %v5528
        %v5612 = vpop.f32.mrf.mxu0
        %v5613 = vadd.f32 0.0, %v5612
        %v5614 = vpop.f32.mrf.mxu0
        %v5615 = vpop.f32.mrf.mxu0
        %v5616 = vadd.f32 0.0, %v5615
        %v5617 = vpop.f32.mrf.mxu0
        %5618 = vmatprep.mubr.bf16.mxu0 0
        %5619 = vmatmul.mubr.bf16.gmra.mxu0 %v5531
        %v5620 = vpop.f32.mrf.mxu0
        %v5621 = vadd.f32 0.0, %v5620
        %v5622 = vpop.f32.mrf.mxu0
        %v5623 = vpop.f32.mrf.mxu0
        %v5624 = vadd.f32 0.0, %v5623
        %v5625 = vpop.f32.mrf.mxu0
        %5626 = vmatprep.mubr.bf16.mxu0 0
        %5627 = vmatmul.mubr.bf16.gmra.mxu0 %v5534
        %v5628 = vpop.f32.mrf.mxu0
        %v5629 = vadd.f32 0.0, %v5628
        %v5630 = vpop.f32.mrf.mxu0
        %v5631 = vpop.f32.mrf.mxu0
        %v5632 = vadd.f32 0.0, %v5631
        %v5633 = vpop.f32.mrf.mxu0
        %5634 = vmatprep.mubr.bf16.mxu0 0
        %5635 = vmatmul.mubr.bf16.gmra.mxu0 %v5537
        %v5636 = vpop.f32.mrf.mxu0
        %v5637 = vadd.f32 0.0, %v5636
        %v5638 = vpop.f32.mrf.mxu0
        %v5639 = vpop.f32.mrf.mxu0
        %v5640 = vadd.f32 0.0, %v5639
        %v5641 = vpop.f32.mrf.mxu0
        %5642 = vmatprep.mubr.bf16.mxu0 0
        %5643 = vmatmul.mubr.bf16.gmra.mxu0 %v5540
        %v5644 = vpop.f32.mrf.mxu0
        %v5645 = vadd.f32 0.0, %v5644
        %v5646 = vpop.f32.mrf.mxu0
        %v5647 = vpop.f32.mrf.mxu0
        %v5648 = vadd.f32 0.0, %v5647
        %v5649 = vpop.f32.mrf.mxu0
        %5650 = vmatprep.mubr.bf16.mxu0 0
        %5651 = vmatmul.mubr.bf16.gmra.mxu0 %v5543
        %v5652 = vpop.f32.mrf.mxu0
        %v5653 = vadd.f32 0.0, %v5652
        %v5654 = vpop.f32.mrf.mxu0
        %v5655 = vpop.f32.mrf.mxu0
        %v5656 = vadd.f32 0.0, %v5655
        %v5657 = vpop.f32.mrf.mxu0
        %5658 = vmatprep.mubr.bf16.mxu0 0
        %5659 = vmatmul.mubr.bf16.gmra.mxu0 %v5546
        %v5660 = vpop.f32.mrf.mxu0
        %v5661 = vadd.f32 0.0, %v5660
        %v5662 = vpop.f32.mrf.mxu0
        %v5663 = vpop.f32.mrf.mxu0
        %v5664 = vadd.f32 0.0, %v5663
        %v5665 = vpop.f32.mrf.mxu0
        %5666 = vmatprep.mubr.bf16.mxu0 0
        %5667 = vmatmul.mubr.bf16.gmra.mxu0 %v5549
        %v5668 = vpop.f32.mrf.mxu0
        %v5669 = vadd.f32 0.0, %v5668
        %v5670 = vpop.f32.mrf.mxu0
        %v5671 = vpop.f32.mrf.mxu0
        %v5672 = vadd.f32 0.0, %v5671
        %v5673 = vpop.f32.mrf.mxu0
        %5674 = vmatprep.mubr.bf16.mxu0 0
        %5675 = vmatmul.mubr.bf16.gmra.mxu0 %v5552
        %v5676 = vpop.f32.mrf.mxu0
        %v5677 = vadd.f32 0.0, %v5676
        %v5678 = vpop.f32.mrf.mxu0
        %v5679 = vpop.f32.mrf.mxu0
        %v5680 = vadd.f32 0.0, %v5679
        %v5681 = vpop.f32.mrf.mxu0
        %5682 = vmatprep.mubr.bf16.mxu0 0
        %5683 = vmatmul.mubr.bf16.gmra.mxu0 %v5555
        %v5684 = vpop.f32.mrf.mxu0
        %v5685 = vadd.f32 0.0, %v5684
        %v5686 = vpop.f32.mrf.mxu0
        %v5687 = vpop.f32.mrf.mxu0
        %v5688 = vadd.f32 0.0, %v5687
        %v5689 = vpop.f32.mrf.mxu0
        %5690 = vmatprep.mubr.bf16.mxu0 0
        %5691 = vmatmul.mubr.bf16.gmra.mxu0 %v5558
        %v5692 = vpop.f32.mrf.mxu0
        %v5693 = vadd.f32 0.0, %v5692
        %v5694 = vpop.f32.mrf.mxu0
        %v5695 = vpop.f32.mrf.mxu0
        %v5696 = vadd.f32 0.0, %v5695
        %v5697 = vpop.f32.mrf.mxu0
        %5698 = vmatprep.mubr.bf16.mxu0 0
        %5699 = vmatmul.mubr.bf16.gmra.mxu0 %v5561
        %v5700 = vpop.f32.mrf.mxu0
        %v5701 = vadd.f32 0.0, %v5700
        %v5702 = vpop.f32.mrf.mxu0
        %v5703 = vpop.f32.mrf.mxu0
        %v5704 = vadd.f32 0.0, %v5703
        %v5705 = vpop.f32.mrf.mxu0
        %5706 = vmatprep.mubr.bf16.mxu0 0
        %5707 = vmatmul.mubr.bf16.gmra.mxu0 %v5564
        %v5708 = vpop.f32.mrf.mxu0
        %v5709 = vadd.f32 0.0, %v5708
        %v5710 = vpop.f32.mrf.mxu0
        %v5711 = vpop.f32.mrf.mxu0
        %v5712 = vadd.f32 0.0, %v5711
        %v5713 = vpop.f32.mrf.mxu0
        %5714 = vmatprep.mubr.bf16.mxu0 0
        %5715 = vmatmul.mubr.bf16.gmra.mxu0 %v5567
        %v5716 = vpop.f32.mrf.mxu0
        %v5717 = vadd.f32 0.0, %v5716
        %v5718 = vpop.f32.mrf.mxu0
        %v5719 = vpop.f32.mrf.mxu0
        %v5720 = vadd.f32 0.0, %v5719
        %v5721 = vpop.f32.mrf.mxu0
        %5722 = vmatprep.mubr.bf16.mxu0 0
        %5723 = vmatmul.mubr.bf16.gmra.mxu0 %v5570
        %v5724 = vpop.f32.mrf.mxu0
        %v5725 = vadd.f32 0.0, %v5724
        %v5726 = vpop.f32.mrf.mxu0
        %v5727 = vpop.f32.mrf.mxu0
        %v5728 = vadd.f32 0.0, %v5727
        %v5729 = vpop.f32.mrf.mxu0
        %5730 = vmatprep.mubr.bf16.mxu0 0
        %5731 = vmatmul.mubr.bf16.gmra.mxu0 %v5573
        %v5732 = vpop.f32.mrf.mxu0
        %v5733 = vadd.f32 0.0, %v5732
        %v5734 = vpop.f32.mrf.mxu0
        %v5735 = vpop.f32.mrf.mxu0
        %v5736 = vadd.f32 0.0, %v5735
        %v5737 = vpop.f32.mrf.mxu0
        %5738 = vdwg.mxu0
        %v5739 = vadd.f32 %v5445, %v5613
        %v5740 = vadd.f32 %v5446, %v5616
        %v5741 = vadd.f32 %v5447, %v5621
        %v5742 = vadd.f32 %v5448, %v5624
        %v5743 = vadd.f32 %v5449, %v5629
        %v5744 = vadd.f32 %v5450, %v5632
        %v5745 = vadd.f32 %v5451, %v5637
        %v5746 = vadd.f32 %v5452, %v5640
        %v5747 = vadd.f32 %v5453, %v5645
        %v5748 = vadd.f32 %v5454, %v5648
        %v5749 = vadd.f32 %v5455, %v5653
        %v5750 = vadd.f32 %v5456, %v5656
        %v5751 = vadd.f32 %v5457, %v5661
        %v5752 = vadd.f32 %v5458, %v5664
        %v5753 = vadd.f32 %v5459, %v5669
        %v5754 = vadd.f32 %v5460, %v5672
        %v5755 = vadd.f32 %v5461, %v5677
        %v5756 = vadd.f32 %v5462, %v5680
        %v5757 = vadd.f32 %v5463, %v5685
        %v5758 = vadd.f32 %v5464, %v5688
        %v5759 = vadd.f32 %v5465, %v5693
        %v5760 = vadd.f32 %v5466, %v5696
        %v5761 = vadd.f32 %v5467, %v5701
        %v5762 = vadd.f32 %v5468, %v5704
        %v5763 = vadd.f32 %v5469, %v5709
        %v5764 = vadd.f32 %v5470, %v5712
        %v5765 = vadd.f32 %v5471, %v5717
        %v5766 = vadd.f32 %v5472, %v5720
        %v5767 = vadd.f32 %v5473, %v5725
        %v5768 = vadd.f32 %v5474, %v5728
        %v5769 = vadd.f32 %v5475, %v5733
        %v5770 = vadd.f32 %v5476, %v5736
        %v5771 = vld [vmem:[%s5182 + $0x2] sm:$0xff]
        %v5772 = vld [vmem:[%s5182 + $0xa] sm:$0xff]
        %v5773 = vld [vmem:[%s5182 + $0x1a] sm:$0xff]
        %v5774 = vld [vmem:[%s5182 + $0x22] sm:$0xff]
        %v5775 = vld [vmem:[%s5182 + $0x32] sm:$0xff]
        %v5776 = vld [vmem:[%s5182 + $0x3a] sm:$0xff]
        %v5777 = vld [vmem:[%s5182 + $0x4a] sm:$0xff]
        %v5778 = vld [vmem:[%s5182 + $0x52] sm:$0xff]
        %v5779 = vld [vmem:[%s5182 + $0x62] sm:$0xff]
        %v5780 = vld [vmem:[%s5182 + $0x6a] sm:$0xff]
        %v5781 = vld [vmem:[%s5182 + $0x7a] sm:$0xff]
        %v5782 = vld [vmem:[%s5182 + $0x82] sm:$0xff]
        %v5783 = vld [vmem:[%s5182 + $0x92] sm:$0xff]
        %v5784 = vld [vmem:[%s5182 + $0x9a] sm:$0xff]
        %v5785 = vld [vmem:[%s5182 + $0xaa] sm:$0xff]
        %v5786 = vld [vmem:[%s5182 + $0xb2] sm:$0xff]
        %v5787 = vld [vmem:[%s5182 + $0xc2] sm:$0xff]
        %v5788 = vld [vmem:[%s5182 + $0xca] sm:$0xff]
        %v5789 = vld [vmem:[%s5182 + $0xda] sm:$0xff]
        %v5790 = vld [vmem:[%s5182 + $0xe2] sm:$0xff]
        %v5791 = vld [vmem:[%s5182 + $0xf2] sm:$0xff]
        %v5792 = vld [vmem:[%s5182 + $0xfa] sm:$0xff]
        %v5793 = vld [vmem:[%s5182 + $0x10a] sm:$0xff]
        %v5794 = vld [vmem:[%s5182 + $0x112] sm:$0xff]
        %v5795 = vld [vmem:[%s5182 + $0x122] sm:$0xff]
        %v5796 = vld [vmem:[%s5182 + $0x12a] sm:$0xff]
        %v5797 = vld [vmem:[%s5182 + $0x13a] sm:$0xff]
        %v5798 = vld [vmem:[%s5182 + $0x142] sm:$0xff]
        %v5799 = vld [vmem:[%s5182 + $0x152] sm:$0xff]
        %v5800 = vld [vmem:[%s5182 + $0x15a] sm:$0xff]
        %v5801 = vld [vmem:[%s5182 + $0x16a] sm:$0xff]
        %v5802 = vld [vmem:[%s5182 + $0x172] sm:$0xff]
        %v5803 = vpack.c.bf16 %v5772, %v5771
        %v5804 = vpack.c.bf16 %v5774, %v5773
        %v5805 = vpack.c.bf16 %v5776, %v5775
        %v5806 = vpack.c.bf16 %v5778, %v5777
        %v5807 = vpack.c.bf16 %v5780, %v5779
        %v5808 = vpack.c.bf16 %v5782, %v5781
        %v5809 = vpack.c.bf16 %v5784, %v5783
        %v5810 = vpack.c.bf16 %v5786, %v5785
        %v5811 = vpack.c.bf16 %v5788, %v5787
        %v5812 = vpack.c.bf16 %v5790, %v5789
        %v5813 = vpack.c.bf16 %v5792, %v5791
        %v5814 = vpack.c.bf16 %v5794, %v5793
        %v5815 = vpack.c.bf16 %v5796, %v5795
        %v5816 = vpack.c.bf16 %v5798, %v5797
        %v5817 = vpack.c.bf16 %v5800, %v5799
        %v5818 = vpack.c.bf16 %v5802, %v5801
        %s5819 = scalar_lea.vmem %s3, 68
        %v5820 = vld [vmem:[%s5819] sm:$0xf]
        %v5822 = vsel %vm580, %v5803, 0
        %v5825 = vsel %vm580, %v5804, 0
        %v5828 = vsel %vm580, %v5805, 0
        %v5831 = vsel %vm580, %v5806, 0
        %v5834 = vsel %vm580, %v5807, 0
        %v5837 = vsel %vm580, %v5808, 0
        %v5840 = vsel %vm580, %v5809, 0
        %v5843 = vsel %vm580, %v5810, 0
        %v5846 = vsel %vm580, %v5811, 0
        %v5849 = vsel %vm580, %v5812, 0
        %v5852 = vsel %vm580, %v5813, 0
        %v5855 = vsel %vm580, %v5814, 0
        %v5858 = vsel %vm580, %v5815, 0
        %v5861 = vsel %vm580, %v5816, 0
        %v5864 = vsel %vm580, %v5817, 0
        %v5867 = vsel %vm580, %v5818, 0
        %v5870 = vsel %vm982, %v5820, 0
        %5872 = vmatprep.subr.bf16.mxu0 0
        %5873 = vmatpush1.bf16.msra.mxu0 0
        %5874 = vmatprep.subr.bf16.mxu0 0
        %5875 = vmatpush1.bf16.msra.mxu0 0
        %5876 = vmatprep.subr.bf16.mxu0 0
        %5877 = vmatpush1.bf16.msra.mxu0 0
        %5878 = vmatprep.subr.bf16.mxu0 0
        %5879 = vmatpush1.bf16.msra.mxu0 0
        %5880 = vmatprep.subr.bf16.mxu0 0
        %5881 = vmatpush1.bf16.msra.mxu0 0
        %5882 = vmatprep.subr.bf16.mxu0 0
        %5883 = vmatpush1.bf16.msra.mxu0 0
        %5884 = vmatprep.subr.bf16.mxu0 0
        %5885 = vmatpush1.bf16.msra.mxu0 0
        %5886 = vmatprep.subr.bf16.mxu0 0
        %5887 = vmatpush1.bf16.msra.mxu0 %v5870
        %5888 = vmatprep.subr.bf16.mxu0 0
        %5889 = vmatpush2.bf16.msra.mxu0 0
        %5890 = vmatprep.subr.bf16.mxu0 0
        %5891 = vmatpush2.bf16.msra.mxu0 0
        %5892 = vmatprep.subr.bf16.mxu0 0
        %5893 = vmatpush2.bf16.msra.mxu0 0
        %5894 = vmatprep.subr.bf16.mxu0 0
        %5895 = vmatpush2.bf16.msra.mxu0 0
        %5896 = vmatprep.subr.bf16.mxu0 0
        %5897 = vmatpush2.bf16.msra.mxu0 0
        %5898 = vmatprep.subr.bf16.mxu0 0
        %5899 = vmatpush2.bf16.msra.mxu0 0
        %5900 = vmatprep.subr.bf16.mxu0 0
        %5901 = vmatpush2.bf16.msra.mxu0 0
        %5902 = vmatprep.subr.bf16.mxu0 0
        %5903 = vmatpush2.bf16.msra.mxu0 0
        %5904 = vmatprep.mubr.bf16.mxu0 0
        %5905 = vmatmul.mubr.bf16.gmra.mxu0 %v5822
        %v5906 = vpop.f32.mrf.mxu0
        %v5907 = vadd.f32 0.0, %v5906
        %v5908 = vpop.f32.mrf.mxu0
        %v5909 = vpop.f32.mrf.mxu0
        %v5910 = vadd.f32 0.0, %v5909
        %v5911 = vpop.f32.mrf.mxu0
        %5912 = vmatprep.mubr.bf16.mxu0 0
        %5913 = vmatmul.mubr.bf16.gmra.mxu0 %v5825
        %v5914 = vpop.f32.mrf.mxu0
        %v5915 = vadd.f32 0.0, %v5914
        %v5916 = vpop.f32.mrf.mxu0
        %v5917 = vpop.f32.mrf.mxu0
        %v5918 = vadd.f32 0.0, %v5917
        %v5919 = vpop.f32.mrf.mxu0
        %5920 = vmatprep.mubr.bf16.mxu0 0
        %5921 = vmatmul.mubr.bf16.gmra.mxu0 %v5828
        %v5922 = vpop.f32.mrf.mxu0
        %v5923 = vadd.f32 0.0, %v5922
        %v5924 = vpop.f32.mrf.mxu0
        %v5925 = vpop.f32.mrf.mxu0
        %v5926 = vadd.f32 0.0, %v5925
        %v5927 = vpop.f32.mrf.mxu0
        %5928 = vmatprep.mubr.bf16.mxu0 0
        %5929 = vmatmul.mubr.bf16.gmra.mxu0 %v5831
        %v5930 = vpop.f32.mrf.mxu0
        %v5931 = vadd.f32 0.0, %v5930
        %v5932 = vpop.f32.mrf.mxu0
        %v5933 = vpop.f32.mrf.mxu0
        %v5934 = vadd.f32 0.0, %v5933
        %v5935 = vpop.f32.mrf.mxu0
        %5936 = vmatprep.mubr.bf16.mxu0 0
        %5937 = vmatmul.mubr.bf16.gmra.mxu0 %v5834
        %v5938 = vpop.f32.mrf.mxu0
        %v5939 = vadd.f32 0.0, %v5938
        %v5940 = vpop.f32.mrf.mxu0
        %v5941 = vpop.f32.mrf.mxu0
        %v5942 = vadd.f32 0.0, %v5941
        %v5943 = vpop.f32.mrf.mxu0
        %5944 = vmatprep.mubr.bf16.mxu0 0
        %5945 = vmatmul.mubr.bf16.gmra.mxu0 %v5837
        %v5946 = vpop.f32.mrf.mxu0
        %v5947 = vadd.f32 0.0, %v5946
        %v5948 = vpop.f32.mrf.mxu0
        %v5949 = vpop.f32.mrf.mxu0
        %v5950 = vadd.f32 0.0, %v5949
        %v5951 = vpop.f32.mrf.mxu0
        %5952 = vmatprep.mubr.bf16.mxu0 0
        %5953 = vmatmul.mubr.bf16.gmra.mxu0 %v5840
        %v5954 = vpop.f32.mrf.mxu0
        %v5955 = vadd.f32 0.0, %v5954
        %v5956 = vpop.f32.mrf.mxu0
        %v5957 = vpop.f32.mrf.mxu0
        %v5958 = vadd.f32 0.0, %v5957
        %v5959 = vpop.f32.mrf.mxu0
        %5960 = vmatprep.mubr.bf16.mxu0 0
        %5961 = vmatmul.mubr.bf16.gmra.mxu0 %v5843
        %v5962 = vpop.f32.mrf.mxu0
        %v5963 = vadd.f32 0.0, %v5962
        %v5964 = vpop.f32.mrf.mxu0
        %v5965 = vpop.f32.mrf.mxu0
        %v5966 = vadd.f32 0.0, %v5965
        %v5967 = vpop.f32.mrf.mxu0
        %5968 = vmatprep.mubr.bf16.mxu0 0
        %5969 = vmatmul.mubr.bf16.gmra.mxu0 %v5846
        %v5970 = vpop.f32.mrf.mxu0
        %v5971 = vadd.f32 0.0, %v5970
        %v5972 = vpop.f32.mrf.mxu0
        %v5973 = vpop.f32.mrf.mxu0
        %v5974 = vadd.f32 0.0, %v5973
        %v5975 = vpop.f32.mrf.mxu0
        %5976 = vmatprep.mubr.bf16.mxu0 0
        %5977 = vmatmul.mubr.bf16.gmra.mxu0 %v5849
        %v5978 = vpop.f32.mrf.mxu0
        %v5979 = vadd.f32 0.0, %v5978
        %v5980 = vpop.f32.mrf.mxu0
        %v5981 = vpop.f32.mrf.mxu0
        %v5982 = vadd.f32 0.0, %v5981
        %v5983 = vpop.f32.mrf.mxu0
        %5984 = vmatprep.mubr.bf16.mxu0 0
        %5985 = vmatmul.mubr.bf16.gmra.mxu0 %v5852
        %v5986 = vpop.f32.mrf.mxu0
        %v5987 = vadd.f32 0.0, %v5986
        %v5988 = vpop.f32.mrf.mxu0
        %v5989 = vpop.f32.mrf.mxu0
        %v5990 = vadd.f32 0.0, %v5989
        %v5991 = vpop.f32.mrf.mxu0
        %5992 = vmatprep.mubr.bf16.mxu0 0
        %5993 = vmatmul.mubr.bf16.gmra.mxu0 %v5855
        %v5994 = vpop.f32.mrf.mxu0
        %v5995 = vadd.f32 0.0, %v5994
        %v5996 = vpop.f32.mrf.mxu0
        %v5997 = vpop.f32.mrf.mxu0
        %v5998 = vadd.f32 0.0, %v5997
        %v5999 = vpop.f32.mrf.mxu0
        %6000 = vmatprep.mubr.bf16.mxu0 0
        %6001 = vmatmul.mubr.bf16.gmra.mxu0 %v5858
        %v6002 = vpop.f32.mrf.mxu0
        %v6003 = vadd.f32 0.0, %v6002
        %v6004 = vpop.f32.mrf.mxu0
        %v6005 = vpop.f32.mrf.mxu0
        %v6006 = vadd.f32 0.0, %v6005
        %v6007 = vpop.f32.mrf.mxu0
        %6008 = vmatprep.mubr.bf16.mxu0 0
        %6009 = vmatmul.mubr.bf16.gmra.mxu0 %v5861
        %v6010 = vpop.f32.mrf.mxu0
        %v6011 = vadd.f32 0.0, %v6010
        %v6012 = vpop.f32.mrf.mxu0
        %v6013 = vpop.f32.mrf.mxu0
        %v6014 = vadd.f32 0.0, %v6013
        %v6015 = vpop.f32.mrf.mxu0
        %6016 = vmatprep.mubr.bf16.mxu0 0
        %6017 = vmatmul.mubr.bf16.gmra.mxu0 %v5864
        %v6018 = vpop.f32.mrf.mxu0
        %v6019 = vadd.f32 0.0, %v6018
        %v6020 = vpop.f32.mrf.mxu0
        %v6021 = vpop.f32.mrf.mxu0
        %v6022 = vadd.f32 0.0, %v6021
        %v6023 = vpop.f32.mrf.mxu0
        %6024 = vmatprep.mubr.bf16.mxu0 0
        %6025 = vmatmul.mubr.bf16.gmra.mxu0 %v5867
        %v6026 = vpop.f32.mrf.mxu0
        %v6027 = vadd.f32 0.0, %v6026
        %v6028 = vpop.f32.mrf.mxu0
        %v6029 = vpop.f32.mrf.mxu0
        %v6030 = vadd.f32 0.0, %v6029
        %v6031 = vpop.f32.mrf.mxu0
        %6032 = vdwg.mxu0
        %v6033 = vadd.f32 %v5739, %v5907
        %v6034 = vadd.f32 %v5740, %v5910
        %v6035 = vadd.f32 %v5741, %v5915
        %v6036 = vadd.f32 %v5742, %v5918
        %v6037 = vadd.f32 %v5743, %v5923
        %v6038 = vadd.f32 %v5744, %v5926
        %v6039 = vadd.f32 %v5745, %v5931
        %v6040 = vadd.f32 %v5746, %v5934
        %v6041 = vadd.f32 %v5747, %v5939
        %v6042 = vadd.f32 %v5748, %v5942
        %v6043 = vadd.f32 %v5749, %v5947
        %v6044 = vadd.f32 %v5750, %v5950
        %v6045 = vadd.f32 %v5751, %v5955
        %v6046 = vadd.f32 %v5752, %v5958
        %v6047 = vadd.f32 %v5753, %v5963
        %v6048 = vadd.f32 %v5754, %v5966
        %v6049 = vadd.f32 %v5755, %v5971
        %v6050 = vadd.f32 %v5756, %v5974
        %v6051 = vadd.f32 %v5757, %v5979
        %v6052 = vadd.f32 %v5758, %v5982
        %v6053 = vadd.f32 %v5759, %v5987
        %v6054 = vadd.f32 %v5760, %v5990
        %v6055 = vadd.f32 %v5761, %v5995
        %v6056 = vadd.f32 %v5762, %v5998
        %v6057 = vadd.f32 %v5763, %v6003
        %v6058 = vadd.f32 %v5764, %v6006
        %v6059 = vadd.f32 %v5765, %v6011
        %v6060 = vadd.f32 %v5766, %v6014
        %v6061 = vadd.f32 %v5767, %v6019
        %v6062 = vadd.f32 %v5768, %v6022
        %v6063 = vadd.f32 %v5769, %v6027
        %v6064 = vadd.f32 %v5770, %v6030
        %v6065 = vld [vmem:[%s5182 + $0x3] sm:$0xff]
        %v6066 = vld [vmem:[%s5182 + $0xb] sm:$0xff]
        %v6067 = vld [vmem:[%s5182 + $0x1b] sm:$0xff]
        %v6068 = vld [vmem:[%s5182 + $0x23] sm:$0xff]
        %v6069 = vld [vmem:[%s5182 + $0x33] sm:$0xff]
        %v6070 = vld [vmem:[%s5182 + $0x3b] sm:$0xff]
        %v6071 = vld [vmem:[%s5182 + $0x4b] sm:$0xff]
        %v6072 = vld [vmem:[%s5182 + $0x53] sm:$0xff]
        %v6073 = vld [vmem:[%s5182 + $0x63] sm:$0xff]
        %v6074 = vld [vmem:[%s5182 + $0x6b] sm:$0xff]
        %v6075 = vld [vmem:[%s5182 + $0x7b] sm:$0xff]
        %v6076 = vld [vmem:[%s5182 + $0x83] sm:$0xff]
        %v6077 = vld [vmem:[%s5182 + $0x93] sm:$0xff]
        %v6078 = vld [vmem:[%s5182 + $0x9b] sm:$0xff]
        %v6079 = vld [vmem:[%s5182 + $0xab] sm:$0xff]
        %v6080 = vld [vmem:[%s5182 + $0xb3] sm:$0xff]
        %v6081 = vld [vmem:[%s5182 + $0xc3] sm:$0xff]
        %v6082 = vld [vmem:[%s5182 + $0xcb] sm:$0xff]
        %v6083 = vld [vmem:[%s5182 + $0xdb] sm:$0xff]
        %v6084 = vld [vmem:[%s5182 + $0xe3] sm:$0xff]
        %v6085 = vld [vmem:[%s5182 + $0xf3] sm:$0xff]
        %v6086 = vld [vmem:[%s5182 + $0xfb] sm:$0xff]
        %v6087 = vld [vmem:[%s5182 + $0x10b] sm:$0xff]
        %v6088 = vld [vmem:[%s5182 + $0x113] sm:$0xff]
        %v6089 = vld [vmem:[%s5182 + $0x123] sm:$0xff]
        %v6090 = vld [vmem:[%s5182 + $0x12b] sm:$0xff]
        %v6091 = vld [vmem:[%s5182 + $0x13b] sm:$0xff]
        %v6092 = vld [vmem:[%s5182 + $0x143] sm:$0xff]
        %v6093 = vld [vmem:[%s5182 + $0x153] sm:$0xff]
        %v6094 = vld [vmem:[%s5182 + $0x15b] sm:$0xff]
        %v6095 = vld [vmem:[%s5182 + $0x16b] sm:$0xff]
        %v6096 = vld [vmem:[%s5182 + $0x173] sm:$0xff]
        %v6097 = vpack.c.bf16 %v6066, %v6065
        %v6098 = vpack.c.bf16 %v6068, %v6067
        %v6099 = vpack.c.bf16 %v6070, %v6069
        %v6100 = vpack.c.bf16 %v6072, %v6071
        %v6101 = vpack.c.bf16 %v6074, %v6073
        %v6102 = vpack.c.bf16 %v6076, %v6075
        %v6103 = vpack.c.bf16 %v6078, %v6077
        %v6104 = vpack.c.bf16 %v6080, %v6079
        %v6105 = vpack.c.bf16 %v6082, %v6081
        %v6106 = vpack.c.bf16 %v6084, %v6083
        %v6107 = vpack.c.bf16 %v6086, %v6085
        %v6108 = vpack.c.bf16 %v6088, %v6087
        %v6109 = vpack.c.bf16 %v6090, %v6089
        %v6110 = vpack.c.bf16 %v6092, %v6091
        %v6111 = vpack.c.bf16 %v6094, %v6093
        %v6112 = vpack.c.bf16 %v6096, %v6095
        %s6113 = scalar_lea.vmem %s3, 72
        %v6114 = vld [vmem:[%s6113] sm:$0xf]
        %v6116 = vsel %vm580, %v6097, 0
        %v6119 = vsel %vm580, %v6098, 0
        %v6122 = vsel %vm580, %v6099, 0
        %v6125 = vsel %vm580, %v6100, 0
        %v6128 = vsel %vm580, %v6101, 0
        %v6131 = vsel %vm580, %v6102, 0
        %v6134 = vsel %vm580, %v6103, 0
        %v6137 = vsel %vm580, %v6104, 0
        %v6140 = vsel %vm580, %v6105, 0
        %v6143 = vsel %vm580, %v6106, 0
        %v6146 = vsel %vm580, %v6107, 0
        %v6149 = vsel %vm580, %v6108, 0
        %v6152 = vsel %vm580, %v6109, 0
        %v6155 = vsel %vm580, %v6110, 0
        %v6158 = vsel %vm580, %v6111, 0
        %v6161 = vsel %vm580, %v6112, 0
        %v6164 = vsel %vm982, %v6114, 0
        %6166 = vmatprep.subr.bf16.mxu0 0
        %6167 = vmatpush1.bf16.msra.mxu0 0
        %6168 = vmatprep.subr.bf16.mxu0 0
        %6169 = vmatpush1.bf16.msra.mxu0 0
        %6170 = vmatprep.subr.bf16.mxu0 0
        %6171 = vmatpush1.bf16.msra.mxu0 0
        %6172 = vmatprep.subr.bf16.mxu0 0
        %6173 = vmatpush1.bf16.msra.mxu0 0
        %6174 = vmatprep.subr.bf16.mxu0 0
        %6175 = vmatpush1.bf16.msra.mxu0 0
        %6176 = vmatprep.subr.bf16.mxu0 0
        %6177 = vmatpush1.bf16.msra.mxu0 0
        %6178 = vmatprep.subr.bf16.mxu0 0
        %6179 = vmatpush1.bf16.msra.mxu0 0
        %6180 = vmatprep.subr.bf16.mxu0 0
        %6181 = vmatpush1.bf16.msra.mxu0 %v6164
        %6182 = vmatprep.subr.bf16.mxu0 0
        %6183 = vmatpush2.bf16.msra.mxu0 0
        %6184 = vmatprep.subr.bf16.mxu0 0
        %6185 = vmatpush2.bf16.msra.mxu0 0
        %6186 = vmatprep.subr.bf16.mxu0 0
        %6187 = vmatpush2.bf16.msra.mxu0 0
        %6188 = vmatprep.subr.bf16.mxu0 0
        %6189 = vmatpush2.bf16.msra.mxu0 0
        %6190 = vmatprep.subr.bf16.mxu0 0
        %6191 = vmatpush2.bf16.msra.mxu0 0
        %6192 = vmatprep.subr.bf16.mxu0 0
        %6193 = vmatpush2.bf16.msra.mxu0 0
        %6194 = vmatprep.subr.bf16.mxu0 0
        %6195 = vmatpush2.bf16.msra.mxu0 0
        %6196 = vmatprep.subr.bf16.mxu0 0
        %6197 = vmatpush2.bf16.msra.mxu0 0
        %6198 = vmatprep.mubr.bf16.mxu0 0
        %6199 = vmatmul.mubr.bf16.gmra.mxu0 %v6116
        %v6200 = vpop.f32.mrf.mxu0
        %v6201 = vadd.f32 0.0, %v6200
        %v6202 = vpop.f32.mrf.mxu0
        %v6203 = vpop.f32.mrf.mxu0
        %v6204 = vadd.f32 0.0, %v6203
        %v6205 = vpop.f32.mrf.mxu0
        %6206 = vmatprep.mubr.bf16.mxu0 0
        %6207 = vmatmul.mubr.bf16.gmra.mxu0 %v6119
        %v6208 = vpop.f32.mrf.mxu0
        %v6209 = vadd.f32 0.0, %v6208
        %v6210 = vpop.f32.mrf.mxu0
        %v6211 = vpop.f32.mrf.mxu0
        %v6212 = vadd.f32 0.0, %v6211
        %v6213 = vpop.f32.mrf.mxu0
        %6214 = vmatprep.mubr.bf16.mxu0 0
        %6215 = vmatmul.mubr.bf16.gmra.mxu0 %v6122
        %v6216 = vpop.f32.mrf.mxu0
        %v6217 = vadd.f32 0.0, %v6216
        %v6218 = vpop.f32.mrf.mxu0
        %v6219 = vpop.f32.mrf.mxu0
        %v6220 = vadd.f32 0.0, %v6219
        %v6221 = vpop.f32.mrf.mxu0
        %6222 = vmatprep.mubr.bf16.mxu0 0
        %6223 = vmatmul.mubr.bf16.gmra.mxu0 %v6125
        %v6224 = vpop.f32.mrf.mxu0
        %v6225 = vadd.f32 0.0, %v6224
        %v6226 = vpop.f32.mrf.mxu0
        %v6227 = vpop.f32.mrf.mxu0
        %v6228 = vadd.f32 0.0, %v6227
        %v6229 = vpop.f32.mrf.mxu0
        %6230 = vmatprep.mubr.bf16.mxu0 0
        %6231 = vmatmul.mubr.bf16.gmra.mxu0 %v6128
        %v6232 = vpop.f32.mrf.mxu0
        %v6233 = vadd.f32 0.0, %v6232
        %v6234 = vpop.f32.mrf.mxu0
        %v6235 = vpop.f32.mrf.mxu0
        %v6236 = vadd.f32 0.0, %v6235
        %v6237 = vpop.f32.mrf.mxu0
        %6238 = vmatprep.mubr.bf16.mxu0 0
        %6239 = vmatmul.mubr.bf16.gmra.mxu0 %v6131
        %v6240 = vpop.f32.mrf.mxu0
        %v6241 = vadd.f32 0.0, %v6240
        %v6242 = vpop.f32.mrf.mxu0
        %v6243 = vpop.f32.mrf.mxu0
        %v6244 = vadd.f32 0.0, %v6243
        %v6245 = vpop.f32.mrf.mxu0
        %6246 = vmatprep.mubr.bf16.mxu0 0
        %6247 = vmatmul.mubr.bf16.gmra.mxu0 %v6134
        %v6248 = vpop.f32.mrf.mxu0
        %v6249 = vadd.f32 0.0, %v6248
        %v6250 = vpop.f32.mrf.mxu0
        %v6251 = vpop.f32.mrf.mxu0
        %v6252 = vadd.f32 0.0, %v6251
        %v6253 = vpop.f32.mrf.mxu0
        %6254 = vmatprep.mubr.bf16.mxu0 0
        %6255 = vmatmul.mubr.bf16.gmra.mxu0 %v6137
        %v6256 = vpop.f32.mrf.mxu0
        %v6257 = vadd.f32 0.0, %v6256
        %v6258 = vpop.f32.mrf.mxu0
        %v6259 = vpop.f32.mrf.mxu0
        %v6260 = vadd.f32 0.0, %v6259
        %v6261 = vpop.f32.mrf.mxu0
        %6262 = vmatprep.mubr.bf16.mxu0 0
        %6263 = vmatmul.mubr.bf16.gmra.mxu0 %v6140
        %v6264 = vpop.f32.mrf.mxu0
        %v6265 = vadd.f32 0.0, %v6264
        %v6266 = vpop.f32.mrf.mxu0
        %v6267 = vpop.f32.mrf.mxu0
        %v6268 = vadd.f32 0.0, %v6267
        %v6269 = vpop.f32.mrf.mxu0
        %6270 = vmatprep.mubr.bf16.mxu0 0
        %6271 = vmatmul.mubr.bf16.gmra.mxu0 %v6143
        %v6272 = vpop.f32.mrf.mxu0
        %v6273 = vadd.f32 0.0, %v6272
        %v6274 = vpop.f32.mrf.mxu0
        %v6275 = vpop.f32.mrf.mxu0
        %v6276 = vadd.f32 0.0, %v6275
        %v6277 = vpop.f32.mrf.mxu0
        %6278 = vmatprep.mubr.bf16.mxu0 0
        %6279 = vmatmul.mubr.bf16.gmra.mxu0 %v6146
        %v6280 = vpop.f32.mrf.mxu0
        %v6281 = vadd.f32 0.0, %v6280
        %v6282 = vpop.f32.mrf.mxu0
        %v6283 = vpop.f32.mrf.mxu0
        %v6284 = vadd.f32 0.0, %v6283
        %v6285 = vpop.f32.mrf.mxu0
        %6286 = vmatprep.mubr.bf16.mxu0 0
        %6287 = vmatmul.mubr.bf16.gmra.mxu0 %v6149
        %v6288 = vpop.f32.mrf.mxu0
        %v6289 = vadd.f32 0.0, %v6288
        %v6290 = vpop.f32.mrf.mxu0
        %v6291 = vpop.f32.mrf.mxu0
        %v6292 = vadd.f32 0.0, %v6291
        %v6293 = vpop.f32.mrf.mxu0
        %6294 = vmatprep.mubr.bf16.mxu0 0
        %6295 = vmatmul.mubr.bf16.gmra.mxu0 %v6152
        %v6296 = vpop.f32.mrf.mxu0
        %v6297 = vadd.f32 0.0, %v6296
        %v6298 = vpop.f32.mrf.mxu0
        %v6299 = vpop.f32.mrf.mxu0
        %v6300 = vadd.f32 0.0, %v6299
        %v6301 = vpop.f32.mrf.mxu0
        %6302 = vmatprep.mubr.bf16.mxu0 0
        %6303 = vmatmul.mubr.bf16.gmra.mxu0 %v6155
        %v6304 = vpop.f32.mrf.mxu0
        %v6305 = vadd.f32 0.0, %v6304
        %v6306 = vpop.f32.mrf.mxu0
        %v6307 = vpop.f32.mrf.mxu0
        %v6308 = vadd.f32 0.0, %v6307
        %v6309 = vpop.f32.mrf.mxu0
        %6310 = vmatprep.mubr.bf16.mxu0 0
        %6311 = vmatmul.mubr.bf16.gmra.mxu0 %v6158
        %v6312 = vpop.f32.mrf.mxu0
        %v6313 = vadd.f32 0.0, %v6312
        %v6314 = vpop.f32.mrf.mxu0
        %v6315 = vpop.f32.mrf.mxu0
        %v6316 = vadd.f32 0.0, %v6315
        %v6317 = vpop.f32.mrf.mxu0
        %6318 = vmatprep.mubr.bf16.mxu0 0
        %6319 = vmatmul.mubr.bf16.gmra.mxu0 %v6161
        %v6320 = vpop.f32.mrf.mxu0
        %v6321 = vadd.f32 0.0, %v6320
        %v6322 = vpop.f32.mrf.mxu0
        %v6323 = vpop.f32.mrf.mxu0
        %v6324 = vadd.f32 0.0, %v6323
        %v6325 = vpop.f32.mrf.mxu0
        %6326 = vdwg.mxu0
        %v6327 = vadd.f32 %v6033, %v6201
        %v6328 = vadd.f32 %v6034, %v6204
        %v6329 = vadd.f32 %v6035, %v6209
        %v6330 = vadd.f32 %v6036, %v6212
        %v6331 = vadd.f32 %v6037, %v6217
        %v6332 = vadd.f32 %v6038, %v6220
        %v6333 = vadd.f32 %v6039, %v6225
        %v6334 = vadd.f32 %v6040, %v6228
        %v6335 = vadd.f32 %v6041, %v6233
        %v6336 = vadd.f32 %v6042, %v6236
        %v6337 = vadd.f32 %v6043, %v6241
        %v6338 = vadd.f32 %v6044, %v6244
        %v6339 = vadd.f32 %v6045, %v6249
        %v6340 = vadd.f32 %v6046, %v6252
        %v6341 = vadd.f32 %v6047, %v6257
        %v6342 = vadd.f32 %v6048, %v6260
        %v6343 = vadd.f32 %v6049, %v6265
        %v6344 = vadd.f32 %v6050, %v6268
        %v6345 = vadd.f32 %v6051, %v6273
        %v6346 = vadd.f32 %v6052, %v6276
        %v6347 = vadd.f32 %v6053, %v6281
        %v6348 = vadd.f32 %v6054, %v6284
        %v6349 = vadd.f32 %v6055, %v6289
        %v6350 = vadd.f32 %v6056, %v6292
        %v6351 = vadd.f32 %v6057, %v6297
        %v6352 = vadd.f32 %v6058, %v6300
        %v6353 = vadd.f32 %v6059, %v6305
        %v6354 = vadd.f32 %v6060, %v6308
        %v6355 = vadd.f32 %v6061, %v6313
        %v6356 = vadd.f32 %v6062, %v6316
        %v6357 = vadd.f32 %v6063, %v6321
        %v6358 = vadd.f32 %v6064, %v6324
        %v6359 = vld [vmem:[%s5182 + $0x4] sm:$0xff]
        %v6360 = vld [vmem:[%s5182 + $0xc] sm:$0xff]
        %v6361 = vld [vmem:[%s5182 + $0x1c] sm:$0xff]
        %v6362 = vld [vmem:[%s5182 + $0x24] sm:$0xff]
        %v6363 = vld [vmem:[%s5182 + $0x34] sm:$0xff]
        %v6364 = vld [vmem:[%s5182 + $0x3c] sm:$0xff]
        %v6365 = vld [vmem:[%s5182 + $0x4c] sm:$0xff]
        %v6366 = vld [vmem:[%s5182 + $0x54] sm:$0xff]
        %v6367 = vld [vmem:[%s5182 + $0x64] sm:$0xff]
        %v6368 = vld [vmem:[%s5182 + $0x6c] sm:$0xff]
        %v6369 = vld [vmem:[%s5182 + $0x7c] sm:$0xff]
        %v6370 = vld [vmem:[%s5182 + $0x84] sm:$0xff]
        %v6371 = vld [vmem:[%s5182 + $0x94] sm:$0xff]
        %v6372 = vld [vmem:[%s5182 + $0x9c] sm:$0xff]
        %v6373 = vld [vmem:[%s5182 + $0xac] sm:$0xff]
        %v6374 = vld [vmem:[%s5182 + $0xb4] sm:$0xff]
        %v6375 = vld [vmem:[%s5182 + $0xc4] sm:$0xff]
        %v6376 = vld [vmem:[%s5182 + $0xcc] sm:$0xff]
        %v6377 = vld [vmem:[%s5182 + $0xdc] sm:$0xff]
        %v6378 = vld [vmem:[%s5182 + $0xe4] sm:$0xff]
        %v6379 = vld [vmem:[%s5182 + $0xf4] sm:$0xff]
        %v6380 = vld [vmem:[%s5182 + $0xfc] sm:$0xff]
        %v6381 = vld [vmem:[%s5182 + $0x10c] sm:$0xff]
        %v6382 = vld [vmem:[%s5182 + $0x114] sm:$0xff]
        %v6383 = vld [vmem:[%s5182 + $0x124] sm:$0xff]
        %v6384 = vld [vmem:[%s5182 + $0x12c] sm:$0xff]
        %v6385 = vld [vmem:[%s5182 + $0x13c] sm:$0xff]
        %v6386 = vld [vmem:[%s5182 + $0x144] sm:$0xff]
        %v6387 = vld [vmem:[%s5182 + $0x154] sm:$0xff]
        %v6388 = vld [vmem:[%s5182 + $0x15c] sm:$0xff]
        %v6389 = vld [vmem:[%s5182 + $0x16c] sm:$0xff]
        %v6390 = vld [vmem:[%s5182 + $0x174] sm:$0xff]
        %v6391 = vpack.c.bf16 %v6360, %v6359
        %v6392 = vpack.c.bf16 %v6362, %v6361
        %v6393 = vpack.c.bf16 %v6364, %v6363
        %v6394 = vpack.c.bf16 %v6366, %v6365
        %v6395 = vpack.c.bf16 %v6368, %v6367
        %v6396 = vpack.c.bf16 %v6370, %v6369
        %v6397 = vpack.c.bf16 %v6372, %v6371
        %v6398 = vpack.c.bf16 %v6374, %v6373
        %v6399 = vpack.c.bf16 %v6376, %v6375
        %v6400 = vpack.c.bf16 %v6378, %v6377
        %v6401 = vpack.c.bf16 %v6380, %v6379
        %v6402 = vpack.c.bf16 %v6382, %v6381
        %v6403 = vpack.c.bf16 %v6384, %v6383
        %v6404 = vpack.c.bf16 %v6386, %v6385
        %v6405 = vpack.c.bf16 %v6388, %v6387
        %v6406 = vpack.c.bf16 %v6390, %v6389
        %s6407 = scalar_lea.vmem %s3, 76
        %v6408 = vld [vmem:[%s6407] sm:$0xf]
        %v6410 = vsel %vm580, %v6391, 0
        %v6413 = vsel %vm580, %v6392, 0
        %v6416 = vsel %vm580, %v6393, 0
        %v6419 = vsel %vm580, %v6394, 0
        %v6422 = vsel %vm580, %v6395, 0
        %v6425 = vsel %vm580, %v6396, 0
        %v6428 = vsel %vm580, %v6397, 0
        %v6431 = vsel %vm580, %v6398, 0
        %v6434 = vsel %vm580, %v6399, 0
        %v6437 = vsel %vm580, %v6400, 0
        %v6440 = vsel %vm580, %v6401, 0
        %v6443 = vsel %vm580, %v6402, 0
        %v6446 = vsel %vm580, %v6403, 0
        %v6449 = vsel %vm580, %v6404, 0
        %v6452 = vsel %vm580, %v6405, 0
        %v6455 = vsel %vm580, %v6406, 0
        %v6458 = vsel %vm982, %v6408, 0
        %6460 = vmatprep.subr.bf16.mxu0 0
        %6461 = vmatpush1.bf16.msra.mxu0 0
        %6462 = vmatprep.subr.bf16.mxu0 0
        %6463 = vmatpush1.bf16.msra.mxu0 0
        %6464 = vmatprep.subr.bf16.mxu0 0
        %6465 = vmatpush1.bf16.msra.mxu0 0
        %6466 = vmatprep.subr.bf16.mxu0 0
        %6467 = vmatpush1.bf16.msra.mxu0 0
        %6468 = vmatprep.subr.bf16.mxu0 0
        %6469 = vmatpush1.bf16.msra.mxu0 0
        %6470 = vmatprep.subr.bf16.mxu0 0
        %6471 = vmatpush1.bf16.msra.mxu0 0
        %6472 = vmatprep.subr.bf16.mxu0 0
        %6473 = vmatpush1.bf16.msra.mxu0 0
        %6474 = vmatprep.subr.bf16.mxu0 0
        %6475 = vmatpush1.bf16.msra.mxu0 %v6458
        %6476 = vmatprep.subr.bf16.mxu0 0
        %6477 = vmatpush2.bf16.msra.mxu0 0
        %6478 = vmatprep.subr.bf16.mxu0 0
        %6479 = vmatpush2.bf16.msra.mxu0 0
        %6480 = vmatprep.subr.bf16.mxu0 0
        %6481 = vmatpush2.bf16.msra.mxu0 0
        %6482 = vmatprep.subr.bf16.mxu0 0
        %6483 = vmatpush2.bf16.msra.mxu0 0
        %6484 = vmatprep.subr.bf16.mxu0 0
        %6485 = vmatpush2.bf16.msra.mxu0 0
        %6486 = vmatprep.subr.bf16.mxu0 0
        %6487 = vmatpush2.bf16.msra.mxu0 0
        %6488 = vmatprep.subr.bf16.mxu0 0
        %6489 = vmatpush2.bf16.msra.mxu0 0
        %6490 = vmatprep.subr.bf16.mxu0 0
        %6491 = vmatpush2.bf16.msra.mxu0 0
        %6492 = vmatprep.mubr.bf16.mxu0 0
        %6493 = vmatmul.mubr.bf16.gmra.mxu0 %v6410
        %v6494 = vpop.f32.mrf.mxu0
        %v6495 = vadd.f32 0.0, %v6494
        %v6496 = vpop.f32.mrf.mxu0
        %v6497 = vpop.f32.mrf.mxu0
        %v6498 = vadd.f32 0.0, %v6497
        %v6499 = vpop.f32.mrf.mxu0
        %6500 = vmatprep.mubr.bf16.mxu0 0
        %6501 = vmatmul.mubr.bf16.gmra.mxu0 %v6413
        %v6502 = vpop.f32.mrf.mxu0
        %v6503 = vadd.f32 0.0, %v6502
        %v6504 = vpop.f32.mrf.mxu0
        %v6505 = vpop.f32.mrf.mxu0
        %v6506 = vadd.f32 0.0, %v6505
        %v6507 = vpop.f32.mrf.mxu0
        %6508 = vmatprep.mubr.bf16.mxu0 0
        %6509 = vmatmul.mubr.bf16.gmra.mxu0 %v6416
        %v6510 = vpop.f32.mrf.mxu0
        %v6511 = vadd.f32 0.0, %v6510
        %v6512 = vpop.f32.mrf.mxu0
        %v6513 = vpop.f32.mrf.mxu0
        %v6514 = vadd.f32 0.0, %v6513
        %v6515 = vpop.f32.mrf.mxu0
        %6516 = vmatprep.mubr.bf16.mxu0 0
        %6517 = vmatmul.mubr.bf16.gmra.mxu0 %v6419
        %v6518 = vpop.f32.mrf.mxu0
        %v6519 = vadd.f32 0.0, %v6518
        %v6520 = vpop.f32.mrf.mxu0
        %v6521 = vpop.f32.mrf.mxu0
        %v6522 = vadd.f32 0.0, %v6521
        %v6523 = vpop.f32.mrf.mxu0
        %6524 = vmatprep.mubr.bf16.mxu0 0
        %6525 = vmatmul.mubr.bf16.gmra.mxu0 %v6422
        %v6526 = vpop.f32.mrf.mxu0
        %v6527 = vadd.f32 0.0, %v6526
        %v6528 = vpop.f32.mrf.mxu0
        %v6529 = vpop.f32.mrf.mxu0
        %v6530 = vadd.f32 0.0, %v6529
        %v6531 = vpop.f32.mrf.mxu0
        %6532 = vmatprep.mubr.bf16.mxu0 0
        %6533 = vmatmul.mubr.bf16.gmra.mxu0 %v6425
        %v6534 = vpop.f32.mrf.mxu0
        %v6535 = vadd.f32 0.0, %v6534
        %v6536 = vpop.f32.mrf.mxu0
        %v6537 = vpop.f32.mrf.mxu0
        %v6538 = vadd.f32 0.0, %v6537
        %v6539 = vpop.f32.mrf.mxu0
        %6540 = vmatprep.mubr.bf16.mxu0 0
        %6541 = vmatmul.mubr.bf16.gmra.mxu0 %v6428
        %v6542 = vpop.f32.mrf.mxu0
        %v6543 = vadd.f32 0.0, %v6542
        %v6544 = vpop.f32.mrf.mxu0
        %v6545 = vpop.f32.mrf.mxu0
        %v6546 = vadd.f32 0.0, %v6545
        %v6547 = vpop.f32.mrf.mxu0
        %6548 = vmatprep.mubr.bf16.mxu0 0
        %6549 = vmatmul.mubr.bf16.gmra.mxu0 %v6431
        %v6550 = vpop.f32.mrf.mxu0
        %v6551 = vadd.f32 0.0, %v6550
        %v6552 = vpop.f32.mrf.mxu0
        %v6553 = vpop.f32.mrf.mxu0
        %v6554 = vadd.f32 0.0, %v6553
        %v6555 = vpop.f32.mrf.mxu0
        %6556 = vmatprep.mubr.bf16.mxu0 0
        %6557 = vmatmul.mubr.bf16.gmra.mxu0 %v6434
        %v6558 = vpop.f32.mrf.mxu0
        %v6559 = vadd.f32 0.0, %v6558
        %v6560 = vpop.f32.mrf.mxu0
        %v6561 = vpop.f32.mrf.mxu0
        %v6562 = vadd.f32 0.0, %v6561
        %v6563 = vpop.f32.mrf.mxu0
        %6564 = vmatprep.mubr.bf16.mxu0 0
        %6565 = vmatmul.mubr.bf16.gmra.mxu0 %v6437
        %v6566 = vpop.f32.mrf.mxu0
        %v6567 = vadd.f32 0.0, %v6566
        %v6568 = vpop.f32.mrf.mxu0
        %v6569 = vpop.f32.mrf.mxu0
        %v6570 = vadd.f32 0.0, %v6569
        %v6571 = vpop.f32.mrf.mxu0
        %6572 = vmatprep.mubr.bf16.mxu0 0
        %6573 = vmatmul.mubr.bf16.gmra.mxu0 %v6440
        %v6574 = vpop.f32.mrf.mxu0
        %v6575 = vadd.f32 0.0, %v6574
        %v6576 = vpop.f32.mrf.mxu0
        %v6577 = vpop.f32.mrf.mxu0
        %v6578 = vadd.f32 0.0, %v6577
        %v6579 = vpop.f32.mrf.mxu0
        %6580 = vmatprep.mubr.bf16.mxu0 0
        %6581 = vmatmul.mubr.bf16.gmra.mxu0 %v6443
        %v6582 = vpop.f32.mrf.mxu0
        %v6583 = vadd.f32 0.0, %v6582
        %v6584 = vpop.f32.mrf.mxu0
        %v6585 = vpop.f32.mrf.mxu0
        %v6586 = vadd.f32 0.0, %v6585
        %v6587 = vpop.f32.mrf.mxu0
        %6588 = vmatprep.mubr.bf16.mxu0 0
        %6589 = vmatmul.mubr.bf16.gmra.mxu0 %v6446
        %v6590 = vpop.f32.mrf.mxu0
        %v6591 = vadd.f32 0.0, %v6590
        %v6592 = vpop.f32.mrf.mxu0
        %v6593 = vpop.f32.mrf.mxu0
        %v6594 = vadd.f32 0.0, %v6593
        %v6595 = vpop.f32.mrf.mxu0
        %6596 = vmatprep.mubr.bf16.mxu0 0
        %6597 = vmatmul.mubr.bf16.gmra.mxu0 %v6449
        %v6598 = vpop.f32.mrf.mxu0
        %v6599 = vadd.f32 0.0, %v6598
        %v6600 = vpop.f32.mrf.mxu0
        %v6601 = vpop.f32.mrf.mxu0
        %v6602 = vadd.f32 0.0, %v6601
        %v6603 = vpop.f32.mrf.mxu0
        %6604 = vmatprep.mubr.bf16.mxu0 0
        %6605 = vmatmul.mubr.bf16.gmra.mxu0 %v6452
        %v6606 = vpop.f32.mrf.mxu0
        %v6607 = vadd.f32 0.0, %v6606
        %v6608 = vpop.f32.mrf.mxu0
        %v6609 = vpop.f32.mrf.mxu0
        %v6610 = vadd.f32 0.0, %v6609
        %v6611 = vpop.f32.mrf.mxu0
        %6612 = vmatprep.mubr.bf16.mxu0 0
        %6613 = vmatmul.mubr.bf16.gmra.mxu0 %v6455
        %v6614 = vpop.f32.mrf.mxu0
        %v6615 = vadd.f32 0.0, %v6614
        %v6616 = vpop.f32.mrf.mxu0
        %v6617 = vpop.f32.mrf.mxu0
        %v6618 = vadd.f32 0.0, %v6617
        %v6619 = vpop.f32.mrf.mxu0
        %6620 = vdwg.mxu0
        %v6621 = vadd.f32 %v6327, %v6495
        %v6622 = vadd.f32 %v6328, %v6498
        %v6623 = vadd.f32 %v6329, %v6503
        %v6624 = vadd.f32 %v6330, %v6506
        %v6625 = vadd.f32 %v6331, %v6511
        %v6626 = vadd.f32 %v6332, %v6514
        %v6627 = vadd.f32 %v6333, %v6519
        %v6628 = vadd.f32 %v6334, %v6522
        %v6629 = vadd.f32 %v6335, %v6527
        %v6630 = vadd.f32 %v6336, %v6530
        %v6631 = vadd.f32 %v6337, %v6535
        %v6632 = vadd.f32 %v6338, %v6538
        %v6633 = vadd.f32 %v6339, %v6543
        %v6634 = vadd.f32 %v6340, %v6546
        %v6635 = vadd.f32 %v6341, %v6551
        %v6636 = vadd.f32 %v6342, %v6554
        %v6637 = vadd.f32 %v6343, %v6559
        %v6638 = vadd.f32 %v6344, %v6562
        %v6639 = vadd.f32 %v6345, %v6567
        %v6640 = vadd.f32 %v6346, %v6570
        %v6641 = vadd.f32 %v6347, %v6575
        %v6642 = vadd.f32 %v6348, %v6578
        %v6643 = vadd.f32 %v6349, %v6583
        %v6644 = vadd.f32 %v6350, %v6586
        %v6645 = vadd.f32 %v6351, %v6591
        %v6646 = vadd.f32 %v6352, %v6594
        %v6647 = vadd.f32 %v6353, %v6599
        %v6648 = vadd.f32 %v6354, %v6602
        %v6649 = vadd.f32 %v6355, %v6607
        %v6650 = vadd.f32 %v6356, %v6610
        %v6651 = vadd.f32 %v6357, %v6615
        %v6652 = vadd.f32 %v6358, %v6618
        %s6653 = scalar_lea.vmem [#allocation2], 96
        %v6654 = vld [vmem:[%s6653] sm:$0xff]
        %v6655 = vld [vmem:[%s6653 + $0x8] sm:$0xff]
        %v6656 = vld [vmem:[%s6653 + $0x18] sm:$0xff]
        %v6657 = vld [vmem:[%s6653 + $0x20] sm:$0xff]
        %v6658 = vld [vmem:[%s6653 + $0x30] sm:$0xff]
        %v6659 = vld [vmem:[%s6653 + $0x38] sm:$0xff]
        %v6660 = vld [vmem:[%s6653 + $0x48] sm:$0xff]
        %v6661 = vld [vmem:[%s6653 + $0x50] sm:$0xff]
        %v6662 = vld [vmem:[%s6653 + $0x60] sm:$0xff]
        %v6663 = vld [vmem:[%s6653 + $0x68] sm:$0xff]
        %v6664 = vld [vmem:[%s6653 + $0x78] sm:$0xff]
        %v6665 = vld [vmem:[%s6653 + $0x80] sm:$0xff]
        %v6666 = vld [vmem:[%s6653 + $0x90] sm:$0xff]
        %v6667 = vld [vmem:[%s6653 + $0x98] sm:$0xff]
        %v6668 = vld [vmem:[%s6653 + $0xa8] sm:$0xff]
        %v6669 = vld [vmem:[%s6653 + $0xb0] sm:$0xff]
        %v6670 = vld [vmem:[%s6653 + $0xc0] sm:$0xff]
        %v6671 = vld [vmem:[%s6653 + $0xc8] sm:$0xff]
        %v6672 = vld [vmem:[%s6653 + $0xd8] sm:$0xff]
        %v6673 = vld [vmem:[%s6653 + $0xe0] sm:$0xff]
        %v6674 = vld [vmem:[%s6653 + $0xf0] sm:$0xff]
        %v6675 = vld [vmem:[%s6653 + $0xf8] sm:$0xff]
        %v6676 = vld [vmem:[%s6653 + $0x108] sm:$0xff]
        %v6677 = vld [vmem:[%s6653 + $0x110] sm:$0xff]
        %v6678 = vld [vmem:[%s6653 + $0x120] sm:$0xff]
        %v6679 = vld [vmem:[%s6653 + $0x128] sm:$0xff]
        %v6680 = vld [vmem:[%s6653 + $0x138] sm:$0xff]
        %v6681 = vld [vmem:[%s6653 + $0x140] sm:$0xff]
        %v6682 = vld [vmem:[%s6653 + $0x150] sm:$0xff]
        %v6683 = vld [vmem:[%s6653 + $0x158] sm:$0xff]
        %v6684 = vld [vmem:[%s6653 + $0x168] sm:$0xff]
        %v6685 = vld [vmem:[%s6653 + $0x170] sm:$0xff]
        %v6686 = vpack.c.bf16 %v6655, %v6654
        %v6687 = vpack.c.bf16 %v6657, %v6656
        %v6688 = vpack.c.bf16 %v6659, %v6658
        %v6689 = vpack.c.bf16 %v6661, %v6660
        %v6690 = vpack.c.bf16 %v6663, %v6662
        %v6691 = vpack.c.bf16 %v6665, %v6664
        %v6692 = vpack.c.bf16 %v6667, %v6666
        %v6693 = vpack.c.bf16 %v6669, %v6668
        %v6694 = vpack.c.bf16 %v6671, %v6670
        %v6695 = vpack.c.bf16 %v6673, %v6672
        %v6696 = vpack.c.bf16 %v6675, %v6674
        %v6697 = vpack.c.bf16 %v6677, %v6676
        %v6698 = vpack.c.bf16 %v6679, %v6678
        %v6699 = vpack.c.bf16 %v6681, %v6680
        %v6700 = vpack.c.bf16 %v6683, %v6682
        %v6701 = vpack.c.bf16 %v6685, %v6684
        %s6702 = scalar_lea.vmem %s3, 80
        %v6703 = vld [vmem:[%s6702] sm:$0xf]
        %v6705 = vsel %vm580, %v6686, 0
        %v6708 = vsel %vm580, %v6687, 0
        %v6711 = vsel %vm580, %v6688, 0
        %v6714 = vsel %vm580, %v6689, 0
        %v6717 = vsel %vm580, %v6690, 0
        %v6720 = vsel %vm580, %v6691, 0
        %v6723 = vsel %vm580, %v6692, 0
        %v6726 = vsel %vm580, %v6693, 0
        %v6729 = vsel %vm580, %v6694, 0
        %v6732 = vsel %vm580, %v6695, 0
        %v6735 = vsel %vm580, %v6696, 0
        %v6738 = vsel %vm580, %v6697, 0
        %v6741 = vsel %vm580, %v6698, 0
        %v6744 = vsel %vm580, %v6699, 0
        %v6747 = vsel %vm580, %v6700, 0
        %v6750 = vsel %vm580, %v6701, 0
        %v6753 = vsel %vm982, %v6703, 0
        %6755 = vmatprep.subr.bf16.mxu0 0
        %6756 = vmatpush1.bf16.msra.mxu0 0
        %6757 = vmatprep.subr.bf16.mxu0 0
        %6758 = vmatpush1.bf16.msra.mxu0 0
        %6759 = vmatprep.subr.bf16.mxu0 0
        %6760 = vmatpush1.bf16.msra.mxu0 0
        %6761 = vmatprep.subr.bf16.mxu0 0
        %6762 = vmatpush1.bf16.msra.mxu0 0
        %6763 = vmatprep.subr.bf16.mxu0 0
        %6764 = vmatpush1.bf16.msra.mxu0 0
        %6765 = vmatprep.subr.bf16.mxu0 0
        %6766 = vmatpush1.bf16.msra.mxu0 0
        %6767 = vmatprep.subr.bf16.mxu0 0
        %6768 = vmatpush1.bf16.msra.mxu0 0
        %6769 = vmatprep.subr.bf16.mxu0 0
        %6770 = vmatpush1.bf16.msra.mxu0 %v6753
        %6771 = vmatprep.subr.bf16.mxu0 0
        %6772 = vmatpush2.bf16.msra.mxu0 0
        %6773 = vmatprep.subr.bf16.mxu0 0
        %6774 = vmatpush2.bf16.msra.mxu0 0
        %6775 = vmatprep.subr.bf16.mxu0 0
        %6776 = vmatpush2.bf16.msra.mxu0 0
        %6777 = vmatprep.subr.bf16.mxu0 0
        %6778 = vmatpush2.bf16.msra.mxu0 0
        %6779 = vmatprep.subr.bf16.mxu0 0
        %6780 = vmatpush2.bf16.msra.mxu0 0
        %6781 = vmatprep.subr.bf16.mxu0 0
        %6782 = vmatpush2.bf16.msra.mxu0 0
        %6783 = vmatprep.subr.bf16.mxu0 0
        %6784 = vmatpush2.bf16.msra.mxu0 0
        %6785 = vmatprep.subr.bf16.mxu0 0
        %6786 = vmatpush2.bf16.msra.mxu0 0
        %6787 = vmatprep.mubr.bf16.mxu0 0
        %6788 = vmatmul.mubr.bf16.gmra.mxu0 %v6705
        %v6789 = vpop.f32.mrf.mxu0
        %v6790 = vadd.f32 0.0, %v6789
        %v6791 = vpop.f32.mrf.mxu0
        %v6792 = vpop.f32.mrf.mxu0
        %v6793 = vadd.f32 0.0, %v6792
        %v6794 = vpop.f32.mrf.mxu0
        %6795 = vmatprep.mubr.bf16.mxu0 0
        %6796 = vmatmul.mubr.bf16.gmra.mxu0 %v6708
        %v6797 = vpop.f32.mrf.mxu0
        %v6798 = vadd.f32 0.0, %v6797
        %v6799 = vpop.f32.mrf.mxu0
        %v6800 = vpop.f32.mrf.mxu0
        %v6801 = vadd.f32 0.0, %v6800
        %v6802 = vpop.f32.mrf.mxu0
        %6803 = vmatprep.mubr.bf16.mxu0 0
        %6804 = vmatmul.mubr.bf16.gmra.mxu0 %v6711
        %v6805 = vpop.f32.mrf.mxu0
        %v6806 = vadd.f32 0.0, %v6805
        %v6807 = vpop.f32.mrf.mxu0
        %v6808 = vpop.f32.mrf.mxu0
        %v6809 = vadd.f32 0.0, %v6808
        %v6810 = vpop.f32.mrf.mxu0
        %6811 = vmatprep.mubr.bf16.mxu0 0
        %6812 = vmatmul.mubr.bf16.gmra.mxu0 %v6714
        %v6813 = vpop.f32.mrf.mxu0
        %v6814 = vadd.f32 0.0, %v6813
        %v6815 = vpop.f32.mrf.mxu0
        %v6816 = vpop.f32.mrf.mxu0
        %v6817 = vadd.f32 0.0, %v6816
        %v6818 = vpop.f32.mrf.mxu0
        %6819 = vmatprep.mubr.bf16.mxu0 0
        %6820 = vmatmul.mubr.bf16.gmra.mxu0 %v6717
        %v6821 = vpop.f32.mrf.mxu0
        %v6822 = vadd.f32 0.0, %v6821
        %v6823 = vpop.f32.mrf.mxu0
        %v6824 = vpop.f32.mrf.mxu0
        %v6825 = vadd.f32 0.0, %v6824
        %v6826 = vpop.f32.mrf.mxu0
        %6827 = vmatprep.mubr.bf16.mxu0 0
        %6828 = vmatmul.mubr.bf16.gmra.mxu0 %v6720
        %v6829 = vpop.f32.mrf.mxu0
        %v6830 = vadd.f32 0.0, %v6829
        %v6831 = vpop.f32.mrf.mxu0
        %v6832 = vpop.f32.mrf.mxu0
        %v6833 = vadd.f32 0.0, %v6832
        %v6834 = vpop.f32.mrf.mxu0
        %6835 = vmatprep.mubr.bf16.mxu0 0
        %6836 = vmatmul.mubr.bf16.gmra.mxu0 %v6723
        %v6837 = vpop.f32.mrf.mxu0
        %v6838 = vadd.f32 0.0, %v6837
        %v6839 = vpop.f32.mrf.mxu0
        %v6840 = vpop.f32.mrf.mxu0
        %v6841 = vadd.f32 0.0, %v6840
        %v6842 = vpop.f32.mrf.mxu0
        %6843 = vmatprep.mubr.bf16.mxu0 0
        %6844 = vmatmul.mubr.bf16.gmra.mxu0 %v6726
        %v6845 = vpop.f32.mrf.mxu0
        %v6846 = vadd.f32 0.0, %v6845
        %v6847 = vpop.f32.mrf.mxu0
        %v6848 = vpop.f32.mrf.mxu0
        %v6849 = vadd.f32 0.0, %v6848
        %v6850 = vpop.f32.mrf.mxu0
        %6851 = vmatprep.mubr.bf16.mxu0 0
        %6852 = vmatmul.mubr.bf16.gmra.mxu0 %v6729
        %v6853 = vpop.f32.mrf.mxu0
        %v6854 = vadd.f32 0.0, %v6853
        %v6855 = vpop.f32.mrf.mxu0
        %v6856 = vpop.f32.mrf.mxu0
        %v6857 = vadd.f32 0.0, %v6856
        %v6858 = vpop.f32.mrf.mxu0
        %6859 = vmatprep.mubr.bf16.mxu0 0
        %6860 = vmatmul.mubr.bf16.gmra.mxu0 %v6732
        %v6861 = vpop.f32.mrf.mxu0
        %v6862 = vadd.f32 0.0, %v6861
        %v6863 = vpop.f32.mrf.mxu0
        %v6864 = vpop.f32.mrf.mxu0
        %v6865 = vadd.f32 0.0, %v6864
        %v6866 = vpop.f32.mrf.mxu0
        %6867 = vmatprep.mubr.bf16.mxu0 0
        %6868 = vmatmul.mubr.bf16.gmra.mxu0 %v6735
        %v6869 = vpop.f32.mrf.mxu0
        %v6870 = vadd.f32 0.0, %v6869
        %v6871 = vpop.f32.mrf.mxu0
        %v6872 = vpop.f32.mrf.mxu0
        %v6873 = vadd.f32 0.0, %v6872
        %v6874 = vpop.f32.mrf.mxu0
        %6875 = vmatprep.mubr.bf16.mxu0 0
        %6876 = vmatmul.mubr.bf16.gmra.mxu0 %v6738
        %v6877 = vpop.f32.mrf.mxu0
        %v6878 = vadd.f32 0.0, %v6877
        %v6879 = vpop.f32.mrf.mxu0
        %v6880 = vpop.f32.mrf.mxu0
        %v6881 = vadd.f32 0.0, %v6880
        %v6882 = vpop.f32.mrf.mxu0
        %6883 = vmatprep.mubr.bf16.mxu0 0
        %6884 = vmatmul.mubr.bf16.gmra.mxu0 %v6741
        %v6885 = vpop.f32.mrf.mxu0
        %v6886 = vadd.f32 0.0, %v6885
        %v6887 = vpop.f32.mrf.mxu0
        %v6888 = vpop.f32.mrf.mxu0
        %v6889 = vadd.f32 0.0, %v6888
        %v6890 = vpop.f32.mrf.mxu0
        %6891 = vmatprep.mubr.bf16.mxu0 0
        %6892 = vmatmul.mubr.bf16.gmra.mxu0 %v6744
        %v6893 = vpop.f32.mrf.mxu0
        %v6894 = vadd.f32 0.0, %v6893
        %v6895 = vpop.f32.mrf.mxu0
        %v6896 = vpop.f32.mrf.mxu0
        %v6897 = vadd.f32 0.0, %v6896
        %v6898 = vpop.f32.mrf.mxu0
        %6899 = vmatprep.mubr.bf16.mxu0 0
        %6900 = vmatmul.mubr.bf16.gmra.mxu0 %v6747
        %v6901 = vpop.f32.mrf.mxu0
        %v6902 = vadd.f32 0.0, %v6901
        %v6903 = vpop.f32.mrf.mxu0
        %v6904 = vpop.f32.mrf.mxu0
        %v6905 = vadd.f32 0.0, %v6904
        %v6906 = vpop.f32.mrf.mxu0
        %6907 = vmatprep.mubr.bf16.mxu0 0
        %6908 = vmatmul.mubr.bf16.gmra.mxu0 %v6750
        %v6909 = vpop.f32.mrf.mxu0
        %v6910 = vadd.f32 0.0, %v6909
        %v6911 = vpop.f32.mrf.mxu0
        %v6912 = vpop.f32.mrf.mxu0
        %v6913 = vadd.f32 0.0, %v6912
        %v6914 = vpop.f32.mrf.mxu0
        %6915 = vdwg.mxu0
        %v6916 = vadd.f32 %v6621, %v6790
        %v6917 = vadd.f32 %v6622, %v6793
        %v6918 = vadd.f32 %v6623, %v6798
        %v6919 = vadd.f32 %v6624, %v6801
        %v6920 = vadd.f32 %v6625, %v6806
        %v6921 = vadd.f32 %v6626, %v6809
        %v6922 = vadd.f32 %v6627, %v6814
        %v6923 = vadd.f32 %v6628, %v6817
        %v6924 = vadd.f32 %v6629, %v6822
        %v6925 = vadd.f32 %v6630, %v6825
        %v6926 = vadd.f32 %v6631, %v6830
        %v6927 = vadd.f32 %v6632, %v6833
        %v6928 = vadd.f32 %v6633, %v6838
        %v6929 = vadd.f32 %v6634, %v6841
        %v6930 = vadd.f32 %v6635, %v6846
        %v6931 = vadd.f32 %v6636, %v6849
        %v6932 = vadd.f32 %v6637, %v6854
        %v6933 = vadd.f32 %v6638, %v6857
        %v6934 = vadd.f32 %v6639, %v6862
        %v6935 = vadd.f32 %v6640, %v6865
        %v6936 = vadd.f32 %v6641, %v6870
        %v6937 = vadd.f32 %v6642, %v6873
        %v6938 = vadd.f32 %v6643, %v6878
        %v6939 = vadd.f32 %v6644, %v6881
        %v6940 = vadd.f32 %v6645, %v6886
        %v6941 = vadd.f32 %v6646, %v6889
        %v6942 = vadd.f32 %v6647, %v6894
        %v6943 = vadd.f32 %v6648, %v6897
        %v6944 = vadd.f32 %v6649, %v6902
        %v6945 = vadd.f32 %v6650, %v6905
        %v6946 = vadd.f32 %v6651, %v6910
        %v6947 = vadd.f32 %v6652, %v6913
        %v6948 = vld [vmem:[%s6653 + $0x1] sm:$0xff]
        %v6949 = vld [vmem:[%s6653 + $0x9] sm:$0xff]
        %v6950 = vld [vmem:[%s6653 + $0x19] sm:$0xff]
        %v6951 = vld [vmem:[%s6653 + $0x21] sm:$0xff]
        %v6952 = vld [vmem:[%s6653 + $0x31] sm:$0xff]
        %v6953 = vld [vmem:[%s6653 + $0x39] sm:$0xff]
        %v6954 = vld [vmem:[%s6653 + $0x49] sm:$0xff]
        %v6955 = vld [vmem:[%s6653 + $0x51] sm:$0xff]
        %v6956 = vld [vmem:[%s6653 + $0x61] sm:$0xff]
        %v6957 = vld [vmem:[%s6653 + $0x69] sm:$0xff]
        %v6958 = vld [vmem:[%s6653 + $0x79] sm:$0xff]
        %v6959 = vld [vmem:[%s6653 + $0x81] sm:$0xff]
        %v6960 = vld [vmem:[%s6653 + $0x91] sm:$0xff]
        %v6961 = vld [vmem:[%s6653 + $0x99] sm:$0xff]
        %v6962 = vld [vmem:[%s6653 + $0xa9] sm:$0xff]
        %v6963 = vld [vmem:[%s6653 + $0xb1] sm:$0xff]
        %v6964 = vld [vmem:[%s6653 + $0xc1] sm:$0xff]
        %v6965 = vld [vmem:[%s6653 + $0xc9] sm:$0xff]
        %v6966 = vld [vmem:[%s6653 + $0xd9] sm:$0xff]
        %v6967 = vld [vmem:[%s6653 + $0xe1] sm:$0xff]
        %v6968 = vld [vmem:[%s6653 + $0xf1] sm:$0xff]
        %v6969 = vld [vmem:[%s6653 + $0xf9] sm:$0xff]
        %v6970 = vld [vmem:[%s6653 + $0x109] sm:$0xff]
        %v6971 = vld [vmem:[%s6653 + $0x111] sm:$0xff]
        %v6972 = vld [vmem:[%s6653 + $0x121] sm:$0xff]
        %v6973 = vld [vmem:[%s6653 + $0x129] sm:$0xff]
        %v6974 = vld [vmem:[%s6653 + $0x139] sm:$0xff]
        %v6975 = vld [vmem:[%s6653 + $0x141] sm:$0xff]
        %v6976 = vld [vmem:[%s6653 + $0x151] sm:$0xff]
        %v6977 = vld [vmem:[%s6653 + $0x159] sm:$0xff]
        %v6978 = vld [vmem:[%s6653 + $0x169] sm:$0xff]
        %v6979 = vld [vmem:[%s6653 + $0x171] sm:$0xff]
        %v6980 = vpack.c.bf16 %v6949, %v6948
        %v6981 = vpack.c.bf16 %v6951, %v6950
        %v6982 = vpack.c.bf16 %v6953, %v6952
        %v6983 = vpack.c.bf16 %v6955, %v6954
        %v6984 = vpack.c.bf16 %v6957, %v6956
        %v6985 = vpack.c.bf16 %v6959, %v6958
        %v6986 = vpack.c.bf16 %v6961, %v6960
        %v6987 = vpack.c.bf16 %v6963, %v6962
        %v6988 = vpack.c.bf16 %v6965, %v6964
        %v6989 = vpack.c.bf16 %v6967, %v6966
        %v6990 = vpack.c.bf16 %v6969, %v6968
        %v6991 = vpack.c.bf16 %v6971, %v6970
        %v6992 = vpack.c.bf16 %v6973, %v6972
        %v6993 = vpack.c.bf16 %v6975, %v6974
        %v6994 = vpack.c.bf16 %v6977, %v6976
        %v6995 = vpack.c.bf16 %v6979, %v6978
        %s6996 = scalar_lea.vmem %s3, 84
        %v6997 = vld [vmem:[%s6996] sm:$0xf]
        %v6999 = vsel %vm580, %v6980, 0
        %v7002 = vsel %vm580, %v6981, 0
        %v7005 = vsel %vm580, %v6982, 0
        %v7008 = vsel %vm580, %v6983, 0
        %v7011 = vsel %vm580, %v6984, 0
        %v7014 = vsel %vm580, %v6985, 0
        %v7017 = vsel %vm580, %v6986, 0
        %v7020 = vsel %vm580, %v6987, 0
        %v7023 = vsel %vm580, %v6988, 0
        %v7026 = vsel %vm580, %v6989, 0
        %v7029 = vsel %vm580, %v6990, 0
        %v7032 = vsel %vm580, %v6991, 0
        %v7035 = vsel %vm580, %v6992, 0
        %v7038 = vsel %vm580, %v6993, 0
        %v7041 = vsel %vm580, %v6994, 0
        %v7044 = vsel %vm580, %v6995, 0
        %v7047 = vsel %vm982, %v6997, 0
        %7049 = vmatprep.subr.bf16.mxu0 0
        %7050 = vmatpush1.bf16.msra.mxu0 0
        %7051 = vmatprep.subr.bf16.mxu0 0
        %7052 = vmatpush1.bf16.msra.mxu0 0
        %7053 = vmatprep.subr.bf16.mxu0 0
        %7054 = vmatpush1.bf16.msra.mxu0 0
        %7055 = vmatprep.subr.bf16.mxu0 0
        %7056 = vmatpush1.bf16.msra.mxu0 0
        %7057 = vmatprep.subr.bf16.mxu0 0
        %7058 = vmatpush1.bf16.msra.mxu0 0
        %7059 = vmatprep.subr.bf16.mxu0 0
        %7060 = vmatpush1.bf16.msra.mxu0 0
        %7061 = vmatprep.subr.bf16.mxu0 0
        %7062 = vmatpush1.bf16.msra.mxu0 0
        %7063 = vmatprep.subr.bf16.mxu0 0
        %7064 = vmatpush1.bf16.msra.mxu0 %v7047
        %7065 = vmatprep.subr.bf16.mxu0 0
        %7066 = vmatpush2.bf16.msra.mxu0 0
        %7067 = vmatprep.subr.bf16.mxu0 0
        %7068 = vmatpush2.bf16.msra.mxu0 0
        %7069 = vmatprep.subr.bf16.mxu0 0
        %7070 = vmatpush2.bf16.msra.mxu0 0
        %7071 = vmatprep.subr.bf16.mxu0 0
        %7072 = vmatpush2.bf16.msra.mxu0 0
        %7073 = vmatprep.subr.bf16.mxu0 0
        %7074 = vmatpush2.bf16.msra.mxu0 0
        %7075 = vmatprep.subr.bf16.mxu0 0
        %7076 = vmatpush2.bf16.msra.mxu0 0
        %7077 = vmatprep.subr.bf16.mxu0 0
        %7078 = vmatpush2.bf16.msra.mxu0 0
        %7079 = vmatprep.subr.bf16.mxu0 0
        %7080 = vmatpush2.bf16.msra.mxu0 0
        %7081 = vmatprep.mubr.bf16.mxu0 0
        %7082 = vmatmul.mubr.bf16.gmra.mxu0 %v6999
        %v7083 = vpop.f32.mrf.mxu0
        %v7084 = vadd.f32 0.0, %v7083
        %v7085 = vpop.f32.mrf.mxu0
        %v7086 = vpop.f32.mrf.mxu0
        %v7087 = vadd.f32 0.0, %v7086
        %v7088 = vpop.f32.mrf.mxu0
        %7089 = vmatprep.mubr.bf16.mxu0 0
        %7090 = vmatmul.mubr.bf16.gmra.mxu0 %v7002
        %v7091 = vpop.f32.mrf.mxu0
        %v7092 = vadd.f32 0.0, %v7091
        %v7093 = vpop.f32.mrf.mxu0
        %v7094 = vpop.f32.mrf.mxu0
        %v7095 = vadd.f32 0.0, %v7094
        %v7096 = vpop.f32.mrf.mxu0
        %7097 = vmatprep.mubr.bf16.mxu0 0
        %7098 = vmatmul.mubr.bf16.gmra.mxu0 %v7005
        %v7099 = vpop.f32.mrf.mxu0
        %v7100 = vadd.f32 0.0, %v7099
        %v7101 = vpop.f32.mrf.mxu0
        %v7102 = vpop.f32.mrf.mxu0
        %v7103 = vadd.f32 0.0, %v7102
        %v7104 = vpop.f32.mrf.mxu0
        %7105 = vmatprep.mubr.bf16.mxu0 0
        %7106 = vmatmul.mubr.bf16.gmra.mxu0 %v7008
        %v7107 = vpop.f32.mrf.mxu0
        %v7108 = vadd.f32 0.0, %v7107
        %v7109 = vpop.f32.mrf.mxu0
        %v7110 = vpop.f32.mrf.mxu0
        %v7111 = vadd.f32 0.0, %v7110
        %v7112 = vpop.f32.mrf.mxu0
        %7113 = vmatprep.mubr.bf16.mxu0 0
        %7114 = vmatmul.mubr.bf16.gmra.mxu0 %v7011
        %v7115 = vpop.f32.mrf.mxu0
        %v7116 = vadd.f32 0.0, %v7115
        %v7117 = vpop.f32.mrf.mxu0
        %v7118 = vpop.f32.mrf.mxu0
        %v7119 = vadd.f32 0.0, %v7118
        %v7120 = vpop.f32.mrf.mxu0
        %7121 = vmatprep.mubr.bf16.mxu0 0
        %7122 = vmatmul.mubr.bf16.gmra.mxu0 %v7014
        %v7123 = vpop.f32.mrf.mxu0
        %v7124 = vadd.f32 0.0, %v7123
        %v7125 = vpop.f32.mrf.mxu0
        %v7126 = vpop.f32.mrf.mxu0
        %v7127 = vadd.f32 0.0, %v7126
        %v7128 = vpop.f32.mrf.mxu0
        %7129 = vmatprep.mubr.bf16.mxu0 0
        %7130 = vmatmul.mubr.bf16.gmra.mxu0 %v7017
        %v7131 = vpop.f32.mrf.mxu0
        %v7132 = vadd.f32 0.0, %v7131
        %v7133 = vpop.f32.mrf.mxu0
        %v7134 = vpop.f32.mrf.mxu0
        %v7135 = vadd.f32 0.0, %v7134
        %v7136 = vpop.f32.mrf.mxu0
        %7137 = vmatprep.mubr.bf16.mxu0 0
        %7138 = vmatmul.mubr.bf16.gmra.mxu0 %v7020
        %v7139 = vpop.f32.mrf.mxu0
        %v7140 = vadd.f32 0.0, %v7139
        %v7141 = vpop.f32.mrf.mxu0
        %v7142 = vpop.f32.mrf.mxu0
        %v7143 = vadd.f32 0.0, %v7142
        %v7144 = vpop.f32.mrf.mxu0
        %7145 = vmatprep.mubr.bf16.mxu0 0
        %7146 = vmatmul.mubr.bf16.gmra.mxu0 %v7023
        %v7147 = vpop.f32.mrf.mxu0
        %v7148 = vadd.f32 0.0, %v7147
        %v7149 = vpop.f32.mrf.mxu0
        %v7150 = vpop.f32.mrf.mxu0
        %v7151 = vadd.f32 0.0, %v7150
        %v7152 = vpop.f32.mrf.mxu0
        %7153 = vmatprep.mubr.bf16.mxu0 0
        %7154 = vmatmul.mubr.bf16.gmra.mxu0 %v7026
        %v7155 = vpop.f32.mrf.mxu0
        %v7156 = vadd.f32 0.0, %v7155
        %v7157 = vpop.f32.mrf.mxu0
        %v7158 = vpop.f32.mrf.mxu0
        %v7159 = vadd.f32 0.0, %v7158
        %v7160 = vpop.f32.mrf.mxu0
        %7161 = vmatprep.mubr.bf16.mxu0 0
        %7162 = vmatmul.mubr.bf16.gmra.mxu0 %v7029
        %v7163 = vpop.f32.mrf.mxu0
        %v7164 = vadd.f32 0.0, %v7163
        %v7165 = vpop.f32.mrf.mxu0
        %v7166 = vpop.f32.mrf.mxu0
        %v7167 = vadd.f32 0.0, %v7166
        %v7168 = vpop.f32.mrf.mxu0
        %7169 = vmatprep.mubr.bf16.mxu0 0
        %7170 = vmatmul.mubr.bf16.gmra.mxu0 %v7032
        %v7171 = vpop.f32.mrf.mxu0
        %v7172 = vadd.f32 0.0, %v7171
        %v7173 = vpop.f32.mrf.mxu0
        %v7174 = vpop.f32.mrf.mxu0
        %v7175 = vadd.f32 0.0, %v7174
        %v7176 = vpop.f32.mrf.mxu0
        %7177 = vmatprep.mubr.bf16.mxu0 0
        %7178 = vmatmul.mubr.bf16.gmra.mxu0 %v7035
        %v7179 = vpop.f32.mrf.mxu0
        %v7180 = vadd.f32 0.0, %v7179
        %v7181 = vpop.f32.mrf.mxu0
        %v7182 = vpop.f32.mrf.mxu0
        %v7183 = vadd.f32 0.0, %v7182
        %v7184 = vpop.f32.mrf.mxu0
        %7185 = vmatprep.mubr.bf16.mxu0 0
        %7186 = vmatmul.mubr.bf16.gmra.mxu0 %v7038
        %v7187 = vpop.f32.mrf.mxu0
        %v7188 = vadd.f32 0.0, %v7187
        %v7189 = vpop.f32.mrf.mxu0
        %v7190 = vpop.f32.mrf.mxu0
        %v7191 = vadd.f32 0.0, %v7190
        %v7192 = vpop.f32.mrf.mxu0
        %7193 = vmatprep.mubr.bf16.mxu0 0
        %7194 = vmatmul.mubr.bf16.gmra.mxu0 %v7041
        %v7195 = vpop.f32.mrf.mxu0
        %v7196 = vadd.f32 0.0, %v7195
        %v7197 = vpop.f32.mrf.mxu0
        %v7198 = vpop.f32.mrf.mxu0
        %v7199 = vadd.f32 0.0, %v7198
        %v7200 = vpop.f32.mrf.mxu0
        %7201 = vmatprep.mubr.bf16.mxu0 0
        %7202 = vmatmul.mubr.bf16.gmra.mxu0 %v7044
        %v7203 = vpop.f32.mrf.mxu0
        %v7204 = vadd.f32 0.0, %v7203
        %v7205 = vpop.f32.mrf.mxu0
        %v7206 = vpop.f32.mrf.mxu0
        %v7207 = vadd.f32 0.0, %v7206
        %v7208 = vpop.f32.mrf.mxu0
        %7209 = vdwg.mxu0
        %v7210 = vadd.f32 %v6916, %v7084
        %v7211 = vadd.f32 %v6917, %v7087
        %v7212 = vadd.f32 %v6918, %v7092
        %v7213 = vadd.f32 %v6919, %v7095
        %v7214 = vadd.f32 %v6920, %v7100
        %v7215 = vadd.f32 %v6921, %v7103
        %v7216 = vadd.f32 %v6922, %v7108
        %v7217 = vadd.f32 %v6923, %v7111
        %v7218 = vadd.f32 %v6924, %v7116
        %v7219 = vadd.f32 %v6925, %v7119
        %v7220 = vadd.f32 %v6926, %v7124
        %v7221 = vadd.f32 %v6927, %v7127
        %v7222 = vadd.f32 %v6928, %v7132
        %v7223 = vadd.f32 %v6929, %v7135
        %v7224 = vadd.f32 %v6930, %v7140
        %v7225 = vadd.f32 %v6931, %v7143
        %v7226 = vadd.f32 %v6932, %v7148
        %v7227 = vadd.f32 %v6933, %v7151
        %v7228 = vadd.f32 %v6934, %v7156
        %v7229 = vadd.f32 %v6935, %v7159
        %v7230 = vadd.f32 %v6936, %v7164
        %v7231 = vadd.f32 %v6937, %v7167
        %v7232 = vadd.f32 %v6938, %v7172
        %v7233 = vadd.f32 %v6939, %v7175
        %v7234 = vadd.f32 %v6940, %v7180
        %v7235 = vadd.f32 %v6941, %v7183
        %v7236 = vadd.f32 %v6942, %v7188
        %v7237 = vadd.f32 %v6943, %v7191
        %v7238 = vadd.f32 %v6944, %v7196
        %v7239 = vadd.f32 %v6945, %v7199
        %v7240 = vadd.f32 %v6946, %v7204
        %v7241 = vadd.f32 %v6947, %v7207
        %v7242 = vld [vmem:[%s6653 + $0x2] sm:$0xff]
        %v7243 = vld [vmem:[%s6653 + $0xa] sm:$0xff]
        %v7244 = vld [vmem:[%s6653 + $0x1a] sm:$0xff]
        %v7245 = vld [vmem:[%s6653 + $0x22] sm:$0xff]
        %v7246 = vld [vmem:[%s6653 + $0x32] sm:$0xff]
        %v7247 = vld [vmem:[%s6653 + $0x3a] sm:$0xff]
        %v7248 = vld [vmem:[%s6653 + $0x4a] sm:$0xff]
        %v7249 = vld [vmem:[%s6653 + $0x52] sm:$0xff]
        %v7250 = vld [vmem:[%s6653 + $0x62] sm:$0xff]
        %v7251 = vld [vmem:[%s6653 + $0x6a] sm:$0xff]
        %v7252 = vld [vmem:[%s6653 + $0x7a] sm:$0xff]
        %v7253 = vld [vmem:[%s6653 + $0x82] sm:$0xff]
        %v7254 = vld [vmem:[%s6653 + $0x92] sm:$0xff]
        %v7255 = vld [vmem:[%s6653 + $0x9a] sm:$0xff]
        %v7256 = vld [vmem:[%s6653 + $0xaa] sm:$0xff]
        %v7257 = vld [vmem:[%s6653 + $0xb2] sm:$0xff]
        %v7258 = vld [vmem:[%s6653 + $0xc2] sm:$0xff]
        %v7259 = vld [vmem:[%s6653 + $0xca] sm:$0xff]
        %v7260 = vld [vmem:[%s6653 + $0xda] sm:$0xff]
        %v7261 = vld [vmem:[%s6653 + $0xe2] sm:$0xff]
        %v7262 = vld [vmem:[%s6653 + $0xf2] sm:$0xff]
        %v7263 = vld [vmem:[%s6653 + $0xfa] sm:$0xff]
        %v7264 = vld [vmem:[%s6653 + $0x10a] sm:$0xff]
        %v7265 = vld [vmem:[%s6653 + $0x112] sm:$0xff]
        %v7266 = vld [vmem:[%s6653 + $0x122] sm:$0xff]
        %v7267 = vld [vmem:[%s6653 + $0x12a] sm:$0xff]
        %v7268 = vld [vmem:[%s6653 + $0x13a] sm:$0xff]
        %v7269 = vld [vmem:[%s6653 + $0x142] sm:$0xff]
        %v7270 = vld [vmem:[%s6653 + $0x152] sm:$0xff]
        %v7271 = vld [vmem:[%s6653 + $0x15a] sm:$0xff]
        %v7272 = vld [vmem:[%s6653 + $0x16a] sm:$0xff]
        %v7273 = vld [vmem:[%s6653 + $0x172] sm:$0xff]
        %v7274 = vpack.c.bf16 %v7243, %v7242
        %v7275 = vpack.c.bf16 %v7245, %v7244
        %v7276 = vpack.c.bf16 %v7247, %v7246
        %v7277 = vpack.c.bf16 %v7249, %v7248
        %v7278 = vpack.c.bf16 %v7251, %v7250
        %v7279 = vpack.c.bf16 %v7253, %v7252
        %v7280 = vpack.c.bf16 %v7255, %v7254
        %v7281 = vpack.c.bf16 %v7257, %v7256
        %v7282 = vpack.c.bf16 %v7259, %v7258
        %v7283 = vpack.c.bf16 %v7261, %v7260
        %v7284 = vpack.c.bf16 %v7263, %v7262
        %v7285 = vpack.c.bf16 %v7265, %v7264
        %v7286 = vpack.c.bf16 %v7267, %v7266
        %v7287 = vpack.c.bf16 %v7269, %v7268
        %v7288 = vpack.c.bf16 %v7271, %v7270
        %v7289 = vpack.c.bf16 %v7273, %v7272
        %s7290 = scalar_lea.vmem %s3, 88
        %v7291 = vld [vmem:[%s7290] sm:$0xf]
        %v7293 = vsel %vm580, %v7274, 0
        %v7296 = vsel %vm580, %v7275, 0
        %v7299 = vsel %vm580, %v7276, 0
        %v7302 = vsel %vm580, %v7277, 0
        %v7305 = vsel %vm580, %v7278, 0
        %v7308 = vsel %vm580, %v7279, 0
        %v7311 = vsel %vm580, %v7280, 0
        %v7314 = vsel %vm580, %v7281, 0
        %v7317 = vsel %vm580, %v7282, 0
        %v7320 = vsel %vm580, %v7283, 0
        %v7323 = vsel %vm580, %v7284, 0
        %v7326 = vsel %vm580, %v7285, 0
        %v7329 = vsel %vm580, %v7286, 0
        %v7332 = vsel %vm580, %v7287, 0
        %v7335 = vsel %vm580, %v7288, 0
        %v7338 = vsel %vm580, %v7289, 0
        %v7341 = vsel %vm982, %v7291, 0
        %7343 = vmatprep.subr.bf16.mxu0 0
        %7344 = vmatpush1.bf16.msra.mxu0 0
        %7345 = vmatprep.subr.bf16.mxu0 0
        %7346 = vmatpush1.bf16.msra.mxu0 0
        %7347 = vmatprep.subr.bf16.mxu0 0
        %7348 = vmatpush1.bf16.msra.mxu0 0
        %7349 = vmatprep.subr.bf16.mxu0 0
        %7350 = vmatpush1.bf16.msra.mxu0 0
        %7351 = vmatprep.subr.bf16.mxu0 0
        %7352 = vmatpush1.bf16.msra.mxu0 0
        %7353 = vmatprep.subr.bf16.mxu0 0
        %7354 = vmatpush1.bf16.msra.mxu0 0
        %7355 = vmatprep.subr.bf16.mxu0 0
        %7356 = vmatpush1.bf16.msra.mxu0 0
        %7357 = vmatprep.subr.bf16.mxu0 0
        %7358 = vmatpush1.bf16.msra.mxu0 %v7341
        %7359 = vmatprep.subr.bf16.mxu0 0
        %7360 = vmatpush2.bf16.msra.mxu0 0
        %7361 = vmatprep.subr.bf16.mxu0 0
        %7362 = vmatpush2.bf16.msra.mxu0 0
        %7363 = vmatprep.subr.bf16.mxu0 0
        %7364 = vmatpush2.bf16.msra.mxu0 0
        %7365 = vmatprep.subr.bf16.mxu0 0
        %7366 = vmatpush2.bf16.msra.mxu0 0
        %7367 = vmatprep.subr.bf16.mxu0 0
        %7368 = vmatpush2.bf16.msra.mxu0 0
        %7369 = vmatprep.subr.bf16.mxu0 0
        %7370 = vmatpush2.bf16.msra.mxu0 0
        %7371 = vmatprep.subr.bf16.mxu0 0
        %7372 = vmatpush2.bf16.msra.mxu0 0
        %7373 = vmatprep.subr.bf16.mxu0 0
        %7374 = vmatpush2.bf16.msra.mxu0 0
        %7375 = vmatprep.mubr.bf16.mxu0 0
        %7376 = vmatmul.mubr.bf16.gmra.mxu0 %v7293
        %v7377 = vpop.f32.mrf.mxu0
        %v7378 = vadd.f32 0.0, %v7377
        %v7379 = vpop.f32.mrf.mxu0
        %v7380 = vpop.f32.mrf.mxu0
        %v7381 = vadd.f32 0.0, %v7380
        %v7382 = vpop.f32.mrf.mxu0
        %7383 = vmatprep.mubr.bf16.mxu0 0
        %7384 = vmatmul.mubr.bf16.gmra.mxu0 %v7296
        %v7385 = vpop.f32.mrf.mxu0
        %v7386 = vadd.f32 0.0, %v7385
        %v7387 = vpop.f32.mrf.mxu0
        %v7388 = vpop.f32.mrf.mxu0
        %v7389 = vadd.f32 0.0, %v7388
        %v7390 = vpop.f32.mrf.mxu0
        %7391 = vmatprep.mubr.bf16.mxu0 0
        %7392 = vmatmul.mubr.bf16.gmra.mxu0 %v7299
        %v7393 = vpop.f32.mrf.mxu0
        %v7394 = vadd.f32 0.0, %v7393
        %v7395 = vpop.f32.mrf.mxu0
        %v7396 = vpop.f32.mrf.mxu0
        %v7397 = vadd.f32 0.0, %v7396
        %v7398 = vpop.f32.mrf.mxu0
        %7399 = vmatprep.mubr.bf16.mxu0 0
        %7400 = vmatmul.mubr.bf16.gmra.mxu0 %v7302
        %v7401 = vpop.f32.mrf.mxu0
        %v7402 = vadd.f32 0.0, %v7401
        %v7403 = vpop.f32.mrf.mxu0
        %v7404 = vpop.f32.mrf.mxu0
        %v7405 = vadd.f32 0.0, %v7404
        %v7406 = vpop.f32.mrf.mxu0
        %7407 = vmatprep.mubr.bf16.mxu0 0
        %7408 = vmatmul.mubr.bf16.gmra.mxu0 %v7305
        %v7409 = vpop.f32.mrf.mxu0
        %v7410 = vadd.f32 0.0, %v7409
        %v7411 = vpop.f32.mrf.mxu0
        %v7412 = vpop.f32.mrf.mxu0
        %v7413 = vadd.f32 0.0, %v7412
        %v7414 = vpop.f32.mrf.mxu0
        %7415 = vmatprep.mubr.bf16.mxu0 0
        %7416 = vmatmul.mubr.bf16.gmra.mxu0 %v7308
        %v7417 = vpop.f32.mrf.mxu0
        %v7418 = vadd.f32 0.0, %v7417
        %v7419 = vpop.f32.mrf.mxu0
        %v7420 = vpop.f32.mrf.mxu0
        %v7421 = vadd.f32 0.0, %v7420
        %v7422 = vpop.f32.mrf.mxu0
        %7423 = vmatprep.mubr.bf16.mxu0 0
        %7424 = vmatmul.mubr.bf16.gmra.mxu0 %v7311
        %v7425 = vpop.f32.mrf.mxu0
        %v7426 = vadd.f32 0.0, %v7425
        %v7427 = vpop.f32.mrf.mxu0
        %v7428 = vpop.f32.mrf.mxu0
        %v7429 = vadd.f32 0.0, %v7428
        %v7430 = vpop.f32.mrf.mxu0
        %7431 = vmatprep.mubr.bf16.mxu0 0
        %7432 = vmatmul.mubr.bf16.gmra.mxu0 %v7314
        %v7433 = vpop.f32.mrf.mxu0
        %v7434 = vadd.f32 0.0, %v7433
        %v7435 = vpop.f32.mrf.mxu0
        %v7436 = vpop.f32.mrf.mxu0
        %v7437 = vadd.f32 0.0, %v7436
        %v7438 = vpop.f32.mrf.mxu0
        %7439 = vmatprep.mubr.bf16.mxu0 0
        %7440 = vmatmul.mubr.bf16.gmra.mxu0 %v7317
        %v7441 = vpop.f32.mrf.mxu0
        %v7442 = vadd.f32 0.0, %v7441
        %v7443 = vpop.f32.mrf.mxu0
        %v7444 = vpop.f32.mrf.mxu0
        %v7445 = vadd.f32 0.0, %v7444
        %v7446 = vpop.f32.mrf.mxu0
        %7447 = vmatprep.mubr.bf16.mxu0 0
        %7448 = vmatmul.mubr.bf16.gmra.mxu0 %v7320
        %v7449 = vpop.f32.mrf.mxu0
        %v7450 = vadd.f32 0.0, %v7449
        %v7451 = vpop.f32.mrf.mxu0
        %v7452 = vpop.f32.mrf.mxu0
        %v7453 = vadd.f32 0.0, %v7452
        %v7454 = vpop.f32.mrf.mxu0
        %7455 = vmatprep.mubr.bf16.mxu0 0
        %7456 = vmatmul.mubr.bf16.gmra.mxu0 %v7323
        %v7457 = vpop.f32.mrf.mxu0
        %v7458 = vadd.f32 0.0, %v7457
        %v7459 = vpop.f32.mrf.mxu0
        %v7460 = vpop.f32.mrf.mxu0
        %v7461 = vadd.f32 0.0, %v7460
        %v7462 = vpop.f32.mrf.mxu0
        %7463 = vmatprep.mubr.bf16.mxu0 0
        %7464 = vmatmul.mubr.bf16.gmra.mxu0 %v7326
        %v7465 = vpop.f32.mrf.mxu0
        %v7466 = vadd.f32 0.0, %v7465
        %v7467 = vpop.f32.mrf.mxu0
        %v7468 = vpop.f32.mrf.mxu0
        %v7469 = vadd.f32 0.0, %v7468
        %v7470 = vpop.f32.mrf.mxu0
        %7471 = vmatprep.mubr.bf16.mxu0 0
        %7472 = vmatmul.mubr.bf16.gmra.mxu0 %v7329
        %v7473 = vpop.f32.mrf.mxu0
        %v7474 = vadd.f32 0.0, %v7473
        %v7475 = vpop.f32.mrf.mxu0
        %v7476 = vpop.f32.mrf.mxu0
        %v7477 = vadd.f32 0.0, %v7476
        %v7478 = vpop.f32.mrf.mxu0
        %7479 = vmatprep.mubr.bf16.mxu0 0
        %7480 = vmatmul.mubr.bf16.gmra.mxu0 %v7332
        %v7481 = vpop.f32.mrf.mxu0
        %v7482 = vadd.f32 0.0, %v7481
        %v7483 = vpop.f32.mrf.mxu0
        %v7484 = vpop.f32.mrf.mxu0
        %v7485 = vadd.f32 0.0, %v7484
        %v7486 = vpop.f32.mrf.mxu0
        %7487 = vmatprep.mubr.bf16.mxu0 0
        %7488 = vmatmul.mubr.bf16.gmra.mxu0 %v7335
        %v7489 = vpop.f32.mrf.mxu0
        %v7490 = vadd.f32 0.0, %v7489
        %v7491 = vpop.f32.mrf.mxu0
        %v7492 = vpop.f32.mrf.mxu0
        %v7493 = vadd.f32 0.0, %v7492
        %v7494 = vpop.f32.mrf.mxu0
        %7495 = vmatprep.mubr.bf16.mxu0 0
        %7496 = vmatmul.mubr.bf16.gmra.mxu0 %v7338
        %v7497 = vpop.f32.mrf.mxu0
        %v7498 = vadd.f32 0.0, %v7497
        %v7499 = vpop.f32.mrf.mxu0
        %v7500 = vpop.f32.mrf.mxu0
        %v7501 = vadd.f32 0.0, %v7500
        %v7502 = vpop.f32.mrf.mxu0
        %7503 = vdwg.mxu0
        %v7504 = vadd.f32 %v7210, %v7378
        %v7505 = vadd.f32 %v7211, %v7381
        %v7506 = vadd.f32 %v7212, %v7386
        %v7507 = vadd.f32 %v7213, %v7389
        %v7508 = vadd.f32 %v7214, %v7394
        %v7509 = vadd.f32 %v7215, %v7397
        %v7510 = vadd.f32 %v7216, %v7402
        %v7511 = vadd.f32 %v7217, %v7405
        %v7512 = vadd.f32 %v7218, %v7410
        %v7513 = vadd.f32 %v7219, %v7413
        %v7514 = vadd.f32 %v7220, %v7418
        %v7515 = vadd.f32 %v7221, %v7421
        %v7516 = vadd.f32 %v7222, %v7426
        %v7517 = vadd.f32 %v7223, %v7429
        %v7518 = vadd.f32 %v7224, %v7434
        %v7519 = vadd.f32 %v7225, %v7437
        %v7520 = vadd.f32 %v7226, %v7442
        %v7521 = vadd.f32 %v7227, %v7445
        %v7522 = vadd.f32 %v7228, %v7450
        %v7523 = vadd.f32 %v7229, %v7453
        %v7524 = vadd.f32 %v7230, %v7458
        %v7525 = vadd.f32 %v7231, %v7461
        %v7526 = vadd.f32 %v7232, %v7466
        %v7527 = vadd.f32 %v7233, %v7469
        %v7528 = vadd.f32 %v7234, %v7474
        %v7529 = vadd.f32 %v7235, %v7477
        %v7530 = vadd.f32 %v7236, %v7482
        %v7531 = vadd.f32 %v7237, %v7485
        %v7532 = vadd.f32 %v7238, %v7490
        %v7533 = vadd.f32 %v7239, %v7493
        %v7534 = vadd.f32 %v7240, %v7498
        %v7535 = vadd.f32 %v7241, %v7501
        %v7536 = vld [vmem:[%s6653 + $0x3] sm:$0xff]
        %v7537 = vld [vmem:[%s6653 + $0xb] sm:$0xff]
        %v7538 = vld [vmem:[%s6653 + $0x1b] sm:$0xff]
        %v7539 = vld [vmem:[%s6653 + $0x23] sm:$0xff]
        %v7540 = vld [vmem:[%s6653 + $0x33] sm:$0xff]
        %v7541 = vld [vmem:[%s6653 + $0x3b] sm:$0xff]
        %v7542 = vld [vmem:[%s6653 + $0x4b] sm:$0xff]
        %v7543 = vld [vmem:[%s6653 + $0x53] sm:$0xff]
        %v7544 = vld [vmem:[%s6653 + $0x63] sm:$0xff]
        %v7545 = vld [vmem:[%s6653 + $0x6b] sm:$0xff]
        %v7546 = vld [vmem:[%s6653 + $0x7b] sm:$0xff]
        %v7547 = vld [vmem:[%s6653 + $0x83] sm:$0xff]
        %v7548 = vld [vmem:[%s6653 + $0x93] sm:$0xff]
        %v7549 = vld [vmem:[%s6653 + $0x9b] sm:$0xff]
        %v7550 = vld [vmem:[%s6653 + $0xab] sm:$0xff]
        %v7551 = vld [vmem:[%s6653 + $0xb3] sm:$0xff]
        %v7552 = vld [vmem:[%s6653 + $0xc3] sm:$0xff]
        %v7553 = vld [vmem:[%s6653 + $0xcb] sm:$0xff]
        %v7554 = vld [vmem:[%s6653 + $0xdb] sm:$0xff]
        %v7555 = vld [vmem:[%s6653 + $0xe3] sm:$0xff]
        %v7556 = vld [vmem:[%s6653 + $0xf3] sm:$0xff]
        %v7557 = vld [vmem:[%s6653 + $0xfb] sm:$0xff]
        %v7558 = vld [vmem:[%s6653 + $0x10b] sm:$0xff]
        %v7559 = vld [vmem:[%s6653 + $0x113] sm:$0xff]
        %v7560 = vld [vmem:[%s6653 + $0x123] sm:$0xff]
        %v7561 = vld [vmem:[%s6653 + $0x12b] sm:$0xff]
        %v7562 = vld [vmem:[%s6653 + $0x13b] sm:$0xff]
        %v7563 = vld [vmem:[%s6653 + $0x143] sm:$0xff]
        %v7564 = vld [vmem:[%s6653 + $0x153] sm:$0xff]
        %v7565 = vld [vmem:[%s6653 + $0x15b] sm:$0xff]
        %v7566 = vld [vmem:[%s6653 + $0x16b] sm:$0xff]
        %v7567 = vld [vmem:[%s6653 + $0x173] sm:$0xff]
        %v7568 = vpack.c.bf16 %v7537, %v7536
        %v7569 = vpack.c.bf16 %v7539, %v7538
        %v7570 = vpack.c.bf16 %v7541, %v7540
        %v7571 = vpack.c.bf16 %v7543, %v7542
        %v7572 = vpack.c.bf16 %v7545, %v7544
        %v7573 = vpack.c.bf16 %v7547, %v7546
        %v7574 = vpack.c.bf16 %v7549, %v7548
        %v7575 = vpack.c.bf16 %v7551, %v7550
        %v7576 = vpack.c.bf16 %v7553, %v7552
        %v7577 = vpack.c.bf16 %v7555, %v7554
        %v7578 = vpack.c.bf16 %v7557, %v7556
        %v7579 = vpack.c.bf16 %v7559, %v7558
        %v7580 = vpack.c.bf16 %v7561, %v7560
        %v7581 = vpack.c.bf16 %v7563, %v7562
        %v7582 = vpack.c.bf16 %v7565, %v7564
        %v7583 = vpack.c.bf16 %v7567, %v7566
        %s7584 = scalar_lea.vmem %s3, 92
        %v7585 = vld [vmem:[%s7584] sm:$0xf]
        %v7587 = vsel %vm580, %v7568, 0
        %v7590 = vsel %vm580, %v7569, 0
        %v7593 = vsel %vm580, %v7570, 0
        %v7596 = vsel %vm580, %v7571, 0
        %v7599 = vsel %vm580, %v7572, 0
        %v7602 = vsel %vm580, %v7573, 0
        %v7605 = vsel %vm580, %v7574, 0
        %v7608 = vsel %vm580, %v7575, 0
        %v7611 = vsel %vm580, %v7576, 0
        %v7614 = vsel %vm580, %v7577, 0
        %v7617 = vsel %vm580, %v7578, 0
        %v7620 = vsel %vm580, %v7579, 0
        %v7623 = vsel %vm580, %v7580, 0
        %v7626 = vsel %vm580, %v7581, 0
        %v7629 = vsel %vm580, %v7582, 0
        %v7632 = vsel %vm580, %v7583, 0
        %v7635 = vsel %vm982, %v7585, 0
        %7637 = vmatprep.subr.bf16.mxu0 0
        %7638 = vmatpush1.bf16.msra.mxu0 0
        %7639 = vmatprep.subr.bf16.mxu0 0
        %7640 = vmatpush1.bf16.msra.mxu0 0
        %7641 = vmatprep.subr.bf16.mxu0 0
        %7642 = vmatpush1.bf16.msra.mxu0 0
        %7643 = vmatprep.subr.bf16.mxu0 0
        %7644 = vmatpush1.bf16.msra.mxu0 0
        %7645 = vmatprep.subr.bf16.mxu0 0
        %7646 = vmatpush1.bf16.msra.mxu0 0
        %7647 = vmatprep.subr.bf16.mxu0 0
        %7648 = vmatpush1.bf16.msra.mxu0 0
        %7649 = vmatprep.subr.bf16.mxu0 0
        %7650 = vmatpush1.bf16.msra.mxu0 0
        %7651 = vmatprep.subr.bf16.mxu0 0
        %7652 = vmatpush1.bf16.msra.mxu0 %v7635
        %7653 = vmatprep.subr.bf16.mxu0 0
        %7654 = vmatpush2.bf16.msra.mxu0 0
        %7655 = vmatprep.subr.bf16.mxu0 0
        %7656 = vmatpush2.bf16.msra.mxu0 0
        %7657 = vmatprep.subr.bf16.mxu0 0
        %7658 = vmatpush2.bf16.msra.mxu0 0
        %7659 = vmatprep.subr.bf16.mxu0 0
        %7660 = vmatpush2.bf16.msra.mxu0 0
        %7661 = vmatprep.subr.bf16.mxu0 0
        %7662 = vmatpush2.bf16.msra.mxu0 0
        %7663 = vmatprep.subr.bf16.mxu0 0
        %7664 = vmatpush2.bf16.msra.mxu0 0
        %7665 = vmatprep.subr.bf16.mxu0 0
        %7666 = vmatpush2.bf16.msra.mxu0 0
        %7667 = vmatprep.subr.bf16.mxu0 0
        %7668 = vmatpush2.bf16.msra.mxu0 0
        %7669 = vmatprep.mubr.bf16.mxu0 0
        %7670 = vmatmul.mubr.bf16.gmra.mxu0 %v7587
        %v7671 = vpop.f32.mrf.mxu0
        %v7672 = vadd.f32 0.0, %v7671
        %v7673 = vpop.f32.mrf.mxu0
        %v7674 = vpop.f32.mrf.mxu0
        %v7675 = vadd.f32 0.0, %v7674
        %v7676 = vpop.f32.mrf.mxu0
        %7677 = vmatprep.mubr.bf16.mxu0 0
        %7678 = vmatmul.mubr.bf16.gmra.mxu0 %v7590
        %v7679 = vpop.f32.mrf.mxu0
        %v7680 = vadd.f32 0.0, %v7679
        %v7681 = vpop.f32.mrf.mxu0
        %v7682 = vpop.f32.mrf.mxu0
        %v7683 = vadd.f32 0.0, %v7682
        %v7684 = vpop.f32.mrf.mxu0
        %7685 = vmatprep.mubr.bf16.mxu0 0
        %7686 = vmatmul.mubr.bf16.gmra.mxu0 %v7593
        %v7687 = vpop.f32.mrf.mxu0
        %v7688 = vadd.f32 0.0, %v7687
        %v7689 = vpop.f32.mrf.mxu0
        %v7690 = vpop.f32.mrf.mxu0
        %v7691 = vadd.f32 0.0, %v7690
        %v7692 = vpop.f32.mrf.mxu0
        %7693 = vmatprep.mubr.bf16.mxu0 0
        %7694 = vmatmul.mubr.bf16.gmra.mxu0 %v7596
        %v7695 = vpop.f32.mrf.mxu0
        %v7696 = vadd.f32 0.0, %v7695
        %v7697 = vpop.f32.mrf.mxu0
        %v7698 = vpop.f32.mrf.mxu0
        %v7699 = vadd.f32 0.0, %v7698
        %v7700 = vpop.f32.mrf.mxu0
        %7701 = vmatprep.mubr.bf16.mxu0 0
        %7702 = vmatmul.mubr.bf16.gmra.mxu0 %v7599
        %v7703 = vpop.f32.mrf.mxu0
        %v7704 = vadd.f32 0.0, %v7703
        %v7705 = vpop.f32.mrf.mxu0
        %v7706 = vpop.f32.mrf.mxu0
        %v7707 = vadd.f32 0.0, %v7706
        %v7708 = vpop.f32.mrf.mxu0
        %7709 = vmatprep.mubr.bf16.mxu0 0
        %7710 = vmatmul.mubr.bf16.gmra.mxu0 %v7602
        %v7711 = vpop.f32.mrf.mxu0
        %v7712 = vadd.f32 0.0, %v7711
        %v7713 = vpop.f32.mrf.mxu0
        %v7714 = vpop.f32.mrf.mxu0
        %v7715 = vadd.f32 0.0, %v7714
        %v7716 = vpop.f32.mrf.mxu0
        %7717 = vmatprep.mubr.bf16.mxu0 0
        %7718 = vmatmul.mubr.bf16.gmra.mxu0 %v7605
        %v7719 = vpop.f32.mrf.mxu0
        %v7720 = vadd.f32 0.0, %v7719
        %v7721 = vpop.f32.mrf.mxu0
        %v7722 = vpop.f32.mrf.mxu0
        %v7723 = vadd.f32 0.0, %v7722
        %v7724 = vpop.f32.mrf.mxu0
        %7725 = vmatprep.mubr.bf16.mxu0 0
        %7726 = vmatmul.mubr.bf16.gmra.mxu0 %v7608
        %v7727 = vpop.f32.mrf.mxu0
        %v7728 = vadd.f32 0.0, %v7727
        %v7729 = vpop.f32.mrf.mxu0
        %v7730 = vpop.f32.mrf.mxu0
        %v7731 = vadd.f32 0.0, %v7730
        %v7732 = vpop.f32.mrf.mxu0
        %7733 = vmatprep.mubr.bf16.mxu0 0
        %7734 = vmatmul.mubr.bf16.gmra.mxu0 %v7611
        %v7735 = vpop.f32.mrf.mxu0
        %v7736 = vadd.f32 0.0, %v7735
        %v7737 = vpop.f32.mrf.mxu0
        %v7738 = vpop.f32.mrf.mxu0
        %v7739 = vadd.f32 0.0, %v7738
        %v7740 = vpop.f32.mrf.mxu0
        %7741 = vmatprep.mubr.bf16.mxu0 0
        %7742 = vmatmul.mubr.bf16.gmra.mxu0 %v7614
        %v7743 = vpop.f32.mrf.mxu0
        %v7744 = vadd.f32 0.0, %v7743
        %v7745 = vpop.f32.mrf.mxu0
        %v7746 = vpop.f32.mrf.mxu0
        %v7747 = vadd.f32 0.0, %v7746
        %v7748 = vpop.f32.mrf.mxu0
        %7749 = vmatprep.mubr.bf16.mxu0 0
        %7750 = vmatmul.mubr.bf16.gmra.mxu0 %v7617
        %v7751 = vpop.f32.mrf.mxu0
        %v7752 = vadd.f32 0.0, %v7751
        %v7753 = vpop.f32.mrf.mxu0
        %v7754 = vpop.f32.mrf.mxu0
        %v7755 = vadd.f32 0.0, %v7754
        %v7756 = vpop.f32.mrf.mxu0
        %7757 = vmatprep.mubr.bf16.mxu0 0
        %7758 = vmatmul.mubr.bf16.gmra.mxu0 %v7620
        %v7759 = vpop.f32.mrf.mxu0
        %v7760 = vadd.f32 0.0, %v7759
        %v7761 = vpop.f32.mrf.mxu0
        %v7762 = vpop.f32.mrf.mxu0
        %v7763 = vadd.f32 0.0, %v7762
        %v7764 = vpop.f32.mrf.mxu0
        %7765 = vmatprep.mubr.bf16.mxu0 0
        %7766 = vmatmul.mubr.bf16.gmra.mxu0 %v7623
        %v7767 = vpop.f32.mrf.mxu0
        %v7768 = vadd.f32 0.0, %v7767
        %v7769 = vpop.f32.mrf.mxu0
        %v7770 = vpop.f32.mrf.mxu0
        %v7771 = vadd.f32 0.0, %v7770
        %v7772 = vpop.f32.mrf.mxu0
        %7773 = vmatprep.mubr.bf16.mxu0 0
        %7774 = vmatmul.mubr.bf16.gmra.mxu0 %v7626
        %v7775 = vpop.f32.mrf.mxu0
        %v7776 = vadd.f32 0.0, %v7775
        %v7777 = vpop.f32.mrf.mxu0
        %v7778 = vpop.f32.mrf.mxu0
        %v7779 = vadd.f32 0.0, %v7778
        %v7780 = vpop.f32.mrf.mxu0
        %7781 = vmatprep.mubr.bf16.mxu0 0
        %7782 = vmatmul.mubr.bf16.gmra.mxu0 %v7629
        %v7783 = vpop.f32.mrf.mxu0
        %v7784 = vadd.f32 0.0, %v7783
        %v7785 = vpop.f32.mrf.mxu0
        %v7786 = vpop.f32.mrf.mxu0
        %v7787 = vadd.f32 0.0, %v7786
        %v7788 = vpop.f32.mrf.mxu0
        %7789 = vmatprep.mubr.bf16.mxu0 0
        %7790 = vmatmul.mubr.bf16.gmra.mxu0 %v7632
        %v7791 = vpop.f32.mrf.mxu0
        %v7792 = vadd.f32 0.0, %v7791
        %v7793 = vpop.f32.mrf.mxu0
        %v7794 = vpop.f32.mrf.mxu0
        %v7795 = vadd.f32 0.0, %v7794
        %v7796 = vpop.f32.mrf.mxu0
        %7797 = vdwg.mxu0
        %v7798 = vadd.f32 %v7504, %v7672
        %v7799 = vadd.f32 %v7505, %v7675
        %v7800 = vadd.f32 %v7506, %v7680
        %v7801 = vadd.f32 %v7507, %v7683
        %v7802 = vadd.f32 %v7508, %v7688
        %v7803 = vadd.f32 %v7509, %v7691
        %v7804 = vadd.f32 %v7510, %v7696
        %v7805 = vadd.f32 %v7511, %v7699
        %v7806 = vadd.f32 %v7512, %v7704
        %v7807 = vadd.f32 %v7513, %v7707
        %v7808 = vadd.f32 %v7514, %v7712
        %v7809 = vadd.f32 %v7515, %v7715
        %v7810 = vadd.f32 %v7516, %v7720
        %v7811 = vadd.f32 %v7517, %v7723
        %v7812 = vadd.f32 %v7518, %v7728
        %v7813 = vadd.f32 %v7519, %v7731
        %v7814 = vadd.f32 %v7520, %v7736
        %v7815 = vadd.f32 %v7521, %v7739
        %v7816 = vadd.f32 %v7522, %v7744
        %v7817 = vadd.f32 %v7523, %v7747
        %v7818 = vadd.f32 %v7524, %v7752
        %v7819 = vadd.f32 %v7525, %v7755
        %v7820 = vadd.f32 %v7526, %v7760
        %v7821 = vadd.f32 %v7527, %v7763
        %v7822 = vadd.f32 %v7528, %v7768
        %v7823 = vadd.f32 %v7529, %v7771
        %v7824 = vadd.f32 %v7530, %v7776
        %v7825 = vadd.f32 %v7531, %v7779
        %v7826 = vadd.f32 %v7532, %v7784
        %v7827 = vadd.f32 %v7533, %v7787
        %v7828 = vadd.f32 %v7534, %v7792
        %v7829 = vadd.f32 %v7535, %v7795
        %v7830 = vld [vmem:[%s6653 + $0x4] sm:$0xff]
        %v7831 = vld [vmem:[%s6653 + $0xc] sm:$0xff]
        %v7832 = vld [vmem:[%s6653 + $0x1c] sm:$0xff]
        %v7833 = vld [vmem:[%s6653 + $0x24] sm:$0xff]
        %v7834 = vld [vmem:[%s6653 + $0x34] sm:$0xff]
        %v7835 = vld [vmem:[%s6653 + $0x3c] sm:$0xff]
        %v7836 = vld [vmem:[%s6653 + $0x4c] sm:$0xff]
        %v7837 = vld [vmem:[%s6653 + $0x54] sm:$0xff]
        %v7838 = vld [vmem:[%s6653 + $0x64] sm:$0xff]
        %v7839 = vld [vmem:[%s6653 + $0x6c] sm:$0xff]
        %v7840 = vld [vmem:[%s6653 + $0x7c] sm:$0xff]
        %v7841 = vld [vmem:[%s6653 + $0x84] sm:$0xff]
        %v7842 = vld [vmem:[%s6653 + $0x94] sm:$0xff]
        %v7843 = vld [vmem:[%s6653 + $0x9c] sm:$0xff]
        %v7844 = vld [vmem:[%s6653 + $0xac] sm:$0xff]
        %v7845 = vld [vmem:[%s6653 + $0xb4] sm:$0xff]
        %v7846 = vld [vmem:[%s6653 + $0xc4] sm:$0xff]
        %v7847 = vld [vmem:[%s6653 + $0xcc] sm:$0xff]
        %v7848 = vld [vmem:[%s6653 + $0xdc] sm:$0xff]
        %v7849 = vld [vmem:[%s6653 + $0xe4] sm:$0xff]
        %v7850 = vld [vmem:[%s6653 + $0xf4] sm:$0xff]
        %v7851 = vld [vmem:[%s6653 + $0xfc] sm:$0xff]
        %v7852 = vld [vmem:[%s6653 + $0x10c] sm:$0xff]
        %v7853 = vld [vmem:[%s6653 + $0x114] sm:$0xff]
        %v7854 = vld [vmem:[%s6653 + $0x124] sm:$0xff]
        %v7855 = vld [vmem:[%s6653 + $0x12c] sm:$0xff]
        %v7856 = vld [vmem:[%s6653 + $0x13c] sm:$0xff]
        %v7857 = vld [vmem:[%s6653 + $0x144] sm:$0xff]
        %v7858 = vld [vmem:[%s6653 + $0x154] sm:$0xff]
        %v7859 = vld [vmem:[%s6653 + $0x15c] sm:$0xff]
        %v7860 = vld [vmem:[%s6653 + $0x16c] sm:$0xff]
        %v7861 = vld [vmem:[%s6653 + $0x174] sm:$0xff]
        %v7862 = vpack.c.bf16 %v7831, %v7830
        %v7863 = vpack.c.bf16 %v7833, %v7832
        %v7864 = vpack.c.bf16 %v7835, %v7834
        %v7865 = vpack.c.bf16 %v7837, %v7836
        %v7866 = vpack.c.bf16 %v7839, %v7838
        %v7867 = vpack.c.bf16 %v7841, %v7840
        %v7868 = vpack.c.bf16 %v7843, %v7842
        %v7869 = vpack.c.bf16 %v7845, %v7844
        %v7870 = vpack.c.bf16 %v7847, %v7846
        %v7871 = vpack.c.bf16 %v7849, %v7848
        %v7872 = vpack.c.bf16 %v7851, %v7850
        %v7873 = vpack.c.bf16 %v7853, %v7852
        %v7874 = vpack.c.bf16 %v7855, %v7854
        %v7875 = vpack.c.bf16 %v7857, %v7856
        %v7876 = vpack.c.bf16 %v7859, %v7858
        %v7877 = vpack.c.bf16 %v7861, %v7860
        %s7878 = scalar_lea.vmem %s3, 96
        %v7879 = vld [vmem:[%s7878] sm:$0xf]
        %v7881 = vsel %vm580, %v7862, 0
        %v7884 = vsel %vm580, %v7863, 0
        %v7887 = vsel %vm580, %v7864, 0
        %v7890 = vsel %vm580, %v7865, 0
        %v7893 = vsel %vm580, %v7866, 0
        %v7896 = vsel %vm580, %v7867, 0
        %v7899 = vsel %vm580, %v7868, 0
        %v7902 = vsel %vm580, %v7869, 0
        %v7905 = vsel %vm580, %v7870, 0
        %v7908 = vsel %vm580, %v7871, 0
        %v7911 = vsel %vm580, %v7872, 0
        %v7914 = vsel %vm580, %v7873, 0
        %v7917 = vsel %vm580, %v7874, 0
        %v7920 = vsel %vm580, %v7875, 0
        %v7923 = vsel %vm580, %v7876, 0
        %v7926 = vsel %vm580, %v7877, 0
        %v7929 = vsel %vm982, %v7879, 0
        %7931 = vmatprep.subr.bf16.mxu0 0
        %7932 = vmatpush1.bf16.msra.mxu0 0
        %7933 = vmatprep.subr.bf16.mxu0 0
        %7934 = vmatpush1.bf16.msra.mxu0 0
        %7935 = vmatprep.subr.bf16.mxu0 0
        %7936 = vmatpush1.bf16.msra.mxu0 0
        %7937 = vmatprep.subr.bf16.mxu0 0
        %7938 = vmatpush1.bf16.msra.mxu0 0
        %7939 = vmatprep.subr.bf16.mxu0 0
        %7940 = vmatpush1.bf16.msra.mxu0 0
        %7941 = vmatprep.subr.bf16.mxu0 0
        %7942 = vmatpush1.bf16.msra.mxu0 0
        %7943 = vmatprep.subr.bf16.mxu0 0
        %7944 = vmatpush1.bf16.msra.mxu0 0
        %7945 = vmatprep.subr.bf16.mxu0 0
        %7946 = vmatpush1.bf16.msra.mxu0 %v7929
        %7947 = vmatprep.subr.bf16.mxu0 0
        %7948 = vmatpush2.bf16.msra.mxu0 0
        %7949 = vmatprep.subr.bf16.mxu0 0
        %7950 = vmatpush2.bf16.msra.mxu0 0
        %7951 = vmatprep.subr.bf16.mxu0 0
        %7952 = vmatpush2.bf16.msra.mxu0 0
        %7953 = vmatprep.subr.bf16.mxu0 0
        %7954 = vmatpush2.bf16.msra.mxu0 0
        %7955 = vmatprep.subr.bf16.mxu0 0
        %7956 = vmatpush2.bf16.msra.mxu0 0
        %7957 = vmatprep.subr.bf16.mxu0 0
        %7958 = vmatpush2.bf16.msra.mxu0 0
        %7959 = vmatprep.subr.bf16.mxu0 0
        %7960 = vmatpush2.bf16.msra.mxu0 0
        %7961 = vmatprep.subr.bf16.mxu0 0
        %7962 = vmatpush2.bf16.msra.mxu0 0
        %7963 = vmatprep.mubr.bf16.mxu0 0
        %7964 = vmatmul.mubr.bf16.gmra.mxu0 %v7881
        %v7965 = vpop.f32.mrf.mxu0
        %v7966 = vadd.f32 0.0, %v7965
        %v7967 = vpop.f32.mrf.mxu0
        %v7968 = vpop.f32.mrf.mxu0
        %v7969 = vadd.f32 0.0, %v7968
        %v7970 = vpop.f32.mrf.mxu0
        %7971 = vmatprep.mubr.bf16.mxu0 0
        %7972 = vmatmul.mubr.bf16.gmra.mxu0 %v7884
        %v7973 = vpop.f32.mrf.mxu0
        %v7974 = vadd.f32 0.0, %v7973
        %v7975 = vpop.f32.mrf.mxu0
        %v7976 = vpop.f32.mrf.mxu0
        %v7977 = vadd.f32 0.0, %v7976
        %v7978 = vpop.f32.mrf.mxu0
        %7979 = vmatprep.mubr.bf16.mxu0 0
        %7980 = vmatmul.mubr.bf16.gmra.mxu0 %v7887
        %v7981 = vpop.f32.mrf.mxu0
        %v7982 = vadd.f32 0.0, %v7981
        %v7983 = vpop.f32.mrf.mxu0
        %v7984 = vpop.f32.mrf.mxu0
        %v7985 = vadd.f32 0.0, %v7984
        %v7986 = vpop.f32.mrf.mxu0
        %7987 = vmatprep.mubr.bf16.mxu0 0
        %7988 = vmatmul.mubr.bf16.gmra.mxu0 %v7890
        %v7989 = vpop.f32.mrf.mxu0
        %v7990 = vadd.f32 0.0, %v7989
        %v7991 = vpop.f32.mrf.mxu0
        %v7992 = vpop.f32.mrf.mxu0
        %v7993 = vadd.f32 0.0, %v7992
        %v7994 = vpop.f32.mrf.mxu0
        %7995 = vmatprep.mubr.bf16.mxu0 0
        %7996 = vmatmul.mubr.bf16.gmra.mxu0 %v7893
        %v7997 = vpop.f32.mrf.mxu0
        %v7998 = vadd.f32 0.0, %v7997
        %v7999 = vpop.f32.mrf.mxu0
        %v8000 = vpop.f32.mrf.mxu0
        %v8001 = vadd.f32 0.0, %v8000
        %v8002 = vpop.f32.mrf.mxu0
        %8003 = vmatprep.mubr.bf16.mxu0 0
        %8004 = vmatmul.mubr.bf16.gmra.mxu0 %v7896
        %v8005 = vpop.f32.mrf.mxu0
        %v8006 = vadd.f32 0.0, %v8005
        %v8007 = vpop.f32.mrf.mxu0
        %v8008 = vpop.f32.mrf.mxu0
        %v8009 = vadd.f32 0.0, %v8008
        %v8010 = vpop.f32.mrf.mxu0
        %8011 = vmatprep.mubr.bf16.mxu0 0
        %8012 = vmatmul.mubr.bf16.gmra.mxu0 %v7899
        %v8013 = vpop.f32.mrf.mxu0
        %v8014 = vadd.f32 0.0, %v8013
        %v8015 = vpop.f32.mrf.mxu0
        %v8016 = vpop.f32.mrf.mxu0
        %v8017 = vadd.f32 0.0, %v8016
        %v8018 = vpop.f32.mrf.mxu0
        %8019 = vmatprep.mubr.bf16.mxu0 0
        %8020 = vmatmul.mubr.bf16.gmra.mxu0 %v7902
        %v8021 = vpop.f32.mrf.mxu0
        %v8022 = vadd.f32 0.0, %v8021
        %v8023 = vpop.f32.mrf.mxu0
        %v8024 = vpop.f32.mrf.mxu0
        %v8025 = vadd.f32 0.0, %v8024
        %v8026 = vpop.f32.mrf.mxu0
        %8027 = vmatprep.mubr.bf16.mxu0 0
        %8028 = vmatmul.mubr.bf16.gmra.mxu0 %v7905
        %v8029 = vpop.f32.mrf.mxu0
        %v8030 = vadd.f32 0.0, %v8029
        %v8031 = vpop.f32.mrf.mxu0
        %v8032 = vpop.f32.mrf.mxu0
        %v8033 = vadd.f32 0.0, %v8032
        %v8034 = vpop.f32.mrf.mxu0
        %8035 = vmatprep.mubr.bf16.mxu0 0
        %8036 = vmatmul.mubr.bf16.gmra.mxu0 %v7908
        %v8037 = vpop.f32.mrf.mxu0
        %v8038 = vadd.f32 0.0, %v8037
        %v8039 = vpop.f32.mrf.mxu0
        %v8040 = vpop.f32.mrf.mxu0
        %v8041 = vadd.f32 0.0, %v8040
        %v8042 = vpop.f32.mrf.mxu0
        %8043 = vmatprep.mubr.bf16.mxu0 0
        %8044 = vmatmul.mubr.bf16.gmra.mxu0 %v7911
        %v8045 = vpop.f32.mrf.mxu0
        %v8046 = vadd.f32 0.0, %v8045
        %v8047 = vpop.f32.mrf.mxu0
        %v8048 = vpop.f32.mrf.mxu0
        %v8049 = vadd.f32 0.0, %v8048
        %v8050 = vpop.f32.mrf.mxu0
        %8051 = vmatprep.mubr.bf16.mxu0 0
        %8052 = vmatmul.mubr.bf16.gmra.mxu0 %v7914
        %v8053 = vpop.f32.mrf.mxu0
        %v8054 = vadd.f32 0.0, %v8053
        %v8055 = vpop.f32.mrf.mxu0
        %v8056 = vpop.f32.mrf.mxu0
        %v8057 = vadd.f32 0.0, %v8056
        %v8058 = vpop.f32.mrf.mxu0
        %8059 = vmatprep.mubr.bf16.mxu0 0
        %8060 = vmatmul.mubr.bf16.gmra.mxu0 %v7917
        %v8061 = vpop.f32.mrf.mxu0
        %v8062 = vadd.f32 0.0, %v8061
        %v8063 = vpop.f32.mrf.mxu0
        %v8064 = vpop.f32.mrf.mxu0
        %v8065 = vadd.f32 0.0, %v8064
        %v8066 = vpop.f32.mrf.mxu0
        %8067 = vmatprep.mubr.bf16.mxu0 0
        %8068 = vmatmul.mubr.bf16.gmra.mxu0 %v7920
        %v8069 = vpop.f32.mrf.mxu0
        %v8070 = vadd.f32 0.0, %v8069
        %v8071 = vpop.f32.mrf.mxu0
        %v8072 = vpop.f32.mrf.mxu0
        %v8073 = vadd.f32 0.0, %v8072
        %v8074 = vpop.f32.mrf.mxu0
        %8075 = vmatprep.mubr.bf16.mxu0 0
        %8076 = vmatmul.mubr.bf16.gmra.mxu0 %v7923
        %v8077 = vpop.f32.mrf.mxu0
        %v8078 = vadd.f32 0.0, %v8077
        %v8079 = vpop.f32.mrf.mxu0
        %v8080 = vpop.f32.mrf.mxu0
        %v8081 = vadd.f32 0.0, %v8080
        %v8082 = vpop.f32.mrf.mxu0
        %8083 = vmatprep.mubr.bf16.mxu0 0
        %8084 = vmatmul.mubr.bf16.gmra.mxu0 %v7926
        %v8085 = vpop.f32.mrf.mxu0
        %v8086 = vadd.f32 0.0, %v8085
        %v8087 = vpop.f32.mrf.mxu0
        %v8088 = vpop.f32.mrf.mxu0
        %v8089 = vadd.f32 0.0, %v8088
        %v8090 = vpop.f32.mrf.mxu0
        %8091 = vdwg.mxu0
        %v8092 = vadd.f32 %v7798, %v7966
        %v8093 = vadd.f32 %v7799, %v7969
        %v8094 = vadd.f32 %v7800, %v7974
        %v8095 = vadd.f32 %v7801, %v7977
        %v8096 = vadd.f32 %v7802, %v7982
        %v8097 = vadd.f32 %v7803, %v7985
        %v8098 = vadd.f32 %v7804, %v7990
        %v8099 = vadd.f32 %v7805, %v7993
        %v8100 = vadd.f32 %v7806, %v7998
        %v8101 = vadd.f32 %v7807, %v8001
        %v8102 = vadd.f32 %v7808, %v8006
        %v8103 = vadd.f32 %v7809, %v8009
        %v8104 = vadd.f32 %v7810, %v8014
        %v8105 = vadd.f32 %v7811, %v8017
        %v8106 = vadd.f32 %v7812, %v8022
        %v8107 = vadd.f32 %v7813, %v8025
        %v8108 = vadd.f32 %v7814, %v8030
        %v8109 = vadd.f32 %v7815, %v8033
        %v8110 = vadd.f32 %v7816, %v8038
        %v8111 = vadd.f32 %v7817, %v8041
        %v8112 = vadd.f32 %v7818, %v8046
        %v8113 = vadd.f32 %v7819, %v8049
        %v8114 = vadd.f32 %v7820, %v8054
        %v8115 = vadd.f32 %v7821, %v8057
        %v8116 = vadd.f32 %v7822, %v8062
        %v8117 = vadd.f32 %v7823, %v8065
        %v8118 = vadd.f32 %v7824, %v8070
        %v8119 = vadd.f32 %v7825, %v8073
        %v8120 = vadd.f32 %v7826, %v8078
        %v8121 = vadd.f32 %v7827, %v8081
        %v8122 = vadd.f32 %v7828, %v8086
        %v8123 = vadd.f32 %v7829, %v8089
        %v8124 = vld [vmem:[%s4] sm:$0x1]
        %v8126 = vlaneseq
        %v8127 = vshrl.u32 %v8126, 7
        %v8128 = vsub.s32 0, %v8127
        %v8129 = vrot.slane %v8124, %v8128
        %v8131 = vadd.f32 %v8092, %v8129
        %v8132 = vadd.f32 %v8093, %v8129
        %v8133 = vadd.f32 %v8094, %v8129
        %v8134 = vadd.f32 %v8095, %v8129
        %v8135 = vadd.f32 %v8096, %v8129
        %v8136 = vadd.f32 %v8097, %v8129
        %v8137 = vadd.f32 %v8098, %v8129
        %v8138 = vadd.f32 %v8099, %v8129
        %v8139 = vadd.f32 %v8100, %v8129
        %v8140 = vadd.f32 %v8101, %v8129
        %v8141 = vadd.f32 %v8102, %v8129
        %v8142 = vadd.f32 %v8103, %v8129
        %v8143 = vadd.f32 %v8104, %v8129
        %v8144 = vadd.f32 %v8105, %v8129
        %v8145 = vadd.f32 %v8106, %v8129
        %v8146 = vadd.f32 %v8107, %v8129
        %v8147 = vadd.f32 %v8108, %v8129
        %v8148 = vadd.f32 %v8109, %v8129
        %v8149 = vadd.f32 %v8110, %v8129
        %v8150 = vadd.f32 %v8111, %v8129
        %v8151 = vadd.f32 %v8112, %v8129
        %v8152 = vadd.f32 %v8113, %v8129
        %v8153 = vadd.f32 %v8114, %v8129
        %v8154 = vadd.f32 %v8115, %v8129
        %v8155 = vadd.f32 %v8116, %v8129
        %v8156 = vadd.f32 %v8117, %v8129
        %v8157 = vadd.f32 %v8118, %v8129
        %v8158 = vadd.f32 %v8119, %v8129
        %v8159 = vadd.f32 %v8120, %v8129
        %v8160 = vadd.f32 %v8121, %v8129
        %v8161 = vadd.f32 %v8122, %v8129
        %v8162 = vadd.f32 %v8123, %v8129
        %v8163 = vmax.f32 %v8131, 0.0
        %v8164 = vmax.f32 %v8132, 0.0
        %v8165 = vmax.f32 %v8133, 0.0
        %v8166 = vmax.f32 %v8134, 0.0
        %v8167 = vmax.f32 %v8135, 0.0
        %v8168 = vmax.f32 %v8136, 0.0
        %v8169 = vmax.f32 %v8137, 0.0
        %v8170 = vmax.f32 %v8138, 0.0
        %v8171 = vmax.f32 %v8139, 0.0
        %v8172 = vmax.f32 %v8140, 0.0
        %v8173 = vmax.f32 %v8141, 0.0
        %v8174 = vmax.f32 %v8142, 0.0
        %v8175 = vmax.f32 %v8143, 0.0
        %v8176 = vmax.f32 %v8144, 0.0
        %v8177 = vmax.f32 %v8145, 0.0
        %v8178 = vmax.f32 %v8146, 0.0
        %v8179 = vmax.f32 %v8147, 0.0
        %v8180 = vmax.f32 %v8148, 0.0
        %v8181 = vmax.f32 %v8149, 0.0
        %v8182 = vmax.f32 %v8150, 0.0
        %v8183 = vmax.f32 %v8151, 0.0
        %v8184 = vmax.f32 %v8152, 0.0
        %v8185 = vmax.f32 %v8153, 0.0
        %v8186 = vmax.f32 %v8154, 0.0
        %v8187 = vmax.f32 %v8155, 0.0
        %v8188 = vmax.f32 %v8156, 0.0
        %v8189 = vmax.f32 %v8157, 0.0
        %v8190 = vmax.f32 %v8158, 0.0
        %v8191 = vmax.f32 %v8159, 0.0
        %v8192 = vmax.f32 %v8160, 0.0
        %v8193 = vmax.f32 %v8161, 0.0
        %v8194 = vmax.f32 %v8162, 0.0
        %8227 = vrot.lane.b32.xlu0 %v8163, 8
        %v8228 = vpop.permute.xlu0 %8227
        %8229 = vrot.lane.b32.xlu0 %v8164, 8
        %v8230 = vpop.permute.xlu0 %8229
        %8231 = vrot.lane.b32.xlu0 %v8165, 8
        %v8232 = vpop.permute.xlu0 %8231
        %8233 = vrot.lane.b32.xlu0 %v8166, 8
        %v8234 = vpop.permute.xlu0 %8233
        %8235 = vrot.lane.b32.xlu0 %v8167, 8
        %v8236 = vpop.permute.xlu0 %8235
        %8237 = vrot.lane.b32.xlu0 %v8168, 8
        %v8238 = vpop.permute.xlu0 %8237
        %8239 = vrot.lane.b32.xlu0 %v8169, 8
        %v8240 = vpop.permute.xlu0 %8239
        %8241 = vrot.lane.b32.xlu0 %v8170, 8
        %v8242 = vpop.permute.xlu0 %8241
        %8243 = vrot.lane.b32.xlu0 %v8171, 8
        %v8244 = vpop.permute.xlu0 %8243
        %8245 = vrot.lane.b32.xlu0 %v8172, 8
        %v8246 = vpop.permute.xlu0 %8245
        %8247 = vrot.lane.b32.xlu0 %v8173, 8
        %v8248 = vpop.permute.xlu0 %8247
        %8249 = vrot.lane.b32.xlu0 %v8174, 8
        %v8250 = vpop.permute.xlu0 %8249
        %8251 = vrot.lane.b32.xlu0 %v8175, 8
        %v8252 = vpop.permute.xlu0 %8251
        %8253 = vrot.lane.b32.xlu0 %v8176, 8
        %v8254 = vpop.permute.xlu0 %8253
        %8255 = vrot.lane.b32.xlu0 %v8177, 8
        %v8256 = vpop.permute.xlu0 %8255
        %8257 = vrot.lane.b32.xlu0 %v8178, 8
        %v8258 = vpop.permute.xlu0 %8257
        %8259 = vrot.lane.b32.xlu0 %v8179, 8
        %v8260 = vpop.permute.xlu0 %8259
        %8261 = vrot.lane.b32.xlu0 %v8180, 8
        %v8262 = vpop.permute.xlu0 %8261
        %8263 = vrot.lane.b32.xlu0 %v8181, 8
        %v8264 = vpop.permute.xlu0 %8263
        %8265 = vrot.lane.b32.xlu0 %v8182, 8
        %v8266 = vpop.permute.xlu0 %8265
        %8267 = vrot.lane.b32.xlu0 %v8183, 8
        %v8268 = vpop.permute.xlu0 %8267
        %8269 = vrot.lane.b32.xlu0 %v8184, 8
        %v8270 = vpop.permute.xlu0 %8269
        %8271 = vrot.lane.b32.xlu0 %v8185, 8
        %v8272 = vpop.permute.xlu0 %8271
        %8273 = vrot.lane.b32.xlu0 %v8186, 8
        %v8274 = vpop.permute.xlu0 %8273
        %8275 = vrot.lane.b32.xlu0 %v8187, 8
        %v8276 = vpop.permute.xlu0 %8275
        %8277 = vrot.lane.b32.xlu0 %v8188, 8
        %v8278 = vpop.permute.xlu0 %8277
        %8279 = vrot.lane.b32.xlu0 %v8189, 8
        %v8280 = vpop.permute.xlu0 %8279
        %8281 = vrot.lane.b32.xlu0 %v8190, 8
        %v8282 = vpop.permute.xlu0 %8281
        %8283 = vrot.lane.b32.xlu0 %v8191, 8
        %v8284 = vpop.permute.xlu0 %8283
        %8285 = vrot.lane.b32.xlu0 %v8192, 8
        %v8286 = vpop.permute.xlu0 %8285
        %8287 = vrot.lane.b32.xlu0 %v8193, 8
        %v8288 = vpop.permute.xlu0 %8287
        %8289 = vrot.lane.b32.xlu0 %v8194, 8
        %v8290 = vpop.permute.xlu0 %8289
        %vm8323 = vcmask 195648
        %8324 = vst.msk [vmem:[%s271] sm:$0xff] %vm8323, %v8228
        %8325 = vst.msk [vmem:[%s271 + $0x8] sm:$0xff] %vm8323, %v8230
        %8326 = vst.msk [vmem:[%s271 + $0x10] sm:$0xff] %vm8323, %v8232
        %8327 = vst.msk [vmem:[%s271 + $0x18] sm:$0xff] %vm8323, %v8234
        %8328 = vst.msk [vmem:[%s271 + $0x20] sm:$0xff] %vm8323, %v8236
        %8329 = vst.msk [vmem:[%s271 + $0x28] sm:$0xff] %vm8323, %v8238
        %8330 = vst.msk [vmem:[%s271 + $0x30] sm:$0xff] %vm8323, %v8240
        %8331 = vst.msk [vmem:[%s271 + $0x38] sm:$0xff] %vm8323, %v8242
        %8332 = vst.msk [vmem:[%s271 + $0x40] sm:$0xff] %vm8323, %v8244
        %8333 = vst.msk [vmem:[%s271 + $0x48] sm:$0xff] %vm8323, %v8246
        %8334 = vst.msk [vmem:[%s271 + $0x50] sm:$0xff] %vm8323, %v8248
        %8335 = vst.msk [vmem:[%s271 + $0x58] sm:$0xff] %vm8323, %v8250
        %8336 = vst.msk [vmem:[%s271 + $0x60] sm:$0xff] %vm8323, %v8252
        %8337 = vst.msk [vmem:[%s271 + $0x68] sm:$0xff] %vm8323, %v8254
        %8338 = vst.msk [vmem:[%s271 + $0x70] sm:$0xff] %vm8323, %v8256
        %8339 = vst.msk [vmem:[%s271 + $0x78] sm:$0xff] %vm8323, %v8258
        %8340 = vst.msk [vmem:[%s271 + $0x80] sm:$0xff] %vm8323, %v8260
        %8341 = vst.msk [vmem:[%s271 + $0x88] sm:$0xff] %vm8323, %v8262
        %8342 = vst.msk [vmem:[%s271 + $0x90] sm:$0xff] %vm8323, %v8264
        %8343 = vst.msk [vmem:[%s271 + $0x98] sm:$0xff] %vm8323, %v8266
        %8344 = vst.msk [vmem:[%s271 + $0xa0] sm:$0xff] %vm8323, %v8268
        %8345 = vst.msk [vmem:[%s271 + $0xa8] sm:$0xff] %vm8323, %v8270
        %8346 = vst.msk [vmem:[%s271 + $0xb0] sm:$0xff] %vm8323, %v8272
        %8347 = vst.msk [vmem:[%s271 + $0xb8] sm:$0xff] %vm8323, %v8274
        %8348 = vst.msk [vmem:[%s271 + $0xc0] sm:$0xff] %vm8323, %v8276
        %8349 = vst.msk [vmem:[%s271 + $0xc8] sm:$0xff] %vm8323, %v8278
        %8350 = vst.msk [vmem:[%s271 + $0xd0] sm:$0xff] %vm8323, %v8280
        %8351 = vst.msk [vmem:[%s271 + $0xd8] sm:$0xff] %vm8323, %v8282
        %8352 = vst.msk [vmem:[%s271 + $0xe0] sm:$0xff] %vm8323, %v8284
        %8353 = vst.msk [vmem:[%s271 + $0xe8] sm:$0xff] %vm8323, %v8286
        %8354 = vst.msk [vmem:[%s271 + $0xf0] sm:$0xff] %vm8323, %v8288
        %8355 = vst.msk [vmem:[%s271 + $0xf8] sm:$0xff] %vm8323, %v8290
        %8356 = vst.msk [vmem:[#allocation3] sm:$0xff] %vm334, -inf
        %8357 = vst.msk [vmem:[#allocation3 + $0x8] sm:$0xff] %vm334, -inf
        %vm8358 = vcmask 25600
        %8359 = vst.msk [vmem:[#allocation3 + $0x10] sm:$0x3] %vm8358, -inf
        %8360 = vst.msk [vmem:[#allocation3 + $0x18] sm:$0xff] %vm334, -inf
        %8361 = vst.msk [vmem:[#allocation3 + $0x20] sm:$0xff] %vm334, -inf
        %8362 = vst.msk [vmem:[#allocation3 + $0x28] sm:$0x3] %vm8358, -inf
        %8363 = vst.msk [vmem:[#allocation3 + $0x30] sm:$0xff] %vm334, -inf
        %8364 = vst.msk [vmem:[#allocation3 + $0x38] sm:$0xff] %vm334, -inf
        %8365 = vst.msk [vmem:[#allocation3 + $0x40] sm:$0x3] %vm8358, -inf
        %8366 = vst.msk [vmem:[#allocation3 + $0x48] sm:$0xff] %vm334, -inf
        %8367 = vst.msk [vmem:[#allocation3 + $0x50] sm:$0xff] %vm334, -inf
        %8368 = vst.msk [vmem:[#allocation3 + $0x58] sm:$0x3] %vm8358, -inf
        %8369 = vst.msk [vmem:[#allocation3 + $0x60] sm:$0xff] %vm334, -inf
        %8370 = vst.msk [vmem:[#allocation3 + $0x68] sm:$0xff] %vm334, -inf
        %8371 = vst.msk [vmem:[#allocation3 + $0x70] sm:$0x3] %vm8358, -inf
        %8372 = vst.msk [vmem:[#allocation3 + $0x78] sm:$0xff] %vm334, -inf
        %8373 = vst.msk [vmem:[#allocation3 + $0x80] sm:$0xff] %vm334, -inf
        %8374 = vst.msk [vmem:[#allocation3 + $0x88] sm:$0x3] %vm8358, -inf
        %8375 = vst.msk [vmem:[#allocation3 + $0x90] sm:$0xff] %vm334, -inf
        %8376 = vst.msk [vmem:[#allocation3 + $0x98] sm:$0xff] %vm334, -inf
        %8377 = vst.msk [vmem:[#allocation3 + $0xa0] sm:$0x3] %vm8358, -inf
        %8378 = vst.msk [vmem:[#allocation3 + $0xa8] sm:$0xff] %vm334, -inf
        %8379 = vst.msk [vmem:[#allocation3 + $0xb0] sm:$0xff] %vm334, -inf
        %8380 = vst.msk [vmem:[#allocation3 + $0xb8] sm:$0x3] %vm8358, -inf
        %8381 = vst.msk [vmem:[#allocation3 + $0xc0] sm:$0xff] %vm334, -inf
        %8382 = vst.msk [vmem:[#allocation3 + $0xc8] sm:$0xff] %vm334, -inf
        %8383 = vst.msk [vmem:[#allocation3 + $0xd0] sm:$0x3] %vm8358, -inf
        %8384 = vst.msk [vmem:[#allocation3 + $0xd8] sm:$0xff] %vm334, -inf
        %8385 = vst.msk [vmem:[#allocation3 + $0xe0] sm:$0xff] %vm334, -inf
        %8386 = vst.msk [vmem:[#allocation3 + $0xe8] sm:$0x3] %vm8358, -inf
        %8387 = vst.msk [vmem:[#allocation3 + $0xf0] sm:$0xff] %vm334, -inf
        %8388 = vst.msk [vmem:[#allocation3 + $0xf8] sm:$0xff] %vm334, -inf
        %8389 = vst.msk [vmem:[#allocation3 + $0x100] sm:$0x3] %vm8358, -inf
        %8390 = vst.msk [vmem:[#allocation3 + $0x108] sm:$0xff] %vm334, -inf
        %8391 = vst.msk [vmem:[#allocation3 + $0x110] sm:$0xff] %vm334, -inf
        %8392 = vst.msk [vmem:[#allocation3 + $0x118] sm:$0x3] %vm8358, -inf
        %8393 = vst.msk [vmem:[#allocation3 + $0x120] sm:$0xff] %vm334, -inf
        %8394 = vst.msk [vmem:[#allocation3 + $0x128] sm:$0xff] %vm334, -inf
        %8395 = vst.msk [vmem:[#allocation3 + $0x130] sm:$0x3] %vm8358, -inf
        %8396 = vst.msk [vmem:[#allocation3 + $0x138] sm:$0xff] %vm334, -inf
        %8397 = vst.msk [vmem:[#allocation3 + $0x140] sm:$0xff] %vm334, -inf
        %8398 = vst.msk [vmem:[#allocation3 + $0x148] sm:$0x3] %vm8358, -inf
        %8399 = vst.msk [vmem:[#allocation3 + $0x150] sm:$0xff] %vm334, -inf
        %8400 = vst.msk [vmem:[#allocation3 + $0x158] sm:$0xff] %vm334, -inf
        %8401 = vst.msk [vmem:[#allocation3 + $0x160] sm:$0x3] %vm8358, -inf
        %8402 = vst.msk [vmem:[#allocation3 + $0x168] sm:$0xff] %vm334, -inf
        %8403 = vst.msk [vmem:[#allocation3 + $0x170] sm:$0xff] %vm334, -inf
        %8404 = vst.msk [vmem:[#allocation3 + $0x178] sm:$0x3] %vm8358, -inf
        %8405 = vst.msk [vmem:[#allocation3 + $0x180] sm:$0xff] %vm334, -inf
        %8406 = vst.msk [vmem:[#allocation3 + $0x188] sm:$0xff] %vm334, -inf
        %8407 = vst.msk [vmem:[#allocation3 + $0x190] sm:$0x3] %vm8358, -inf
        %8408 = vst.msk [vmem:[#allocation3 + $0x198] sm:$0xff] %vm334, -inf
        %8409 = vst.msk [vmem:[#allocation3 + $0x1a0] sm:$0xff] %vm334, -inf
        %8410 = vst.msk [vmem:[#allocation3 + $0x1a8] sm:$0x3] %vm8358, -inf
        %s8411 = scalar_lea.vmem [#allocation3], 24
        %8412 = vst.msk [vmem:[%s8411 + $0x1] sm:$0xff] %vm334, %v278
        %8413 = vst.msk [vmem:[%s8411 + $0x9] sm:$0xff] %vm334, %v279
        %8414 = vst.msk [vmem:[%s8411 + $0x19] sm:$0xff] %vm334, %v280
        %8415 = vst.msk [vmem:[%s8411 + $0x21] sm:$0xff] %vm334, %v281
        %8416 = vst.msk [vmem:[%s8411 + $0x31] sm:$0xff] %vm334, %v282
        %8417 = vst.msk [vmem:[%s8411 + $0x39] sm:$0xff] %vm334, %v283
        %8418 = vst.msk [vmem:[%s8411 + $0x49] sm:$0xff] %vm334, %v284
        %8419 = vst.msk [vmem:[%s8411 + $0x51] sm:$0xff] %vm334, %v285
        %8420 = vst.msk [vmem:[%s8411 + $0x61] sm:$0xff] %vm334, %v286
        %8421 = vst.msk [vmem:[%s8411 + $0x69] sm:$0xff] %vm334, %v287
        %8422 = vst.msk [vmem:[%s8411 + $0x79] sm:$0xff] %vm334, %v288
        %8423 = vst.msk [vmem:[%s8411 + $0x81] sm:$0xff] %vm334, %v289
        %8424 = vst.msk [vmem:[%s8411 + $0x91] sm:$0xff] %vm334, %v290
        %8425 = vst.msk [vmem:[%s8411 + $0x99] sm:$0xff] %vm334, %v291
        %8426 = vst.msk [vmem:[%s8411 + $0xa9] sm:$0xff] %vm334, %v292
        %8427 = vst.msk [vmem:[%s8411 + $0xb1] sm:$0xff] %vm334, %v293
        %8428 = vst.msk [vmem:[%s8411 + $0xc1] sm:$0xff] %vm334, %v294
        %8429 = vst.msk [vmem:[%s8411 + $0xc9] sm:$0xff] %vm334, %v295
        %8430 = vst.msk [vmem:[%s8411 + $0xd9] sm:$0xff] %vm334, %v296
        %8431 = vst.msk [vmem:[%s8411 + $0xe1] sm:$0xff] %vm334, %v297
        %8432 = vst.msk [vmem:[%s8411 + $0xf1] sm:$0xff] %vm334, %v298
        %8433 = vst.msk [vmem:[%s8411 + $0xf9] sm:$0xff] %vm334, %v299
        %8434 = vst.msk [vmem:[%s8411 + $0x109] sm:$0xff] %vm334, %v300
        %8435 = vst.msk [vmem:[%s8411 + $0x111] sm:$0xff] %vm334, %v301
        %8436 = vst.msk [vmem:[%s8411 + $0x121] sm:$0xff] %vm334, %v302
        %8437 = vst.msk [vmem:[%s8411 + $0x129] sm:$0xff] %vm334, %v303
        %8438 = vst.msk [vmem:[%s8411 + $0x139] sm:$0xff] %vm334, %v304
        %8439 = vst.msk [vmem:[%s8411 + $0x141] sm:$0xff] %vm334, %v305
        %8440 = vst.msk [vmem:[%s8411 + $0x151] sm:$0xff] %vm334, %v306
        %8441 = vst.msk [vmem:[%s8411 + $0x159] sm:$0xff] %vm334, %v307
        %8442 = vst.msk [vmem:[%s8411 + $0x169] sm:$0xff] %vm334, %v308
        %8443 = vst.msk [vmem:[%s8411 + $0x171] sm:$0xff] %vm334, %v309
        %v8444 = vld [vmem:[#allocation3] sm:$0xff]
        %v8445 = vld [vmem:[#allocation3 + $0x8] sm:$0xff]
        %v8446 = vld [vmem:[#allocation3 + $0x18] sm:$0xff]
        %v8447 = vld [vmem:[#allocation3 + $0x20] sm:$0xff]
        %v8448 = vld [vmem:[#allocation3 + $0x30] sm:$0xff]
        %v8449 = vld [vmem:[#allocation3 + $0x38] sm:$0xff]
        %v8450 = vld [vmem:[#allocation3 + $0x48] sm:$0xff]
        %v8451 = vld [vmem:[#allocation3 + $0x50] sm:$0xff]
        %v8452 = vld [vmem:[#allocation3 + $0x60] sm:$0xff]
        %v8453 = vld [vmem:[#allocation3 + $0x68] sm:$0xff]
        %v8454 = vld [vmem:[#allocation3 + $0x78] sm:$0xff]
        %v8455 = vld [vmem:[#allocation3 + $0x80] sm:$0xff]
        %v8456 = vld [vmem:[#allocation3 + $0x90] sm:$0xff]
        %v8457 = vld [vmem:[#allocation3 + $0x98] sm:$0xff]
        %v8458 = vld [vmem:[#allocation3 + $0xa8] sm:$0xff]
        %v8459 = vld [vmem:[#allocation3 + $0xb0] sm:$0xff]
        %v8460 = vld [vmem:[#allocation3 + $0xc0] sm:$0xff]
        %v8461 = vld [vmem:[#allocation3 + $0xc8] sm:$0xff]
        %v8462 = vld [vmem:[#allocation3 + $0xd8] sm:$0xff]
        %v8463 = vld [vmem:[#allocation3 + $0xe0] sm:$0xff]
        %v8464 = vld [vmem:[#allocation3 + $0xf0] sm:$0xff]
        %v8465 = vld [vmem:[#allocation3 + $0xf8] sm:$0xff]
        %v8466 = vld [vmem:[#allocation3 + $0x108] sm:$0xff]
        %v8467 = vld [vmem:[#allocation3 + $0x110] sm:$0xff]
        %v8468 = vld [vmem:[#allocation3 + $0x120] sm:$0xff]
        %v8469 = vld [vmem:[#allocation3 + $0x128] sm:$0xff]
        %v8470 = vld [vmem:[#allocation3 + $0x138] sm:$0xff]
        %v8471 = vld [vmem:[#allocation3 + $0x140] sm:$0xff]
        %v8472 = vld [vmem:[#allocation3 + $0x150] sm:$0xff]
        %v8473 = vld [vmem:[#allocation3 + $0x158] sm:$0xff]
        %v8474 = vld [vmem:[#allocation3 + $0x168] sm:$0xff]
        %v8475 = vld [vmem:[#allocation3 + $0x170] sm:$0xff]
        %v8476 = vld [vmem:[#allocation3 + $0x180] sm:$0xff]
        %v8477 = vld [vmem:[#allocation3 + $0x188] sm:$0xff]
        %v8478 = vld [vmem:[#allocation3 + $0x198] sm:$0xff]
        %v8479 = vld [vmem:[#allocation3 + $0x1a0] sm:$0xff]
        %v8480 = vld [vmem:[#allocation3 + $0x1] sm:$0xff]
        %v8481 = vld [vmem:[#allocation3 + $0x9] sm:$0xff]
        %v8482 = vld [vmem:[#allocation3 + $0x19] sm:$0xff]
        %v8483 = vld [vmem:[#allocation3 + $0x21] sm:$0xff]
        %v8484 = vld [vmem:[#allocation3 + $0x31] sm:$0xff]
        %v8485 = vld [vmem:[#allocation3 + $0x39] sm:$0xff]
        %v8486 = vld [vmem:[#allocation3 + $0x49] sm:$0xff]
        %v8487 = vld [vmem:[#allocation3 + $0x51] sm:$0xff]
        %v8488 = vld [vmem:[#allocation3 + $0x61] sm:$0xff]
        %v8489 = vld [vmem:[#allocation3 + $0x69] sm:$0xff]
        %v8490 = vld [vmem:[#allocation3 + $0x79] sm:$0xff]
        %v8491 = vld [vmem:[#allocation3 + $0x81] sm:$0xff]
        %v8492 = vld [vmem:[#allocation3 + $0x91] sm:$0xff]
        %v8493 = vld [vmem:[#allocation3 + $0x99] sm:$0xff]
        %v8494 = vld [vmem:[#allocation3 + $0xa9] sm:$0xff]
        %v8495 = vld [vmem:[#allocation3 + $0xb1] sm:$0xff]
        %v8496 = vld [vmem:[#allocation3 + $0xc1] sm:$0xff]
        %v8497 = vld [vmem:[#allocation3 + $0xc9] sm:$0xff]
        %v8498 = vld [vmem:[#allocation3 + $0xd9] sm:$0xff]
        %v8499 = vld [vmem:[#allocation3 + $0xe1] sm:$0xff]
        %v8500 = vld [vmem:[#allocation3 + $0xf1] sm:$0xff]
        %v8501 = vld [vmem:[#allocation3 + $0xf9] sm:$0xff]
        %v8502 = vld [vmem:[#allocation3 + $0x109] sm:$0xff]
        %v8503 = vld [vmem:[#allocation3 + $0x111] sm:$0xff]
        %v8504 = vld [vmem:[#allocation3 + $0x121] sm:$0xff]
        %v8505 = vld [vmem:[#allocation3 + $0x129] sm:$0xff]
        %v8506 = vld [vmem:[#allocation3 + $0x139] sm:$0xff]
        %v8507 = vld [vmem:[#allocation3 + $0x141] sm:$0xff]
        %v8508 = vld [vmem:[#allocation3 + $0x151] sm:$0xff]
        %v8509 = vld [vmem:[#allocation3 + $0x159] sm:$0xff]
        %v8510 = vld [vmem:[#allocation3 + $0x169] sm:$0xff]
        %v8511 = vld [vmem:[#allocation3 + $0x171] sm:$0xff]
        %v8512 = vld [vmem:[#allocation3 + $0x181] sm:$0xff]
        %v8513 = vld [vmem:[#allocation3 + $0x189] sm:$0xff]
        %v8514 = vld [vmem:[#allocation3 + $0x199] sm:$0xff]
        %v8515 = vld [vmem:[#allocation3 + $0x1a1] sm:$0xff]
        %v8516 = vmax.f32 %v8444, %v8480
        %v8517 = vmax.f32 %v8445, %v8481
        %v8518 = vmax.f32 %v8446, %v8482
        %v8519 = vmax.f32 %v8447, %v8483
        %v8520 = vmax.f32 %v8448, %v8484
        %v8521 = vmax.f32 %v8449, %v8485
        %v8522 = vmax.f32 %v8450, %v8486
        %v8523 = vmax.f32 %v8451, %v8487
        %v8524 = vmax.f32 %v8452, %v8488
        %v8525 = vmax.f32 %v8453, %v8489
        %v8526 = vmax.f32 %v8454, %v8490
        %v8527 = vmax.f32 %v8455, %v8491
        %v8528 = vmax.f32 %v8456, %v8492
        %v8529 = vmax.f32 %v8457, %v8493
        %v8530 = vmax.f32 %v8458, %v8494
        %v8531 = vmax.f32 %v8459, %v8495
        %v8532 = vmax.f32 %v8460, %v8496
        %v8533 = vmax.f32 %v8461, %v8497
        %v8534 = vmax.f32 %v8462, %v8498
        %v8535 = vmax.f32 %v8463, %v8499
        %v8536 = vmax.f32 %v8464, %v8500
        %v8537 = vmax.f32 %v8465, %v8501
        %v8538 = vmax.f32 %v8466, %v8502
        %v8539 = vmax.f32 %v8467, %v8503
        %v8540 = vmax.f32 %v8468, %v8504
        %v8541 = vmax.f32 %v8469, %v8505
        %v8542 = vmax.f32 %v8470, %v8506
        %v8543 = vmax.f32 %v8471, %v8507
        %v8544 = vmax.f32 %v8472, %v8508
        %v8545 = vmax.f32 %v8473, %v8509
        %v8546 = vmax.f32 %v8474, %v8510
        %v8547 = vmax.f32 %v8475, %v8511
        %v8548 = vmax.f32 %v8476, %v8512
        %v8549 = vmax.f32 %v8477, %v8513
        %v8550 = vmax.f32 %v8478, %v8514
        %v8551 = vmax.f32 %v8479, %v8515
        %v8552 = vld [vmem:[#allocation3 + $0x2] sm:$0xff]
        %v8553 = vld [vmem:[#allocation3 + $0xa] sm:$0xff]
        %v8554 = vld [vmem:[#allocation3 + $0x1a] sm:$0xff]
        %v8555 = vld [vmem:[#allocation3 + $0x22] sm:$0xff]
        %v8556 = vld [vmem:[#allocation3 + $0x32] sm:$0xff]
        %v8557 = vld [vmem:[#allocation3 + $0x3a] sm:$0xff]
        %v8558 = vld [vmem:[#allocation3 + $0x4a] sm:$0xff]
        %v8559 = vld [vmem:[#allocation3 + $0x52] sm:$0xff]
        %v8560 = vld [vmem:[#allocation3 + $0x62] sm:$0xff]
        %v8561 = vld [vmem:[#allocation3 + $0x6a] sm:$0xff]
        %v8562 = vld [vmem:[#allocation3 + $0x7a] sm:$0xff]
        %v8563 = vld [vmem:[#allocation3 + $0x82] sm:$0xff]
        %v8564 = vld [vmem:[#allocation3 + $0x92] sm:$0xff]
        %v8565 = vld [vmem:[#allocation3 + $0x9a] sm:$0xff]
        %v8566 = vld [vmem:[#allocation3 + $0xaa] sm:$0xff]
        %v8567 = vld [vmem:[#allocation3 + $0xb2] sm:$0xff]
        %v8568 = vld [vmem:[#allocation3 + $0xc2] sm:$0xff]
        %v8569 = vld [vmem:[#allocation3 + $0xca] sm:$0xff]
        %v8570 = vld [vmem:[#allocation3 + $0xda] sm:$0xff]
        %v8571 = vld [vmem:[#allocation3 + $0xe2] sm:$0xff]
        %v8572 = vld [vmem:[#allocation3 + $0xf2] sm:$0xff]
        %v8573 = vld [vmem:[#allocation3 + $0xfa] sm:$0xff]
        %v8574 = vld [vmem:[#allocation3 + $0x10a] sm:$0xff]
        %v8575 = vld [vmem:[#allocation3 + $0x112] sm:$0xff]
        %v8576 = vld [vmem:[#allocation3 + $0x122] sm:$0xff]
        %v8577 = vld [vmem:[#allocation3 + $0x12a] sm:$0xff]
        %v8578 = vld [vmem:[#allocation3 + $0x13a] sm:$0xff]
        %v8579 = vld [vmem:[#allocation3 + $0x142] sm:$0xff]
        %v8580 = vld [vmem:[#allocation3 + $0x152] sm:$0xff]
        %v8581 = vld [vmem:[#allocation3 + $0x15a] sm:$0xff]
        %v8582 = vld [vmem:[#allocation3 + $0x16a] sm:$0xff]
        %v8583 = vld [vmem:[#allocation3 + $0x172] sm:$0xff]
        %v8584 = vld [vmem:[#allocation3 + $0x182] sm:$0xff]
        %v8585 = vld [vmem:[#allocation3 + $0x18a] sm:$0xff]
        %v8586 = vld [vmem:[#allocation3 + $0x19a] sm:$0xff]
        %v8587 = vld [vmem:[#allocation3 + $0x1a2] sm:$0xff]
        %v8588 = vmax.f32 %v8516, %v8552
        %v8589 = vmax.f32 %v8517, %v8553
        %v8590 = vmax.f32 %v8518, %v8554
        %v8591 = vmax.f32 %v8519, %v8555
        %v8592 = vmax.f32 %v8520, %v8556
        %v8593 = vmax.f32 %v8521, %v8557
        %v8594 = vmax.f32 %v8522, %v8558
        %v8595 = vmax.f32 %v8523, %v8559
        %v8596 = vmax.f32 %v8524, %v8560
        %v8597 = vmax.f32 %v8525, %v8561
        %v8598 = vmax.f32 %v8526, %v8562
        %v8599 = vmax.f32 %v8527, %v8563
        %v8600 = vmax.f32 %v8528, %v8564
        %v8601 = vmax.f32 %v8529, %v8565
        %v8602 = vmax.f32 %v8530, %v8566
        %v8603 = vmax.f32 %v8531, %v8567
        %v8604 = vmax.f32 %v8532, %v8568
        %v8605 = vmax.f32 %v8533, %v8569
        %v8606 = vmax.f32 %v8534, %v8570
        %v8607 = vmax.f32 %v8535, %v8571
        %v8608 = vmax.f32 %v8536, %v8572
        %v8609 = vmax.f32 %v8537, %v8573
        %v8610 = vmax.f32 %v8538, %v8574
        %v8611 = vmax.f32 %v8539, %v8575
        %v8612 = vmax.f32 %v8540, %v8576
        %v8613 = vmax.f32 %v8541, %v8577
        %v8614 = vmax.f32 %v8542, %v8578
        %v8615 = vmax.f32 %v8543, %v8579
        %v8616 = vmax.f32 %v8544, %v8580
        %v8617 = vmax.f32 %v8545, %v8581
        %v8618 = vmax.f32 %v8546, %v8582
        %v8619 = vmax.f32 %v8547, %v8583
        %v8620 = vmax.f32 %v8548, %v8584
        %v8621 = vmax.f32 %v8549, %v8585
        %v8622 = vmax.f32 %v8550, %v8586
        %v8623 = vmax.f32 %v8551, %v8587
        %v8624 = vmax.f32 %v8588, %v8590
        %v8625 = vmax.f32 %v8589, %v8591
        %v8626 = vmax.f32 %v8590, %v8592
        %v8627 = vmax.f32 %v8591, %v8593
        %v8628 = vmax.f32 %v8592, %v8594
        %v8629 = vmax.f32 %v8593, %v8595
        %v8630 = vmax.f32 %v8594, %v8596
        %v8631 = vmax.f32 %v8595, %v8597
        %v8632 = vmax.f32 %v8596, %v8598
        %v8633 = vmax.f32 %v8597, %v8599
        %v8634 = vmax.f32 %v8598, %v8600
        %v8635 = vmax.f32 %v8599, %v8601
        %v8636 = vmax.f32 %v8600, %v8602
        %v8637 = vmax.f32 %v8601, %v8603
        %v8638 = vmax.f32 %v8602, %v8604
        %v8639 = vmax.f32 %v8603, %v8605
        %v8640 = vmax.f32 %v8604, %v8606
        %v8641 = vmax.f32 %v8605, %v8607
        %v8642 = vmax.f32 %v8606, %v8608
        %v8643 = vmax.f32 %v8607, %v8609
        %v8644 = vmax.f32 %v8608, %v8610
        %v8645 = vmax.f32 %v8609, %v8611
        %v8646 = vmax.f32 %v8610, %v8612
        %v8647 = vmax.f32 %v8611, %v8613
        %v8648 = vmax.f32 %v8612, %v8614
        %v8649 = vmax.f32 %v8613, %v8615
        %v8650 = vmax.f32 %v8614, %v8616
        %v8651 = vmax.f32 %v8615, %v8617
        %v8652 = vmax.f32 %v8616, %v8618
        %v8653 = vmax.f32 %v8617, %v8619
        %v8654 = vmax.f32 %v8618, %v8620
        %v8655 = vmax.f32 %v8619, %v8621
        %v8656 = vmax.f32 %v8624, %v8592
        %v8657 = vmax.f32 %v8625, %v8593
        %v8658 = vmax.f32 %v8626, %v8594
        %v8659 = vmax.f32 %v8627, %v8595
        %v8660 = vmax.f32 %v8628, %v8596
        %v8661 = vmax.f32 %v8629, %v8597
        %v8662 = vmax.f32 %v8630, %v8598
        %v8663 = vmax.f32 %v8631, %v8599
        %v8664 = vmax.f32 %v8632, %v8600
        %v8665 = vmax.f32 %v8633, %v8601
        %v8666 = vmax.f32 %v8634, %v8602
        %v8667 = vmax.f32 %v8635, %v8603
        %v8668 = vmax.f32 %v8636, %v8604
        %v8669 = vmax.f32 %v8637, %v8605
        %v8670 = vmax.f32 %v8638, %v8606
        %v8671 = vmax.f32 %v8639, %v8607
        %v8672 = vmax.f32 %v8640, %v8608
        %v8673 = vmax.f32 %v8641, %v8609
        %v8674 = vmax.f32 %v8642, %v8610
        %v8675 = vmax.f32 %v8643, %v8611
        %v8676 = vmax.f32 %v8644, %v8612
        %v8677 = vmax.f32 %v8645, %v8613
        %v8678 = vmax.f32 %v8646, %v8614
        %v8679 = vmax.f32 %v8647, %v8615
        %v8680 = vmax.f32 %v8648, %v8616
        %v8681 = vmax.f32 %v8649, %v8617
        %v8682 = vmax.f32 %v8650, %v8618
        %v8683 = vmax.f32 %v8651, %v8619
        %v8684 = vmax.f32 %v8652, %v8620
        %v8685 = vmax.f32 %v8653, %v8621
        %v8686 = vmax.f32 %v8654, %v8622
        %v8687 = vmax.f32 %v8655, %v8623
        %v8688 = vpack.c.bf16 %v8657, %v8656
        %v8689 = vpack.c.bf16 %v8659, %v8658
        %v8690 = vpack.c.bf16 %v8661, %v8660
        %v8691 = vpack.c.bf16 %v8663, %v8662
        %v8692 = vpack.c.bf16 %v8665, %v8664
        %v8693 = vpack.c.bf16 %v8667, %v8666
        %v8694 = vpack.c.bf16 %v8669, %v8668
        %v8695 = vpack.c.bf16 %v8671, %v8670
        %v8696 = vpack.c.bf16 %v8673, %v8672
        %v8697 = vpack.c.bf16 %v8675, %v8674
        %v8698 = vpack.c.bf16 %v8677, %v8676
        %v8699 = vpack.c.bf16 %v8679, %v8678
        %v8700 = vpack.c.bf16 %v8681, %v8680
        %v8701 = vpack.c.bf16 %v8683, %v8682
        %v8702 = vpack.c.bf16 %v8685, %v8684
        %v8703 = vpack.c.bf16 %v8687, %v8686
        %v8704 = vld [vmem:[%s5] sm:$0x3]
        %v8705 = vld [vmem:[%s6] sm:$0x1]
        %v8707 = vlaneseq
        %v8708 = vshrl.u32 %v8707, 7
        %v8709 = vsub.s32 0, %v8708
        %v8710 = vrot.slane %v8705, %v8709
        %v8713 = vsel %vm334, %v8688, 0
        %v8716 = vsel %vm334, %v8689, 0
        %v8719 = vsel %vm334, %v8690, 0
        %v8722 = vsel %vm334, %v8691, 0
        %v8725 = vsel %vm334, %v8692, 0
        %v8728 = vsel %vm334, %v8693, 0
        %v8731 = vsel %vm334, %v8694, 0
        %v8734 = vsel %vm334, %v8695, 0
        %v8737 = vsel %vm334, %v8696, 0
        %v8740 = vsel %vm334, %v8697, 0
        %v8743 = vsel %vm334, %v8698, 0
        %v8746 = vsel %vm334, %v8699, 0
        %v8749 = vsel %vm334, %v8700, 0
        %v8752 = vsel %vm334, %v8701, 0
        %v8755 = vsel %vm334, %v8702, 0
        %v8758 = vsel %vm334, %v8703, 0
        %v8761 = vsel %vm383, %v8704, 0
        %8763 = vmatprep.subr.bf16.mxu0 0
        %8764 = vmatpush1.bf16.msra.mxu0 0
        %8765 = vmatprep.subr.bf16.mxu0 0
        %8766 = vmatpush1.bf16.msra.mxu0 0
        %8767 = vmatprep.subr.bf16.mxu0 0
        %8768 = vmatpush1.bf16.msra.mxu0 0
        %8769 = vmatprep.subr.bf16.mxu0 0
        %8770 = vmatpush1.bf16.msra.mxu0 0
        %8771 = vmatprep.subr.bf16.mxu0 0
        %8772 = vmatpush1.bf16.msra.mxu0 0
        %8773 = vmatprep.subr.bf16.mxu0 0
        %8774 = vmatpush1.bf16.msra.mxu0 0
        %8775 = vmatprep.subr.bf16.mxu0 0
        %8776 = vmatpush1.bf16.msra.mxu0 0
        %8777 = vmatprep.subr.bf16.mxu0 0
        %8778 = vmatpush1.bf16.msra.mxu0 %v8761
        %8779 = vmatprep.subr.bf16.mxu0 0
        %8780 = vmatpush2.bf16.msra.mxu0 0
        %8781 = vmatprep.subr.bf16.mxu0 0
        %8782 = vmatpush2.bf16.msra.mxu0 0
        %8783 = vmatprep.subr.bf16.mxu0 0
        %8784 = vmatpush2.bf16.msra.mxu0 0
        %8785 = vmatprep.subr.bf16.mxu0 0
        %8786 = vmatpush2.bf16.msra.mxu0 0
        %8787 = vmatprep.subr.bf16.mxu0 0
        %8788 = vmatpush2.bf16.msra.mxu0 0
        %8789 = vmatprep.subr.bf16.mxu0 0
        %8790 = vmatpush2.bf16.msra.mxu0 0
        %8791 = vmatprep.subr.bf16.mxu0 0
        %8792 = vmatpush2.bf16.msra.mxu0 0
        %8793 = vmatprep.subr.bf16.mxu0 0
        %8794 = vmatpush2.bf16.msra.mxu0 0
        %8795 = vmatprep.mubr.bf16.mxu0 0
        %8796 = vmatmul.mubr.bf16.gmra.mxu0 %v8713
        %v8797 = vpop.f32.mrf.mxu0
        %v8798 = vadd.f32 %v8710, %v8797
        %v8799 = vpop.f32.mrf.mxu0
        %v8800 = vpop.f32.mrf.mxu0
        %v8801 = vadd.f32 %v8710, %v8800
        %v8802 = vpop.f32.mrf.mxu0
        %8803 = vmatprep.mubr.bf16.mxu0 0
        %8804 = vmatmul.mubr.bf16.gmra.mxu0 %v8716
        %v8805 = vpop.f32.mrf.mxu0
        %v8806 = vadd.f32 %v8710, %v8805
        %v8807 = vpop.f32.mrf.mxu0
        %v8808 = vpop.f32.mrf.mxu0
        %v8809 = vadd.f32 %v8710, %v8808
        %v8810 = vpop.f32.mrf.mxu0
        %8811 = vmatprep.mubr.bf16.mxu0 0
        %8812 = vmatmul.mubr.bf16.gmra.mxu0 %v8719
        %v8813 = vpop.f32.mrf.mxu0
        %v8814 = vadd.f32 %v8710, %v8813
        %v8815 = vpop.f32.mrf.mxu0
        %v8816 = vpop.f32.mrf.mxu0
        %v8817 = vadd.f32 %v8710, %v8816
        %v8818 = vpop.f32.mrf.mxu0
        %8819 = vmatprep.mubr.bf16.mxu0 0
        %8820 = vmatmul.mubr.bf16.gmra.mxu0 %v8722
        %v8821 = vpop.f32.mrf.mxu0
        %v8822 = vadd.f32 %v8710, %v8821
        %v8823 = vpop.f32.mrf.mxu0
        %v8824 = vpop.f32.mrf.mxu0
        %v8825 = vadd.f32 %v8710, %v8824
        %v8826 = vpop.f32.mrf.mxu0
        %8827 = vmatprep.mubr.bf16.mxu0 0
        %8828 = vmatmul.mubr.bf16.gmra.mxu0 %v8725
        %v8829 = vpop.f32.mrf.mxu0
        %v8830 = vadd.f32 %v8710, %v8829
        %v8831 = vpop.f32.mrf.mxu0
        %v8832 = vpop.f32.mrf.mxu0
        %v8833 = vadd.f32 %v8710, %v8832
        %v8834 = vpop.f32.mrf.mxu0
        %8835 = vmatprep.mubr.bf16.mxu0 0
        %8836 = vmatmul.mubr.bf16.gmra.mxu0 %v8728
        %v8837 = vpop.f32.mrf.mxu0
        %v8838 = vadd.f32 %v8710, %v8837
        %v8839 = vpop.f32.mrf.mxu0
        %v8840 = vpop.f32.mrf.mxu0
        %v8841 = vadd.f32 %v8710, %v8840
        %v8842 = vpop.f32.mrf.mxu0
        %8843 = vmatprep.mubr.bf16.mxu0 0
        %8844 = vmatmul.mubr.bf16.gmra.mxu0 %v8731
        %v8845 = vpop.f32.mrf.mxu0
        %v8846 = vadd.f32 %v8710, %v8845
        %v8847 = vpop.f32.mrf.mxu0
        %v8848 = vpop.f32.mrf.mxu0
        %v8849 = vadd.f32 %v8710, %v8848
        %v8850 = vpop.f32.mrf.mxu0
        %8851 = vmatprep.mubr.bf16.mxu0 0
        %8852 = vmatmul.mubr.bf16.gmra.mxu0 %v8734
        %v8853 = vpop.f32.mrf.mxu0
        %v8854 = vadd.f32 %v8710, %v8853
        %v8855 = vpop.f32.mrf.mxu0
        %v8856 = vpop.f32.mrf.mxu0
        %v8857 = vadd.f32 %v8710, %v8856
        %v8858 = vpop.f32.mrf.mxu0
        %8859 = vmatprep.mubr.bf16.mxu0 0
        %8860 = vmatmul.mubr.bf16.gmra.mxu0 %v8737
        %v8861 = vpop.f32.mrf.mxu0
        %v8862 = vadd.f32 %v8710, %v8861
        %v8863 = vpop.f32.mrf.mxu0
        %v8864 = vpop.f32.mrf.mxu0
        %v8865 = vadd.f32 %v8710, %v8864
        %v8866 = vpop.f32.mrf.mxu0
        %8867 = vmatprep.mubr.bf16.mxu0 0
        %8868 = vmatmul.mubr.bf16.gmra.mxu0 %v8740
        %v8869 = vpop.f32.mrf.mxu0
        %v8870 = vadd.f32 %v8710, %v8869
        %v8871 = vpop.f32.mrf.mxu0
        %v8872 = vpop.f32.mrf.mxu0
        %v8873 = vadd.f32 %v8710, %v8872
        %v8874 = vpop.f32.mrf.mxu0
        %8875 = vmatprep.mubr.bf16.mxu0 0
        %8876 = vmatmul.mubr.bf16.gmra.mxu0 %v8743
        %v8877 = vpop.f32.mrf.mxu0
        %v8878 = vadd.f32 %v8710, %v8877
        %v8879 = vpop.f32.mrf.mxu0
        %v8880 = vpop.f32.mrf.mxu0
        %v8881 = vadd.f32 %v8710, %v8880
        %v8882 = vpop.f32.mrf.mxu0
        %8883 = vmatprep.mubr.bf16.mxu0 0
        %8884 = vmatmul.mubr.bf16.gmra.mxu0 %v8746
        %v8885 = vpop.f32.mrf.mxu0
        %v8886 = vadd.f32 %v8710, %v8885
        %v8887 = vpop.f32.mrf.mxu0
        %v8888 = vpop.f32.mrf.mxu0
        %v8889 = vadd.f32 %v8710, %v8888
        %v8890 = vpop.f32.mrf.mxu0
        %8891 = vmatprep.mubr.bf16.mxu0 0
        %8892 = vmatmul.mubr.bf16.gmra.mxu0 %v8749
        %v8893 = vpop.f32.mrf.mxu0
        %v8894 = vadd.f32 %v8710, %v8893
        %v8895 = vpop.f32.mrf.mxu0
        %v8896 = vpop.f32.mrf.mxu0
        %v8897 = vadd.f32 %v8710, %v8896
        %v8898 = vpop.f32.mrf.mxu0
        %8899 = vmatprep.mubr.bf16.mxu0 0
        %8900 = vmatmul.mubr.bf16.gmra.mxu0 %v8752
        %v8901 = vpop.f32.mrf.mxu0
        %v8902 = vadd.f32 %v8710, %v8901
        %v8903 = vpop.f32.mrf.mxu0
        %v8904 = vpop.f32.mrf.mxu0
        %v8905 = vadd.f32 %v8710, %v8904
        %v8906 = vpop.f32.mrf.mxu0
        %8907 = vmatprep.mubr.bf16.mxu0 0
        %8908 = vmatmul.mubr.bf16.gmra.mxu0 %v8755
        %v8909 = vpop.f32.mrf.mxu0
        %v8910 = vadd.f32 %v8710, %v8909
        %v8911 = vpop.f32.mrf.mxu0
        %v8912 = vpop.f32.mrf.mxu0
        %v8913 = vadd.f32 %v8710, %v8912
        %v8914 = vpop.f32.mrf.mxu0
        %8915 = vmatprep.mubr.bf16.mxu0 0
        %8916 = vmatmul.mubr.bf16.gmra.mxu0 %v8758
        %v8917 = vpop.f32.mrf.mxu0
        %v8918 = vadd.f32 %v8710, %v8917
        %v8919 = vpop.f32.mrf.mxu0
        %v8920 = vpop.f32.mrf.mxu0
        %v8921 = vadd.f32 %v8710, %v8920
        %v8922 = vpop.f32.mrf.mxu0
        %8923 = vdwg.mxu0
        %v8924 = vmax.f32 %v8798, 0.0
        %v8925 = vmax.f32 %v8801, 0.0
        %v8926 = vmax.f32 %v8806, 0.0
        %v8927 = vmax.f32 %v8809, 0.0
        %v8928 = vmax.f32 %v8814, 0.0
        %v8929 = vmax.f32 %v8817, 0.0
        %v8930 = vmax.f32 %v8822, 0.0
        %v8931 = vmax.f32 %v8825, 0.0
        %v8932 = vmax.f32 %v8830, 0.0
        %v8933 = vmax.f32 %v8833, 0.0
        %v8934 = vmax.f32 %v8838, 0.0
        %v8935 = vmax.f32 %v8841, 0.0
        %v8936 = vmax.f32 %v8846, 0.0
        %v8937 = vmax.f32 %v8849, 0.0
        %v8938 = vmax.f32 %v8854, 0.0
        %v8939 = vmax.f32 %v8857, 0.0
        %v8940 = vmax.f32 %v8862, 0.0
        %v8941 = vmax.f32 %v8865, 0.0
        %v8942 = vmax.f32 %v8870, 0.0
        %v8943 = vmax.f32 %v8873, 0.0
        %v8944 = vmax.f32 %v8878, 0.0
        %v8945 = vmax.f32 %v8881, 0.0
        %v8946 = vmax.f32 %v8886, 0.0
        %v8947 = vmax.f32 %v8889, 0.0
        %v8948 = vmax.f32 %v8894, 0.0
        %v8949 = vmax.f32 %v8897, 0.0
        %v8950 = vmax.f32 %v8902, 0.0
        %v8951 = vmax.f32 %v8905, 0.0
        %v8952 = vmax.f32 %v8910, 0.0
        %v8953 = vmax.f32 %v8913, 0.0
        %v8954 = vmax.f32 %v8918, 0.0
        %v8955 = vmax.f32 %v8921, 0.0
        %8988 = vrot.lane.b32.xlu0 %v8924, 24
        %v8989 = vpop.permute.xlu0 %8988
        %8990 = vrot.lane.b32.xlu0 %v8925, 24
        %v8991 = vpop.permute.xlu0 %8990
        %8992 = vrot.lane.b32.xlu0 %v8926, 24
        %v8993 = vpop.permute.xlu0 %8992
        %8994 = vrot.lane.b32.xlu0 %v8927, 24
        %v8995 = vpop.permute.xlu0 %8994
        %8996 = vrot.lane.b32.xlu0 %v8928, 24
        %v8997 = vpop.permute.xlu0 %8996
        %8998 = vrot.lane.b32.xlu0 %v8929, 24
        %v8999 = vpop.permute.xlu0 %8998
        %9000 = vrot.lane.b32.xlu0 %v8930, 24
        %v9001 = vpop.permute.xlu0 %9000
        %9002 = vrot.lane.b32.xlu0 %v8931, 24
        %v9003 = vpop.permute.xlu0 %9002
        %9004 = vrot.lane.b32.xlu0 %v8932, 24
        %v9005 = vpop.permute.xlu0 %9004
        %9006 = vrot.lane.b32.xlu0 %v8933, 24
        %v9007 = vpop.permute.xlu0 %9006
        %9008 = vrot.lane.b32.xlu0 %v8934, 24
        %v9009 = vpop.permute.xlu0 %9008
        %9010 = vrot.lane.b32.xlu0 %v8935, 24
        %v9011 = vpop.permute.xlu0 %9010
        %9012 = vrot.lane.b32.xlu0 %v8936, 24
        %v9013 = vpop.permute.xlu0 %9012
        %9014 = vrot.lane.b32.xlu0 %v8937, 24
        %v9015 = vpop.permute.xlu0 %9014
        %9016 = vrot.lane.b32.xlu0 %v8938, 24
        %v9017 = vpop.permute.xlu0 %9016
        %9018 = vrot.lane.b32.xlu0 %v8939, 24
        %v9019 = vpop.permute.xlu0 %9018
        %9020 = vrot.lane.b32.xlu0 %v8940, 24
        %v9021 = vpop.permute.xlu0 %9020
        %9022 = vrot.lane.b32.xlu0 %v8941, 24
        %v9023 = vpop.permute.xlu0 %9022
        %9024 = vrot.lane.b32.xlu0 %v8942, 24
        %v9025 = vpop.permute.xlu0 %9024
        %9026 = vrot.lane.b32.xlu0 %v8943, 24
        %v9027 = vpop.permute.xlu0 %9026
        %9028 = vrot.lane.b32.xlu0 %v8944, 24
        %v9029 = vpop.permute.xlu0 %9028
        %9030 = vrot.lane.b32.xlu0 %v8945, 24
        %v9031 = vpop.permute.xlu0 %9030
        %9032 = vrot.lane.b32.xlu0 %v8946, 24
        %v9033 = vpop.permute.xlu0 %9032
        %9034 = vrot.lane.b32.xlu0 %v8947, 24
        %v9035 = vpop.permute.xlu0 %9034
        %9036 = vrot.lane.b32.xlu0 %v8948, 24
        %v9037 = vpop.permute.xlu0 %9036
        %9038 = vrot.lane.b32.xlu0 %v8949, 24
        %v9039 = vpop.permute.xlu0 %9038
        %9040 = vrot.lane.b32.xlu0 %v8950, 24
        %v9041 = vpop.permute.xlu0 %9040
        %9042 = vrot.lane.b32.xlu0 %v8951, 24
        %v9043 = vpop.permute.xlu0 %9042
        %9044 = vrot.lane.b32.xlu0 %v8952, 24
        %v9045 = vpop.permute.xlu0 %9044
        %9046 = vrot.lane.b32.xlu0 %v8953, 24
        %v9047 = vpop.permute.xlu0 %9046
        %9048 = vrot.lane.b32.xlu0 %v8954, 24
        %v9049 = vpop.permute.xlu0 %9048
        %9050 = vrot.lane.b32.xlu0 %v8955, 24
        %v9051 = vpop.permute.xlu0 %9050
        %vm9084 = vcmask 261312
        %9085 = vst.msk [vmem:[%s271] sm:$0xff] %vm9084, %v8989
        %9086 = vst.msk [vmem:[%s271 + $0x8] sm:$0xff] %vm9084, %v8991
        %9087 = vst.msk [vmem:[%s271 + $0x10] sm:$0xff] %vm9084, %v8993
        %9088 = vst.msk [vmem:[%s271 + $0x18] sm:$0xff] %vm9084, %v8995
        %9089 = vst.msk [vmem:[%s271 + $0x20] sm:$0xff] %vm9084, %v8997
        %9090 = vst.msk [vmem:[%s271 + $0x28] sm:$0xff] %vm9084, %v8999
        %9091 = vst.msk [vmem:[%s271 + $0x30] sm:$0xff] %vm9084, %v9001
        %9092 = vst.msk [vmem:[%s271 + $0x38] sm:$0xff] %vm9084, %v9003
        %9093 = vst.msk [vmem:[%s271 + $0x40] sm:$0xff] %vm9084, %v9005
        %9094 = vst.msk [vmem:[%s271 + $0x48] sm:$0xff] %vm9084, %v9007
        %9095 = vst.msk [vmem:[%s271 + $0x50] sm:$0xff] %vm9084, %v9009
        %9096 = vst.msk [vmem:[%s271 + $0x58] sm:$0xff] %vm9084, %v9011
        %9097 = vst.msk [vmem:[%s271 + $0x60] sm:$0xff] %vm9084, %v9013
        %9098 = vst.msk [vmem:[%s271 + $0x68] sm:$0xff] %vm9084, %v9015
        %9099 = vst.msk [vmem:[%s271 + $0x70] sm:$0xff] %vm9084, %v9017
        %9100 = vst.msk [vmem:[%s271 + $0x78] sm:$0xff] %vm9084, %v9019
        %9101 = vst.msk [vmem:[%s271 + $0x80] sm:$0xff] %vm9084, %v9021
        %9102 = vst.msk [vmem:[%s271 + $0x88] sm:$0xff] %vm9084, %v9023
        %9103 = vst.msk [vmem:[%s271 + $0x90] sm:$0xff] %vm9084, %v9025
        %9104 = vst.msk [vmem:[%s271 + $0x98] sm:$0xff] %vm9084, %v9027
        %9105 = vst.msk [vmem:[%s271 + $0xa0] sm:$0xff] %vm9084, %v9029
        %9106 = vst.msk [vmem:[%s271 + $0xa8] sm:$0xff] %vm9084, %v9031
        %9107 = vst.msk [vmem:[%s271 + $0xb0] sm:$0xff] %vm9084, %v9033
        %9108 = vst.msk [vmem:[%s271 + $0xb8] sm:$0xff] %vm9084, %v9035
        %9109 = vst.msk [vmem:[%s271 + $0xc0] sm:$0xff] %vm9084, %v9037
        %9110 = vst.msk [vmem:[%s271 + $0xc8] sm:$0xff] %vm9084, %v9039
        %9111 = vst.msk [vmem:[%s271 + $0xd0] sm:$0xff] %vm9084, %v9041
        %9112 = vst.msk [vmem:[%s271 + $0xd8] sm:$0xff] %vm9084, %v9043
        %9113 = vst.msk [vmem:[%s271 + $0xe0] sm:$0xff] %vm9084, %v9045
        %9114 = vst.msk [vmem:[%s271 + $0xe8] sm:$0xff] %vm9084, %v9047
        %9115 = vst.msk [vmem:[%s271 + $0xf0] sm:$0xff] %vm9084, %v9049
        %9116 = vst.msk [vmem:[%s271 + $0xf8] sm:$0xff] %vm9084, %v9051
        %s9117 = sand.u32 %s181, 1
        %s9118 = scalar_lea.sflag [#allocation5], %s9117
        %s9119 = sand.u32 %s181, 1
        %s9120 = smul.addr %s9119, 256
        %s9121 = scalar_lea.vmem [#allocation4], %s9120
        // Predicated region
        $region49: #{inception_block.1} parent=47 // pred_check
          %p9122 = pneg %p191
        $region50: #{inception_block.1} parent=47 // pred_check_branch
          %9124 = sbr.rel (%p9122) target = $region52
        $region51: #{inception_block.1} parent=47 // pred_region
          %s9126 = ssub.s32 4096, 4096
          %9127 = vsyncadd %s9118, %s9126
          %s9128 = smul.addr %s21, 32
          %s9129 = smul.addr %s9128, 128
          %s9130 = scalar_lea.hbm %s7, %s9129
          %s9131 = sshll.u32 %s9121, 4
          %s9132 = int_to_ptr.vmem [resolvable:$true] %s9131
          %9137 = dma.vmem_to_hbm [thread:$0]  %s9132, 4096, %s9130, %s9118, 128, 128, 8
        $region52: #{inception_block.1} parent=47 // pred_fallthru
          _
      $region48: #{inception_block.1} parent=5 // pred_fallthru
        _
      %p9138 = scmp.le.s32.totalorder 2, %s16
      // Predicated region
      $region53: #{inception_block.1} parent=5 // pred_check
        %p9139 = pneg %p9138
      $region54: #{inception_block.1} parent=5 // pred_check_branch
        %9141 = sbr.rel (%p9139) target = $region56
      $region55: #{inception_block.1} parent=5 // pred_region
        %s9142 = ssub.s32 %s16, 2
        // Predicated region
        $region57: #{inception_block.1} parent=55 // pred_check
          %p9143 = pneg %p197
        $region58: #{inception_block.1} parent=55 // pred_check_branch
          %9145 = sbr.rel (%p9143) target = $region60
        $region59: #{inception_block.1} parent=55 // pred_region
          %s9146 = sand.u32 %s182, 1
          %s9147 = scalar_lea.sflag [#allocation5], %s9146
          %s9148 = sand.u32 %s182, 1
          %s9149 = smul.addr %s9148, 256
          %s9150 = scalar_lea.vmem [#allocation4], %s9149
          %9151 = dma.done %s9147, 4096
        $region60: #{inception_block.1} parent=55 // pred_fallthru
          _
      $region56: #{inception_block.1} parent=5 // pred_fallthru
        _
    $region6: #{inception_block.1} parent=1 // loop_footer
      %s20 = sadd.s32 1, %s16
    $region7: #{inception_block.1} parent=1 // loop_footer_branch
      %15 = sbr.rel target = $region3
    $region8: #{inception_block.1} parent=1 // loop_exit
      _
    %9152 = vsyncpa [#allocation5], 1
    %s9153 = scalar_lea.sflag [#allocation5], 1
    %9154 = vsyncpa %s9153, 1

</llo_original>
